<compile_context>
chip_gen: v7x
topology: tpu7x:2x2x1
jax: 0.10.0
libtpu: 0.0.40
codegen_flags: <defaults>
</compile_context>

<pallas_src>
import numpy as np
import jax
import jax.numpy as jnp
from jax import lax
from jax.experimental import pallas as pl
from jax.experimental.pallas import tpu as pltpu


# ----------------------------------------------------------------------------
# glue: banded-matrix construction for the (1, kw) "same" convolutions
# ----------------------------------------------------------------------------
def _make_band(w_conv, C):
    """w_conv: (O, I, kw) conv weight -> band matrix (I*C, O*C) for 'same' 1-D conv."""
    O, I, kw = w_conv.shape
    pad = kw // 2
    band = np.zeros((I * C, O * C), dtype=np.float32)
    w = np.asarray(w_conv, dtype=np.float32)
    for o in range(O):
        for i in range(I):
            for k in range(kw):
                d = k - pad                      # c_in = c_out + d
                for c_out in range(C):
                    c_in = c_out + d
                    if 0 <= c_in < C:
                        band[i * C + c_in, o * C + c_out] = w[o, i, k]
    return band


# ----------------------------------------------------------------------------
# Pallas kernel: one grid step == T_BLK RWA time steps
# ----------------------------------------------------------------------------
def _make_rwa_kernel(B, B_pad, C, FC, T, T_BLK, T_pad, eps):
    FC3 = 3 * FC
    inv_cnt = 1.0 / float(B * C)

    def kernel(x_ref, wxb_ref, wbh_ref, gg_ref, bg_ref, gu_ref, bu_ref,
               bones3_ref, bones1_ref, rsumb_ref, bmask_ref,
               wo_ref, bo_ref, s_ref,
               n0_ref, d0_ref, h0_ref, am0_ref,
               outs_ref, n_ref, d_ref, h_ref, am_ref,
               hs_ref):
        gidx = pl.program_id(0)

        @pl.when(gidx == 0)
        def _init():
            # pre-loop step of forward(): h = h + tanh(s), broadcast over batch
            h_ref[...] = h0_ref[...] + jnp.tanh(s_ref[...])
            n_ref[...] = n0_ref[...]
            d_ref[...] = d0_ref[...]
            am_ref[...] = am0_ref[...]

        # hoisted grid-invariant loads
        wbh = wbh_ref[...]
        bones3 = bones3_ref[...]
        bmask = bmask_ref[...]
        gam_gad = gg_ref[...]
        bet_gad = bg_ref[...]

        # ---- whole-block x path (state independent): one bf16 MXU matmul ----
        # columns: [ g | a | decay | u ], each FC wide
        pre_x = jnp.dot(x_ref[...].astype(jnp.bfloat16), wxb_ref[...],
                        preferred_element_type=jnp.float32)      # (T_BLK*Bp, 4FC)
        pre_gad_x = pre_x[:, :FC3]                               # (T_BLK*Bp, 3FC)
        pre_u = pre_x[:, FC3:]                                   # (T_BLK*Bp, FC)

        # ---- u gate hoisted out of the recurrence (depends only on x) -------
        # per-timestep batch sums (masked for batch padding) via one selector
        # matmul, per-channel sum+broadcast via a block-ones matmul.
        rsumb = rsumb_ref[...]                                   # (T_BLK, T_BLK*Bp)
        bones1 = bones1_ref[...]                                 # (FC, FC)
        m1 = jnp.dot(rsumb, pre_u, preferred_element_type=jnp.float32)
        m2 = jnp.dot(rsumb, pre_u * pre_u, preferred_element_type=jnp.float32)
        m1s = jnp.dot(m1, bones1, preferred_element_type=jnp.float32)
        m2s = jnp.dot(m2, bones1, preferred_element_type=jnp.float32)
        mean_u = m1s * inv_cnt
        var_u = m2s * inv_cnt - mean_u * mean_u
        scale_u = lax.rsqrt(var_u + eps) * gu_ref[...]           # (T_BLK, FC)
        shift_u = bu_ref[...] - mean_u * scale_u                 # (T_BLK, FC)

        for i in range(T_BLK):                 # fully unrolled, static indices
            r0 = i * B_pad
            h_prev = h_ref[...]
            n_prev = n_ref[...]
            d_prev = d_ref[...]
            am_prev = am_ref[...]

            # g|a|decay pre-activations of this step: ONE bf16 MXU matmul on the
            # serial chain (conv bias omitted: cancelled by training-mode BN).
            pre = pre_gad_x[r0:r0 + B_pad, :] + jnp.dot(
                h_prev.astype(jnp.bfloat16), wbh,
                preferred_element_type=jnp.float32)              # (Bp, 3FC)

            # BatchNorm (training batch stats), fused:
            #   batch moments on the VPU/XLU in exact f32 (masked sublane sums),
            #   then ONE block-ones matmul for the per-channel sum + broadcast.
            prem = pre * bmask                                   # mask padded rows
            s1 = jnp.sum(prem, axis=0, keepdims=True)            # (1, 3FC)
            s2 = jnp.sum(prem * pre, axis=0, keepdims=True)      # (1, 3FC)
            sums = jnp.dot(jnp.concatenate([s1, s2], axis=0), bones3,
                           preferred_element_type=jnp.float32)   # (2, 3FC)
            mean = sums[0:1] * inv_cnt
            var = sums[1:2] * inv_cnt - mean * mean
            scale = lax.rsqrt(var + eps) * gam_gad
            shift = bet_gad - mean * scale
            gate = pre * scale + shift                           # (Bp, 3FC)

            g_pre = gate[:, 0:FC]
            a_t = gate[:, FC:2 * FC]
            decay = jax.nn.sigmoid(gate[:, 2 * FC:FC3])

            # hoisted u gate: apply the precomputed per-step BN affine
            u_t = (pre_u[r0:r0 + B_pad, :] * scale_u[i:i + 1, :]
                   + shift_u[i:i + 1, :])

            # RWA recurrence (numerically-stable running weighted average)
            z = u_t * jnp.tanh(g_pre)
            edec = jnp.exp(-decay)
            a_newmax = jnp.maximum(am_prev * edec, a_t)
            carry = jnp.exp(am_prev - a_newmax - decay)   # = edec*exp(am-a_newmax)
            exp_scaled = jnp.exp(a_t - a_newmax)
            n_new = n_prev * carry + z * exp_scaled
            d_new = d_prev * carry + exp_scaled
            h_new = jnp.tanh(n_new * pl.reciprocal(d_new, approx=True))

            if T_pad != T:
                # mask state updates for padded tail timesteps
                valid = (gidx * T_BLK + i) < T
                n_new = jnp.where(valid, n_new, n_prev)
                d_new = jnp.where(valid, d_new, d_prev)
                h_new = jnp.where(valid, h_new, h_prev)
                a_newmax = jnp.where(valid, a_newmax, am_prev)

            n_ref[...] = n_new
            d_ref[...] = d_new
            h_ref[...] = h_new
            am_ref[...] = a_newmax
            hs_ref[r0:r0 + B_pad, :] = h_new                 # VMEM h-slab scratch

        # whole-block output projection -> one lane-dense (T_BLK*Bp, 128) store
        outs = jnp.dot(hs_ref[...].astype(jnp.bfloat16), wo_ref[...],
                       preferred_element_type=jnp.float32) + bo_ref[...]
        outs_ref[...] = outs.astype(outs_ref.dtype)

    return kernel


# ----------------------------------------------------------------------------
# wrapper: parameter flattening/folding + pallas_call
# ----------------------------------------------------------------------------
def rwa_forward_pallas(x, s, n, d, h, a_max, params, eps=1e-5, t_block=32,
                       out_dtype=jnp.float32):
    """x: (B, T, num_features); s: (F, 1, C); n/d/h/a_max: (B, F, 1, C).

    out_dtype=jnp.bfloat16 halves the (heavily lane-padded) output writeback
    stream -- recommended on bandwidth-poor v5e."""
    B, T, nf = x.shape
    F, _, C = s.shape
    FC = F * C
    FC3 = 3 * FC
    FC4 = 4 * FC
    ncls = params['Wo'].shape[1]

    B_pad = -(-B // 8) * 8                      # sublane multiple
    T_BLK = min(t_block, T)
    n_blocks = -(-T // T_BLK)
    T_pad = n_blocks * T_BLK
    ncls_pad = -(-ncls // 128) * 128            # lane-dense output

    # ---- glue: banded / folded parameters (numpy, trace-time) ----
    band_g = _make_band(np.asarray(params['Wg']), C)   # ((F+1)C, FC)
    band_u = _make_band(np.asarray(params['Wu']), C)   # (C, FC)
    band_a = _make_band(np.asarray(params['Wa']), C)
    band_d = _make_band(np.asarray(params['Wd']), C)
    # x-side column layout: [g | a | decay | u]; h-side: [g | a | decay]
    wb_x = np.concatenate([band_g[:C], band_a[:C], band_d[:C], band_u], axis=1)
    wb_h = np.concatenate([band_g[C:], band_a[C:], band_d[C:]], axis=1)  # (FC,3FC)
    # fold x_resize into the x-side band: x @ Wxr @ band_x == x @ wxb
    wxb = np.asarray(params['Wxr'], np.float32) @ wb_x                   # (nf,4FC)

    def chan_full(v):
        return np.repeat(np.asarray(v, np.float32), C)
    gam_gad = np.concatenate([chan_full(params['gam_g']),
                              chan_full(params['gam_a']),
                              chan_full(params['gam_d'])])[None, :]      # (1,3FC)
    bet_gad = np.concatenate([chan_full(params['bet_g']),
                              chan_full(params['bet_a']),
                              chan_full(params['bet_d'])])[None, :]
    gam_u = chan_full(params['gam_u'])[None, :]                          # (1,FC)
    bet_u = chan_full(params['bet_u'])[None, :]

    # per-channel sum-and-broadcast (the old msel @ mexp folded into block-ones)
    bones1 = np.kron(np.eye(F, dtype=np.float32), np.ones((C, C), np.float32))
    bones3 = np.kron(np.eye(3 * F, dtype=np.float32), np.ones((C, C), np.float32))

    # per-timestep batch-sum selector (block level, u stats) + per-row batch mask
    rsum_blk = np.zeros((T_BLK, T_BLK * B_pad), np.float32)
    for t in range(T_BLK):
        rsum_blk[t, t * B_pad:t * B_pad + B] = 1.0
    bmask = np.zeros((B_pad, 1), np.float32)
    bmask[:B, 0] = 1.0

    wo = np.zeros((FC, ncls_pad), np.float32)
    wo[:, :ncls] = np.asarray(params['Wo'], np.float32)
    bo = np.zeros((1, ncls_pad), np.float32)
    bo[0, :ncls] = np.asarray(params['bo'], np.float32)

    # ---- inputs: time-major, batch padded, flattened to 2-D (row = t*Bp + b) --
    x_k = jnp.transpose(x, (1, 0, 2)).astype(jnp.float32)            # (T, B, nf)
    x_k = jnp.pad(x_k, ((0, T_pad - T), (0, B_pad - B), (0, 0)))
    x2d = jnp.reshape(x_k, (T_pad * B_pad, nf))

    def prep_state(v):
        v2 = jnp.reshape(v, (B, FC)).astype(jnp.float32)
        return jnp.pad(v2, ((0, B_pad - B), (0, 0)))

    s_flat = jnp.reshape(s, (1, FC)).astype(jnp.float32)
    n0, d0, h0, am0 = (prep_state(v) for v in (n, d, h, a_max))

    def const_spec(shape):
        return pl.BlockSpec(shape, lambda g: (0, 0))

    # NOTE: total VMEM-resident footprint here is ~2 MiB, far under the limit on
    # every TPU generation, so no weight tiling / single-buffering is needed.
    grid_spec = pltpu.PrefetchScalarGridSpec(
        num_scalar_prefetch=0,
        grid=(n_blocks,),
        in_specs=[
            pl.BlockSpec((T_BLK * B_pad, nf), lambda g: (g, 0)),     # x (time block)
            const_spec((nf, FC4)),          # folded x-side band (bf16)
            const_spec((FC, FC3)),          # h-side band, g|a|d only (bf16)
            const_spec((1, FC3)),           # BN gamma  g|a|d
            const_spec((1, FC3)),           # BN beta   g|a|d
            const_spec((1, FC)),            # BN gamma  u
            const_spec((1, FC)),            # BN beta   u
            const_spec((FC3, FC3)),         # block-ones (per-channel sum+bcast)
            const_spec((FC, FC)),           # block-ones for u
            const_spec((T_BLK, T_BLK * B_pad)),  # per-step batch-sum selector
            const_spec((B_pad, 1)),         # batch mask (excludes padding)
            const_spec((FC, ncls_pad)),     # Wo (bf16, lane-padded)
            const_spec((1, ncls_pad)),      # bo (lane-padded)
            const_spec((1, FC)),            # s (flattened)
            const_spec((B_pad, FC)),        # n0
            const_spec((B_pad, FC)),        # d0
            const_spec((B_pad, FC)),        # h0
            const_spec((B_pad, FC)),        # a_max0
        ],
        out_specs=[
            pl.BlockSpec((T_BLK * B_pad, ncls_pad), lambda g: (g, 0)),  # outs
            const_spec((B_pad, FC)),        # n  (VMEM-resident state)
            const_spec((B_pad, FC)),        # d
            const_spec((B_pad, FC)),        # h
            const_spec((B_pad, FC)),        # a_max
        ],
        scratch_shapes=[pltpu.VMEM((T_BLK * B_pad, FC), jnp.float32)],  # h slab
    )

    outs2d, n_t, d_t, h_t, am_t = pl.pallas_call(
        _make_rwa_kernel(B, B_pad, C, FC, T, T_BLK, T_pad, eps),
        out_shape=(
            jax.ShapeDtypeStruct((T_pad * B_pad, ncls_pad), out_dtype),
            jax.ShapeDtypeStruct((B_pad, FC), jnp.float32),
            jax.ShapeDtypeStruct((B_pad, FC), jnp.float32),
            jax.ShapeDtypeStruct((B_pad, FC), jnp.float32),
            jax.ShapeDtypeStruct((B_pad, FC), jnp.float32),
        ),
        grid_spec=grid_spec,
        compiler_params=pltpu.CompilerParams(
            dimension_semantics=("arbitrary",)),
    )(x2d,
      jnp.asarray(wxb, jnp.bfloat16), jnp.asarray(wb_h, jnp.bfloat16),
      jnp.asarray(gam_gad), jnp.asarray(bet_gad),
      jnp.asarray(gam_u), jnp.asarray(bet_u),
      jnp.asarray(bones3), jnp.asarray(bones1),
      jnp.asarray(rsum_blk), jnp.asarray(bmask),
      jnp.asarray(wo, jnp.bfloat16), jnp.asarray(bo),
      s_flat, n0, d0, h0, am0)

    outs = jnp.reshape(outs2d.astype(jnp.float32),
                       (T_pad, B_pad, ncls_pad))[:T, :B, :ncls]
    outs = jnp.transpose(outs, (1, 0, 2))                            # (B, T, ncls)
    re = lambda v: jnp.reshape(v[:B], (B, F, 1, C))
    return outs, s, re(n_t), re(d_t), re(h_t), re(am_t)


# ----------------------------------------------------------------------------
# plain-JAX reference (mirrors the PyTorch forward) for verification
# ----------------------------------------------------------------------------
def rwa_forward_reference(x, s, n, d, h, a_max, params, eps=1e-5):
    B, T, nf = x.shape
    F, _, C = s.shape
    HI = jax.lax.Precision.HIGHEST
    h3 = jnp.reshape(h, (B, F, C)) + jnp.tanh(s[:, 0, :])[None]
    n3 = jnp.reshape(n, (B, F, C))
    d3 = jnp.reshape(d, (B, F, C))
    am3 = jnp.reshape(a_max, (B, F, C))

    def conv_bn(inp, W, b, gam, bet):
        kw = W.shape[2]
        pad = kw // 2
        xp = jnp.pad(inp, ((0, 0), (0, 0), (pad, pad)))
        out = jnp.broadcast_to(b[None, :, None], (B, W.shape[0], C)).astype(jnp.float32)
        for k in range(kw):
            out = out + jnp.einsum('oi,bic->boc', W[:, :, k], xp[:, :, k:k + C],
                                   precision=HI)
        mean = out.mean(axis=(0, 2), keepdims=True)
        var = ((out - mean) ** 2).mean(axis=(0, 2), keepdims=True)
        return (out - mean) / jnp.sqrt(var + eps) * gam[None, :, None] + bet[None, :, None]

    outs = []
    for t in range(T):
        xr = jnp.dot(x[:, t, :], params['Wxr'], precision=HI)
        xr3 = xr[:, None, :]
        xh = jnp.concatenate([xr3, h3], axis=1)
        g = conv_bn(xh, params['Wg'], params['bg'], params['gam_g'], params['bet_g'])
        u = conv_bn(xr3, params['Wu'], params['bu'], params['gam_u'], params['bet_u'])
        a = conv_bn(xh, params['Wa'], params['ba'], params['gam_a'], params['bet_a'])
        decay = jax.nn.sigmoid(conv_bn(xh, params['Wd'], params['bd'],
                                       params['gam_d'], params['bet_d']))
        z = u * jnp.tanh(g)
        edec = jnp.exp(-decay)
        a_newmax = jnp.maximum(am3 * edec, a)
        exp_diff = jnp.exp(am3 - a_newmax)
        exp_scaled = jnp.exp(a - a_newmax)
        n3 = n3 * edec * exp_diff + z * exp_scaled
        d3 = d3 * edec * exp_diff + exp_scaled
        h3 = jnp.tanh(n3 / d3)
        am3 = a_newmax
        outs.append(jnp.dot(h3.reshape(B, -1), params['Wo'], precision=HI) + params['bo'])
    re = lambda v: jnp.reshape(v, (B, F, 1, C))
    return jnp.stack(outs, axis=1), s, re(n3), re(d3), re(h3), re(am3)


# ----------------------------------------------------------------------------
# deterministic parameter / state initialization (shapes from __init__)
# ----------------------------------------------------------------------------
def init_params(key, num_features, kernel_width, num_filters, num_classes, init=1.0):
    C = num_features * num_filters            # num_cells
    FC = num_filters * C
    ks = jax.random.split(key, 10)
    nrm = lambda k, shape, sc: jax.random.normal(k, shape, dtype=jnp.float32) * sc
    params = {
        'Wxr': nrm(ks[0], (num_features, C), 1.0 / np.sqrt(num_features)),
        'Wg': nrm(ks[1], (num_filters, num_filters + 1, kernel_width), 0.3),
        'bg': nrm(ks[2], (num_filters,), 0.1),
        'Wu': nrm(ks[3], (num_filters, 1, kernel_width), 0.3),
        'bu': nrm(ks[4], (num_filters,), 0.1),
        'Wa': nrm(ks[5], (num_filters, num_filters + 1, kernel_width), 0.3),
        'ba': nrm(ks[6], (num_filters,), 0.1),
        'Wd': nrm(ks[7], (num_filters, num_filters + 1, kernel_width), 0.3),
        'bd': nrm(ks[8], (num_filters,), 0.1),
    }
    for gate in ('g', 'u', 'a', 'd'):
        params['gam_' + gate] = jnp.ones((num_filters,), jnp.float32)   # BN defaults
        params['bet_' + gate] = jnp.zeros((num_filters,), jnp.float32)
    o_fac = float(np.sqrt(6.0 * init / (C + num_classes)))
    params['Wo'] = jax.random.uniform(ks[9], (FC, num_classes), jnp.float32,
                                      minval=-o_fac, maxval=o_fac)
    params['bo'] = jnp.zeros((num_classes,), jnp.float32)
    return params


def init_sndha(key, batch_size, num_filters, num_cells, init=1.0):
    s = jax.random.normal(key, (num_filters, 1, num_cells), jnp.float32) * init
    zeros = jnp.zeros((batch_size, num_filters, 1, num_cells), jnp.float32)
    a_max = jnp.full((batch_size, num_filters, 1, num_cells), -1e38, jnp.float32)
    return s, zeros, zeros, zeros, a_max


if __name__ == "__main__":
    num_features, kernel_width, num_filters, num_classes = 8, 3, 4, 5
    batch, seq = 2, 8
    num_cells = num_features * num_filters         # 32 -> F*C = 128

    key = jax.random.PRNGKey(0)
    kp, ks, kx = jax.random.split(key, 3)
    params = init_params(kp, num_features, kernel_width, num_filters, num_classes)
    s, n0, d0, h0, a_max0 = init_sndha(ks, batch, num_filters, num_cells)
    x = jax.random.normal(kx, (batch, seq, num_features), jnp.float32)

    outs, s_out, n_t, d_t, h_t, am_t = rwa_forward_pallas(x, s, n0, d0, h0, a_max0, params)
    jax.block_until_ready(outs)

    # sanity check against a plain-JAX f32 reference of the PyTorch forward.
    # tolerance is loose because the kernel uses bf16 MXU inputs and an approx
    # reciprocal inside an 8-step recurrence (typical max-abs drift ~1e-2);
    # real kernel bugs produce O(1) errors and are still caught.
    r_outs, _, r_n, r_d, r_h, r_am = rwa_forward_reference(x, s, n0, d0, h0, a_max0, params)
    for got, want in ((outs, r_outs), (n_t, r_n), (d_t, r_d), (h_t, r_h), (am_t, r_am)):
        err = float(jnp.max(jnp.abs(got - want)))
        assert err < 1e-1, f"mismatch vs reference: max abs err {err}"

    print("KERNEL_OK")
</pallas_src>

<mosaic_0001>
module attributes {stable_mosaic.version = 11 : i64} {
  func.func @kernel(%arg0: i32, %arg1: memref<64x8xf32, #tpu.memory_space<vmem>>, %arg2: memref<8x512xbf16, #tpu.memory_space<vmem>>, %arg3: memref<128x384xbf16, #tpu.memory_space<vmem>>, %arg4: memref<1x384xf32, #tpu.memory_space<vmem>>, %arg5: memref<1x384xf32, #tpu.memory_space<vmem>>, %arg6: memref<1x128xf32, #tpu.memory_space<vmem>>, %arg7: memref<1x128xf32, #tpu.memory_space<vmem>>, %arg8: memref<384x384xf32, #tpu.memory_space<vmem>>, %arg9: memref<128x128xf32, #tpu.memory_space<vmem>>, %arg10: memref<8x64xf32, #tpu.memory_space<vmem>>, %arg11: memref<8x1xf32, #tpu.memory_space<vmem>>, %arg12: memref<128x128xbf16, #tpu.memory_space<vmem>>, %arg13: memref<1x128xf32, #tpu.memory_space<vmem>>, %arg14: memref<1x128xf32, #tpu.memory_space<vmem>>, %arg15: memref<8x128xf32, #tpu.memory_space<vmem>>, %arg16: memref<8x128xf32, #tpu.memory_space<vmem>>, %arg17: memref<8x128xf32, #tpu.memory_space<vmem>>, %arg18: memref<8x128xf32, #tpu.memory_space<vmem>>, %arg19: memref<64x128xf32, #tpu.memory_space<vmem>>, %arg20: memref<8x128xf32, #tpu.memory_space<vmem>>, %arg21: memref<8x128xf32, #tpu.memory_space<vmem>>, %arg22: memref<8x128xf32, #tpu.memory_space<vmem>>, %arg23: memref<8x128xf32, #tpu.memory_space<vmem>>, %arg24: memref<64x128xf32, #tpu.memory_space<vmem>>) attributes {dimension_semantics = [#tpu.dimension_semantics<arbitrary>], iteration_bounds = array<i64: 1>, scalar_prefetch = 0 : i64, scratch_operands = 1 : i64, tpu.core_type = #tpu.core_type<tc>, window_params = [{transform_indices = @transform_0, window_bounds = array<i64: 64, 8>}, {pipeline_mode = #tpu.pipeline_mode<synchronous>, transform_indices = @transform_1, window_bounds = array<i64: 8, 512>}, {pipeline_mode = #tpu.pipeline_mode<synchronous>, transform_indices = @transform_2, window_bounds = array<i64: 128, 384>}, {pipeline_mode = #tpu.pipeline_mode<synchronous>, transform_indices = @transform_3, window_bounds = array<i64: 1, 384>}, {pipeline_mode = #tpu.pipeline_mode<synchronous>, transform_indices = @transform_4, window_bounds = array<i64: 1, 384>}, {pipeline_mode = #tpu.pipeline_mode<synchronous>, transform_indices = @transform_5, window_bounds = array<i64: 1, 128>}, {pipeline_mode = #tpu.pipeline_mode<synchronous>, transform_indices = @transform_6, window_bounds = array<i64: 1, 128>}, {pipeline_mode = #tpu.pipeline_mode<synchronous>, transform_indices = @transform_7, window_bounds = array<i64: 384, 384>}, {pipeline_mode = #tpu.pipeline_mode<synchronous>, transform_indices = @transform_8, window_bounds = array<i64: 128, 128>}, {pipeline_mode = #tpu.pipeline_mode<synchronous>, transform_indices = @transform_9, window_bounds = array<i64: 8, 64>}, {pipeline_mode = #tpu.pipeline_mode<synchronous>, transform_indices = @transform_10, window_bounds = array<i64: 8, 1>}, {pipeline_mode = #tpu.pipeline_mode<synchronous>, transform_indices = @transform_11, window_bounds = array<i64: 128, 128>}, {pipeline_mode = #tpu.pipeline_mode<synchronous>, transform_indices = @transform_12, window_bounds = array<i64: 1, 128>}, {pipeline_mode = #tpu.pipeline_mode<synchronous>, transform_indices = @transform_13, window_bounds = array<i64: 1, 128>}, {pipeline_mode = #tpu.pipeline_mode<synchronous>, transform_indices = @transform_14, window_bounds = array<i64: 8, 128>}, {pipeline_mode = #tpu.pipeline_mode<synchronous>, transform_indices = @transform_15, window_bounds = array<i64: 8, 128>}, {pipeline_mode = #tpu.pipeline_mode<synchronous>, transform_indices = @transform_16, window_bounds = array<i64: 8, 128>}, {pipeline_mode = #tpu.pipeline_mode<synchronous>, transform_indices = @transform_17, window_bounds = array<i64: 8, 128>}, {transform_indices = @transform_18, window_bounds = array<i64: 64, 128>}, {pipeline_mode = #tpu.pipeline_mode<synchronous>, transform_indices = @transform_19, window_bounds = array<i64: 8, 128>}, {pipeline_mode = #tpu.pipeline_mode<synchronous>, transform_indices = @transform_20, window_bounds = array<i64: 8, 128>}, {pipeline_mode = #tpu.pipeline_mode<synchronous>, transform_indices = @transform_21, window_bounds = array<i64: 8, 128>}, {pipeline_mode = #tpu.pipeline_mode<synchronous>, transform_indices = @transform_22, window_bounds = array<i64: 8, 128>}]} {
    %c0_i32 = arith.constant 0 : i32
    %0 = arith.cmpi eq, %arg0, %c0_i32 : i32
    %1 = arith.extui %0 : i1 to i32
    %c0_i32_0 = arith.constant 0 : i32
    %2 = arith.cmpi ne, %1, %c0_i32_0 : i32
    scf.if %2 {
      %c0_247 = arith.constant 0 : index
      %c0_248 = arith.constant 0 : index
      %645 = vector.load %arg17[%c0_247, %c0_248] : memref<8x128xf32, #tpu.memory_space<vmem>>, vector<8x128xf32>
      %c0_249 = arith.constant 0 : index
      %c0_250 = arith.constant 0 : index
      %646 = vector.load %arg14[%c0_249, %c0_250] : memref<1x128xf32, #tpu.memory_space<vmem>>, vector<1x128xf32>
      %647 = math.tanh %646 : vector<1x128xf32>
      %648 = vector.broadcast %647 : vector<1x128xf32> to vector<8x128xf32>
      %649 = arith.addf %645, %648 : vector<8x128xf32>
      %c0_251 = arith.constant 0 : index
      %c0_252 = arith.constant 0 : index
      %650 = vector.load %arg22[%c0_251, %c0_252] : memref<8x128xf32, #tpu.memory_space<vmem>>, vector<8x128xf32>
      tpu.vector_store %arg22[%c0_251, %c0_252], %649 {strides = array<i32>} : memref<8x128xf32, #tpu.memory_space<vmem>>, vector<8x128xf32>,
      %c0_253 = arith.constant 0 : index
      %c0_254 = arith.constant 0 : index
      %651 = vector.load %arg15[%c0_253, %c0_254] : memref<8x128xf32, #tpu.memory_space<vmem>>, vector<8x128xf32>
      %c0_255 = arith.constant 0 : index
      %c0_256 = arith.constant 0 : index
      %652 = vector.load %arg20[%c0_255, %c0_256] : memref<8x128xf32, #tpu.memory_space<vmem>>, vector<8x128xf32>
      tpu.vector_store %arg20[%c0_255, %c0_256], %651 {strides = array<i32>} : memref<8x128xf32, #tpu.memory_space<vmem>>, vector<8x128xf32>,
      %c0_257 = arith.constant 0 : index
      %c0_258 = arith.constant 0 : index
      %653 = vector.load %arg16[%c0_257, %c0_258] : memref<8x128xf32, #tpu.memory_space<vmem>>, vector<8x128xf32>
      %c0_259 = arith.constant 0 : index
      %c0_260 = arith.constant 0 : index
      %654 = vector.load %arg21[%c0_259, %c0_260] : memref<8x128xf32, #tpu.memory_space<vmem>>, vector<8x128xf32>
      tpu.vector_store %arg21[%c0_259, %c0_260], %653 {strides = array<i32>} : memref<8x128xf32, #tpu.memory_space<vmem>>, vector<8x128xf32>,
      %c0_261 = arith.constant 0 : index
      %c0_262 = arith.constant 0 : index
      %655 = vector.load %arg18[%c0_261, %c0_262] : memref<8x128xf32, #tpu.memory_space<vmem>>, vector<8x128xf32>
      %c0_263 = arith.constant 0 : index
      %c0_264 = arith.constant 0 : index
      %656 = vector.load %arg23[%c0_263, %c0_264] : memref<8x128xf32, #tpu.memory_space<vmem>>, vector<8x128xf32>
      tpu.vector_store %arg23[%c0_263, %c0_264], %655 {strides = array<i32>} : memref<8x128xf32, #tpu.memory_space<vmem>>, vector<8x128xf32>,
    } else {
    }
    %c0 = arith.constant 0 : index
    %c0_1 = arith.constant 0 : index
    %3 = vector.load %arg3[%c0, %c0_1] : memref<128x384xbf16, #tpu.memory_space<vmem>>, vector<128x384xbf16>
    %c0_2 = arith.constant 0 : index
    %c0_3 = arith.constant 0 : index
    %4 = vector.load %arg8[%c0_2, %c0_3] : memref<384x384xf32, #tpu.memory_space<vmem>>, vector<384x384xf32>
    %c0_4 = arith.constant 0 : index
    %c0_5 = arith.constant 0 : index
    %5 = vector.load %arg11[%c0_4, %c0_5] : memref<8x1xf32, #tpu.memory_space<vmem>>, vector<8x1xf32>
    %c0_6 = arith.constant 0 : index
    %c0_7 = arith.constant 0 : index
    %6 = vector.load %arg4[%c0_6, %c0_7] : memref<1x384xf32, #tpu.memory_space<vmem>>, vector<1x384xf32>
    %c0_8 = arith.constant 0 : index
    %c0_9 = arith.constant 0 : index
    %7 = vector.load %arg5[%c0_8, %c0_9] : memref<1x384xf32, #tpu.memory_space<vmem>>, vector<1x384xf32>
    %c0_10 = arith.constant 0 : index
    %c0_11 = arith.constant 0 : index
    %8 = vector.load %arg1[%c0_10, %c0_11] : memref<64x8xf32, #tpu.memory_space<vmem>>, vector<64x8xf32>
    %9 = arith.truncf %8 : vector<64x8xf32> to vector<64x8xbf16>
    %c0_12 = arith.constant 0 : index
    %c0_13 = arith.constant 0 : index
    %10 = vector.load %arg2[%c0_12, %c0_13] : memref<8x512xbf16, #tpu.memory_space<vmem>>, vector<8x512xbf16>
    %cst = arith.constant dense<0.000000e+00> : vector<64x512xf32>
    %11 = tpu.matmul %9, %10, %cst {dimension_numbers = #tpu.dot_dimension_numbers<[1], [0], [0], [1], [0, 0, 1, 1], [], []>} : vector<64x8xbf16>, vector<8x512xbf16>, vector<64x512xf32> -> vector<64x512xf32>
    %12 = vector.extract_strided_slice %11 {offsets = [0, 0], sizes = [64, 384], strides = [1, 1]} : vector<64x512xf32> to vector<64x384xf32>
    %13 = vector.extract_strided_slice %11 {offsets = [0, 384], sizes = [64, 128], strides = [1, 1]} : vector<64x512xf32> to vector<64x128xf32>
    %c0_14 = arith.constant 0 : index
    %c0_15 = arith.constant 0 : index
    %14 = vector.load %arg10[%c0_14, %c0_15] : memref<8x64xf32, #tpu.memory_space<vmem>>, vector<8x64xf32>
    %c0_16 = arith.constant 0 : index
    %c0_17 = arith.constant 0 : index
    %15 = vector.load %arg9[%c0_16, %c0_17] : memref<128x128xf32, #tpu.memory_space<vmem>>, vector<128x128xf32>
    %cst_18 = arith.constant dense<0.000000e+00> : vector<8x128xf32>
    %16 = tpu.matmul %14, %13, %cst_18 {dimension_numbers = #tpu.dot_dimension_numbers<[1], [0], [0], [1], [0, 0, 1, 1], [], []>} : vector<8x64xf32>, vector<64x128xf32>, vector<8x128xf32> -> vector<8x128xf32>
    %17 = arith.mulf %13, %13 : vector<64x128xf32>
    %cst_19 = arith.constant dense<0.000000e+00> : vector<8x128xf32>
    %18 = tpu.matmul %14, %17, %cst_19 {dimension_numbers = #tpu.dot_dimension_numbers<[1], [0], [0], [1], [0, 0, 1, 1], [], []>} : vector<8x64xf32>, vector<64x128xf32>, vector<8x128xf32> -> vector<8x128xf32>
    %cst_20 = arith.constant dense<0.000000e+00> : vector<8x128xf32>
    %19 = tpu.matmul %16, %15, %cst_20 {dimension_numbers = #tpu.dot_dimension_numbers<[1], [0], [0], [1], [0, 0, 1, 1], [], []>} : vector<8x128xf32>, vector<128x128xf32>, vector<8x128xf32> -> vector<8x128xf32>
    %cst_21 = arith.constant dense<0.000000e+00> : vector<8x128xf32>
    %20 = tpu.matmul %18, %15, %cst_21 {dimension_numbers = #tpu.dot_dimension_numbers<[1], [0], [0], [1], [0, 0, 1, 1], [], []>} : vector<8x128xf32>, vector<128x128xf32>, vector<8x128xf32> -> vector<8x128xf32>
    %cst_22 = arith.constant 1.562500e-02 : f32
    %21 = vector.broadcast %cst_22 : f32 to vector<8x128xf32>
    %22 = arith.mulf %19, %21 : vector<8x128xf32>
    %cst_23 = arith.constant 1.562500e-02 : f32
    %23 = vector.broadcast %cst_23 : f32 to vector<8x128xf32>
    %24 = arith.mulf %20, %23 : vector<8x128xf32>
    %25 = arith.mulf %22, %22 : vector<8x128xf32>
    %26 = arith.subf %24, %25 : vector<8x128xf32>
    %cst_24 = arith.constant 9.99999974E-6 : f32
    %27 = vector.broadcast %cst_24 : f32 to vector<8x128xf32>
    %28 = arith.addf %26, %27 : vector<8x128xf32>
    %29 = math.rsqrt %28 : vector<8x128xf32>
    %c0_25 = arith.constant 0 : index
    %c0_26 = arith.constant 0 : index
    %30 = vector.load %arg6[%c0_25, %c0_26] : memref<1x128xf32, #tpu.memory_space<vmem>>, vector<1x128xf32>
    %31 = vector.broadcast %30 : vector<1x128xf32> to vector<8x128xf32>
    %32 = arith.mulf %29, %31 : vector<8x128xf32>
    %c0_27 = arith.constant 0 : index
    %c0_28 = arith.constant 0 : index
    %33 = vector.load %arg7[%c0_27, %c0_28] : memref<1x128xf32, #tpu.memory_space<vmem>>, vector<1x128xf32>
    %34 = arith.mulf %22, %32 : vector<8x128xf32>
    %35 = vector.broadcast %33 : vector<1x128xf32> to vector<8x128xf32>
    %36 = arith.subf %35, %34 : vector<8x128xf32>
    %c0_29 = arith.constant 0 : index
    %c0_30 = arith.constant 0 : index
    %37 = vector.load %arg22[%c0_29, %c0_30] : memref<8x128xf32, #tpu.memory_space<vmem>>, vector<8x128xf32>
    %c0_31 = arith.constant 0 : index
    %c0_32 = arith.constant 0 : index
    %38 = vector.load %arg20[%c0_31, %c0_32] : memref<8x128xf32, #tpu.memory_space<vmem>>, vector<8x128xf32>
    %c0_33 = arith.constant 0 : index
    %c0_34 = arith.constant 0 : index
    %39 = vector.load %arg21[%c0_33, %c0_34] : memref<8x128xf32, #tpu.memory_space<vmem>>, vector<8x128xf32>
    %c0_35 = arith.constant 0 : index
    %c0_36 = arith.constant 0 : index
    %40 = vector.load %arg23[%c0_35, %c0_36] : memref<8x128xf32, #tpu.memory_space<vmem>>, vector<8x128xf32>
    %41 = vector.extract_strided_slice %12 {offsets = [0, 0], sizes = [8, 384], strides = [1, 1]} : vector<64x384xf32> to vector<8x384xf32>
    %42 = arith.truncf %37 : vector<8x128xf32> to vector<8x128xbf16>
    %cst_37 = arith.constant dense<0.000000e+00> : vector<8x384xf32>
    %43 = tpu.matmul %42, %3, %cst_37 {dimension_numbers = #tpu.dot_dimension_numbers<[1], [0], [0], [1], [0, 0, 1, 1], [], []>} : vector<8x128xbf16>, vector<128x384xbf16>, vector<8x384xf32> -> vector<8x384xf32>
    %44 = arith.addf %41, %43 : vector<8x384xf32>
    %45 = vector.broadcast %5 : vector<8x1xf32> to vector<8x384xf32>
    %46 = arith.mulf %44, %45 : vector<8x384xf32>
    %cst_38 = arith.constant dense<0.000000e+00> : vector<384xf32>
    %47 = vector.multi_reduction <add>, %46, %cst_38 [0] : vector<8x384xf32> to vector<384xf32>
    %48 = vector.shape_cast %47 : vector<384xf32> to vector<1x384xf32>
    %49 = arith.mulf %46, %44 : vector<8x384xf32>
    %cst_39 = arith.constant dense<0.000000e+00> : vector<384xf32>
    %50 = vector.multi_reduction <add>, %49, %cst_39 [0] : vector<8x384xf32> to vector<384xf32>
    %51 = vector.shape_cast %50 : vector<384xf32> to vector<1x384xf32>
    %52 = tpu.concatenate %48, %51 in 0 : vector<1x384xf32>, vector<1x384xf32> -> vector<2x384xf32>
    %cst_40 = arith.constant dense<0.000000e+00> : vector<2x384xf32>
    %53 = tpu.matmul %52, %4, %cst_40 {dimension_numbers = #tpu.dot_dimension_numbers<[1], [0], [0], [1], [0, 0, 1, 1], [], []>} : vector<2x384xf32>, vector<384x384xf32>, vector<2x384xf32> -> vector<2x384xf32>
    %54 = vector.extract_strided_slice %53 {offsets = [0, 0], sizes = [1, 384], strides = [1, 1]} : vector<2x384xf32> to vector<1x384xf32>
    %cst_41 = arith.constant 1.562500e-02 : f32
    %55 = vector.broadcast %cst_41 : f32 to vector<1x384xf32>
    %56 = arith.mulf %54, %55 : vector<1x384xf32>
    %57 = vector.extract_strided_slice %53 {offsets = [1, 0], sizes = [1, 384], strides = [1, 1]} : vector<2x384xf32> to vector<1x384xf32>
    %cst_42 = arith.constant 1.562500e-02 : f32
    %58 = vector.broadcast %cst_42 : f32 to vector<1x384xf32>
    %59 = arith.mulf %57, %58 : vector<1x384xf32>
    %60 = arith.mulf %56, %56 : vector<1x384xf32>
    %61 = arith.subf %59, %60 : vector<1x384xf32>
    %cst_43 = arith.constant 9.99999974E-6 : f32
    %62 = vector.broadcast %cst_43 : f32 to vector<1x384xf32>
    %63 = arith.addf %61, %62 : vector<1x384xf32>
    %64 = math.rsqrt %63 : vector<1x384xf32>
    %65 = arith.mulf %64, %6 : vector<1x384xf32>
    %66 = arith.mulf %56, %65 : vector<1x384xf32>
    %67 = arith.subf %7, %66 : vector<1x384xf32>
    %68 = vector.broadcast %65 : vector<1x384xf32> to vector<8x384xf32>
    %69 = arith.mulf %44, %68 : vector<8x384xf32>
    %70 = vector.broadcast %67 : vector<1x384xf32> to vector<8x384xf32>
    %71 = arith.addf %69, %70 : vector<8x384xf32>
    %72 = vector.extract_strided_slice %71 {offsets = [0, 0], sizes = [8, 128], strides = [1, 1]} : vector<8x384xf32> to vector<8x128xf32>
    %73 = vector.extract_strided_slice %71 {offsets = [0, 128], sizes = [8, 128], strides = [1, 1]} : vector<8x384xf32> to vector<8x128xf32>
    %74 = vector.extract_strided_slice %71 {offsets = [0, 256], sizes = [8, 128], strides = [1, 1]} : vector<8x384xf32> to vector<8x128xf32>
    %75 = arith.negf %74 : vector<8x128xf32>
    %76 = math.exp %75 : vector<8x128xf32>
    %cst_44 = arith.constant 1.000000e+00 : f32
    %77 = vector.broadcast %cst_44 : f32 to vector<8x128xf32>
    %78 = arith.addf %77, %76 : vector<8x128xf32>
    %79 = arith.divf %77, %78 : vector<8x128xf32>
    %80 = vector.extract_strided_slice %13 {offsets = [0, 0], sizes = [8, 128], strides = [1, 1]} : vector<64x128xf32> to vector<8x128xf32>
    %81 = vector.extract_strided_slice %32 {offsets = [0, 0], sizes = [1, 128], strides = [1, 1]} : vector<8x128xf32> to vector<1x128xf32>
    %82 = vector.broadcast %81 : vector<1x128xf32> to vector<8x128xf32>
    %83 = arith.mulf %80, %82 : vector<8x128xf32>
    %84 = vector.extract_strided_slice %36 {offsets = [0, 0], sizes = [1, 128], strides = [1, 1]} : vector<8x128xf32> to vector<1x128xf32>
    %85 = vector.broadcast %84 : vector<1x128xf32> to vector<8x128xf32>
    %86 = arith.addf %83, %85 : vector<8x128xf32>
    %87 = math.tanh %72 : vector<8x128xf32>
    %88 = arith.mulf %86, %87 : vector<8x128xf32>
    %cst_45 = arith.constant 0.000000e+00 : f32
    %89 = vector.broadcast %cst_45 : f32 to vector<8x128xf32>
    %90 = arith.subf %89, %79 : vector<8x128xf32>
    %91 = math.exp %90 : vector<8x128xf32>
    %92 = arith.mulf %40, %91 : vector<8x128xf32>
    %93 = arith.maximumf %92, %73 : vector<8x128xf32>
    %94 = arith.subf %40, %93 : vector<8x128xf32>
    %95 = arith.subf %94, %79 : vector<8x128xf32>
    %96 = math.exp %95 : vector<8x128xf32>
    %97 = arith.subf %73, %93 : vector<8x128xf32>
    %98 = math.exp %97 : vector<8x128xf32>
    %99 = arith.mulf %38, %96 : vector<8x128xf32>
    %100 = arith.mulf %88, %98 : vector<8x128xf32>
    %101 = arith.addf %99, %100 : vector<8x128xf32>
    %102 = arith.mulf %39, %96 : vector<8x128xf32>
    %103 = arith.addf %102, %98 : vector<8x128xf32>
    %104 = tpu.reciprocal %103 {approx = true} : vector<8x128xf32> -> vector<8x128xf32>
    %105 = arith.mulf %101, %104 : vector<8x128xf32>
    %106 = math.tanh %105 : vector<8x128xf32>
    %c0_46 = arith.constant 0 : index
    %c0_47 = arith.constant 0 : index
    %107 = vector.load %arg20[%c0_46, %c0_47] : memref<8x128xf32, #tpu.memory_space<vmem>>, vector<8x128xf32>
    tpu.vector_store %arg20[%c0_46, %c0_47], %101 {strides = array<i32>} : memref<8x128xf32, #tpu.memory_space<vmem>>, vector<8x128xf32>,
    %c0_48 = arith.constant 0 : index
    %c0_49 = arith.constant 0 : index
    %108 = vector.load %arg21[%c0_48, %c0_49] : memref<8x128xf32, #tpu.memory_space<vmem>>, vector<8x128xf32>
    tpu.vector_store %arg21[%c0_48, %c0_49], %103 {strides = array<i32>} : memref<8x128xf32, #tpu.memory_space<vmem>>, vector<8x128xf32>,
    %c0_50 = arith.constant 0 : index
    %c0_51 = arith.constant 0 : index
    %109 = vector.load %arg22[%c0_50, %c0_51] : memref<8x128xf32, #tpu.memory_space<vmem>>, vector<8x128xf32>
    tpu.vector_store %arg22[%c0_50, %c0_51], %106 {strides = array<i32>} : memref<8x128xf32, #tpu.memory_space<vmem>>, vector<8x128xf32>,
    %c0_52 = arith.constant 0 : index
    %c0_53 = arith.constant 0 : index
    %110 = vector.load %arg23[%c0_52, %c0_53] : memref<8x128xf32, #tpu.memory_space<vmem>>, vector<8x128xf32>
    tpu.vector_store %arg23[%c0_52, %c0_53], %93 {strides = array<i32>} : memref<8x128xf32, #tpu.memory_space<vmem>>, vector<8x128xf32>,
    %c0_54 = arith.constant 0 : index
    %c0_55 = arith.constant 0 : index
    %111 = vector.load %arg24[%c0_54, %c0_55] : memref<64x128xf32, #tpu.memory_space<vmem>>, vector<8x128xf32>
    tpu.vector_store %arg24[%c0_54, %c0_55], %106 {strides = array<i32>} : memref<64x128xf32, #tpu.memory_space<vmem>>, vector<8x128xf32>,
    %c0_56 = arith.constant 0 : index
    %c0_57 = arith.constant 0 : index
    %112 = vector.load %arg22[%c0_56, %c0_57] : memref<8x128xf32, #tpu.memory_space<vmem>>, vector<8x128xf32>
    %c0_58 = arith.constant 0 : index
    %c0_59 = arith.constant 0 : index
    %113 = vector.load %arg20[%c0_58, %c0_59] : memref<8x128xf32, #tpu.memory_space<vmem>>, vector<8x128xf32>
    %c0_60 = arith.constant 0 : index
    %c0_61 = arith.constant 0 : index
    %114 = vector.load %arg21[%c0_60, %c0_61] : memref<8x128xf32, #tpu.memory_space<vmem>>, vector<8x128xf32>
    %c0_62 = arith.constant 0 : index
    %c0_63 = arith.constant 0 : index
    %115 = vector.load %arg23[%c0_62, %c0_63] : memref<8x128xf32, #tpu.memory_space<vmem>>, vector<8x128xf32>
    %116 = vector.extract_strided_slice %12 {offsets = [8, 0], sizes = [8, 384], strides = [1, 1]} : vector<64x384xf32> to vector<8x384xf32>
    %117 = arith.truncf %112 : vector<8x128xf32> to vector<8x128xbf16>
    %cst_64 = arith.constant dense<0.000000e+00> : vector<8x384xf32>
    %118 = tpu.matmul %117, %3, %cst_64 {dimension_numbers = #tpu.dot_dimension_numbers<[1], [0], [0], [1], [0, 0, 1, 1], [], []>} : vector<8x128xbf16>, vector<128x384xbf16>, vector<8x384xf32> -> vector<8x384xf32>
    %119 = arith.addf %116, %118 : vector<8x384xf32>
    %120 = vector.broadcast %5 : vector<8x1xf32> to vector<8x384xf32>
    %121 = arith.mulf %119, %120 : vector<8x384xf32>
    %cst_65 = arith.constant dense<0.000000e+00> : vector<384xf32>
    %122 = vector.multi_reduction <add>, %121, %cst_65 [0] : vector<8x384xf32> to vector<384xf32>
    %123 = vector.shape_cast %122 : vector<384xf32> to vector<1x384xf32>
    %124 = arith.mulf %121, %119 : vector<8x384xf32>
    %cst_66 = arith.constant dense<0.000000e+00> : vector<384xf32>
    %125 = vector.multi_reduction <add>, %124, %cst_66 [0] : vector<8x384xf32> to vector<384xf32>
    %126 = vector.shape_cast %125 : vector<384xf32> to vector<1x384xf32>
    %127 = tpu.concatenate %123, %126 in 0 : vector<1x384xf32>, vector<1x384xf32> -> vector<2x384xf32>
    %cst_67 = arith.constant dense<0.000000e+00> : vector<2x384xf32>
    %128 = tpu.matmul %127, %4, %cst_67 {dimension_numbers = #tpu.dot_dimension_numbers<[1], [0], [0], [1], [0, 0, 1, 1], [], []>} : vector<2x384xf32>, vector<384x384xf32>, vector<2x384xf32> -> vector<2x384xf32>
    %129 = vector.extract_strided_slice %128 {offsets = [0, 0], sizes = [1, 384], strides = [1, 1]} : vector<2x384xf32> to vector<1x384xf32>
    %cst_68 = arith.constant 1.562500e-02 : f32
    %130 = vector.broadcast %cst_68 : f32 to vector<1x384xf32>
    %131 = arith.mulf %129, %130 : vector<1x384xf32>
    %132 = vector.extract_strided_slice %128 {offsets = [1, 0], sizes = [1, 384], strides = [1, 1]} : vector<2x384xf32> to vector<1x384xf32>
    %cst_69 = arith.constant 1.562500e-02 : f32
    %133 = vector.broadcast %cst_69 : f32 to vector<1x384xf32>
    %134 = arith.mulf %132, %133 : vector<1x384xf32>
    %135 = arith.mulf %131, %131 : vector<1x384xf32>
    %136 = arith.subf %134, %135 : vector<1x384xf32>
    %cst_70 = arith.constant 9.99999974E-6 : f32
    %137 = vector.broadcast %cst_70 : f32 to vector<1x384xf32>
    %138 = arith.addf %136, %137 : vector<1x384xf32>
    %139 = math.rsqrt %138 : vector<1x384xf32>
    %140 = arith.mulf %139, %6 : vector<1x384xf32>
    %141 = arith.mulf %131, %140 : vector<1x384xf32>
    %142 = arith.subf %7, %141 : vector<1x384xf32>
    %143 = vector.broadcast %140 : vector<1x384xf32> to vector<8x384xf32>
    %144 = arith.mulf %119, %143 : vector<8x384xf32>
    %145 = vector.broadcast %142 : vector<1x384xf32> to vector<8x384xf32>
    %146 = arith.addf %144, %145 : vector<8x384xf32>
    %147 = vector.extract_strided_slice %146 {offsets = [0, 0], sizes = [8, 128], strides = [1, 1]} : vector<8x384xf32> to vector<8x128xf32>
    %148 = vector.extract_strided_slice %146 {offsets = [0, 128], sizes = [8, 128], strides = [1, 1]} : vector<8x384xf32> to vector<8x128xf32>
    %149 = vector.extract_strided_slice %146 {offsets = [0, 256], sizes = [8, 128], strides = [1, 1]} : vector<8x384xf32> to vector<8x128xf32>
    %150 = arith.negf %149 : vector<8x128xf32>
    %151 = math.exp %150 : vector<8x128xf32>
    %cst_71 = arith.constant 1.000000e+00 : f32
    %152 = vector.broadcast %cst_71 : f32 to vector<8x128xf32>
    %153 = arith.addf %152, %151 : vector<8x128xf32>
    %154 = arith.divf %152, %153 : vector<8x128xf32>
    %155 = vector.extract_strided_slice %13 {offsets = [8, 0], sizes = [8, 128], strides = [1, 1]} : vector<64x128xf32> to vector<8x128xf32>
    %156 = vector.extract_strided_slice %32 {offsets = [1, 0], sizes = [1, 128], strides = [1, 1]} : vector<8x128xf32> to vector<1x128xf32>
    %157 = vector.broadcast %156 : vector<1x128xf32> to vector<8x128xf32>
    %158 = arith.mulf %155, %157 : vector<8x128xf32>
    %159 = vector.extract_strided_slice %36 {offsets = [1, 0], sizes = [1, 128], strides = [1, 1]} : vector<8x128xf32> to vector<1x128xf32>
    %160 = vector.broadcast %159 : vector<1x128xf32> to vector<8x128xf32>
    %161 = arith.addf %158, %160 : vector<8x128xf32>
    %162 = math.tanh %147 : vector<8x128xf32>
    %163 = arith.mulf %161, %162 : vector<8x128xf32>
    %cst_72 = arith.constant 0.000000e+00 : f32
    %164 = vector.broadcast %cst_72 : f32 to vector<8x128xf32>
    %165 = arith.subf %164, %154 : vector<8x128xf32>
    %166 = math.exp %165 : vector<8x128xf32>
    %167 = arith.mulf %115, %166 : vector<8x128xf32>
    %168 = arith.maximumf %167, %148 : vector<8x128xf32>
    %169 = arith.subf %115, %168 : vector<8x128xf32>
    %170 = arith.subf %169, %154 : vector<8x128xf32>
    %171 = math.exp %170 : vector<8x128xf32>
    %172 = arith.subf %148, %168 : vector<8x128xf32>
    %173 = math.exp %172 : vector<8x128xf32>
    %174 = arith.mulf %113, %171 : vector<8x128xf32>
    %175 = arith.mulf %163, %173 : vector<8x128xf32>
    %176 = arith.addf %174, %175 : vector<8x128xf32>
    %177 = arith.mulf %114, %171 : vector<8x128xf32>
    %178 = arith.addf %177, %173 : vector<8x128xf32>
    %179 = tpu.reciprocal %178 {approx = true} : vector<8x128xf32> -> vector<8x128xf32>
    %180 = arith.mulf %176, %179 : vector<8x128xf32>
    %181 = math.tanh %180 : vector<8x128xf32>
    %c0_73 = arith.constant 0 : index
    %c0_74 = arith.constant 0 : index
    %182 = vector.load %arg20[%c0_73, %c0_74] : memref<8x128xf32, #tpu.memory_space<vmem>>, vector<8x128xf32>
    tpu.vector_store %arg20[%c0_73, %c0_74], %176 {strides = array<i32>} : memref<8x128xf32, #tpu.memory_space<vmem>>, vector<8x128xf32>,
    %c0_75 = arith.constant 0 : index
    %c0_76 = arith.constant 0 : index
    %183 = vector.load %arg21[%c0_75, %c0_76] : memref<8x128xf32, #tpu.memory_space<vmem>>, vector<8x128xf32>
    tpu.vector_store %arg21[%c0_75, %c0_76], %178 {strides = array<i32>} : memref<8x128xf32, #tpu.memory_space<vmem>>, vector<8x128xf32>,
    %c0_77 = arith.constant 0 : index
    %c0_78 = arith.constant 0 : index
    %184 = vector.load %arg22[%c0_77, %c0_78] : memref<8x128xf32, #tpu.memory_space<vmem>>, vector<8x128xf32>
    tpu.vector_store %arg22[%c0_77, %c0_78], %181 {strides = array<i32>} : memref<8x128xf32, #tpu.memory_space<vmem>>, vector<8x128xf32>,
    %c0_79 = arith.constant 0 : index
    %c0_80 = arith.constant 0 : index
    %185 = vector.load %arg23[%c0_79, %c0_80] : memref<8x128xf32, #tpu.memory_space<vmem>>, vector<8x128xf32>
    tpu.vector_store %arg23[%c0_79, %c0_80], %168 {strides = array<i32>} : memref<8x128xf32, #tpu.memory_space<vmem>>, vector<8x128xf32>,
    %c8 = arith.constant 8 : index
    %c0_81 = arith.constant 0 : index
    %186 = vector.load %arg24[%c8, %c0_81] : memref<64x128xf32, #tpu.memory_space<vmem>>, vector<8x128xf32>
    tpu.vector_store %arg24[%c8, %c0_81], %181 {strides = array<i32>} : memref<64x128xf32, #tpu.memory_space<vmem>>, vector<8x128xf32>,
    %c0_82 = arith.constant 0 : index
    %c0_83 = arith.constant 0 : index
    %187 = vector.load %arg22[%c0_82, %c0_83] : memref<8x128xf32, #tpu.memory_space<vmem>>, vector<8x128xf32>
    %c0_84 = arith.constant 0 : index
    %c0_85 = arith.constant 0 : index
    %188 = vector.load %arg20[%c0_84, %c0_85] : memref<8x128xf32, #tpu.memory_space<vmem>>, vector<8x128xf32>
    %c0_86 = arith.constant 0 : index
    %c0_87 = arith.constant 0 : index
    %189 = vector.load %arg21[%c0_86, %c0_87] : memref<8x128xf32, #tpu.memory_space<vmem>>, vector<8x128xf32>
    %c0_88 = arith.constant 0 : index
    %c0_89 = arith.constant 0 : index
    %190 = vector.load %arg23[%c0_88, %c0_89] : memref<8x128xf32, #tpu.memory_space<vmem>>, vector<8x128xf32>
    %191 = vector.extract_strided_slice %12 {offsets = [16, 0], sizes = [8, 384], strides = [1, 1]} : vector<64x384xf32> to vector<8x384xf32>
    %192 = arith.truncf %187 : vector<8x128xf32> to vector<8x128xbf16>
    %cst_90 = arith.constant dense<0.000000e+00> : vector<8x384xf32>
    %193 = tpu.matmul %192, %3, %cst_90 {dimension_numbers = #tpu.dot_dimension_numbers<[1], [0], [0], [1], [0, 0, 1, 1], [], []>} : vector<8x128xbf16>, vector<128x384xbf16>, vector<8x384xf32> -> vector<8x384xf32>
    %194 = arith.addf %191, %193 : vector<8x384xf32>
    %195 = vector.broadcast %5 : vector<8x1xf32> to vector<8x384xf32>
    %196 = arith.mulf %194, %195 : vector<8x384xf32>
    %cst_91 = arith.constant dense<0.000000e+00> : vector<384xf32>
    %197 = vector.multi_reduction <add>, %196, %cst_91 [0] : vector<8x384xf32> to vector<384xf32>
    %198 = vector.shape_cast %197 : vector<384xf32> to vector<1x384xf32>
    %199 = arith.mulf %196, %194 : vector<8x384xf32>
    %cst_92 = arith.constant dense<0.000000e+00> : vector<384xf32>
    %200 = vector.multi_reduction <add>, %199, %cst_92 [0] : vector<8x384xf32> to vector<384xf32>
    %201 = vector.shape_cast %200 : vector<384xf32> to vector<1x384xf32>
    %202 = tpu.concatenate %198, %201 in 0 : vector<1x384xf32>, vector<1x384xf32> -> vector<2x384xf32>
    %cst_93 = arith.constant dense<0.000000e+00> : vector<2x384xf32>
    %203 = tpu.matmul %202, %4, %cst_93 {dimension_numbers = #tpu.dot_dimension_numbers<[1], [0], [0], [1], [0, 0, 1, 1], [], []>} : vector<2x384xf32>, vector<384x384xf32>, vector<2x384xf32> -> vector<2x384xf32>
    %204 = vector.extract_strided_slice %203 {offsets = [0, 0], sizes = [1, 384], strides = [1, 1]} : vector<2x384xf32> to vector<1x384xf32>
    %cst_94 = arith.constant 1.562500e-02 : f32
    %205 = vector.broadcast %cst_94 : f32 to vector<1x384xf32>
    %206 = arith.mulf %204, %205 : vector<1x384xf32>
    %207 = vector.extract_strided_slice %203 {offsets = [1, 0], sizes = [1, 384], strides = [1, 1]} : vector<2x384xf32> to vector<1x384xf32>
    %cst_95 = arith.constant 1.562500e-02 : f32
    %208 = vector.broadcast %cst_95 : f32 to vector<1x384xf32>
    %209 = arith.mulf %207, %208 : vector<1x384xf32>
    %210 = arith.mulf %206, %206 : vector<1x384xf32>
    %211 = arith.subf %209, %210 : vector<1x384xf32>
    %cst_96 = arith.constant 9.99999974E-6 : f32
    %212 = vector.broadcast %cst_96 : f32 to vector<1x384xf32>
    %213 = arith.addf %211, %212 : vector<1x384xf32>
    %214 = math.rsqrt %213 : vector<1x384xf32>
    %215 = arith.mulf %214, %6 : vector<1x384xf32>
    %216 = arith.mulf %206, %215 : vector<1x384xf32>
    %217 = arith.subf %7, %216 : vector<1x384xf32>
    %218 = vector.broadcast %215 : vector<1x384xf32> to vector<8x384xf32>
    %219 = arith.mulf %194, %218 : vector<8x384xf32>
    %220 = vector.broadcast %217 : vector<1x384xf32> to vector<8x384xf32>
    %221 = arith.addf %219, %220 : vector<8x384xf32>
    %222 = vector.extract_strided_slice %221 {offsets = [0, 0], sizes = [8, 128], strides = [1, 1]} : vector<8x384xf32> to vector<8x128xf32>
    %223 = vector.extract_strided_slice %221 {offsets = [0, 128], sizes = [8, 128], strides = [1, 1]} : vector<8x384xf32> to vector<8x128xf32>
    %224 = vector.extract_strided_slice %221 {offsets = [0, 256], sizes = [8, 128], strides = [1, 1]} : vector<8x384xf32> to vector<8x128xf32>
    %225 = arith.negf %224 : vector<8x128xf32>
    %226 = math.exp %225 : vector<8x128xf32>
    %cst_97 = arith.constant 1.000000e+00 : f32
    %227 = vector.broadcast %cst_97 : f32 to vector<8x128xf32>
    %228 = arith.addf %227, %226 : vector<8x128xf32>
    %229 = arith.divf %227, %228 : vector<8x128xf32>
    %230 = vector.extract_strided_slice %13 {offsets = [16, 0], sizes = [8, 128], strides = [1, 1]} : vector<64x128xf32> to vector<8x128xf32>
    %231 = vector.extract_strided_slice %32 {offsets = [2, 0], sizes = [1, 128], strides = [1, 1]} : vector<8x128xf32> to vector<1x128xf32>
    %232 = vector.broadcast %231 : vector<1x128xf32> to vector<8x128xf32>
    %233 = arith.mulf %230, %232 : vector<8x128xf32>
    %234 = vector.extract_strided_slice %36 {offsets = [2, 0], sizes = [1, 128], strides = [1, 1]} : vector<8x128xf32> to vector<1x128xf32>
    %235 = vector.broadcast %234 : vector<1x128xf32> to vector<8x128xf32>
    %236 = arith.addf %233, %235 : vector<8x128xf32>
    %237 = math.tanh %222 : vector<8x128xf32>
    %238 = arith.mulf %236, %237 : vector<8x128xf32>
    %cst_98 = arith.constant 0.000000e+00 : f32
    %239 = vector.broadcast %cst_98 : f32 to vector<8x128xf32>
    %240 = arith.subf %239, %229 : vector<8x128xf32>
    %241 = math.exp %240 : vector<8x128xf32>
    %242 = arith.mulf %190, %241 : vector<8x128xf32>
    %243 = arith.maximumf %242, %223 : vector<8x128xf32>
    %244 = arith.subf %190, %243 : vector<8x128xf32>
    %245 = arith.subf %244, %229 : vector<8x128xf32>
    %246 = math.exp %245 : vector<8x128xf32>
    %247 = arith.subf %223, %243 : vector<8x128xf32>
    %248 = math.exp %247 : vector<8x128xf32>
    %249 = arith.mulf %188, %246 : vector<8x128xf32>
    %250 = arith.mulf %238, %248 : vector<8x128xf32>
    %251 = arith.addf %249, %250 : vector<8x128xf32>
    %252 = arith.mulf %189, %246 : vector<8x128xf32>
    %253 = arith.addf %252, %248 : vector<8x128xf32>
    %254 = tpu.reciprocal %253 {approx = true} : vector<8x128xf32> -> vector<8x128xf32>
    %255 = arith.mulf %251, %254 : vector<8x128xf32>
    %256 = math.tanh %255 : vector<8x128xf32>
    %c0_99 = arith.constant 0 : index
    %c0_100 = arith.constant 0 : index
    %257 = vector.load %arg20[%c0_99, %c0_100] : memref<8x128xf32, #tpu.memory_space<vmem>>, vector<8x128xf32>
    tpu.vector_store %arg20[%c0_99, %c0_100], %251 {strides = array<i32>} : memref<8x128xf32, #tpu.memory_space<vmem>>, vector<8x128xf32>,
    %c0_101 = arith.constant 0 : index
    %c0_102 = arith.constant 0 : index
    %258 = vector.load %arg21[%c0_101, %c0_102] : memref<8x128xf32, #tpu.memory_space<vmem>>, vector<8x128xf32>
    tpu.vector_store %arg21[%c0_101, %c0_102], %253 {strides = array<i32>} : memref<8x128xf32, #tpu.memory_space<vmem>>, vector<8x128xf32>,
    %c0_103 = arith.constant 0 : index
    %c0_104 = arith.constant 0 : index
    %259 = vector.load %arg22[%c0_103, %c0_104] : memref<8x128xf32, #tpu.memory_space<vmem>>, vector<8x128xf32>
    tpu.vector_store %arg22[%c0_103, %c0_104], %256 {strides = array<i32>} : memref<8x128xf32, #tpu.memory_space<vmem>>, vector<8x128xf32>,
    %c0_105 = arith.constant 0 : index
    %c0_106 = arith.constant 0 : index
    %260 = vector.load %arg23[%c0_105, %c0_106] : memref<8x128xf32, #tpu.memory_space<vmem>>, vector<8x128xf32>
    tpu.vector_store %arg23[%c0_105, %c0_106], %243 {strides = array<i32>} : memref<8x128xf32, #tpu.memory_space<vmem>>, vector<8x128xf32>,
    %c16 = arith.constant 16 : index
    %c0_107 = arith.constant 0 : index
    %261 = vector.load %arg24[%c16, %c0_107] : memref<64x128xf32, #tpu.memory_space<vmem>>, vector<8x128xf32>
    tpu.vector_store %arg24[%c16, %c0_107], %256 {strides = array<i32>} : memref<64x128xf32, #tpu.memory_space<vmem>>, vector<8x128xf32>,
    %c0_108 = arith.constant 0 : index
    %c0_109 = arith.constant 0 : index
    %262 = vector.load %arg22[%c0_108, %c0_109] : memref<8x128xf32, #tpu.memory_space<vmem>>, vector<8x128xf32>
    %c0_110 = arith.constant 0 : index
    %c0_111 = arith.constant 0 : index
    %263 = vector.load %arg20[%c0_110, %c0_111] : memref<8x128xf32, #tpu.memory_space<vmem>>, vector<8x128xf32>
    %c0_112 = arith.constant 0 : index
    %c0_113 = arith.constant 0 : index
    %264 = vector.load %arg21[%c0_112, %c0_113] : memref<8x128xf32, #tpu.memory_space<vmem>>, vector<8x128xf32>
    %c0_114 = arith.constant 0 : index
    %c0_115 = arith.constant 0 : index
    %265 = vector.load %arg23[%c0_114, %c0_115] : memref<8x128xf32, #tpu.memory_space<vmem>>, vector<8x128xf32>
    %266 = vector.extract_strided_slice %12 {offsets = [24, 0], sizes = [8, 384], strides = [1, 1]} : vector<64x384xf32> to vector<8x384xf32>
    %267 = arith.truncf %262 : vector<8x128xf32> to vector<8x128xbf16>
    %cst_116 = arith.constant dense<0.000000e+00> : vector<8x384xf32>
    %268 = tpu.matmul %267, %3, %cst_116 {dimension_numbers = #tpu.dot_dimension_numbers<[1], [0], [0], [1], [0, 0, 1, 1], [], []>} : vector<8x128xbf16>, vector<128x384xbf16>, vector<8x384xf32> -> vector<8x384xf32>
    %269 = arith.addf %266, %268 : vector<8x384xf32>
    %270 = vector.broadcast %5 : vector<8x1xf32> to vector<8x384xf32>
    %271 = arith.mulf %269, %270 : vector<8x384xf32>
    %cst_117 = arith.constant dense<0.000000e+00> : vector<384xf32>
    %272 = vector.multi_reduction <add>, %271, %cst_117 [0] : vector<8x384xf32> to vector<384xf32>
    %273 = vector.shape_cast %272 : vector<384xf32> to vector<1x384xf32>
    %274 = arith.mulf %271, %269 : vector<8x384xf32>
    %cst_118 = arith.constant dense<0.000000e+00> : vector<384xf32>
    %275 = vector.multi_reduction <add>, %274, %cst_118 [0] : vector<8x384xf32> to vector<384xf32>
    %276 = vector.shape_cast %275 : vector<384xf32> to vector<1x384xf32>
    %277 = tpu.concatenate %273, %276 in 0 : vector<1x384xf32>, vector<1x384xf32> -> vector<2x384xf32>
    %cst_119 = arith.constant dense<0.000000e+00> : vector<2x384xf32>
    %278 = tpu.matmul %277, %4, %cst_119 {dimension_numbers = #tpu.dot_dimension_numbers<[1], [0], [0], [1], [0, 0, 1, 1], [], []>} : vector<2x384xf32>, vector<384x384xf32>, vector<2x384xf32> -> vector<2x384xf32>
    %279 = vector.extract_strided_slice %278 {offsets = [0, 0], sizes = [1, 384], strides = [1, 1]} : vector<2x384xf32> to vector<1x384xf32>
    %cst_120 = arith.constant 1.562500e-02 : f32
    %280 = vector.broadcast %cst_120 : f32 to vector<1x384xf32>
    %281 = arith.mulf %279, %280 : vector<1x384xf32>
    %282 = vector.extract_strided_slice %278 {offsets = [1, 0], sizes = [1, 384], strides = [1, 1]} : vector<2x384xf32> to vector<1x384xf32>
    %cst_121 = arith.constant 1.562500e-02 : f32
    %283 = vector.broadcast %cst_121 : f32 to vector<1x384xf32>
    %284 = arith.mulf %282, %283 : vector<1x384xf32>
    %285 = arith.mulf %281, %281 : vector<1x384xf32>
    %286 = arith.subf %284, %285 : vector<1x384xf32>
    %cst_122 = arith.constant 9.99999974E-6 : f32
    %287 = vector.broadcast %cst_122 : f32 to vector<1x384xf32>
    %288 = arith.addf %286, %287 : vector<1x384xf32>
    %289 = math.rsqrt %288 : vector<1x384xf32>
    %290 = arith.mulf %289, %6 : vector<1x384xf32>
    %291 = arith.mulf %281, %290 : vector<1x384xf32>
    %292 = arith.subf %7, %291 : vector<1x384xf32>
    %293 = vector.broadcast %290 : vector<1x384xf32> to vector<8x384xf32>
    %294 = arith.mulf %269, %293 : vector<8x384xf32>
    %295 = vector.broadcast %292 : vector<1x384xf32> to vector<8x384xf32>
    %296 = arith.addf %294, %295 : vector<8x384xf32>
    %297 = vector.extract_strided_slice %296 {offsets = [0, 0], sizes = [8, 128], strides = [1, 1]} : vector<8x384xf32> to vector<8x128xf32>
    %298 = vector.extract_strided_slice %296 {offsets = [0, 128], sizes = [8, 128], strides = [1, 1]} : vector<8x384xf32> to vector<8x128xf32>
    %299 = vector.extract_strided_slice %296 {offsets = [0, 256], sizes = [8, 128], strides = [1, 1]} : vector<8x384xf32> to vector<8x128xf32>
    %300 = arith.negf %299 : vector<8x128xf32>
    %301 = math.exp %300 : vector<8x128xf32>
    %cst_123 = arith.constant 1.000000e+00 : f32
    %302 = vector.broadcast %cst_123 : f32 to vector<8x128xf32>
    %303 = arith.addf %302, %301 : vector<8x128xf32>
    %304 = arith.divf %302, %303 : vector<8x128xf32>
    %305 = vector.extract_strided_slice %13 {offsets = [24, 0], sizes = [8, 128], strides = [1, 1]} : vector<64x128xf32> to vector<8x128xf32>
    %306 = vector.extract_strided_slice %32 {offsets = [3, 0], sizes = [1, 128], strides = [1, 1]} : vector<8x128xf32> to vector<1x128xf32>
    %307 = vector.broadcast %306 : vector<1x128xf32> to vector<8x128xf32>
    %308 = arith.mulf %305, %307 : vector<8x128xf32>
    %309 = vector.extract_strided_slice %36 {offsets = [3, 0], sizes = [1, 128], strides = [1, 1]} : vector<8x128xf32> to vector<1x128xf32>
    %310 = vector.broadcast %309 : vector<1x128xf32> to vector<8x128xf32>
    %311 = arith.addf %308, %310 : vector<8x128xf32>
    %312 = math.tanh %297 : vector<8x128xf32>
    %313 = arith.mulf %311, %312 : vector<8x128xf32>
    %cst_124 = arith.constant 0.000000e+00 : f32
    %314 = vector.broadcast %cst_124 : f32 to vector<8x128xf32>
    %315 = arith.subf %314, %304 : vector<8x128xf32>
    %316 = math.exp %315 : vector<8x128xf32>
    %317 = arith.mulf %265, %316 : vector<8x128xf32>
    %318 = arith.maximumf %317, %298 : vector<8x128xf32>
    %319 = arith.subf %265, %318 : vector<8x128xf32>
    %320 = arith.subf %319, %304 : vector<8x128xf32>
    %321 = math.exp %320 : vector<8x128xf32>
    %322 = arith.subf %298, %318 : vector<8x128xf32>
    %323 = math.exp %322 : vector<8x128xf32>
    %324 = arith.mulf %263, %321 : vector<8x128xf32>
    %325 = arith.mulf %313, %323 : vector<8x128xf32>
    %326 = arith.addf %324, %325 : vector<8x128xf32>
    %327 = arith.mulf %264, %321 : vector<8x128xf32>
    %328 = arith.addf %327, %323 : vector<8x128xf32>
    %329 = tpu.reciprocal %328 {approx = true} : vector<8x128xf32> -> vector<8x128xf32>
    %330 = arith.mulf %326, %329 : vector<8x128xf32>
    %331 = math.tanh %330 : vector<8x128xf32>
    %c0_125 = arith.constant 0 : index
    %c0_126 = arith.constant 0 : index
    %332 = vector.load %arg20[%c0_125, %c0_126] : memref<8x128xf32, #tpu.memory_space<vmem>>, vector<8x128xf32>
    tpu.vector_store %arg20[%c0_125, %c0_126], %326 {strides = array<i32>} : memref<8x128xf32, #tpu.memory_space<vmem>>, vector<8x128xf32>,
    %c0_127 = arith.constant 0 : index
    %c0_128 = arith.constant 0 : index
    %333 = vector.load %arg21[%c0_127, %c0_128] : memref<8x128xf32, #tpu.memory_space<vmem>>, vector<8x128xf32>
    tpu.vector_store %arg21[%c0_127, %c0_128], %328 {strides = array<i32>} : memref<8x128xf32, #tpu.memory_space<vmem>>, vector<8x128xf32>,
    %c0_129 = arith.constant 0 : index
    %c0_130 = arith.constant 0 : index
    %334 = vector.load %arg22[%c0_129, %c0_130] : memref<8x128xf32, #tpu.memory_space<vmem>>, vector<8x128xf32>
    tpu.vector_store %arg22[%c0_129, %c0_130], %331 {strides = array<i32>} : memref<8x128xf32, #tpu.memory_space<vmem>>, vector<8x128xf32>,
    %c0_131 = arith.constant 0 : index
    %c0_132 = arith.constant 0 : index
    %335 = vector.load %arg23[%c0_131, %c0_132] : memref<8x128xf32, #tpu.memory_space<vmem>>, vector<8x128xf32>
    tpu.vector_store %arg23[%c0_131, %c0_132], %318 {strides = array<i32>} : memref<8x128xf32, #tpu.memory_space<vmem>>, vector<8x128xf32>,
    %c24 = arith.constant 24 : index
    %c0_133 = arith.constant 0 : index
    %336 = vector.load %arg24[%c24, %c0_133] : memref<64x128xf32, #tpu.memory_space<vmem>>, vector<8x128xf32>
    tpu.vector_store %arg24[%c24, %c0_133], %331 {strides = array<i32>} : memref<64x128xf32, #tpu.memory_space<vmem>>, vector<8x128xf32>,
    %c0_134 = arith.constant 0 : index
    %c0_135 = arith.constant 0 : index
    %337 = vector.load %arg22[%c0_134, %c0_135] : memref<8x128xf32, #tpu.memory_space<vmem>>, vector<8x128xf32>
    %c0_136 = arith.constant 0 : index
    %c0_137 = arith.constant 0 : index
    %338 = vector.load %arg20[%c0_136, %c0_137] : memref<8x128xf32, #tpu.memory_space<vmem>>, vector<8x128xf32>
    %c0_138 = arith.constant 0 : index
    %c0_139 = arith.constant 0 : index
    %339 = vector.load %arg21[%c0_138, %c0_139] : memref<8x128xf32, #tpu.memory_space<vmem>>, vector<8x128xf32>
    %c0_140 = arith.constant 0 : index
    %c0_141 = arith.constant 0 : index
    %340 = vector.load %arg23[%c0_140, %c0_141] : memref<8x128xf32, #tpu.memory_space<vmem>>, vector<8x128xf32>
    %341 = vector.extract_strided_slice %12 {offsets = [32, 0], sizes = [8, 384], strides = [1, 1]} : vector<64x384xf32> to vector<8x384xf32>
    %342 = arith.truncf %337 : vector<8x128xf32> to vector<8x128xbf16>
    %cst_142 = arith.constant dense<0.000000e+00> : vector<8x384xf32>
    %343 = tpu.matmul %342, %3, %cst_142 {dimension_numbers = #tpu.dot_dimension_numbers<[1], [0], [0], [1], [0, 0, 1, 1], [], []>} : vector<8x128xbf16>, vector<128x384xbf16>, vector<8x384xf32> -> vector<8x384xf32>
    %344 = arith.addf %341, %343 : vector<8x384xf32>
    %345 = vector.broadcast %5 : vector<8x1xf32> to vector<8x384xf32>
    %346 = arith.mulf %344, %345 : vector<8x384xf32>
    %cst_143 = arith.constant dense<0.000000e+00> : vector<384xf32>
    %347 = vector.multi_reduction <add>, %346, %cst_143 [0] : vector<8x384xf32> to vector<384xf32>
    %348 = vector.shape_cast %347 : vector<384xf32> to vector<1x384xf32>
    %349 = arith.mulf %346, %344 : vector<8x384xf32>
    %cst_144 = arith.constant dense<0.000000e+00> : vector<384xf32>
    %350 = vector.multi_reduction <add>, %349, %cst_144 [0] : vector<8x384xf32> to vector<384xf32>
    %351 = vector.shape_cast %350 : vector<384xf32> to vector<1x384xf32>
    %352 = tpu.concatenate %348, %351 in 0 : vector<1x384xf32>, vector<1x384xf32> -> vector<2x384xf32>
    %cst_145 = arith.constant dense<0.000000e+00> : vector<2x384xf32>
    %353 = tpu.matmul %352, %4, %cst_145 {dimension_numbers = #tpu.dot_dimension_numbers<[1], [0], [0], [1], [0, 0, 1, 1], [], []>} : vector<2x384xf32>, vector<384x384xf32>, vector<2x384xf32> -> vector<2x384xf32>
    %354 = vector.extract_strided_slice %353 {offsets = [0, 0], sizes = [1, 384], strides = [1, 1]} : vector<2x384xf32> to vector<1x384xf32>
    %cst_146 = arith.constant 1.562500e-02 : f32
    %355 = vector.broadcast %cst_146 : f32 to vector<1x384xf32>
    %356 = arith.mulf %354, %355 : vector<1x384xf32>
    %357 = vector.extract_strided_slice %353 {offsets = [1, 0], sizes = [1, 384], strides = [1, 1]} : vector<2x384xf32> to vector<1x384xf32>
    %cst_147 = arith.constant 1.562500e-02 : f32
    %358 = vector.broadcast %cst_147 : f32 to vector<1x384xf32>
    %359 = arith.mulf %357, %358 : vector<1x384xf32>
    %360 = arith.mulf %356, %356 : vector<1x384xf32>
    %361 = arith.subf %359, %360 : vector<1x384xf32>
    %cst_148 = arith.constant 9.99999974E-6 : f32
    %362 = vector.broadcast %cst_148 : f32 to vector<1x384xf32>
    %363 = arith.addf %361, %362 : vector<1x384xf32>
    %364 = math.rsqrt %363 : vector<1x384xf32>
    %365 = arith.mulf %364, %6 : vector<1x384xf32>
    %366 = arith.mulf %356, %365 : vector<1x384xf32>
    %367 = arith.subf %7, %366 : vector<1x384xf32>
    %368 = vector.broadcast %365 : vector<1x384xf32> to vector<8x384xf32>
    %369 = arith.mulf %344, %368 : vector<8x384xf32>
    %370 = vector.broadcast %367 : vector<1x384xf32> to vector<8x384xf32>
    %371 = arith.addf %369, %370 : vector<8x384xf32>
    %372 = vector.extract_strided_slice %371 {offsets = [0, 0], sizes = [8, 128], strides = [1, 1]} : vector<8x384xf32> to vector<8x128xf32>
    %373 = vector.extract_strided_slice %371 {offsets = [0, 128], sizes = [8, 128], strides = [1, 1]} : vector<8x384xf32> to vector<8x128xf32>
    %374 = vector.extract_strided_slice %371 {offsets = [0, 256], sizes = [8, 128], strides = [1, 1]} : vector<8x384xf32> to vector<8x128xf32>
    %375 = arith.negf %374 : vector<8x128xf32>
    %376 = math.exp %375 : vector<8x128xf32>
    %cst_149 = arith.constant 1.000000e+00 : f32
    %377 = vector.broadcast %cst_149 : f32 to vector<8x128xf32>
    %378 = arith.addf %377, %376 : vector<8x128xf32>
    %379 = arith.divf %377, %378 : vector<8x128xf32>
    %380 = vector.extract_strided_slice %13 {offsets = [32, 0], sizes = [8, 128], strides = [1, 1]} : vector<64x128xf32> to vector<8x128xf32>
    %381 = vector.extract_strided_slice %32 {offsets = [4, 0], sizes = [1, 128], strides = [1, 1]} : vector<8x128xf32> to vector<1x128xf32>
    %382 = vector.broadcast %381 : vector<1x128xf32> to vector<8x128xf32>
    %383 = arith.mulf %380, %382 : vector<8x128xf32>
    %384 = vector.extract_strided_slice %36 {offsets = [4, 0], sizes = [1, 128], strides = [1, 1]} : vector<8x128xf32> to vector<1x128xf32>
    %385 = vector.broadcast %384 : vector<1x128xf32> to vector<8x128xf32>
    %386 = arith.addf %383, %385 : vector<8x128xf32>
    %387 = math.tanh %372 : vector<8x128xf32>
    %388 = arith.mulf %386, %387 : vector<8x128xf32>
    %cst_150 = arith.constant 0.000000e+00 : f32
    %389 = vector.broadcast %cst_150 : f32 to vector<8x128xf32>
    %390 = arith.subf %389, %379 : vector<8x128xf32>
    %391 = math.exp %390 : vector<8x128xf32>
    %392 = arith.mulf %340, %391 : vector<8x128xf32>
    %393 = arith.maximumf %392, %373 : vector<8x128xf32>
    %394 = arith.subf %340, %393 : vector<8x128xf32>
    %395 = arith.subf %394, %379 : vector<8x128xf32>
    %396 = math.exp %395 : vector<8x128xf32>
    %397 = arith.subf %373, %393 : vector<8x128xf32>
    %398 = math.exp %397 : vector<8x128xf32>
    %399 = arith.mulf %338, %396 : vector<8x128xf32>
    %400 = arith.mulf %388, %398 : vector<8x128xf32>
    %401 = arith.addf %399, %400 : vector<8x128xf32>
    %402 = arith.mulf %339, %396 : vector<8x128xf32>
    %403 = arith.addf %402, %398 : vector<8x128xf32>
    %404 = tpu.reciprocal %403 {approx = true} : vector<8x128xf32> -> vector<8x128xf32>
    %405 = arith.mulf %401, %404 : vector<8x128xf32>
    %406 = math.tanh %405 : vector<8x128xf32>
    %c0_151 = arith.constant 0 : index
    %c0_152 = arith.constant 0 : index
    %407 = vector.load %arg20[%c0_151, %c0_152] : memref<8x128xf32, #tpu.memory_space<vmem>>, vector<8x128xf32>
    tpu.vector_store %arg20[%c0_151, %c0_152], %401 {strides = array<i32>} : memref<8x128xf32, #tpu.memory_space<vmem>>, vector<8x128xf32>,
    %c0_153 = arith.constant 0 : index
    %c0_154 = arith.constant 0 : index
    %408 = vector.load %arg21[%c0_153, %c0_154] : memref<8x128xf32, #tpu.memory_space<vmem>>, vector<8x128xf32>
    tpu.vector_store %arg21[%c0_153, %c0_154], %403 {strides = array<i32>} : memref<8x128xf32, #tpu.memory_space<vmem>>, vector<8x128xf32>,
    %c0_155 = arith.constant 0 : index
    %c0_156 = arith.constant 0 : index
    %409 = vector.load %arg22[%c0_155, %c0_156] : memref<8x128xf32, #tpu.memory_space<vmem>>, vector<8x128xf32>
    tpu.vector_store %arg22[%c0_155, %c0_156], %406 {strides = array<i32>} : memref<8x128xf32, #tpu.memory_space<vmem>>, vector<8x128xf32>,
    %c0_157 = arith.constant 0 : index
    %c0_158 = arith.constant 0 : index
    %410 = vector.load %arg23[%c0_157, %c0_158] : memref<8x128xf32, #tpu.memory_space<vmem>>, vector<8x128xf32>
    tpu.vector_store %arg23[%c0_157, %c0_158], %393 {strides = array<i32>} : memref<8x128xf32, #tpu.memory_space<vmem>>, vector<8x128xf32>,
    %c32 = arith.constant 32 : index
    %c0_159 = arith.constant 0 : index
    %411 = vector.load %arg24[%c32, %c0_159] : memref<64x128xf32, #tpu.memory_space<vmem>>, vector<8x128xf32>
    tpu.vector_store %arg24[%c32, %c0_159], %406 {strides = array<i32>} : memref<64x128xf32, #tpu.memory_space<vmem>>, vector<8x128xf32>,
    %c0_160 = arith.constant 0 : index
    %c0_161 = arith.constant 0 : index
    %412 = vector.load %arg22[%c0_160, %c0_161] : memref<8x128xf32, #tpu.memory_space<vmem>>, vector<8x128xf32>
    %c0_162 = arith.constant 0 : index
    %c0_163 = arith.constant 0 : index
    %413 = vector.load %arg20[%c0_162, %c0_163] : memref<8x128xf32, #tpu.memory_space<vmem>>, vector<8x128xf32>
    %c0_164 = arith.constant 0 : index
    %c0_165 = arith.constant 0 : index
    %414 = vector.load %arg21[%c0_164, %c0_165] : memref<8x128xf32, #tpu.memory_space<vmem>>, vector<8x128xf32>
    %c0_166 = arith.constant 0 : index
    %c0_167 = arith.constant 0 : index
    %415 = vector.load %arg23[%c0_166, %c0_167] : memref<8x128xf32, #tpu.memory_space<vmem>>, vector<8x128xf32>
    %416 = vector.extract_strided_slice %12 {offsets = [40, 0], sizes = [8, 384], strides = [1, 1]} : vector<64x384xf32> to vector<8x384xf32>
    %417 = arith.truncf %412 : vector<8x128xf32> to vector<8x128xbf16>
    %cst_168 = arith.constant dense<0.000000e+00> : vector<8x384xf32>
    %418 = tpu.matmul %417, %3, %cst_168 {dimension_numbers = #tpu.dot_dimension_numbers<[1], [0], [0], [1], [0, 0, 1, 1], [], []>} : vector<8x128xbf16>, vector<128x384xbf16>, vector<8x384xf32> -> vector<8x384xf32>
    %419 = arith.addf %416, %418 : vector<8x384xf32>
    %420 = vector.broadcast %5 : vector<8x1xf32> to vector<8x384xf32>
    %421 = arith.mulf %419, %420 : vector<8x384xf32>
    %cst_169 = arith.constant dense<0.000000e+00> : vector<384xf32>
    %422 = vector.multi_reduction <add>, %421, %cst_169 [0] : vector<8x384xf32> to vector<384xf32>
    %423 = vector.shape_cast %422 : vector<384xf32> to vector<1x384xf32>
    %424 = arith.mulf %421, %419 : vector<8x384xf32>
    %cst_170 = arith.constant dense<0.000000e+00> : vector<384xf32>
    %425 = vector.multi_reduction <add>, %424, %cst_170 [0] : vector<8x384xf32> to vector<384xf32>
    %426 = vector.shape_cast %425 : vector<384xf32> to vector<1x384xf32>
    %427 = tpu.concatenate %423, %426 in 0 : vector<1x384xf32>, vector<1x384xf32> -> vector<2x384xf32>
    %cst_171 = arith.constant dense<0.000000e+00> : vector<2x384xf32>
    %428 = tpu.matmul %427, %4, %cst_171 {dimension_numbers = #tpu.dot_dimension_numbers<[1], [0], [0], [1], [0, 0, 1, 1], [], []>} : vector<2x384xf32>, vector<384x384xf32>, vector<2x384xf32> -> vector<2x384xf32>
    %429 = vector.extract_strided_slice %428 {offsets = [0, 0], sizes = [1, 384], strides = [1, 1]} : vector<2x384xf32> to vector<1x384xf32>
    %cst_172 = arith.constant 1.562500e-02 : f32
    %430 = vector.broadcast %cst_172 : f32 to vector<1x384xf32>
    %431 = arith.mulf %429, %430 : vector<1x384xf32>
    %432 = vector.extract_strided_slice %428 {offsets = [1, 0], sizes = [1, 384], strides = [1, 1]} : vector<2x384xf32> to vector<1x384xf32>
    %cst_173 = arith.constant 1.562500e-02 : f32
    %433 = vector.broadcast %cst_173 : f32 to vector<1x384xf32>
    %434 = arith.mulf %432, %433 : vector<1x384xf32>
    %435 = arith.mulf %431, %431 : vector<1x384xf32>
    %436 = arith.subf %434, %435 : vector<1x384xf32>
    %cst_174 = arith.constant 9.99999974E-6 : f32
    %437 = vector.broadcast %cst_174 : f32 to vector<1x384xf32>
    %438 = arith.addf %436, %437 : vector<1x384xf32>
    %439 = math.rsqrt %438 : vector<1x384xf32>
    %440 = arith.mulf %439, %6 : vector<1x384xf32>
    %441 = arith.mulf %431, %440 : vector<1x384xf32>
    %442 = arith.subf %7, %441 : vector<1x384xf32>
    %443 = vector.broadcast %440 : vector<1x384xf32> to vector<8x384xf32>
    %444 = arith.mulf %419, %443 : vector<8x384xf32>
    %445 = vector.broadcast %442 : vector<1x384xf32> to vector<8x384xf32>
    %446 = arith.addf %444, %445 : vector<8x384xf32>
    %447 = vector.extract_strided_slice %446 {offsets = [0, 0], sizes = [8, 128], strides = [1, 1]} : vector<8x384xf32> to vector<8x128xf32>
    %448 = vector.extract_strided_slice %446 {offsets = [0, 128], sizes = [8, 128], strides = [1, 1]} : vector<8x384xf32> to vector<8x128xf32>
    %449 = vector.extract_strided_slice %446 {offsets = [0, 256], sizes = [8, 128], strides = [1, 1]} : vector<8x384xf32> to vector<8x128xf32>
    %450 = arith.negf %449 : vector<8x128xf32>
    %451 = math.exp %450 : vector<8x128xf32>
    %cst_175 = arith.constant 1.000000e+00 : f32
    %452 = vector.broadcast %cst_175 : f32 to vector<8x128xf32>
    %453 = arith.addf %452, %451 : vector<8x128xf32>
    %454 = arith.divf %452, %453 : vector<8x128xf32>
    %455 = vector.extract_strided_slice %13 {offsets = [40, 0], sizes = [8, 128], strides = [1, 1]} : vector<64x128xf32> to vector<8x128xf32>
    %456 = vector.extract_strided_slice %32 {offsets = [5, 0], sizes = [1, 128], strides = [1, 1]} : vector<8x128xf32> to vector<1x128xf32>
    %457 = vector.broadcast %456 : vector<1x128xf32> to vector<8x128xf32>
    %458 = arith.mulf %455, %457 : vector<8x128xf32>
    %459 = vector.extract_strided_slice %36 {offsets = [5, 0], sizes = [1, 128], strides = [1, 1]} : vector<8x128xf32> to vector<1x128xf32>
    %460 = vector.broadcast %459 : vector<1x128xf32> to vector<8x128xf32>
    %461 = arith.addf %458, %460 : vector<8x128xf32>
    %462 = math.tanh %447 : vector<8x128xf32>
    %463 = arith.mulf %461, %462 : vector<8x128xf32>
    %cst_176 = arith.constant 0.000000e+00 : f32
    %464 = vector.broadcast %cst_176 : f32 to vector<8x128xf32>
    %465 = arith.subf %464, %454 : vector<8x128xf32>
    %466 = math.exp %465 : vector<8x128xf32>
    %467 = arith.mulf %415, %466 : vector<8x128xf32>
    %468 = arith.maximumf %467, %448 : vector<8x128xf32>
    %469 = arith.subf %415, %468 : vector<8x128xf32>
    %470 = arith.subf %469, %454 : vector<8x128xf32>
    %471 = math.exp %470 : vector<8x128xf32>
    %472 = arith.subf %448, %468 : vector<8x128xf32>
    %473 = math.exp %472 : vector<8x128xf32>
    %474 = arith.mulf %413, %471 : vector<8x128xf32>
    %475 = arith.mulf %463, %473 : vector<8x128xf32>
    %476 = arith.addf %474, %475 : vector<8x128xf32>
    %477 = arith.mulf %414, %471 : vector<8x128xf32>
    %478 = arith.addf %477, %473 : vector<8x128xf32>
    %479 = tpu.reciprocal %478 {approx = true} : vector<8x128xf32> -> vector<8x128xf32>
    %480 = arith.mulf %476, %479 : vector<8x128xf32>
    %481 = math.tanh %480 : vector<8x128xf32>
    %c0_177 = arith.constant 0 : index
    %c0_178 = arith.constant 0 : index
    %482 = vector.load %arg20[%c0_177, %c0_178] : memref<8x128xf32, #tpu.memory_space<vmem>>, vector<8x128xf32>
    tpu.vector_store %arg20[%c0_177, %c0_178], %476 {strides = array<i32>} : memref<8x128xf32, #tpu.memory_space<vmem>>, vector<8x128xf32>,
    %c0_179 = arith.constant 0 : index
    %c0_180 = arith.constant 0 : index
    %483 = vector.load %arg21[%c0_179, %c0_180] : memref<8x128xf32, #tpu.memory_space<vmem>>, vector<8x128xf32>
    tpu.vector_store %arg21[%c0_179, %c0_180], %478 {strides = array<i32>} : memref<8x128xf32, #tpu.memory_space<vmem>>, vector<8x128xf32>,
    %c0_181 = arith.constant 0 : index
    %c0_182 = arith.constant 0 : index
    %484 = vector.load %arg22[%c0_181, %c0_182] : memref<8x128xf32, #tpu.memory_space<vmem>>, vector<8x128xf32>
    tpu.vector_store %arg22[%c0_181, %c0_182], %481 {strides = array<i32>} : memref<8x128xf32, #tpu.memory_space<vmem>>, vector<8x128xf32>,
    %c0_183 = arith.constant 0 : index
    %c0_184 = arith.constant 0 : index
    %485 = vector.load %arg23[%c0_183, %c0_184] : memref<8x128xf32, #tpu.memory_space<vmem>>, vector<8x128xf32>
    tpu.vector_store %arg23[%c0_183, %c0_184], %468 {strides = array<i32>} : memref<8x128xf32, #tpu.memory_space<vmem>>, vector<8x128xf32>,
    %c40 = arith.constant 40 : index
    %c0_185 = arith.constant 0 : index
    %486 = vector.load %arg24[%c40, %c0_185] : memref<64x128xf32, #tpu.memory_space<vmem>>, vector<8x128xf32>
    tpu.vector_store %arg24[%c40, %c0_185], %481 {strides = array<i32>} : memref<64x128xf32, #tpu.memory_space<vmem>>, vector<8x128xf32>,
    %c0_186 = arith.constant 0 : index
    %c0_187 = arith.constant 0 : index
    %487 = vector.load %arg22[%c0_186, %c0_187] : memref<8x128xf32, #tpu.memory_space<vmem>>, vector<8x128xf32>
    %c0_188 = arith.constant 0 : index
    %c0_189 = arith.constant 0 : index
    %488 = vector.load %arg20[%c0_188, %c0_189] : memref<8x128xf32, #tpu.memory_space<vmem>>, vector<8x128xf32>
    %c0_190 = arith.constant 0 : index
    %c0_191 = arith.constant 0 : index
    %489 = vector.load %arg21[%c0_190, %c0_191] : memref<8x128xf32, #tpu.memory_space<vmem>>, vector<8x128xf32>
    %c0_192 = arith.constant 0 : index
    %c0_193 = arith.constant 0 : index
    %490 = vector.load %arg23[%c0_192, %c0_193] : memref<8x128xf32, #tpu.memory_space<vmem>>, vector<8x128xf32>
    %491 = vector.extract_strided_slice %12 {offsets = [48, 0], sizes = [8, 384], strides = [1, 1]} : vector<64x384xf32> to vector<8x384xf32>
    %492 = arith.truncf %487 : vector<8x128xf32> to vector<8x128xbf16>
    %cst_194 = arith.constant dense<0.000000e+00> : vector<8x384xf32>
    %493 = tpu.matmul %492, %3, %cst_194 {dimension_numbers = #tpu.dot_dimension_numbers<[1], [0], [0], [1], [0, 0, 1, 1], [], []>} : vector<8x128xbf16>, vector<128x384xbf16>, vector<8x384xf32> -> vector<8x384xf32>
    %494 = arith.addf %491, %493 : vector<8x384xf32>
    %495 = vector.broadcast %5 : vector<8x1xf32> to vector<8x384xf32>
    %496 = arith.mulf %494, %495 : vector<8x384xf32>
    %cst_195 = arith.constant dense<0.000000e+00> : vector<384xf32>
    %497 = vector.multi_reduction <add>, %496, %cst_195 [0] : vector<8x384xf32> to vector<384xf32>
    %498 = vector.shape_cast %497 : vector<384xf32> to vector<1x384xf32>
    %499 = arith.mulf %496, %494 : vector<8x384xf32>
    %cst_196 = arith.constant dense<0.000000e+00> : vector<384xf32>
    %500 = vector.multi_reduction <add>, %499, %cst_196 [0] : vector<8x384xf32> to vector<384xf32>
    %501 = vector.shape_cast %500 : vector<384xf32> to vector<1x384xf32>
    %502 = tpu.concatenate %498, %501 in 0 : vector<1x384xf32>, vector<1x384xf32> -> vector<2x384xf32>
    %cst_197 = arith.constant dense<0.000000e+00> : vector<2x384xf32>
    %503 = tpu.matmul %502, %4, %cst_197 {dimension_numbers = #tpu.dot_dimension_numbers<[1], [0], [0], [1], [0, 0, 1, 1], [], []>} : vector<2x384xf32>, vector<384x384xf32>, vector<2x384xf32> -> vector<2x384xf32>
    %504 = vector.extract_strided_slice %503 {offsets = [0, 0], sizes = [1, 384], strides = [1, 1]} : vector<2x384xf32> to vector<1x384xf32>
    %cst_198 = arith.constant 1.562500e-02 : f32
    %505 = vector.broadcast %cst_198 : f32 to vector<1x384xf32>
    %506 = arith.mulf %504, %505 : vector<1x384xf32>
    %507 = vector.extract_strided_slice %503 {offsets = [1, 0], sizes = [1, 384], strides = [1, 1]} : vector<2x384xf32> to vector<1x384xf32>
    %cst_199 = arith.constant 1.562500e-02 : f32
    %508 = vector.broadcast %cst_199 : f32 to vector<1x384xf32>
    %509 = arith.mulf %507, %508 : vector<1x384xf32>
    %510 = arith.mulf %506, %506 : vector<1x384xf32>
    %511 = arith.subf %509, %510 : vector<1x384xf32>
    %cst_200 = arith.constant 9.99999974E-6 : f32
    %512 = vector.broadcast %cst_200 : f32 to vector<1x384xf32>
    %513 = arith.addf %511, %512 : vector<1x384xf32>
    %514 = math.rsqrt %513 : vector<1x384xf32>
    %515 = arith.mulf %514, %6 : vector<1x384xf32>
    %516 = arith.mulf %506, %515 : vector<1x384xf32>
    %517 = arith.subf %7, %516 : vector<1x384xf32>
    %518 = vector.broadcast %515 : vector<1x384xf32> to vector<8x384xf32>
    %519 = arith.mulf %494, %518 : vector<8x384xf32>
    %520 = vector.broadcast %517 : vector<1x384xf32> to vector<8x384xf32>
    %521 = arith.addf %519, %520 : vector<8x384xf32>
    %522 = vector.extract_strided_slice %521 {offsets = [0, 0], sizes = [8, 128], strides = [1, 1]} : vector<8x384xf32> to vector<8x128xf32>
    %523 = vector.extract_strided_slice %521 {offsets = [0, 128], sizes = [8, 128], strides = [1, 1]} : vector<8x384xf32> to vector<8x128xf32>
    %524 = vector.extract_strided_slice %521 {offsets = [0, 256], sizes = [8, 128], strides = [1, 1]} : vector<8x384xf32> to vector<8x128xf32>
    %525 = arith.negf %524 : vector<8x128xf32>
    %526 = math.exp %525 : vector<8x128xf32>
    %cst_201 = arith.constant 1.000000e+00 : f32
    %527 = vector.broadcast %cst_201 : f32 to vector<8x128xf32>
    %528 = arith.addf %527, %526 : vector<8x128xf32>
    %529 = arith.divf %527, %528 : vector<8x128xf32>
    %530 = vector.extract_strided_slice %13 {offsets = [48, 0], sizes = [8, 128], strides = [1, 1]} : vector<64x128xf32> to vector<8x128xf32>
    %531 = vector.extract_strided_slice %32 {offsets = [6, 0], sizes = [1, 128], strides = [1, 1]} : vector<8x128xf32> to vector<1x128xf32>
    %532 = vector.broadcast %531 : vector<1x128xf32> to vector<8x128xf32>
    %533 = arith.mulf %530, %532 : vector<8x128xf32>
    %534 = vector.extract_strided_slice %36 {offsets = [6, 0], sizes = [1, 128], strides = [1, 1]} : vector<8x128xf32> to vector<1x128xf32>
    %535 = vector.broadcast %534 : vector<1x128xf32> to vector<8x128xf32>
    %536 = arith.addf %533, %535 : vector<8x128xf32>
    %537 = math.tanh %522 : vector<8x128xf32>
    %538 = arith.mulf %536, %537 : vector<8x128xf32>
    %cst_202 = arith.constant 0.000000e+00 : f32
    %539 = vector.broadcast %cst_202 : f32 to vector<8x128xf32>
    %540 = arith.subf %539, %529 : vector<8x128xf32>
    %541 = math.exp %540 : vector<8x128xf32>
    %542 = arith.mulf %490, %541 : vector<8x128xf32>
    %543 = arith.maximumf %542, %523 : vector<8x128xf32>
    %544 = arith.subf %490, %543 : vector<8x128xf32>
    %545 = arith.subf %544, %529 : vector<8x128xf32>
    %546 = math.exp %545 : vector<8x128xf32>
    %547 = arith.subf %523, %543 : vector<8x128xf32>
    %548 = math.exp %547 : vector<8x128xf32>
    %549 = arith.mulf %488, %546 : vector<8x128xf32>
    %550 = arith.mulf %538, %548 : vector<8x128xf32>
    %551 = arith.addf %549, %550 : vector<8x128xf32>
    %552 = arith.mulf %489, %546 : vector<8x128xf32>
    %553 = arith.addf %552, %548 : vector<8x128xf32>
    %554 = tpu.reciprocal %553 {approx = true} : vector<8x128xf32> -> vector<8x128xf32>
    %555 = arith.mulf %551, %554 : vector<8x128xf32>
    %556 = math.tanh %555 : vector<8x128xf32>
    %c0_203 = arith.constant 0 : index
    %c0_204 = arith.constant 0 : index
    %557 = vector.load %arg20[%c0_203, %c0_204] : memref<8x128xf32, #tpu.memory_space<vmem>>, vector<8x128xf32>
    tpu.vector_store %arg20[%c0_203, %c0_204], %551 {strides = array<i32>} : memref<8x128xf32, #tpu.memory_space<vmem>>, vector<8x128xf32>,
    %c0_205 = arith.constant 0 : index
    %c0_206 = arith.constant 0 : index
    %558 = vector.load %arg21[%c0_205, %c0_206] : memref<8x128xf32, #tpu.memory_space<vmem>>, vector<8x128xf32>
    tpu.vector_store %arg21[%c0_205, %c0_206], %553 {strides = array<i32>} : memref<8x128xf32, #tpu.memory_space<vmem>>, vector<8x128xf32>,
    %c0_207 = arith.constant 0 : index
    %c0_208 = arith.constant 0 : index
    %559 = vector.load %arg22[%c0_207, %c0_208] : memref<8x128xf32, #tpu.memory_space<vmem>>, vector<8x128xf32>
    tpu.vector_store %arg22[%c0_207, %c0_208], %556 {strides = array<i32>} : memref<8x128xf32, #tpu.memory_space<vmem>>, vector<8x128xf32>,
    %c0_209 = arith.constant 0 : index
    %c0_210 = arith.constant 0 : index
    %560 = vector.load %arg23[%c0_209, %c0_210] : memref<8x128xf32, #tpu.memory_space<vmem>>, vector<8x128xf32>
    tpu.vector_store %arg23[%c0_209, %c0_210], %543 {strides = array<i32>} : memref<8x128xf32, #tpu.memory_space<vmem>>, vector<8x128xf32>,
    %c48 = arith.constant 48 : index
    %c0_211 = arith.constant 0 : index
    %561 = vector.load %arg24[%c48, %c0_211] : memref<64x128xf32, #tpu.memory_space<vmem>>, vector<8x128xf32>
    tpu.vector_store %arg24[%c48, %c0_211], %556 {strides = array<i32>} : memref<64x128xf32, #tpu.memory_space<vmem>>, vector<8x128xf32>,
    %c0_212 = arith.constant 0 : index
    %c0_213 = arith.constant 0 : index
    %562 = vector.load %arg22[%c0_212, %c0_213] : memref<8x128xf32, #tpu.memory_space<vmem>>, vector<8x128xf32>
    %c0_214 = arith.constant 0 : index
    %c0_215 = arith.constant 0 : index
    %563 = vector.load %arg20[%c0_214, %c0_215] : memref<8x128xf32, #tpu.memory_space<vmem>>, vector<8x128xf32>
    %c0_216 = arith.constant 0 : index
    %c0_217 = arith.constant 0 : index
    %564 = vector.load %arg21[%c0_216, %c0_217] : memref<8x128xf32, #tpu.memory_space<vmem>>, vector<8x128xf32>
    %c0_218 = arith.constant 0 : index
    %c0_219 = arith.constant 0 : index
    %565 = vector.load %arg23[%c0_218, %c0_219] : memref<8x128xf32, #tpu.memory_space<vmem>>, vector<8x128xf32>
    %566 = vector.extract_strided_slice %12 {offsets = [56, 0], sizes = [8, 384], strides = [1, 1]} : vector<64x384xf32> to vector<8x384xf32>
    %567 = arith.truncf %562 : vector<8x128xf32> to vector<8x128xbf16>
    %cst_220 = arith.constant dense<0.000000e+00> : vector<8x384xf32>
    %568 = tpu.matmul %567, %3, %cst_220 {dimension_numbers = #tpu.dot_dimension_numbers<[1], [0], [0], [1], [0, 0, 1, 1], [], []>} : vector<8x128xbf16>, vector<128x384xbf16>, vector<8x384xf32> -> vector<8x384xf32>
    %569 = arith.addf %566, %568 : vector<8x384xf32>
    %570 = vector.broadcast %5 : vector<8x1xf32> to vector<8x384xf32>
    %571 = arith.mulf %569, %570 : vector<8x384xf32>
    %cst_221 = arith.constant dense<0.000000e+00> : vector<384xf32>
    %572 = vector.multi_reduction <add>, %571, %cst_221 [0] : vector<8x384xf32> to vector<384xf32>
    %573 = vector.shape_cast %572 : vector<384xf32> to vector<1x384xf32>
    %574 = arith.mulf %571, %569 : vector<8x384xf32>
    %cst_222 = arith.constant dense<0.000000e+00> : vector<384xf32>
    %575 = vector.multi_reduction <add>, %574, %cst_222 [0] : vector<8x384xf32> to vector<384xf32>
    %576 = vector.shape_cast %575 : vector<384xf32> to vector<1x384xf32>
    %577 = tpu.concatenate %573, %576 in 0 : vector<1x384xf32>, vector<1x384xf32> -> vector<2x384xf32>
    %cst_223 = arith.constant dense<0.000000e+00> : vector<2x384xf32>
    %578 = tpu.matmul %577, %4, %cst_223 {dimension_numbers = #tpu.dot_dimension_numbers<[1], [0], [0], [1], [0, 0, 1, 1], [], []>} : vector<2x384xf32>, vector<384x384xf32>, vector<2x384xf32> -> vector<2x384xf32>
    %579 = vector.extract_strided_slice %578 {offsets = [0, 0], sizes = [1, 384], strides = [1, 1]} : vector<2x384xf32> to vector<1x384xf32>
    %cst_224 = arith.constant 1.562500e-02 : f32
    %580 = vector.broadcast %cst_224 : f32 to vector<1x384xf32>
    %581 = arith.mulf %579, %580 : vector<1x384xf32>
    %582 = vector.extract_strided_slice %578 {offsets = [1, 0], sizes = [1, 384], strides = [1, 1]} : vector<2x384xf32> to vector<1x384xf32>
    %cst_225 = arith.constant 1.562500e-02 : f32
    %583 = vector.broadcast %cst_225 : f32 to vector<1x384xf32>
    %584 = arith.mulf %582, %583 : vector<1x384xf32>
    %585 = arith.mulf %581, %581 : vector<1x384xf32>
    %586 = arith.subf %584, %585 : vector<1x384xf32>
    %cst_226 = arith.constant 9.99999974E-6 : f32
    %587 = vector.broadcast %cst_226 : f32 to vector<1x384xf32>
    %588 = arith.addf %586, %587 : vector<1x384xf32>
    %589 = math.rsqrt %588 : vector<1x384xf32>
    %590 = arith.mulf %589, %6 : vector<1x384xf32>
    %591 = arith.mulf %581, %590 : vector<1x384xf32>
    %592 = arith.subf %7, %591 : vector<1x384xf32>
    %593 = vector.broadcast %590 : vector<1x384xf32> to vector<8x384xf32>
    %594 = arith.mulf %569, %593 : vector<8x384xf32>
    %595 = vector.broadcast %592 : vector<1x384xf32> to vector<8x384xf32>
    %596 = arith.addf %594, %595 : vector<8x384xf32>
    %597 = vector.extract_strided_slice %596 {offsets = [0, 0], sizes = [8, 128], strides = [1, 1]} : vector<8x384xf32> to vector<8x128xf32>
    %598 = vector.extract_strided_slice %596 {offsets = [0, 128], sizes = [8, 128], strides = [1, 1]} : vector<8x384xf32> to vector<8x128xf32>
    %599 = vector.extract_strided_slice %596 {offsets = [0, 256], sizes = [8, 128], strides = [1, 1]} : vector<8x384xf32> to vector<8x128xf32>
    %600 = arith.negf %599 : vector<8x128xf32>
    %601 = math.exp %600 : vector<8x128xf32>
    %cst_227 = arith.constant 1.000000e+00 : f32
    %602 = vector.broadcast %cst_227 : f32 to vector<8x128xf32>
    %603 = arith.addf %602, %601 : vector<8x128xf32>
    %604 = arith.divf %602, %603 : vector<8x128xf32>
    %605 = vector.extract_strided_slice %13 {offsets = [56, 0], sizes = [8, 128], strides = [1, 1]} : vector<64x128xf32> to vector<8x128xf32>
    %606 = vector.extract_strided_slice %32 {offsets = [7, 0], sizes = [1, 128], strides = [1, 1]} : vector<8x128xf32> to vector<1x128xf32>
    %607 = vector.broadcast %606 : vector<1x128xf32> to vector<8x128xf32>
    %608 = arith.mulf %605, %607 : vector<8x128xf32>
    %609 = vector.extract_strided_slice %36 {offsets = [7, 0], sizes = [1, 128], strides = [1, 1]} : vector<8x128xf32> to vector<1x128xf32>
    %610 = vector.broadcast %609 : vector<1x128xf32> to vector<8x128xf32>
    %611 = arith.addf %608, %610 : vector<8x128xf32>
    %612 = math.tanh %597 : vector<8x128xf32>
    %613 = arith.mulf %611, %612 : vector<8x128xf32>
    %cst_228 = arith.constant 0.000000e+00 : f32
    %614 = vector.broadcast %cst_228 : f32 to vector<8x128xf32>
    %615 = arith.subf %614, %604 : vector<8x128xf32>
    %616 = math.exp %615 : vector<8x128xf32>
    %617 = arith.mulf %565, %616 : vector<8x128xf32>
    %618 = arith.maximumf %617, %598 : vector<8x128xf32>
    %619 = arith.subf %565, %618 : vector<8x128xf32>
    %620 = arith.subf %619, %604 : vector<8x128xf32>
    %621 = math.exp %620 : vector<8x128xf32>
    %622 = arith.subf %598, %618 : vector<8x128xf32>
    %623 = math.exp %622 : vector<8x128xf32>
    %624 = arith.mulf %563, %621 : vector<8x128xf32>
    %625 = arith.mulf %613, %623 : vector<8x128xf32>
    %626 = arith.addf %624, %625 : vector<8x128xf32>
    %627 = arith.mulf %564, %621 : vector<8x128xf32>
    %628 = arith.addf %627, %623 : vector<8x128xf32>
    %629 = tpu.reciprocal %628 {approx = true} : vector<8x128xf32> -> vector<8x128xf32>
    %630 = arith.mulf %626, %629 : vector<8x128xf32>
    %631 = math.tanh %630 : vector<8x128xf32>
    %c0_229 = arith.constant 0 : index
    %c0_230 = arith.constant 0 : index
    %632 = vector.load %arg20[%c0_229, %c0_230] : memref<8x128xf32, #tpu.memory_space<vmem>>, vector<8x128xf32>
    tpu.vector_store %arg20[%c0_229, %c0_230], %626 {strides = array<i32>} : memref<8x128xf32, #tpu.memory_space<vmem>>, vector<8x128xf32>,
    %c0_231 = arith.constant 0 : index
    %c0_232 = arith.constant 0 : index
    %633 = vector.load %arg21[%c0_231, %c0_232] : memref<8x128xf32, #tpu.memory_space<vmem>>, vector<8x128xf32>
    tpu.vector_store %arg21[%c0_231, %c0_232], %628 {strides = array<i32>} : memref<8x128xf32, #tpu.memory_space<vmem>>, vector<8x128xf32>,
    %c0_233 = arith.constant 0 : index
    %c0_234 = arith.constant 0 : index
    %634 = vector.load %arg22[%c0_233, %c0_234] : memref<8x128xf32, #tpu.memory_space<vmem>>, vector<8x128xf32>
    tpu.vector_store %arg22[%c0_233, %c0_234], %631 {strides = array<i32>} : memref<8x128xf32, #tpu.memory_space<vmem>>, vector<8x128xf32>,
    %c0_235 = arith.constant 0 : index
    %c0_236 = arith.constant 0 : index
    %635 = vector.load %arg23[%c0_235, %c0_236] : memref<8x128xf32, #tpu.memory_space<vmem>>, vector<8x128xf32>
    tpu.vector_store %arg23[%c0_235, %c0_236], %618 {strides = array<i32>} : memref<8x128xf32, #tpu.memory_space<vmem>>, vector<8x128xf32>,
    %c56 = arith.constant 56 : index
    %c0_237 = arith.constant 0 : index
    %636 = vector.load %arg24[%c56, %c0_237] : memref<64x128xf32, #tpu.memory_space<vmem>>, vector<8x128xf32>
    tpu.vector_store %arg24[%c56, %c0_237], %631 {strides = array<i32>} : memref<64x128xf32, #tpu.memory_space<vmem>>, vector<8x128xf32>,
    %c0_238 = arith.constant 0 : index
    %c0_239 = arith.constant 0 : index
    %637 = vector.load %arg24[%c0_238, %c0_239] : memref<64x128xf32, #tpu.memory_space<vmem>>, vector<64x128xf32>
    %638 = arith.truncf %637 : vector<64x128xf32> to vector<64x128xbf16>
    %c0_240 = arith.constant 0 : index
    %c0_241 = arith.constant 0 : index
    %639 = vector.load %arg12[%c0_240, %c0_241] : memref<128x128xbf16, #tpu.memory_space<vmem>>, vector<128x128xbf16>
    %cst_242 = arith.constant dense<0.000000e+00> : vector<64x128xf32>
    %640 = tpu.matmul %638, %639, %cst_242 {dimension_numbers = #tpu.dot_dimension_numbers<[1], [0], [0], [1], [0, 0, 1, 1], [], []>} : vector<64x128xbf16>, vector<128x128xbf16>, vector<64x128xf32> -> vector<64x128xf32>
    %c0_243 = arith.constant 0 : index
    %c0_244 = arith.constant 0 : index
    %641 = vector.load %arg13[%c0_243, %c0_244] : memref<1x128xf32, #tpu.memory_space<vmem>>, vector<1x128xf32>
    %642 = vector.broadcast %641 : vector<1x128xf32> to vector<64x128xf32>
    %643 = arith.addf %640, %642 : vector<64x128xf32>
    %c0_245 = arith.constant 0 : index
    %c0_246 = arith.constant 0 : index
    %644 = vector.load %arg19[%c0_245, %c0_246] : memref<64x128xf32, #tpu.memory_space<vmem>>, vector<64x128xf32>
    tpu.vector_store %arg19[%c0_245, %c0_246], %643 {strides = array<i32>} : memref<64x128xf32, #tpu.memory_space<vmem>>, vector<64x128xf32>,
    return
  }
  func.func @transform_0(%arg0: i32) -> (i32, i32) {
    %c0_i32 = arith.constant 0 : i32
    %c0_i32_0 = arith.constant 0 : i32
    return %arg0, %c0_i32 : i32, i32
  }
  func.func @transform_1(%arg0: i32) -> (i32, i32) {
    %c0_i32 = arith.constant 0 : i32
    %c0_i32_0 = arith.constant 0 : i32
    %c0_i32_1 = arith.constant 0 : i32
    return %c0_i32, %c0_i32_0 : i32, i32
  }
  func.func @transform_2(%arg0: i32) -> (i32, i32) {
    %c0_i32 = arith.constant 0 : i32
    %c0_i32_0 = arith.constant 0 : i32
    %c0_i32_1 = arith.constant 0 : i32
    return %c0_i32, %c0_i32_0 : i32, i32
  }
  func.func @transform_3(%arg0: i32) -> (i32, i32) {
    %c0_i32 = arith.constant 0 : i32
    %c0_i32_0 = arith.constant 0 : i32
    %c0_i32_1 = arith.constant 0 : i32
    return %c0_i32, %c0_i32_0 : i32, i32
  }
  func.func @transform_4(%arg0: i32) -> (i32, i32) {
    %c0_i32 = arith.constant 0 : i32
    %c0_i32_0 = arith.constant 0 : i32
    %c0_i32_1 = arith.constant 0 : i32
    return %c0_i32, %c0_i32_0 : i32, i32
  }
  func.func @transform_5(%arg0: i32) -> (i32, i32) {
    %c0_i32 = arith.constant 0 : i32
    %c0_i32_0 = arith.constant 0 : i32
    %c0_i32_1 = arith.constant 0 : i32
    return %c0_i32, %c0_i32_0 : i32, i32
  }
  func.func @transform_6(%arg0: i32) -> (i32, i32) {
    %c0_i32 = arith.constant 0 : i32
    %c0_i32_0 = arith.constant 0 : i32
    %c0_i32_1 = arith.constant 0 : i32
    return %c0_i32, %c0_i32_0 : i32, i32
  }
  func.func @transform_7(%arg0: i32) -> (i32, i32) {
    %c0_i32 = arith.constant 0 : i32
    %c0_i32_0 = arith.constant 0 : i32
    %c0_i32_1 = arith.constant 0 : i32
    return %c0_i32, %c0_i32_0 : i32, i32
  }
  func.func @transform_8(%arg0: i32) -> (i32, i32) {
    %c0_i32 = arith.constant 0 : i32
    %c0_i32_0 = arith.constant 0 : i32
    %c0_i32_1 = arith.constant 0 : i32
    return %c0_i32, %c0_i32_0 : i32, i32
  }
  func.func @transform_9(%arg0: i32) -> (i32, i32) {
    %c0_i32 = arith.constant 0 : i32
    %c0_i32_0 = arith.constant 0 : i32
    %c0_i32_1 = arith.constant 0 : i32
    return %c0_i32, %c0_i32_0 : i32, i32
  }
  func.func @transform_10(%arg0: i32) -> (i32, i32) {
    %c0_i32 = arith.constant 0 : i32
    %c0_i32_0 = arith.constant 0 : i32
    %c0_i32_1 = arith.constant 0 : i32
    return %c0_i32, %c0_i32_0 : i32, i32
  }
  func.func @transform_11(%arg0: i32) -> (i32, i32) {
    %c0_i32 = arith.constant 0 : i32
    %c0_i32_0 = arith.constant 0 : i32
    %c0_i32_1 = arith.constant 0 : i32
    return %c0_i32, %c0_i32_0 : i32, i32
  }
  func.func @transform_12(%arg0: i32) -> (i32, i32) {
    %c0_i32 = arith.constant 0 : i32
    %c0_i32_0 = arith.constant 0 : i32
    %c0_i32_1 = arith.constant 0 : i32
    return %c0_i32, %c0_i32_0 : i32, i32
  }
  func.func @transform_13(%arg0: i32) -> (i32, i32) {
    %c0_i32 = arith.constant 0 : i32
    %c0_i32_0 = arith.constant 0 : i32
    %c0_i32_1 = arith.constant 0 : i32
    return %c0_i32, %c0_i32_0 : i32, i32
  }
  func.func @transform_14(%arg0: i32) -> (i32, i32) {
    %c0_i32 = arith.constant 0 : i32
    %c0_i32_0 = arith.constant 0 : i32
    %c0_i32_1 = arith.constant 0 : i32
    return %c0_i32, %c0_i32_0 : i32, i32
  }
  func.func @transform_15(%arg0: i32) -> (i32, i32) {
    %c0_i32 = arith.constant 0 : i32
    %c0_i32_0 = arith.constant 0 : i32
    %c0_i32_1 = arith.constant 0 : i32
    return %c0_i32, %c0_i32_0 : i32, i32
  }
  func.func @transform_16(%arg0: i32) -> (i32, i32) {
    %c0_i32 = arith.constant 0 : i32
    %c0_i32_0 = arith.constant 0 : i32
    %c0_i32_1 = arith.constant 0 : i32
    return %c0_i32, %c0_i32_0 : i32, i32
  }
  func.func @transform_17(%arg0: i32) -> (i32, i32) {
    %c0_i32 = arith.constant 0 : i32
    %c0_i32_0 = arith.constant 0 : i32
    %c0_i32_1 = arith.constant 0 : i32
    return %c0_i32, %c0_i32_0 : i32, i32
  }
  func.func @transform_18(%arg0: i32) -> (i32, i32) {
    %c0_i32 = arith.constant 0 : i32
    %c0_i32_0 = arith.constant 0 : i32
    return %arg0, %c0_i32 : i32, i32
  }
  func.func @transform_19(%arg0: i32) -> (i32, i32) {
    %c0_i32 = arith.constant 0 : i32
    %c0_i32_0 = arith.constant 0 : i32
    %c0_i32_1 = arith.constant 0 : i32
    return %c0_i32, %c0_i32_0 : i32, i32
  }
  func.func @transform_20(%arg0: i32) -> (i32, i32) {
    %c0_i32 = arith.constant 0 : i32
    %c0_i32_0 = arith.constant 0 : i32
    %c0_i32_1 = arith.constant 0 : i32
    return %c0_i32, %c0_i32_0 : i32, i32
  }
  func.func @transform_21(%arg0: i32) -> (i32, i32) {
    %c0_i32 = arith.constant 0 : i32
    %c0_i32_0 = arith.constant 0 : i32
    %c0_i32_1 = arith.constant 0 : i32
    return %c0_i32, %c0_i32_0 : i32, i32
  }
  func.func @transform_22(%arg0: i32) -> (i32, i32) {
    %c0_i32 = arith.constant 0 : i32
    %c0_i32_0 = arith.constant 0 : i32
    %c0_i32_1 = arith.constant 0 : i32
    return %c0_i32, %c0_i32_0 : i32, i32
  }
}

</mosaic_0001>

<llo_original>
// kernel: tpu_custom_call.1
$region0: #{tpu_custom_call.1}
  #allocation0 [shape = 'u32[]', space=smem, size = 0x4, offset = 0x4, fixed_abs, tag = 'smem constant byte address 0x4 - core index']
  #allocation1 [shape = 'u32[144,128]{1,0:T(1,128)}', space=vmem, size = 0x12000, scoped, tag = 'internal scratch']
  #allocation2 [shape = 'f32[64,128]{1,0:T(8,128)}', space=vmem, size = 0x8000, scoped, tag = 'scratch operand']
  %s0 = inlined_call_operand.vmem [shape: f32[64,8], index: 0, kind: input, shape index: {}]
  %s1 = inlined_call_operand.vmem [shape: bf16[8,512], index: 1, kind: input, shape index: {}]
  %s2 = inlined_call_operand.hbm [shape: bf16[128,384], index: 2, kind: input, shape index: {}]
  %s3 = inlined_call_operand.hbm [shape: f32[1,384], index: 3, kind: input, shape index: {}]
  %s4 = inlined_call_operand.hbm [shape: f32[1,384], index: 4, kind: input, shape index: {}]
  %s5 = inlined_call_operand.vmem [shape: f32[1,128], index: 5, kind: input, shape index: {}]
  %s6 = inlined_call_operand.vmem [shape: f32[1,128], index: 6, kind: input, shape index: {}]
  %s7 = inlined_call_operand.hbm [shape: f32[384,384], index: 7, kind: input, shape index: {}]
  %s8 = inlined_call_operand.hbm [shape: f32[128,128], index: 8, kind: input, shape index: {}]
  %s9 = inlined_call_operand.vmem [shape: f32[8,64], index: 9, kind: input, shape index: {}]
  %s10 = inlined_call_operand.vmem [shape: f32[8,1], index: 10, kind: input, shape index: {}]
  %s11 = inlined_call_operand.vmem [shape: bf16[128,128], index: 11, kind: input, shape index: {}]
  %s12 = inlined_call_operand.vmem [shape: f32[1,128], index: 12, kind: input, shape index: {}]
  %s13 = inlined_call_operand.vmem [shape: f32[1,128], index: 13, kind: input, shape index: {}]
  %s14 = inlined_call_operand.vmem [shape: f32[8,128], index: 14, kind: input, shape index: {}]
  %s15 = inlined_call_operand.vmem [shape: f32[8,128], index: 15, kind: input, shape index: {}]
  %s16 = inlined_call_operand.vmem [shape: f32[8,128], index: 16, kind: input, shape index: {}]
  %s17 = inlined_call_operand.vmem [shape: f32[8,128], index: 17, kind: input, shape index: {}]
  %s18 = inlined_call_operand.hbm [shape: f32[64,128], index: 18, kind: output, shape index: {0}]
  %s19 = inlined_call_operand.hbm [shape: f32[8,128], index: 19, kind: output, shape index: {1}]
  %s20 = inlined_call_operand.hbm [shape: f32[8,128], index: 20, kind: output, shape index: {2}]
  %s21 = inlined_call_operand.hbm [shape: f32[8,128], index: 21, kind: output, shape index: {3}]
  %s22 = inlined_call_operand.hbm [shape: f32[8,128], index: 22, kind: output, shape index: {4}]
  %23 = xla_tuple %s18, %s19, %s20, %s21, %s22
  %s24 = sld [smem:[#allocation0]]
  $region138: #{tpu_custom_call.1} parent=0
    _
  %s26 = ssub.s32 1, %s24
  %s27 = scalar_select 0, %s26, %s24
  $region1: #{tpu_custom_call.1} parent=0
    #allocation3 [shape = 'u8[98304]{0}', space=vmem, size = 0x18000, scoped, tag = 'input window, operand 2, single buffered']
    #allocation4 [shape = 's32[1]{0}', space=sflag, size = 0x4, scoped, tag = 'scoped memory for tpu_custom_call.1']
    #allocation5 [shape = 's32[1]{0}', space=sflag, size = 0x4, scoped, tag = 'scoped memory for tpu_custom_call.1']
    #allocation6 [shape = 'u8[1536]{0}', space=vmem, size = 0x800, scoped, tag = 'input window, operand 3, single buffered']
    #allocation7 [shape = 's32[1]{0}', space=sflag, size = 0x4, scoped, tag = 'scoped memory for tpu_custom_call.1']
    #allocation8 [shape = 'u8[1536]{0}', space=vmem, size = 0x800, scoped, tag = 'input window, operand 4, single buffered']
    #allocation9 [shape = 'u8[589824]{0}', space=vmem, size = 0x90000, scoped, tag = 'input window, operand 7, single buffered']
    #allocation10 [shape = 's32[1]{0}', space=sflag, size = 0x4, scoped, tag = 'scoped memory for tpu_custom_call.1']
    #allocation11 [shape = 'u8[65536]{0}', space=vmem, size = 0x10000, scoped, tag = 'input window, operand 8, single buffered']
    #allocation12 [shape = 'u8[32768]{0}', space=vmem, size = 0x8000, scoped, tag = 'output window, operand 0, single buffered']
    #allocation13 [shape = 'u8[4096]{0}', space=vmem, size = 0x1000, scoped, tag = 'output window, operand 1, single buffered']
    #allocation14 [shape = 's32[1]{0}', space=sflag, size = 0x4, scoped, tag = 'scoped memory for tpu_custom_call.1']
    #allocation15 [shape = 'u8[4096]{0}', space=vmem, size = 0x1000, scoped, tag = 'output window, operand 2, single buffered']
    #allocation16 [shape = 'u8[4096]{0}', space=vmem, size = 0x1000, scoped, tag = 'output window, operand 3, single buffered']
    #allocation17 [shape = 's32[1]{0}', space=sflag, size = 0x4, scoped, tag = 'scoped memory for tpu_custom_call.1']
    #allocation18 [shape = 'u8[4096]{0}', space=vmem, size = 0x1000, scoped, tag = 'output window, operand 4, single buffered']
    %28 = vsyncpa [#allocation4], 0
    %29 = vsyncpa [#allocation7], 0
    %30 = vsyncpa [#allocation10], 0
    %31 = vsyncpa [#allocation5], 0
    %32 = vsyncpa [#allocation14], 0
    %33 = vsyncpa [#allocation17], 0
    // Predicated region
    $region2: #{tpu_custom_call.1} parent=1 // pred_check
      _
    $region3: #{tpu_custom_call.1} parent=1 // pred_check_branch
      %35 = sbr.rel (0) target = $region5
    $region4: #{tpu_custom_call.1} parent=1 // pred_region
      _
    $region5: #{tpu_custom_call.1} parent=1 // pred_fallthru
      _
    // Predicated region
    $region6: #{tpu_custom_call.1} parent=1 // pred_check
      _
    $region7: #{tpu_custom_call.1} parent=1 // pred_check_branch
      %37 = sbr.rel (0) target = $region9
    $region8: #{tpu_custom_call.1} parent=1 // pred_region
      _
    $region9: #{tpu_custom_call.1} parent=1 // pred_fallthru
      _
    // Predicated region
    $region10: #{tpu_custom_call.1} parent=1 // pred_check
      _
    $region11: #{tpu_custom_call.1} parent=1 // pred_check_branch
      %39 = sbr.rel (0) target = $region13
    $region12: #{tpu_custom_call.1} parent=1 // pred_region
      %s41 = ssub.s32 3072, 3072
      %42 = vsyncadd [#allocation4], %s41
      %s43 = sshll.u32 [#allocation3], 4
      %s44 = int_to_ptr.vmem [resolvable:$true] %s43
      %49 = dma.hbm_to_vmem [thread:$0]  %s2, 3072, %s44, [#allocation4], 192, 192, 12
    $region13: #{tpu_custom_call.1} parent=1 // pred_fallthru
      _
    // Predicated region
    $region14: #{tpu_custom_call.1} parent=1 // pred_check
      _
    $region15: #{tpu_custom_call.1} parent=1 // pred_check_branch
      %51 = sbr.rel (0) target = $region17
    $region16: #{tpu_custom_call.1} parent=1 // pred_region
      %s53 = ssub.s32 48, 48
      %54 = vsyncadd [#allocation7], %s53
      %s56 = sshll.u32 [#allocation6], 4
      %s57 = int_to_ptr.vmem [resolvable:$true] %s56
      %59 = dma.hbm_to_vmem [thread:$0]  %s3, 48, %s57, [#allocation7]
    $region17: #{tpu_custom_call.1} parent=1 // pred_fallthru
      _
    // Predicated region
    $region18: #{tpu_custom_call.1} parent=1 // pred_check
      _
    $region19: #{tpu_custom_call.1} parent=1 // pred_check_branch
      %61 = sbr.rel (0) target = $region21
    $region20: #{tpu_custom_call.1} parent=1 // pred_region
      %s63 = ssub.s32 48, 48
      %64 = vsyncadd [#allocation7], %s63
      %s66 = sshll.u32 [#allocation8], 4
      %s67 = int_to_ptr.vmem [resolvable:$true] %s66
      %69 = dma.hbm_to_vmem [thread:$0]  %s4, 48, %s67, [#allocation7]
    $region21: #{tpu_custom_call.1} parent=1 // pred_fallthru
      _
    // Predicated region
    $region22: #{tpu_custom_call.1} parent=1 // pred_check
      _
    $region23: #{tpu_custom_call.1} parent=1 // pred_check_branch
      %71 = sbr.rel (0) target = $region25
    $region24: #{tpu_custom_call.1} parent=1 // pred_region
      _
    $region25: #{tpu_custom_call.1} parent=1 // pred_fallthru
      _
    // Predicated region
    $region26: #{tpu_custom_call.1} parent=1 // pred_check
      _
    $region27: #{tpu_custom_call.1} parent=1 // pred_check_branch
      %73 = sbr.rel (0) target = $region29
    $region28: #{tpu_custom_call.1} parent=1 // pred_region
      _
    $region29: #{tpu_custom_call.1} parent=1 // pred_fallthru
      _
    // Predicated region
    $region30: #{tpu_custom_call.1} parent=1 // pred_check
      _
    $region31: #{tpu_custom_call.1} parent=1 // pred_check_branch
      %75 = sbr.rel (0) target = $region33
    $region32: #{tpu_custom_call.1} parent=1 // pred_region
      %s77 = ssub.s32 18432, 18432
      %78 = vsyncadd [#allocation10], %s77
      %s79 = sshll.u32 [#allocation9], 4
      %s80 = int_to_ptr.vmem [resolvable:$true] %s79
      %85 = dma.hbm_to_vmem [thread:$0]  %s7, 18432, %s80, [#allocation10], 384, 384, 24
    $region33: #{tpu_custom_call.1} parent=1 // pred_fallthru
      _
    // Predicated region
    $region34: #{tpu_custom_call.1} parent=1 // pred_check
      _
    $region35: #{tpu_custom_call.1} parent=1 // pred_check_branch
      %87 = sbr.rel (0) target = $region37
    $region36: #{tpu_custom_call.1} parent=1 // pred_region
      %s89 = ssub.s32 2048, 2048
      %90 = vsyncadd [#allocation10], %s89
      %s91 = sshll.u32 [#allocation11], 4
      %s92 = int_to_ptr.vmem [resolvable:$true] %s91
      %97 = dma.hbm_to_vmem [thread:$0]  %s8, 2048, %s92, [#allocation10], 128, 128, 8
    $region37: #{tpu_custom_call.1} parent=1 // pred_fallthru
      _
    // Predicated region
    $region38: #{tpu_custom_call.1} parent=1 // pred_check
      _
    $region39: #{tpu_custom_call.1} parent=1 // pred_check_branch
      %99 = sbr.rel (0) target = $region41
    $region40: #{tpu_custom_call.1} parent=1 // pred_region
      _
    $region41: #{tpu_custom_call.1} parent=1 // pred_fallthru
      _
    // Predicated region
    $region42: #{tpu_custom_call.1} parent=1 // pred_check
      _
    $region43: #{tpu_custom_call.1} parent=1 // pred_check_branch
      %101 = sbr.rel (0) target = $region45
    $region44: #{tpu_custom_call.1} parent=1 // pred_region
      _
    $region45: #{tpu_custom_call.1} parent=1 // pred_fallthru
      _
    // Predicated region
    $region46: #{tpu_custom_call.1} parent=1 // pred_check
      _
    $region47: #{tpu_custom_call.1} parent=1 // pred_check_branch
      %103 = sbr.rel (0) target = $region49
    $region48: #{tpu_custom_call.1} parent=1 // pred_region
      _
    $region49: #{tpu_custom_call.1} parent=1 // pred_fallthru
      _
    // Predicated region
    $region50: #{tpu_custom_call.1} parent=1 // pred_check
      _
    $region51: #{tpu_custom_call.1} parent=1 // pred_check_branch
      %105 = sbr.rel (0) target = $region53
    $region52: #{tpu_custom_call.1} parent=1 // pred_region
      _
    $region53: #{tpu_custom_call.1} parent=1 // pred_fallthru
      _
    // Predicated region
    $region54: #{tpu_custom_call.1} parent=1 // pred_check
      _
    $region55: #{tpu_custom_call.1} parent=1 // pred_check_branch
      %107 = sbr.rel (0) target = $region57
    $region56: #{tpu_custom_call.1} parent=1 // pred_region
      _
    $region57: #{tpu_custom_call.1} parent=1 // pred_fallthru
      _
    // Predicated region
    $region58: #{tpu_custom_call.1} parent=1 // pred_check
      _
    $region59: #{tpu_custom_call.1} parent=1 // pred_check_branch
      %109 = sbr.rel (0) target = $region61
    $region60: #{tpu_custom_call.1} parent=1 // pred_region
      _
    $region61: #{tpu_custom_call.1} parent=1 // pred_fallthru
      _
    // Predicated region
    $region62: #{tpu_custom_call.1} parent=1 // pred_check
      _
    $region63: #{tpu_custom_call.1} parent=1 // pred_check_branch
      %111 = sbr.rel (0) target = $region65
    $region64: #{tpu_custom_call.1} parent=1 // pred_region
      _
    $region65: #{tpu_custom_call.1} parent=1 // pred_fallthru
      _
    // Predicated region
    $region66: #{tpu_custom_call.1} parent=1 // pred_check
      _
    $region67: #{tpu_custom_call.1} parent=1 // pred_check_branch
      %113 = sbr.rel (0) target = $region69
    $region68: #{tpu_custom_call.1} parent=1 // pred_region
      _
    $region69: #{tpu_custom_call.1} parent=1 // pred_fallthru
      _
    // Predicated region
    $region70: #{tpu_custom_call.1} parent=1 // pred_check
      _
    $region71: #{tpu_custom_call.1} parent=1 // pred_check_branch
      %115 = sbr.rel (0) target = $region73
    $region72: #{tpu_custom_call.1} parent=1 // pred_region
      _
    $region73: #{tpu_custom_call.1} parent=1 // pred_fallthru
      _
    // Predicated region
    $region74: #{tpu_custom_call.1} parent=1 // pred_check
      _
    $region75: #{tpu_custom_call.1} parent=1 // pred_check_branch
      %117 = sbr.rel (0) target = $region77
    $region76: #{tpu_custom_call.1} parent=1 // pred_region
      %118 = dma.done [#allocation4], 3072
    $region77: #{tpu_custom_call.1} parent=1 // pred_fallthru
      _
    // Predicated region
    $region78: #{tpu_custom_call.1} parent=1 // pred_check
      _
    $region79: #{tpu_custom_call.1} parent=1 // pred_check_branch
      %120 = sbr.rel (0) target = $region81
    $region80: #{tpu_custom_call.1} parent=1 // pred_region
      %121 = dma.done [#allocation7], 48
    $region81: #{tpu_custom_call.1} parent=1 // pred_fallthru
      _
    // Predicated region
    $region82: #{tpu_custom_call.1} parent=1 // pred_check
      _
    $region83: #{tpu_custom_call.1} parent=1 // pred_check_branch
      %123 = sbr.rel (0) target = $region85
    $region84: #{tpu_custom_call.1} parent=1 // pred_region
      %124 = dma.done [#allocation7], 48
    $region85: #{tpu_custom_call.1} parent=1 // pred_fallthru
      _
    // Predicated region
    $region86: #{tpu_custom_call.1} parent=1 // pred_check
      _
    $region87: #{tpu_custom_call.1} parent=1 // pred_check_branch
      %126 = sbr.rel (0) target = $region89
    $region88: #{tpu_custom_call.1} parent=1 // pred_region
      %127 = dma.done [#allocation10], 18432
    $region89: #{tpu_custom_call.1} parent=1 // pred_fallthru
      _
    // Predicated region
    $region90: #{tpu_custom_call.1} parent=1 // pred_check
      _
    $region91: #{tpu_custom_call.1} parent=1 // pred_check_branch
      %129 = sbr.rel (0) target = $region93
    $region92: #{tpu_custom_call.1} parent=1 // pred_region
      %130 = dma.done [#allocation10], 2048
    $region93: #{tpu_custom_call.1} parent=1 // pred_fallthru
      _
    %p132 = scmp.eq.s32.totalorder 0, 0
    // Predicated region
    $region94: #{tpu_custom_call.1} parent=1 // pred_check
      %p133 = pneg %p132
    $region95: #{tpu_custom_call.1} parent=1 // pred_check_branch
      %135 = sbr.rel (%p133) target = $region97
    $region96: #{tpu_custom_call.1} parent=1 // pred_region
      %v136 = vld [vmem:[%s16] sm:$0xff]
      %v137 = vld [vmem:[%s13] sm:$0x1]
      %v138 = vtanh.pop %v137
      %v140 = vlaneseq
      %v141 = vshrl.u32 %v140, 7
      %v142 = vsub.s32 0, %v141
      %v143 = vrot.slane %v138, %v142
      %v145 = vadd.f32 %v136, %v143
      %146 = vst [vmem:[#allocation16] sm:$0xff] %v145
      %v147 = vld [vmem:[%s14] sm:$0xff]
      %148 = vst [vmem:[#allocation13] sm:$0xff] %v147
      %v149 = vld [vmem:[%s15] sm:$0xff]
      %150 = vst [vmem:[#allocation15] sm:$0xff] %v149
      %v151 = vld [vmem:[%s17] sm:$0xff]
      %152 = vst [vmem:[#allocation18] sm:$0xff] %v151
    $region97: #{tpu_custom_call.1} parent=1 // pred_fallthru
      _
    %v153 = vld [vmem:[#allocation3] sm:$0xff]
    %v154 = vld [vmem:[#allocation3 + $0x8] sm:$0xf]
    %v155 = vld [vmem:[#allocation3 + $0xc] sm:$0xff]
    %v156 = vld [vmem:[#allocation3 + $0x14] sm:$0xf]
    %v157 = vld [vmem:[#allocation3 + $0x18] sm:$0xff]
    %v158 = vld [vmem:[#allocation3 + $0x20] sm:$0xf]
    %v159 = vld [vmem:[#allocation3 + $0x24] sm:$0xff]
    %v160 = vld [vmem:[#allocation3 + $0x2c] sm:$0xf]
    %v161 = vld [vmem:[#allocation3 + $0x30] sm:$0xff]
    %v162 = vld [vmem:[#allocation3 + $0x38] sm:$0xf]
    %v163 = vld [vmem:[#allocation3 + $0x3c] sm:$0xff]
    %v164 = vld [vmem:[#allocation3 + $0x44] sm:$0xf]
    %v165 = vld [vmem:[#allocation3 + $0x48] sm:$0xff]
    %v166 = vld [vmem:[#allocation3 + $0x50] sm:$0xf]
    %v167 = vld [vmem:[#allocation3 + $0x54] sm:$0xff]
    %v168 = vld [vmem:[#allocation3 + $0x5c] sm:$0xf]
    %v169 = vld [vmem:[#allocation3 + $0x60] sm:$0xff]
    %v170 = vld [vmem:[#allocation3 + $0x68] sm:$0xf]
    %v171 = vld [vmem:[#allocation3 + $0x6c] sm:$0xff]
    %v172 = vld [vmem:[#allocation3 + $0x74] sm:$0xf]
    %v173 = vld [vmem:[#allocation3 + $0x78] sm:$0xff]
    %v174 = vld [vmem:[#allocation3 + $0x80] sm:$0xf]
    %v175 = vld [vmem:[#allocation3 + $0x84] sm:$0xff]
    %v176 = vld [vmem:[#allocation3 + $0x8c] sm:$0xf]
    %v177 = vld [vmem:[#allocation3 + $0x90] sm:$0xff]
    %v178 = vld [vmem:[#allocation3 + $0x98] sm:$0xf]
    %v179 = vld [vmem:[#allocation3 + $0x9c] sm:$0xff]
    %v180 = vld [vmem:[#allocation3 + $0xa4] sm:$0xf]
    %v181 = vld [vmem:[#allocation3 + $0xa8] sm:$0xff]
    %v182 = vld [vmem:[#allocation3 + $0xb0] sm:$0xf]
    %v183 = vld [vmem:[#allocation3 + $0xb4] sm:$0xff]
    %v184 = vld [vmem:[#allocation3 + $0xbc] sm:$0xf]
    %v185 = vld [vmem:[#allocation9] sm:$0xff]
    %v186 = vld [vmem:[#allocation9 + $0x8] sm:$0xff]
    %v187 = vld [vmem:[#allocation9 + $0x10] sm:$0xff]
    %v188 = vld [vmem:[#allocation9 + $0x18] sm:$0xff]
    %v189 = vld [vmem:[#allocation9 + $0x20] sm:$0xff]
    %v190 = vld [vmem:[#allocation9 + $0x28] sm:$0xff]
    %v191 = vld [vmem:[#allocation9 + $0x30] sm:$0xff]
    %v192 = vld [vmem:[#allocation9 + $0x38] sm:$0xff]
    %v193 = vld [vmem:[#allocation9 + $0x40] sm:$0xff]
    %v194 = vld [vmem:[#allocation9 + $0x48] sm:$0xff]
    %v195 = vld [vmem:[#allocation9 + $0x50] sm:$0xff]
    %v196 = vld [vmem:[#allocation9 + $0x58] sm:$0xff]
    %v197 = vld [vmem:[#allocation9 + $0x60] sm:$0xff]
    %v198 = vld [vmem:[#allocation9 + $0x68] sm:$0xff]
    %v199 = vld [vmem:[#allocation9 + $0x70] sm:$0xff]
    %v200 = vld [vmem:[#allocation9 + $0x78] sm:$0xff]
    %v201 = vld [vmem:[#allocation9 + $0x80] sm:$0xff]
    %v202 = vld [vmem:[#allocation9 + $0x88] sm:$0xff]
    %v203 = vld [vmem:[#allocation9 + $0x90] sm:$0xff]
    %v204 = vld [vmem:[#allocation9 + $0x98] sm:$0xff]
    %v205 = vld [vmem:[#allocation9 + $0xa0] sm:$0xff]
    %v206 = vld [vmem:[#allocation9 + $0xa8] sm:$0xff]
    %v207 = vld [vmem:[#allocation9 + $0xb0] sm:$0xff]
    %v208 = vld [vmem:[#allocation9 + $0xb8] sm:$0xff]
    %v209 = vld [vmem:[#allocation9 + $0xc0] sm:$0xff]
    %v210 = vld [vmem:[#allocation9 + $0xc8] sm:$0xff]
    %v211 = vld [vmem:[#allocation9 + $0xd0] sm:$0xff]
    %v212 = vld [vmem:[#allocation9 + $0xd8] sm:$0xff]
    %v213 = vld [vmem:[#allocation9 + $0xe0] sm:$0xff]
    %v214 = vld [vmem:[#allocation9 + $0xe8] sm:$0xff]
    %v215 = vld [vmem:[#allocation9 + $0xf0] sm:$0xff]
    %v216 = vld [vmem:[#allocation9 + $0xf8] sm:$0xff]
    %v217 = vld [vmem:[#allocation9 + $0x100] sm:$0xff]
    %v218 = vld [vmem:[#allocation9 + $0x108] sm:$0xff]
    %v219 = vld [vmem:[#allocation9 + $0x110] sm:$0xff]
    %v220 = vld [vmem:[#allocation9 + $0x118] sm:$0xff]
    %v221 = vld [vmem:[#allocation9 + $0x120] sm:$0xff]
    %v222 = vld [vmem:[#allocation9 + $0x128] sm:$0xff]
    %v223 = vld [vmem:[#allocation9 + $0x130] sm:$0xff]
    %v224 = vld [vmem:[#allocation9 + $0x138] sm:$0xff]
    %v225 = vld [vmem:[#allocation9 + $0x140] sm:$0xff]
    %v226 = vld [vmem:[#allocation9 + $0x148] sm:$0xff]
    %v227 = vld [vmem:[#allocation9 + $0x150] sm:$0xff]
    %v228 = vld [vmem:[#allocation9 + $0x158] sm:$0xff]
    %v229 = vld [vmem:[#allocation9 + $0x160] sm:$0xff]
    %v230 = vld [vmem:[#allocation9 + $0x168] sm:$0xff]
    %v231 = vld [vmem:[#allocation9 + $0x170] sm:$0xff]
    %v232 = vld [vmem:[#allocation9 + $0x178] sm:$0xff]
    %v233 = vld [vmem:[#allocation9 + $0x180] sm:$0xff]
    %v234 = vld [vmem:[#allocation9 + $0x188] sm:$0xff]
    %v235 = vld [vmem:[#allocation9 + $0x190] sm:$0xff]
    %v236 = vld [vmem:[#allocation9 + $0x198] sm:$0xff]
    %v237 = vld [vmem:[#allocation9 + $0x1a0] sm:$0xff]
    %v238 = vld [vmem:[#allocation9 + $0x1a8] sm:$0xff]
    %v239 = vld [vmem:[#allocation9 + $0x1b0] sm:$0xff]
    %v240 = vld [vmem:[#allocation9 + $0x1b8] sm:$0xff]
    %v241 = vld [vmem:[#allocation9 + $0x1c0] sm:$0xff]
    %v242 = vld [vmem:[#allocation9 + $0x1c8] sm:$0xff]
    %v243 = vld [vmem:[#allocation9 + $0x1d0] sm:$0xff]
    %v244 = vld [vmem:[#allocation9 + $0x1d8] sm:$0xff]
    %v245 = vld [vmem:[#allocation9 + $0x1e0] sm:$0xff]
    %v246 = vld [vmem:[#allocation9 + $0x1e8] sm:$0xff]
    %v247 = vld [vmem:[#allocation9 + $0x1f0] sm:$0xff]
    %v248 = vld [vmem:[#allocation9 + $0x1f8] sm:$0xff]
    %v249 = vld [vmem:[#allocation9 + $0x200] sm:$0xff]
    %v250 = vld [vmem:[#allocation9 + $0x208] sm:$0xff]
    %v251 = vld [vmem:[#allocation9 + $0x210] sm:$0xff]
    %v252 = vld [vmem:[#allocation9 + $0x218] sm:$0xff]
    %v253 = vld [vmem:[#allocation9 + $0x220] sm:$0xff]
    %v254 = vld [vmem:[#allocation9 + $0x228] sm:$0xff]
    %v255 = vld [vmem:[#allocation9 + $0x230] sm:$0xff]
    %v256 = vld [vmem:[#allocation9 + $0x238] sm:$0xff]
    %v257 = vld [vmem:[#allocation9 + $0x240] sm:$0xff]
    %v258 = vld [vmem:[#allocation9 + $0x248] sm:$0xff]
    %v259 = vld [vmem:[#allocation9 + $0x250] sm:$0xff]
    %v260 = vld [vmem:[#allocation9 + $0x258] sm:$0xff]
    %v261 = vld [vmem:[#allocation9 + $0x260] sm:$0xff]
    %v262 = vld [vmem:[#allocation9 + $0x268] sm:$0xff]
    %v263 = vld [vmem:[#allocation9 + $0x270] sm:$0xff]
    %v264 = vld [vmem:[#allocation9 + $0x278] sm:$0xff]
    %v265 = vld [vmem:[#allocation9 + $0x280] sm:$0xff]
    %v266 = vld [vmem:[#allocation9 + $0x288] sm:$0xff]
    %v267 = vld [vmem:[#allocation9 + $0x290] sm:$0xff]
    %v268 = vld [vmem:[#allocation9 + $0x298] sm:$0xff]
    %v269 = vld [vmem:[#allocation9 + $0x2a0] sm:$0xff]
    %v270 = vld [vmem:[#allocation9 + $0x2a8] sm:$0xff]
    %v271 = vld [vmem:[#allocation9 + $0x2b0] sm:$0xff]
    %v272 = vld [vmem:[#allocation9 + $0x2b8] sm:$0xff]
    %v273 = vld [vmem:[#allocation9 + $0x2c0] sm:$0xff]
    %v274 = vld [vmem:[#allocation9 + $0x2c8] sm:$0xff]
    %v275 = vld [vmem:[#allocation9 + $0x2d0] sm:$0xff]
    %v276 = vld [vmem:[#allocation9 + $0x2d8] sm:$0xff]
    %v277 = vld [vmem:[#allocation9 + $0x2e0] sm:$0xff]
    %v278 = vld [vmem:[#allocation9 + $0x2e8] sm:$0xff]
    %v279 = vld [vmem:[#allocation9 + $0x2f0] sm:$0xff]
    %v280 = vld [vmem:[#allocation9 + $0x2f8] sm:$0xff]
    %v281 = vld [vmem:[#allocation9 + $0x300] sm:$0xff]
    %v282 = vld [vmem:[#allocation9 + $0x308] sm:$0xff]
    %v283 = vld [vmem:[#allocation9 + $0x310] sm:$0xff]
    %v284 = vld [vmem:[#allocation9 + $0x318] sm:$0xff]
    %v285 = vld [vmem:[#allocation9 + $0x320] sm:$0xff]
    %v286 = vld [vmem:[#allocation9 + $0x328] sm:$0xff]
    %v287 = vld [vmem:[#allocation9 + $0x330] sm:$0xff]
    %v288 = vld [vmem:[#allocation9 + $0x338] sm:$0xff]
    %v289 = vld [vmem:[#allocation9 + $0x340] sm:$0xff]
    %v290 = vld [vmem:[#allocation9 + $0x348] sm:$0xff]
    %v291 = vld [vmem:[#allocation9 + $0x350] sm:$0xff]
    %v292 = vld [vmem:[#allocation9 + $0x358] sm:$0xff]
    %v293 = vld [vmem:[#allocation9 + $0x360] sm:$0xff]
    %v294 = vld [vmem:[#allocation9 + $0x368] sm:$0xff]
    %v295 = vld [vmem:[#allocation9 + $0x370] sm:$0xff]
    %v296 = vld [vmem:[#allocation9 + $0x378] sm:$0xff]
    %v297 = vld [vmem:[#allocation9 + $0x380] sm:$0xff]
    %v298 = vld [vmem:[#allocation9 + $0x388] sm:$0xff]
    %v299 = vld [vmem:[#allocation9 + $0x390] sm:$0xff]
    %v300 = vld [vmem:[#allocation9 + $0x398] sm:$0xff]
    %v301 = vld [vmem:[#allocation9 + $0x3a0] sm:$0xff]
    %v302 = vld [vmem:[#allocation9 + $0x3a8] sm:$0xff]
    %v303 = vld [vmem:[#allocation9 + $0x3b0] sm:$0xff]
    %v304 = vld [vmem:[#allocation9 + $0x3b8] sm:$0xff]
    %v305 = vld [vmem:[#allocation9 + $0x3c0] sm:$0xff]
    %v306 = vld [vmem:[#allocation9 + $0x3c8] sm:$0xff]
    %v307 = vld [vmem:[#allocation9 + $0x3d0] sm:$0xff]
    %v308 = vld [vmem:[#allocation9 + $0x3d8] sm:$0xff]
    %v309 = vld [vmem:[#allocation9 + $0x3e0] sm:$0xff]
    %v310 = vld [vmem:[#allocation9 + $0x3e8] sm:$0xff]
    %v311 = vld [vmem:[#allocation9 + $0x3f0] sm:$0xff]
    %v312 = vld [vmem:[#allocation9 + $0x3f8] sm:$0xff]
    %v313 = vld [vmem:[#allocation9 + $0x400] sm:$0xff]
    %v314 = vld [vmem:[#allocation9 + $0x408] sm:$0xff]
    %v315 = vld [vmem:[#allocation9 + $0x410] sm:$0xff]
    %v316 = vld [vmem:[#allocation9 + $0x418] sm:$0xff]
    %v317 = vld [vmem:[#allocation9 + $0x420] sm:$0xff]
    %v318 = vld [vmem:[#allocation9 + $0x428] sm:$0xff]
    %v319 = vld [vmem:[#allocation9 + $0x430] sm:$0xff]
    %v320 = vld [vmem:[#allocation9 + $0x438] sm:$0xff]
    %v321 = vld [vmem:[#allocation9 + $0x440] sm:$0xff]
    %v322 = vld [vmem:[#allocation9 + $0x448] sm:$0xff]
    %v323 = vld [vmem:[#allocation9 + $0x450] sm:$0xff]
    %v324 = vld [vmem:[#allocation9 + $0x458] sm:$0xff]
    %v325 = vld [vmem:[#allocation9 + $0x460] sm:$0xff]
    %v326 = vld [vmem:[#allocation9 + $0x468] sm:$0xff]
    %v327 = vld [vmem:[#allocation9 + $0x470] sm:$0xff]
    %v328 = vld [vmem:[#allocation9 + $0x478] sm:$0xff]
    %v329 = vld [vmem:[%s10] sm:$0xff]
    %v330 = vld [vmem:[#allocation6] sm:$0x7]
    %v331 = vld [vmem:[#allocation8] sm:$0x7]
    %v332 = vld [vmem:[%s0] sm:$0xff]
    %v333 = vld [vmem:[%s0 + $0x8] sm:$0xff]
    %v334 = vld [vmem:[%s0 + $0x10] sm:$0xff]
    %v335 = vld [vmem:[%s0 + $0x18] sm:$0xff]
    %v336 = vld [vmem:[%s0 + $0x20] sm:$0xff]
    %v337 = vld [vmem:[%s0 + $0x28] sm:$0xff]
    %v338 = vld [vmem:[%s0 + $0x30] sm:$0xff]
    %v339 = vld [vmem:[%s0 + $0x38] sm:$0xff]
    %v340 = vpack.c.bf16 %v333, %v332
    %v341 = vpack.c.bf16 %v335, %v334
    %v342 = vpack.c.bf16 %v337, %v336
    %v343 = vpack.c.bf16 %v339, %v338
    %v344 = vld [vmem:[%s1] sm:$0xff]
    %v345 = vld [vmem:[%s1 + $0x8] sm:$0xff]
    %v348 = vunpack.c.l.b16 %v344
    %v349 = vunpack.c.h.b16 %v344
    %v350 = vunpack.c.l.b16 %v345
    %v351 = vunpack.c.h.b16 %v345
    %v352 = vpack.c.b16 %v348, %v348
    %v353 = vpack.c.b16 %v349, %v349
    %v354 = vpack.c.b16 %v350, %v350
    %v355 = vpack.c.b16 %v351, %v351
    %vm356 = vcmask 64512
    %v358 = vsel %vm356, %v340, 0
    %v361 = vsel %vm356, %v341, 0
    %v364 = vsel %vm356, %v342, 0
    %v367 = vsel %vm356, %v343, 0
    %vm369 = vcmask 1043456
    %v371 = vsel %vm369, %v352, 0
    %v374 = vsel %vm369, %v353, 0
    %v377 = vsel %vm369, %v354, 0
    %v380 = vsel %vm369, %v355, 0
    %382 = vmatprep.subr.bf16.mxu0 %v374
    %383 = vmatpush1.bf16.msra.mxu0 %v371
    %384 = vmatprep.subr.bf16.mxu0 0
    %385 = vmatpush1.bf16.msra.mxu0 0
    %386 = vmatprep.subr.bf16.mxu0 0
    %387 = vmatpush1.bf16.msra.mxu0 0
    %388 = vmatprep.subr.bf16.mxu0 0
    %389 = vmatpush1.bf16.msra.mxu0 0
    %390 = vmatprep.subr.bf16.mxu0 0
    %391 = vmatpush1.bf16.msra.mxu0 0
    %392 = vmatprep.subr.bf16.mxu0 0
    %393 = vmatpush1.bf16.msra.mxu0 0
    %394 = vmatprep.subr.bf16.mxu0 0
    %395 = vmatpush1.bf16.msra.mxu0 0
    %396 = vmatprep.subr.bf16.mxu0 0
    %397 = vmatpush1.bf16.msra.mxu0 0
    %398 = vmatprep.subr.bf16.mxu0 0
    %399 = vmatpush1.bf16.msra.mxu0 0
    %400 = vmatprep.subr.bf16.mxu0 0
    %401 = vmatpush1.bf16.msra.mxu0 0
    %402 = vmatprep.subr.bf16.mxu0 0
    %403 = vmatpush1.bf16.msra.mxu0 0
    %404 = vmatprep.subr.bf16.mxu0 0
    %405 = vmatpush1.bf16.msra.mxu0 0
    %406 = vmatprep.subr.bf16.mxu0 0
    %407 = vmatpush1.bf16.msra.mxu0 0
    %408 = vmatprep.subr.bf16.mxu0 0
    %409 = vmatpush1.bf16.msra.mxu0 0
    %410 = vmatprep.subr.bf16.mxu0 0
    %411 = vmatpush1.bf16.msra.mxu0 0
    %412 = vmatprep.subr.bf16.mxu0 0
    %413 = vmatpush1.bf16.msra.mxu0 0
    %414 = vmatprep.mubr.bf16.mxu0 0
    %415 = vmatmul.mubr.bf16.gmra.mrb[0].mxu0 %v358
    %v416 = vpop.f32.mrb[0].mxu0
    %v417 = vadd.f32 0.0, %v416
    %v418 = vpop.f32.mrb[0].mxu0
    %v419 = vadd.f32 0.0, %v418
    %v420 = vpop.f32.mrb[0].mxu0
    %v421 = vadd.f32 0.0, %v420
    %v422 = vpop.f32.mrb[0].mxu0
    %v423 = vadd.f32 0.0, %v422
    %424 = vmatprep.mubr.bf16.mxu0 0
    %425 = vmatmul.mubr.bf16.gmra.mrb[0].mxu0 %v361
    %v426 = vpop.f32.mrb[0].mxu0
    %v427 = vadd.f32 0.0, %v426
    %v428 = vpop.f32.mrb[0].mxu0
    %v429 = vadd.f32 0.0, %v428
    %v430 = vpop.f32.mrb[0].mxu0
    %v431 = vadd.f32 0.0, %v430
    %v432 = vpop.f32.mrb[0].mxu0
    %v433 = vadd.f32 0.0, %v432
    %434 = vmatprep.mubr.bf16.mxu0 0
    %435 = vmatmul.mubr.bf16.gmra.mrb[0].mxu0 %v364
    %v436 = vpop.f32.mrb[0].mxu0
    %v437 = vadd.f32 0.0, %v436
    %v438 = vpop.f32.mrb[0].mxu0
    %v439 = vadd.f32 0.0, %v438
    %v440 = vpop.f32.mrb[0].mxu0
    %v441 = vadd.f32 0.0, %v440
    %v442 = vpop.f32.mrb[0].mxu0
    %v443 = vadd.f32 0.0, %v442
    %444 = vmatprep.mubr.bf16.mxu0 0
    %445 = vmatmul.mubr.bf16.gmra.mrb[0].mxu0 %v367
    %v446 = vpop.f32.mrb[0].mxu0
    %v447 = vadd.f32 0.0, %v446
    %v448 = vpop.f32.mrb[0].mxu0
    %v449 = vadd.f32 0.0, %v448
    %v450 = vpop.f32.mrb[0].mxu0
    %v451 = vadd.f32 0.0, %v450
    %v452 = vpop.f32.mrb[0].mxu0
    %v453 = vadd.f32 0.0, %v452
    %454 = vdwg.mxu0
    %455 = vmatprep.subr.bf16.mxu0 %v380
    %456 = vmatpush1.bf16.msra.mxu0 %v377
    %457 = vmatprep.subr.bf16.mxu0 0
    %458 = vmatpush1.bf16.msra.mxu0 0
    %459 = vmatprep.subr.bf16.mxu0 0
    %460 = vmatpush1.bf16.msra.mxu0 0
    %461 = vmatprep.subr.bf16.mxu0 0
    %462 = vmatpush1.bf16.msra.mxu0 0
    %463 = vmatprep.subr.bf16.mxu0 0
    %464 = vmatpush1.bf16.msra.mxu0 0
    %465 = vmatprep.subr.bf16.mxu0 0
    %466 = vmatpush1.bf16.msra.mxu0 0
    %467 = vmatprep.subr.bf16.mxu0 0
    %468 = vmatpush1.bf16.msra.mxu0 0
    %469 = vmatprep.subr.bf16.mxu0 0
    %470 = vmatpush1.bf16.msra.mxu0 0
    %471 = vmatprep.subr.bf16.mxu0 0
    %472 = vmatpush1.bf16.msra.mxu0 0
    %473 = vmatprep.subr.bf16.mxu0 0
    %474 = vmatpush1.bf16.msra.mxu0 0
    %475 = vmatprep.subr.bf16.mxu0 0
    %476 = vmatpush1.bf16.msra.mxu0 0
    %477 = vmatprep.subr.bf16.mxu0 0
    %478 = vmatpush1.bf16.msra.mxu0 0
    %479 = vmatprep.subr.bf16.mxu0 0
    %480 = vmatpush1.bf16.msra.mxu0 0
    %481 = vmatprep.subr.bf16.mxu0 0
    %482 = vmatpush1.bf16.msra.mxu0 0
    %483 = vmatprep.subr.bf16.mxu0 0
    %484 = vmatpush1.bf16.msra.mxu0 0
    %485 = vmatprep.subr.bf16.mxu0 0
    %486 = vmatpush1.bf16.msra.mxu0 0
    %487 = vmatprep.mubr.bf16.mxu0 0
    %488 = vmatmul.mubr.bf16.gmra.mrb[0].mxu0 %v358
    %v489 = vpop.f32.mrb[0].mxu0
    %v490 = vadd.f32 0.0, %v489
    %v491 = vpop.f32.mrb[0].mxu0
    %v492 = vadd.f32 0.0, %v491
    %v493 = vpop.f32.mrb[0].mxu0
    %v494 = vadd.f32 0.0, %v493
    %v495 = vpop.f32.mrb[0].mxu0
    %v496 = vadd.f32 0.0, %v495
    %497 = vmatprep.mubr.bf16.mxu0 0
    %498 = vmatmul.mubr.bf16.gmra.mrb[0].mxu0 %v361
    %v499 = vpop.f32.mrb[0].mxu0
    %v500 = vadd.f32 0.0, %v499
    %v501 = vpop.f32.mrb[0].mxu0
    %v502 = vadd.f32 0.0, %v501
    %v503 = vpop.f32.mrb[0].mxu0
    %v504 = vadd.f32 0.0, %v503
    %v505 = vpop.f32.mrb[0].mxu0
    %v506 = vadd.f32 0.0, %v505
    %507 = vmatprep.mubr.bf16.mxu0 0
    %508 = vmatmul.mubr.bf16.gmra.mrb[0].mxu0 %v364
    %v509 = vpop.f32.mrb[0].mxu0
    %v510 = vadd.f32 0.0, %v509
    %v511 = vpop.f32.mrb[0].mxu0
    %v512 = vadd.f32 0.0, %v511
    %v513 = vpop.f32.mrb[0].mxu0
    %v514 = vadd.f32 0.0, %v513
    %v515 = vpop.f32.mrb[0].mxu0
    %v516 = vadd.f32 0.0, %v515
    %517 = vmatprep.mubr.bf16.mxu0 0
    %518 = vmatmul.mubr.bf16.gmra.mrb[0].mxu0 %v367
    %v519 = vpop.f32.mrb[0].mxu0
    %v520 = vadd.f32 0.0, %v519
    %v521 = vpop.f32.mrb[0].mxu0
    %v522 = vadd.f32 0.0, %v521
    %v523 = vpop.f32.mrb[0].mxu0
    %v524 = vadd.f32 0.0, %v523
    %v525 = vpop.f32.mrb[0].mxu0
    %v526 = vadd.f32 0.0, %v525
    %527 = vdwg.mxu0
    %v528 = vld [vmem:[%s9] sm:$0xff]
    %v529 = vld [vmem:[#allocation11] sm:$0xff]
    %v530 = vld [vmem:[#allocation11 + $0x8] sm:$0xff]
    %v531 = vld [vmem:[#allocation11 + $0x10] sm:$0xff]
    %v532 = vld [vmem:[#allocation11 + $0x18] sm:$0xff]
    %v533 = vld [vmem:[#allocation11 + $0x20] sm:$0xff]
    %v534 = vld [vmem:[#allocation11 + $0x28] sm:$0xff]
    %v535 = vld [vmem:[#allocation11 + $0x30] sm:$0xff]
    %v536 = vld [vmem:[#allocation11 + $0x38] sm:$0xff]
    %v537 = vld [vmem:[#allocation11 + $0x40] sm:$0xff]
    %v538 = vld [vmem:[#allocation11 + $0x48] sm:$0xff]
    %v539 = vld [vmem:[#allocation11 + $0x50] sm:$0xff]
    %v540 = vld [vmem:[#allocation11 + $0x58] sm:$0xff]
    %v541 = vld [vmem:[#allocation11 + $0x60] sm:$0xff]
    %v542 = vld [vmem:[#allocation11 + $0x68] sm:$0xff]
    %v543 = vld [vmem:[#allocation11 + $0x70] sm:$0xff]
    %v544 = vld [vmem:[#allocation11 + $0x78] sm:$0xff]
    %vm545 = vcmask 523264
    %v547 = vsel %vm545, %v528, 0
    %549 = vmatprep.subr.mxu0 0.0
    %550 = vmatpush1.msra.mxu0 %v492
    %551 = vmatprep.subr.mxu0 0.0
    %552 = vmatpush1.msra.mxu0 %v496
    %553 = vmatprep.subr.mxu0 0.0
    %554 = vmatpush1.msra.mxu0 %v502
    %555 = vmatprep.subr.mxu0 0.0
    %556 = vmatpush1.msra.mxu0 %v506
    %557 = vmatprep.subr.mxu0 0.0
    %558 = vmatpush1.msra.mxu0 %v512
    %559 = vmatprep.subr.mxu0 0.0
    %560 = vmatpush1.msra.mxu0 %v516
    %561 = vmatprep.subr.mxu0 0.0
    %562 = vmatpush1.msra.mxu0 %v522
    %563 = vmatprep.subr.mxu0 0.0
    %564 = vmatpush1.msra.mxu0 %v526
    %565 = vmatprep.subr.mxu0 0.0
    %566 = vmatpush1.msra.mxu0 0.0
    %567 = vmatprep.subr.mxu0 0.0
    %568 = vmatpush1.msra.mxu0 0.0
    %569 = vmatprep.subr.mxu0 0.0
    %570 = vmatpush1.msra.mxu0 0.0
    %571 = vmatprep.subr.mxu0 0.0
    %572 = vmatpush1.msra.mxu0 0.0
    %573 = vmatprep.subr.mxu0 0.0
    %574 = vmatpush1.msra.mxu0 0.0
    %575 = vmatprep.subr.mxu0 0.0
    %576 = vmatpush1.msra.mxu0 0.0
    %577 = vmatprep.subr.mxu0 0.0
    %578 = vmatpush1.msra.mxu0 0.0
    %579 = vmatprep.subr.mxu0 0.0
    %580 = vmatpush1.msra.mxu0 0.0
    %581 = vmatprep.subr.mxu0 0.0
    %582 = vmatpush1.msra.mxu0 0.0
    %583 = vmatprep.subr.mxu0 0.0
    %584 = vmatpush1.msra.mxu0 0.0
    %585 = vmatprep.subr.mxu0 0.0
    %586 = vmatpush1.msra.mxu0 0.0
    %587 = vmatprep.subr.mxu0 0.0
    %588 = vmatpush1.msra.mxu0 0.0
    %589 = vmatprep.subr.mxu0 0.0
    %590 = vmatpush1.msra.mxu0 0.0
    %591 = vmatprep.subr.mxu0 0.0
    %592 = vmatpush1.msra.mxu0 0.0
    %593 = vmatprep.subr.mxu0 0.0
    %594 = vmatpush1.msra.mxu0 0.0
    %595 = vmatprep.subr.mxu0 0.0
    %596 = vmatpush1.msra.mxu0 0.0
    %597 = vmatprep.subr.mxu0 0.0
    %598 = vmatpush1.msra.mxu0 0.0
    %599 = vmatprep.subr.mxu0 0.0
    %600 = vmatpush1.msra.mxu0 0.0
    %601 = vmatprep.subr.mxu0 0.0
    %602 = vmatpush1.msra.mxu0 0.0
    %603 = vmatprep.subr.mxu0 0.0
    %604 = vmatpush1.msra.mxu0 0.0
    %605 = vmatprep.subr.mxu0 0.0
    %606 = vmatpush1.msra.mxu0 0.0
    %607 = vmatprep.subr.mxu0 0.0
    %608 = vmatpush1.msra.mxu0 0.0
    %609 = vmatprep.subr.mxu0 0.0
    %610 = vmatpush1.msra.mxu0 0.0
    %611 = vmatprep.subr.mxu0 0.0
    %612 = vmatpush1.msra.mxu0 0.0
    %613 = vmatprep.mubr.f32.mxu0 0.0
    %614 = vmatmul.mubr.f32.gmra.mrb[0].mxu0 %v547
    %v615 = vpop.f32.mrb[0].mxu0
    %v616 = vadd.f32 0.0, %v615
    %v617 = vpop.f32.mrb[0].mxu0
    %618 = vdwg.mxu0
    %v619 = vmul.f32 %v492, %v492
    %v620 = vmul.f32 %v496, %v496
    %v621 = vmul.f32 %v502, %v502
    %v622 = vmul.f32 %v506, %v506
    %v623 = vmul.f32 %v512, %v512
    %v624 = vmul.f32 %v516, %v516
    %v625 = vmul.f32 %v522, %v522
    %v626 = vmul.f32 %v526, %v526
    %627 = vmatprep.subr.mxu0 0.0
    %628 = vmatpush1.msra.mxu0 %v619
    %629 = vmatprep.subr.mxu0 0.0
    %630 = vmatpush1.msra.mxu0 %v620
    %631 = vmatprep.subr.mxu0 0.0
    %632 = vmatpush1.msra.mxu0 %v621
    %633 = vmatprep.subr.mxu0 0.0
    %634 = vmatpush1.msra.mxu0 %v622
    %635 = vmatprep.subr.mxu0 0.0
    %636 = vmatpush1.msra.mxu0 %v623
    %637 = vmatprep.subr.mxu0 0.0
    %638 = vmatpush1.msra.mxu0 %v624
    %639 = vmatprep.subr.mxu0 0.0
    %640 = vmatpush1.msra.mxu0 %v625
    %641 = vmatprep.subr.mxu0 0.0
    %642 = vmatpush1.msra.mxu0 %v626
    %643 = vmatprep.subr.mxu0 0.0
    %644 = vmatpush1.msra.mxu0 0.0
    %645 = vmatprep.subr.mxu0 0.0
    %646 = vmatpush1.msra.mxu0 0.0
    %647 = vmatprep.subr.mxu0 0.0
    %648 = vmatpush1.msra.mxu0 0.0
    %649 = vmatprep.subr.mxu0 0.0
    %650 = vmatpush1.msra.mxu0 0.0
    %651 = vmatprep.subr.mxu0 0.0
    %652 = vmatpush1.msra.mxu0 0.0
    %653 = vmatprep.subr.mxu0 0.0
    %654 = vmatpush1.msra.mxu0 0.0
    %655 = vmatprep.subr.mxu0 0.0
    %656 = vmatpush1.msra.mxu0 0.0
    %657 = vmatprep.subr.mxu0 0.0
    %658 = vmatpush1.msra.mxu0 0.0
    %659 = vmatprep.subr.mxu0 0.0
    %660 = vmatpush1.msra.mxu0 0.0
    %661 = vmatprep.subr.mxu0 0.0
    %662 = vmatpush1.msra.mxu0 0.0
    %663 = vmatprep.subr.mxu0 0.0
    %664 = vmatpush1.msra.mxu0 0.0
    %665 = vmatprep.subr.mxu0 0.0
    %666 = vmatpush1.msra.mxu0 0.0
    %667 = vmatprep.subr.mxu0 0.0
    %668 = vmatpush1.msra.mxu0 0.0
    %669 = vmatprep.subr.mxu0 0.0
    %670 = vmatpush1.msra.mxu0 0.0
    %671 = vmatprep.subr.mxu0 0.0
    %672 = vmatpush1.msra.mxu0 0.0
    %673 = vmatprep.subr.mxu0 0.0
    %674 = vmatpush1.msra.mxu0 0.0
    %675 = vmatprep.subr.mxu0 0.0
    %676 = vmatpush1.msra.mxu0 0.0
    %677 = vmatprep.subr.mxu0 0.0
    %678 = vmatpush1.msra.mxu0 0.0
    %679 = vmatprep.subr.mxu0 0.0
    %680 = vmatpush1.msra.mxu0 0.0
    %681 = vmatprep.subr.mxu0 0.0
    %682 = vmatpush1.msra.mxu0 0.0
    %683 = vmatprep.subr.mxu0 0.0
    %684 = vmatpush1.msra.mxu0 0.0
    %685 = vmatprep.subr.mxu0 0.0
    %686 = vmatpush1.msra.mxu0 0.0
    %687 = vmatprep.subr.mxu0 0.0
    %688 = vmatpush1.msra.mxu0 0.0
    %689 = vmatprep.subr.mxu0 0.0
    %690 = vmatpush1.msra.mxu0 0.0
    %691 = vmatprep.mubr.f32.mxu0 0.0
    %692 = vmatmul.mubr.f32.gmra.mrb[0].mxu0 %v547
    %v693 = vpop.f32.mrb[0].mxu0
    %v694 = vadd.f32 0.0, %v693
    %v695 = vpop.f32.mrb[0].mxu0
    %696 = vdwg.mxu0
    %697 = vmatprep.subr.mxu0 0.0
    %698 = vmatpush1.msra.mxu0 %v529
    %699 = vmatprep.subr.mxu0 0.0
    %700 = vmatpush1.msra.mxu0 %v530
    %701 = vmatprep.subr.mxu0 0.0
    %702 = vmatpush1.msra.mxu0 %v531
    %703 = vmatprep.subr.mxu0 0.0
    %704 = vmatpush1.msra.mxu0 %v532
    %705 = vmatprep.subr.mxu0 0.0
    %706 = vmatpush1.msra.mxu0 %v533
    %707 = vmatprep.subr.mxu0 0.0
    %708 = vmatpush1.msra.mxu0 %v534
    %709 = vmatprep.subr.mxu0 0.0
    %710 = vmatpush1.msra.mxu0 %v535
    %711 = vmatprep.subr.mxu0 0.0
    %712 = vmatpush1.msra.mxu0 %v536
    %713 = vmatprep.subr.mxu0 0.0
    %714 = vmatpush1.msra.mxu0 %v537
    %715 = vmatprep.subr.mxu0 0.0
    %716 = vmatpush1.msra.mxu0 %v538
    %717 = vmatprep.subr.mxu0 0.0
    %718 = vmatpush1.msra.mxu0 %v539
    %719 = vmatprep.subr.mxu0 0.0
    %720 = vmatpush1.msra.mxu0 %v540
    %721 = vmatprep.subr.mxu0 0.0
    %722 = vmatpush1.msra.mxu0 %v541
    %723 = vmatprep.subr.mxu0 0.0
    %724 = vmatpush1.msra.mxu0 %v542
    %725 = vmatprep.subr.mxu0 0.0
    %726 = vmatpush1.msra.mxu0 %v543
    %727 = vmatprep.subr.mxu0 0.0
    %728 = vmatpush1.msra.mxu0 %v544
    %729 = vmatprep.subr.mxu0 0.0
    %730 = vmatpush1.msra.mxu0 0.0
    %731 = vmatprep.subr.mxu0 0.0
    %732 = vmatpush1.msra.mxu0 0.0
    %733 = vmatprep.subr.mxu0 0.0
    %734 = vmatpush1.msra.mxu0 0.0
    %735 = vmatprep.subr.mxu0 0.0
    %736 = vmatpush1.msra.mxu0 0.0
    %737 = vmatprep.subr.mxu0 0.0
    %738 = vmatpush1.msra.mxu0 0.0
    %739 = vmatprep.subr.mxu0 0.0
    %740 = vmatpush1.msra.mxu0 0.0
    %741 = vmatprep.subr.mxu0 0.0
    %742 = vmatpush1.msra.mxu0 0.0
    %743 = vmatprep.subr.mxu0 0.0
    %744 = vmatpush1.msra.mxu0 0.0
    %745 = vmatprep.subr.mxu0 0.0
    %746 = vmatpush1.msra.mxu0 0.0
    %747 = vmatprep.subr.mxu0 0.0
    %748 = vmatpush1.msra.mxu0 0.0
    %749 = vmatprep.subr.mxu0 0.0
    %750 = vmatpush1.msra.mxu0 0.0
    %751 = vmatprep.subr.mxu0 0.0
    %752 = vmatpush1.msra.mxu0 0.0
    %753 = vmatprep.subr.mxu0 0.0
    %754 = vmatpush1.msra.mxu0 0.0
    %755 = vmatprep.subr.mxu0 0.0
    %756 = vmatpush1.msra.mxu0 0.0
    %757 = vmatprep.subr.mxu0 0.0
    %758 = vmatpush1.msra.mxu0 0.0
    %759 = vmatprep.subr.mxu0 0.0
    %760 = vmatpush1.msra.mxu0 0.0
    %761 = vmatprep.mubr.f32.mxu0 0.0
    %762 = vmatmul.mubr.f32.gmra.mrb[0].mxu0 %v616
    %v763 = vpop.f32.mrb[0].mxu0
    %v764 = vadd.f32 0.0, %v763
    %v765 = vpop.f32.mrb[0].mxu0
    %766 = vdwg.mxu0
    %767 = vmatprep.subr.mxu0 0.0
    %768 = vmatpush1.msra.mxu0 %v529
    %769 = vmatprep.subr.mxu0 0.0
    %770 = vmatpush1.msra.mxu0 %v530
    %771 = vmatprep.subr.mxu0 0.0
    %772 = vmatpush1.msra.mxu0 %v531
    %773 = vmatprep.subr.mxu0 0.0
    %774 = vmatpush1.msra.mxu0 %v532
    %775 = vmatprep.subr.mxu0 0.0
    %776 = vmatpush1.msra.mxu0 %v533
    %777 = vmatprep.subr.mxu0 0.0
    %778 = vmatpush1.msra.mxu0 %v534
    %779 = vmatprep.subr.mxu0 0.0
    %780 = vmatpush1.msra.mxu0 %v535
    %781 = vmatprep.subr.mxu0 0.0
    %782 = vmatpush1.msra.mxu0 %v536
    %783 = vmatprep.subr.mxu0 0.0
    %784 = vmatpush1.msra.mxu0 %v537
    %785 = vmatprep.subr.mxu0 0.0
    %786 = vmatpush1.msra.mxu0 %v538
    %787 = vmatprep.subr.mxu0 0.0
    %788 = vmatpush1.msra.mxu0 %v539
    %789 = vmatprep.subr.mxu0 0.0
    %790 = vmatpush1.msra.mxu0 %v540
    %791 = vmatprep.subr.mxu0 0.0
    %792 = vmatpush1.msra.mxu0 %v541
    %793 = vmatprep.subr.mxu0 0.0
    %794 = vmatpush1.msra.mxu0 %v542
    %795 = vmatprep.subr.mxu0 0.0
    %796 = vmatpush1.msra.mxu0 %v543
    %797 = vmatprep.subr.mxu0 0.0
    %798 = vmatpush1.msra.mxu0 %v544
    %799 = vmatprep.subr.mxu0 0.0
    %800 = vmatpush1.msra.mxu0 0.0
    %801 = vmatprep.subr.mxu0 0.0
    %802 = vmatpush1.msra.mxu0 0.0
    %803 = vmatprep.subr.mxu0 0.0
    %804 = vmatpush1.msra.mxu0 0.0
    %805 = vmatprep.subr.mxu0 0.0
    %806 = vmatpush1.msra.mxu0 0.0
    %807 = vmatprep.subr.mxu0 0.0
    %808 = vmatpush1.msra.mxu0 0.0
    %809 = vmatprep.subr.mxu0 0.0
    %810 = vmatpush1.msra.mxu0 0.0
    %811 = vmatprep.subr.mxu0 0.0
    %812 = vmatpush1.msra.mxu0 0.0
    %813 = vmatprep.subr.mxu0 0.0
    %814 = vmatpush1.msra.mxu0 0.0
    %815 = vmatprep.subr.mxu0 0.0
    %816 = vmatpush1.msra.mxu0 0.0
    %817 = vmatprep.subr.mxu0 0.0
    %818 = vmatpush1.msra.mxu0 0.0
    %819 = vmatprep.subr.mxu0 0.0
    %820 = vmatpush1.msra.mxu0 0.0
    %821 = vmatprep.subr.mxu0 0.0
    %822 = vmatpush1.msra.mxu0 0.0
    %823 = vmatprep.subr.mxu0 0.0
    %824 = vmatpush1.msra.mxu0 0.0
    %825 = vmatprep.subr.mxu0 0.0
    %826 = vmatpush1.msra.mxu0 0.0
    %827 = vmatprep.subr.mxu0 0.0
    %828 = vmatpush1.msra.mxu0 0.0
    %829 = vmatprep.subr.mxu0 0.0
    %830 = vmatpush1.msra.mxu0 0.0
    %831 = vmatprep.mubr.f32.mxu0 0.0
    %832 = vmatmul.mubr.f32.gmra.mrb[0].mxu0 %v694
    %v833 = vpop.f32.mrb[0].mxu0
    %v834 = vadd.f32 0.0, %v833
    %v835 = vpop.f32.mrb[0].mxu0
    %836 = vdwg.mxu0
    %v837 = vmul.f32 %v764, 0.015625
    %v838 = vmul.f32 %v834, 0.015625
    %v839 = vmul.f32 %v837, %v837
    %v840 = vsub.f32 %v838, %v839
    %v841 = vadd.f32 %v840, 1e-05
    %v842 = vrsqrt.pop %v841
    %v843 = vld [vmem:[%s5] sm:$0x1]
    %v845 = vlaneseq
    %v846 = vshrl.u32 %v845, 7
    %v847 = vsub.s32 0, %v846
    %v848 = vrot.slane %v843, %v847
    %v850 = vmul.f32 %v842, %v848
    %v851 = vld [vmem:[%s6] sm:$0x1]
    %v852 = vmul.f32 %v837, %v850
    %v854 = vlaneseq
    %v855 = vshrl.u32 %v854, 7
    %v856 = vsub.s32 0, %v855
    %v857 = vrot.slane %v851, %v856
    %v859 = vsub.f32 %v857, %v852
    %v860 = vld [vmem:[#allocation16] sm:$0xff]
    %v861 = vld [vmem:[#allocation13] sm:$0xff]
    %v862 = vld [vmem:[#allocation15] sm:$0xff]
    %v863 = vld [vmem:[#allocation18] sm:$0xff]
    %v864 = vpack.c.bf16 %v860, %v860
    %v897 = vunpack.c.l.b16 %v153
    %v898 = vunpack.c.h.b16 %v153
    %v899 = vunpack.c.l.b16 %v154
    %v900 = vunpack.c.l.b16 %v155
    %v901 = vunpack.c.h.b16 %v155
    %v902 = vunpack.c.l.b16 %v156
    %v903 = vunpack.c.l.b16 %v157
    %v904 = vunpack.c.h.b16 %v157
    %v905 = vunpack.c.l.b16 %v158
    %v906 = vunpack.c.l.b16 %v159
    %v907 = vunpack.c.h.b16 %v159
    %v908 = vunpack.c.l.b16 %v160
    %v909 = vunpack.c.l.b16 %v161
    %v910 = vunpack.c.h.b16 %v161
    %v911 = vunpack.c.l.b16 %v162
    %v912 = vunpack.c.l.b16 %v163
    %v913 = vunpack.c.h.b16 %v163
    %v914 = vunpack.c.l.b16 %v164
    %v915 = vunpack.c.l.b16 %v165
    %v916 = vunpack.c.h.b16 %v165
    %v917 = vunpack.c.l.b16 %v166
    %v918 = vunpack.c.l.b16 %v167
    %v919 = vunpack.c.h.b16 %v167
    %v920 = vunpack.c.l.b16 %v168
    %v921 = vunpack.c.l.b16 %v169
    %v922 = vunpack.c.h.b16 %v169
    %v923 = vunpack.c.l.b16 %v170
    %v924 = vunpack.c.l.b16 %v171
    %v925 = vunpack.c.h.b16 %v171
    %v926 = vunpack.c.l.b16 %v172
    %v927 = vunpack.c.l.b16 %v173
    %v928 = vunpack.c.h.b16 %v173
    %v929 = vunpack.c.l.b16 %v174
    %v930 = vunpack.c.l.b16 %v175
    %v931 = vunpack.c.h.b16 %v175
    %v932 = vunpack.c.l.b16 %v176
    %v933 = vunpack.c.l.b16 %v177
    %v934 = vunpack.c.h.b16 %v177
    %v935 = vunpack.c.l.b16 %v178
    %v936 = vunpack.c.l.b16 %v179
    %v937 = vunpack.c.h.b16 %v179
    %v938 = vunpack.c.l.b16 %v180
    %v939 = vunpack.c.l.b16 %v181
    %v940 = vunpack.c.h.b16 %v181
    %v941 = vunpack.c.l.b16 %v182
    %v942 = vunpack.c.l.b16 %v183
    %v943 = vunpack.c.h.b16 %v183
    %v944 = vunpack.c.l.b16 %v184
    %v945 = vpack.c.b16 %v900, %v897
    %v946 = vpack.c.b16 %v901, %v898
    %v947 = vpack.c.b16 %v902, %v899
    %v948 = vpack.c.b16 %v906, %v903
    %v949 = vpack.c.b16 %v907, %v904
    %v950 = vpack.c.b16 %v908, %v905
    %v951 = vpack.c.b16 %v912, %v909
    %v952 = vpack.c.b16 %v913, %v910
    %v953 = vpack.c.b16 %v914, %v911
    %v954 = vpack.c.b16 %v918, %v915
    %v955 = vpack.c.b16 %v919, %v916
    %v956 = vpack.c.b16 %v920, %v917
    %v957 = vpack.c.b16 %v924, %v921
    %v958 = vpack.c.b16 %v925, %v922
    %v959 = vpack.c.b16 %v926, %v923
    %v960 = vpack.c.b16 %v930, %v927
    %v961 = vpack.c.b16 %v931, %v928
    %v962 = vpack.c.b16 %v932, %v929
    %v963 = vpack.c.b16 %v936, %v933
    %v964 = vpack.c.b16 %v937, %v934
    %v965 = vpack.c.b16 %v938, %v935
    %v966 = vpack.c.b16 %v942, %v939
    %v967 = vpack.c.b16 %v943, %v940
    %v968 = vpack.c.b16 %v944, %v941
    %993 = vmatprep.subr.bf16.mxu0 %v946
    %994 = vmatpush1.bf16.msra.mxu0 %v945
    %995 = vmatprep.subr.bf16.mxu0 %v949
    %996 = vmatpush1.bf16.msra.mxu0 %v948
    %997 = vmatprep.subr.bf16.mxu0 %v952
    %998 = vmatpush1.bf16.msra.mxu0 %v951
    %999 = vmatprep.subr.bf16.mxu0 %v955
    %1000 = vmatpush1.bf16.msra.mxu0 %v954
    %1001 = vmatprep.subr.bf16.mxu0 %v958
    %1002 = vmatpush1.bf16.msra.mxu0 %v957
    %1003 = vmatprep.subr.bf16.mxu0 %v961
    %1004 = vmatpush1.bf16.msra.mxu0 %v960
    %1005 = vmatprep.subr.bf16.mxu0 %v964
    %1006 = vmatpush1.bf16.msra.mxu0 %v963
    %1007 = vmatprep.subr.bf16.mxu0 %v967
    %1008 = vmatpush1.bf16.msra.mxu0 %v966
    %1009 = vmatprep.subr.bf16.mxu0 0
    %1010 = vmatpush1.bf16.msra.mxu0 0
    %1011 = vmatprep.subr.bf16.mxu0 0
    %1012 = vmatpush1.bf16.msra.mxu0 0
    %1013 = vmatprep.subr.bf16.mxu0 0
    %1014 = vmatpush1.bf16.msra.mxu0 0
    %1015 = vmatprep.subr.bf16.mxu0 0
    %1016 = vmatpush1.bf16.msra.mxu0 0
    %1017 = vmatprep.subr.bf16.mxu0 0
    %1018 = vmatpush1.bf16.msra.mxu0 0
    %1019 = vmatprep.subr.bf16.mxu0 0
    %1020 = vmatpush1.bf16.msra.mxu0 0
    %1021 = vmatprep.subr.bf16.mxu0 0
    %1022 = vmatpush1.bf16.msra.mxu0 0
    %1023 = vmatprep.subr.bf16.mxu0 0
    %1024 = vmatpush1.bf16.msra.mxu0 0
    %1025 = vmatprep.mubr.bf16.mxu0 0
    %1026 = vmatmul.mubr.bf16.gmra.mrb[0].mxu0 %v864
    %v1027 = vpop.f32.mrb[0].mxu0
    %v1028 = vadd.f32 0.0, %v1027
    %v1029 = vpop.f32.mrb[0].mxu0
    %v1030 = vadd.f32 0.0, %v1029
    %v1031 = vpop.f32.mrb[0].mxu0
    %v1032 = vpop.f32.mrb[0].mxu0
    %1033 = vdwg.mxu0
    %1034 = vmatprep.subr.bf16.mxu0 0
    %1035 = vmatpush1.bf16.msra.mxu0 %v947
    %1036 = vmatprep.subr.bf16.mxu0 0
    %1037 = vmatpush1.bf16.msra.mxu0 %v950
    %1038 = vmatprep.subr.bf16.mxu0 0
    %1039 = vmatpush1.bf16.msra.mxu0 %v953
    %1040 = vmatprep.subr.bf16.mxu0 0
    %1041 = vmatpush1.bf16.msra.mxu0 %v956
    %1042 = vmatprep.subr.bf16.mxu0 0
    %1043 = vmatpush1.bf16.msra.mxu0 %v959
    %1044 = vmatprep.subr.bf16.mxu0 0
    %1045 = vmatpush1.bf16.msra.mxu0 %v962
    %1046 = vmatprep.subr.bf16.mxu0 0
    %1047 = vmatpush1.bf16.msra.mxu0 %v965
    %1048 = vmatprep.subr.bf16.mxu0 0
    %1049 = vmatpush1.bf16.msra.mxu0 %v968
    %1050 = vmatprep.subr.bf16.mxu0 0
    %1051 = vmatpush1.bf16.msra.mxu0 0
    %1052 = vmatprep.subr.bf16.mxu0 0
    %1053 = vmatpush1.bf16.msra.mxu0 0
    %1054 = vmatprep.subr.bf16.mxu0 0
    %1055 = vmatpush1.bf16.msra.mxu0 0
    %1056 = vmatprep.subr.bf16.mxu0 0
    %1057 = vmatpush1.bf16.msra.mxu0 0
    %1058 = vmatprep.subr.bf16.mxu0 0
    %1059 = vmatpush1.bf16.msra.mxu0 0
    %1060 = vmatprep.subr.bf16.mxu0 0
    %1061 = vmatpush1.bf16.msra.mxu0 0
    %1062 = vmatprep.subr.bf16.mxu0 0
    %1063 = vmatpush1.bf16.msra.mxu0 0
    %1064 = vmatprep.subr.bf16.mxu0 0
    %1065 = vmatpush1.bf16.msra.mxu0 0
    %1066 = vmatprep.mubr.bf16.mxu0 0
    %1067 = vmatmul.mubr.bf16.gmra.mrb[0].mxu0 %v864
    %v1068 = vpop.f32.mrb[0].mxu0
    %v1069 = vadd.f32 0.0, %v1068
    %v1070 = vpop.f32.mrb[0].mxu0
    %v1071 = vpop.f32.mrb[0].mxu0
    %v1072 = vpop.f32.mrb[0].mxu0
    %1073 = vdwg.mxu0
    %v1074 = vadd.f32 %v417, %v1028
    %v1075 = vadd.f32 %v419, %v1030
    %v1076 = vadd.f32 %v490, %v1069
    %1078 = vset.pattern.permute.xlu0 0
    %1079 = vperm.xlu0 %1078, %v329
    %v1080 = vpop.permute.xlu0 %1079
    %v1082 = vmul.f32 %v1074, %v1080
    %v1083 = vmul.f32 %v1075, %v1080
    %v1084 = vmul.f32 %v1076, %v1080
    %v1085 = vrot.slane %v1082, 4
    %v1086 = vadd.f32 %v1082, %v1085
    %v1087 = vrot.slane %v1086, 2
    %v1088 = vadd.f32 %v1086, %v1087
    %v1089 = vrot.slane %v1088, 1
    %v1090 = vadd.f32 %v1088, %v1089
    %v1091 = vrot.slane %v1083, 4
    %v1092 = vadd.f32 %v1083, %v1091
    %v1093 = vrot.slane %v1092, 2
    %v1094 = vadd.f32 %v1092, %v1093
    %v1095 = vrot.slane %v1094, 1
    %v1096 = vadd.f32 %v1094, %v1095
    %v1097 = vrot.slane %v1084, 4
    %v1098 = vadd.f32 %v1084, %v1097
    %v1099 = vrot.slane %v1098, 2
    %v1100 = vadd.f32 %v1098, %v1099
    %v1101 = vrot.slane %v1100, 1
    %v1102 = vadd.f32 %v1100, %v1101
    %v1103 = vmul.f32 %v1082, %v1074
    %v1104 = vmul.f32 %v1083, %v1075
    %v1105 = vmul.f32 %v1084, %v1076
    %v1106 = vrot.slane %v1103, 4
    %v1107 = vadd.f32 %v1103, %v1106
    %v1108 = vrot.slane %v1107, 2
    %v1109 = vadd.f32 %v1107, %v1108
    %v1110 = vrot.slane %v1109, 1
    %v1111 = vadd.f32 %v1109, %v1110
    %v1112 = vrot.slane %v1104, 4
    %v1113 = vadd.f32 %v1104, %v1112
    %v1114 = vrot.slane %v1113, 2
    %v1115 = vadd.f32 %v1113, %v1114
    %v1116 = vrot.slane %v1115, 1
    %v1117 = vadd.f32 %v1115, %v1116
    %v1118 = vrot.slane %v1105, 4
    %v1119 = vadd.f32 %v1105, %v1118
    %v1120 = vrot.slane %v1119, 2
    %v1121 = vadd.f32 %v1119, %v1120
    %v1122 = vrot.slane %v1121, 1
    %v1123 = vadd.f32 %v1121, %v1122
    %vm1124 = vcmask 1040384
    %v1125 = vsel %vm1124, %v1090, %v1111
    %v1126 = vsel %vm1124, %v1096, %v1117
    %v1127 = vsel %vm1124, %v1102, %v1123
    %1128 = vmatprep.subr.mxu0 %v186
    %1129 = vmatpush1.msra.mxu0 %v185
    %1130 = vmatprep.subr.mxu0 %v189
    %1131 = vmatpush1.msra.mxu0 %v188
    %1132 = vmatprep.subr.mxu0 %v192
    %1133 = vmatpush1.msra.mxu0 %v191
    %1134 = vmatprep.subr.mxu0 %v195
    %1135 = vmatpush1.msra.mxu0 %v194
    %1136 = vmatprep.subr.mxu0 %v198
    %1137 = vmatpush1.msra.mxu0 %v197
    %1138 = vmatprep.subr.mxu0 %v201
    %1139 = vmatpush1.msra.mxu0 %v200
    %1140 = vmatprep.subr.mxu0 %v204
    %1141 = vmatpush1.msra.mxu0 %v203
    %1142 = vmatprep.subr.mxu0 %v207
    %1143 = vmatpush1.msra.mxu0 %v206
    %1144 = vmatprep.subr.mxu0 %v210
    %1145 = vmatpush1.msra.mxu0 %v209
    %1146 = vmatprep.subr.mxu0 %v213
    %1147 = vmatpush1.msra.mxu0 %v212
    %1148 = vmatprep.subr.mxu0 %v216
    %1149 = vmatpush1.msra.mxu0 %v215
    %1150 = vmatprep.subr.mxu0 %v219
    %1151 = vmatpush1.msra.mxu0 %v218
    %1152 = vmatprep.subr.mxu0 %v222
    %1153 = vmatpush1.msra.mxu0 %v221
    %1154 = vmatprep.subr.mxu0 %v225
    %1155 = vmatpush1.msra.mxu0 %v224
    %1156 = vmatprep.subr.mxu0 %v228
    %1157 = vmatpush1.msra.mxu0 %v227
    %1158 = vmatprep.subr.mxu0 %v231
    %1159 = vmatpush1.msra.mxu0 %v230
    %1160 = vmatprep.subr.mxu0 %v234
    %1161 = vmatpush1.msra.mxu0 %v233
    %1162 = vmatprep.subr.mxu0 %v237
    %1163 = vmatpush1.msra.mxu0 %v236
    %1164 = vmatprep.subr.mxu0 %v240
    %1165 = vmatpush1.msra.mxu0 %v239
    %1166 = vmatprep.subr.mxu0 %v243
    %1167 = vmatpush1.msra.mxu0 %v242
    %1168 = vmatprep.subr.mxu0 %v246
    %1169 = vmatpush1.msra.mxu0 %v245
    %1170 = vmatprep.subr.mxu0 %v249
    %1171 = vmatpush1.msra.mxu0 %v248
    %1172 = vmatprep.subr.mxu0 %v252
    %1173 = vmatpush1.msra.mxu0 %v251
    %1174 = vmatprep.subr.mxu0 %v255
    %1175 = vmatpush1.msra.mxu0 %v254
    %1176 = vmatprep.subr.mxu0 %v258
    %1177 = vmatpush1.msra.mxu0 %v257
    %1178 = vmatprep.subr.mxu0 %v261
    %1179 = vmatpush1.msra.mxu0 %v260
    %1180 = vmatprep.subr.mxu0 %v264
    %1181 = vmatpush1.msra.mxu0 %v263
    %1182 = vmatprep.subr.mxu0 %v267
    %1183 = vmatpush1.msra.mxu0 %v266
    %1184 = vmatprep.subr.mxu0 %v270
    %1185 = vmatpush1.msra.mxu0 %v269
    %1186 = vmatprep.subr.mxu0 %v273
    %1187 = vmatpush1.msra.mxu0 %v272
    %1188 = vmatprep.subr.mxu0 %v276
    %1189 = vmatpush1.msra.mxu0 %v275
    %1190 = vmatprep.subr.mxu0 %v279
    %1191 = vmatpush1.msra.mxu0 %v278
    %1192 = vmatprep.mubr.f32.mxu0 %v1126
    %1193 = vmatmul.mubr.f32.gmra.mrb[0].mxu0 %v1125
    %v1194 = vpop.f32.mrb[0].mxu0
    %v1195 = vadd.f32 0.0, %v1194
    %v1196 = vpop.f32.mrb[0].mxu0
    %v1197 = vadd.f32 0.0, %v1196
    %1198 = vdwg.mxu0
    %1199 = vmatprep.subr.mxu0 %v282
    %1200 = vmatpush1.msra.mxu0 %v281
    %1201 = vmatprep.subr.mxu0 %v285
    %1202 = vmatpush1.msra.mxu0 %v284
    %1203 = vmatprep.subr.mxu0 %v288
    %1204 = vmatpush1.msra.mxu0 %v287
    %1205 = vmatprep.subr.mxu0 %v291
    %1206 = vmatpush1.msra.mxu0 %v290
    %1207 = vmatprep.subr.mxu0 %v294
    %1208 = vmatpush1.msra.mxu0 %v293
    %1209 = vmatprep.subr.mxu0 %v297
    %1210 = vmatpush1.msra.mxu0 %v296
    %1211 = vmatprep.subr.mxu0 %v300
    %1212 = vmatpush1.msra.mxu0 %v299
    %1213 = vmatprep.subr.mxu0 %v303
    %1214 = vmatpush1.msra.mxu0 %v302
    %1215 = vmatprep.subr.mxu0 %v306
    %1216 = vmatpush1.msra.mxu0 %v305
    %1217 = vmatprep.subr.mxu0 %v309
    %1218 = vmatpush1.msra.mxu0 %v308
    %1219 = vmatprep.subr.mxu0 %v312
    %1220 = vmatpush1.msra.mxu0 %v311
    %1221 = vmatprep.subr.mxu0 %v315
    %1222 = vmatpush1.msra.mxu0 %v314
    %1223 = vmatprep.subr.mxu0 %v318
    %1224 = vmatpush1.msra.mxu0 %v317
    %1225 = vmatprep.subr.mxu0 %v321
    %1226 = vmatpush1.msra.mxu0 %v320
    %1227 = vmatprep.subr.mxu0 %v324
    %1228 = vmatpush1.msra.mxu0 %v323
    %1229 = vmatprep.subr.mxu0 %v327
    %1230 = vmatpush1.msra.mxu0 %v326
    %1231 = vmatprep.subr.mxu0 0.0
    %1232 = vmatpush1.msra.mxu0 0.0
    %1233 = vmatprep.subr.mxu0 0.0
    %1234 = vmatpush1.msra.mxu0 0.0
    %1235 = vmatprep.subr.mxu0 0.0
    %1236 = vmatpush1.msra.mxu0 0.0
    %1237 = vmatprep.subr.mxu0 0.0
    %1238 = vmatpush1.msra.mxu0 0.0
    %1239 = vmatprep.subr.mxu0 0.0
    %1240 = vmatpush1.msra.mxu0 0.0
    %1241 = vmatprep.subr.mxu0 0.0
    %1242 = vmatpush1.msra.mxu0 0.0
    %1243 = vmatprep.subr.mxu0 0.0
    %1244 = vmatpush1.msra.mxu0 0.0
    %1245 = vmatprep.subr.mxu0 0.0
    %1246 = vmatpush1.msra.mxu0 0.0
    %1247 = vmatprep.subr.mxu0 0.0
    %1248 = vmatpush1.msra.mxu0 0.0
    %1249 = vmatprep.subr.mxu0 0.0
    %1250 = vmatpush1.msra.mxu0 0.0
    %1251 = vmatprep.subr.mxu0 0.0
    %1252 = vmatpush1.msra.mxu0 0.0
    %1253 = vmatprep.subr.mxu0 0.0
    %1254 = vmatpush1.msra.mxu0 0.0
    %1255 = vmatprep.subr.mxu0 0.0
    %1256 = vmatpush1.msra.mxu0 0.0
    %1257 = vmatprep.subr.mxu0 0.0
    %1258 = vmatpush1.msra.mxu0 0.0
    %1259 = vmatprep.subr.mxu0 0.0
    %1260 = vmatpush1.msra.mxu0 0.0
    %1261 = vmatprep.subr.mxu0 0.0
    %1262 = vmatpush1.msra.mxu0 0.0
    %1263 = vmatprep.mubr.f32.mxu0 0.0
    %1264 = vmatmul.mubr.f32.gmra.mrb[0].mxu0 %v1127
    %v1265 = vpop.f32.mrb[0].mxu0
    %v1266 = vadd.f32 %v1195, %v1265
    %v1267 = vpop.f32.mrb[0].mxu0
    %v1268 = vadd.f32 %v1197, %v1267
    %1269 = vdwg.mxu0
    %1270 = vmatprep.subr.mxu0 0.0
    %1271 = vmatpush1.msra.mxu0 %v187
    %1272 = vmatprep.subr.mxu0 0.0
    %1273 = vmatpush1.msra.mxu0 %v190
    %1274 = vmatprep.subr.mxu0 0.0
    %1275 = vmatpush1.msra.mxu0 %v193
    %1276 = vmatprep.subr.mxu0 0.0
    %1277 = vmatpush1.msra.mxu0 %v196
    %1278 = vmatprep.subr.mxu0 0.0
    %1279 = vmatpush1.msra.mxu0 %v199
    %1280 = vmatprep.subr.mxu0 0.0
    %1281 = vmatpush1.msra.mxu0 %v202
    %1282 = vmatprep.subr.mxu0 0.0
    %1283 = vmatpush1.msra.mxu0 %v205
    %1284 = vmatprep.subr.mxu0 0.0
    %1285 = vmatpush1.msra.mxu0 %v208
    %1286 = vmatprep.subr.mxu0 0.0
    %1287 = vmatpush1.msra.mxu0 %v211
    %1288 = vmatprep.subr.mxu0 0.0
    %1289 = vmatpush1.msra.mxu0 %v214
    %1290 = vmatprep.subr.mxu0 0.0
    %1291 = vmatpush1.msra.mxu0 %v217
    %1292 = vmatprep.subr.mxu0 0.0
    %1293 = vmatpush1.msra.mxu0 %v220
    %1294 = vmatprep.subr.mxu0 0.0
    %1295 = vmatpush1.msra.mxu0 %v223
    %1296 = vmatprep.subr.mxu0 0.0
    %1297 = vmatpush1.msra.mxu0 %v226
    %1298 = vmatprep.subr.mxu0 0.0
    %1299 = vmatpush1.msra.mxu0 %v229
    %1300 = vmatprep.subr.mxu0 0.0
    %1301 = vmatpush1.msra.mxu0 %v232
    %1302 = vmatprep.subr.mxu0 0.0
    %1303 = vmatpush1.msra.mxu0 %v235
    %1304 = vmatprep.subr.mxu0 0.0
    %1305 = vmatpush1.msra.mxu0 %v238
    %1306 = vmatprep.subr.mxu0 0.0
    %1307 = vmatpush1.msra.mxu0 %v241
    %1308 = vmatprep.subr.mxu0 0.0
    %1309 = vmatpush1.msra.mxu0 %v244
    %1310 = vmatprep.subr.mxu0 0.0
    %1311 = vmatpush1.msra.mxu0 %v247
    %1312 = vmatprep.subr.mxu0 0.0
    %1313 = vmatpush1.msra.mxu0 %v250
    %1314 = vmatprep.subr.mxu0 0.0
    %1315 = vmatpush1.msra.mxu0 %v253
    %1316 = vmatprep.subr.mxu0 0.0
    %1317 = vmatpush1.msra.mxu0 %v256
    %1318 = vmatprep.subr.mxu0 0.0
    %1319 = vmatpush1.msra.mxu0 %v259
    %1320 = vmatprep.subr.mxu0 0.0
    %1321 = vmatpush1.msra.mxu0 %v262
    %1322 = vmatprep.subr.mxu0 0.0
    %1323 = vmatpush1.msra.mxu0 %v265
    %1324 = vmatprep.subr.mxu0 0.0
    %1325 = vmatpush1.msra.mxu0 %v268
    %1326 = vmatprep.subr.mxu0 0.0
    %1327 = vmatpush1.msra.mxu0 %v271
    %1328 = vmatprep.subr.mxu0 0.0
    %1329 = vmatpush1.msra.mxu0 %v274
    %1330 = vmatprep.subr.mxu0 0.0
    %1331 = vmatpush1.msra.mxu0 %v277
    %1332 = vmatprep.subr.mxu0 0.0
    %1333 = vmatpush1.msra.mxu0 %v280
    %1334 = vmatprep.mubr.f32.mxu0 %v1126
    %1335 = vmatmul.mubr.f32.gmra.mrb[0].mxu0 %v1125
    %v1336 = vpop.f32.mrb[0].mxu0
    %v1337 = vadd.f32 0.0, %v1336
    %v1338 = vpop.f32.mrb[0].mxu0
    %1339 = vdwg.mxu0
    %1340 = vmatprep.subr.mxu0 0.0
    %1341 = vmatpush1.msra.mxu0 %v283
    %1342 = vmatprep.subr.mxu0 0.0
    %1343 = vmatpush1.msra.mxu0 %v286
    %1344 = vmatprep.subr.mxu0 0.0
    %1345 = vmatpush1.msra.mxu0 %v289
    %1346 = vmatprep.subr.mxu0 0.0
    %1347 = vmatpush1.msra.mxu0 %v292
    %1348 = vmatprep.subr.mxu0 0.0
    %1349 = vmatpush1.msra.mxu0 %v295
    %1350 = vmatprep.subr.mxu0 0.0
    %1351 = vmatpush1.msra.mxu0 %v298
    %1352 = vmatprep.subr.mxu0 0.0
    %1353 = vmatpush1.msra.mxu0 %v301
    %1354 = vmatprep.subr.mxu0 0.0
    %1355 = vmatpush1.msra.mxu0 %v304
    %1356 = vmatprep.subr.mxu0 0.0
    %1357 = vmatpush1.msra.mxu0 %v307
    %1358 = vmatprep.subr.mxu0 0.0
    %1359 = vmatpush1.msra.mxu0 %v310
    %1360 = vmatprep.subr.mxu0 0.0
    %1361 = vmatpush1.msra.mxu0 %v313
    %1362 = vmatprep.subr.mxu0 0.0
    %1363 = vmatpush1.msra.mxu0 %v316
    %1364 = vmatprep.subr.mxu0 0.0
    %1365 = vmatpush1.msra.mxu0 %v319
    %1366 = vmatprep.subr.mxu0 0.0
    %1367 = vmatpush1.msra.mxu0 %v322
    %1368 = vmatprep.subr.mxu0 0.0
    %1369 = vmatpush1.msra.mxu0 %v325
    %1370 = vmatprep.subr.mxu0 0.0
    %1371 = vmatpush1.msra.mxu0 %v328
    %1372 = vmatprep.subr.mxu0 0.0
    %1373 = vmatpush1.msra.mxu0 0.0
    %1374 = vmatprep.subr.mxu0 0.0
    %1375 = vmatpush1.msra.mxu0 0.0
    %1376 = vmatprep.subr.mxu0 0.0
    %1377 = vmatpush1.msra.mxu0 0.0
    %1378 = vmatprep.subr.mxu0 0.0
    %1379 = vmatpush1.msra.mxu0 0.0
    %1380 = vmatprep.subr.mxu0 0.0
    %1381 = vmatpush1.msra.mxu0 0.0
    %1382 = vmatprep.subr.mxu0 0.0
    %1383 = vmatpush1.msra.mxu0 0.0
    %1384 = vmatprep.subr.mxu0 0.0
    %1385 = vmatpush1.msra.mxu0 0.0
    %1386 = vmatprep.subr.mxu0 0.0
    %1387 = vmatpush1.msra.mxu0 0.0
    %1388 = vmatprep.subr.mxu0 0.0
    %1389 = vmatpush1.msra.mxu0 0.0
    %1390 = vmatprep.subr.mxu0 0.0
    %1391 = vmatpush1.msra.mxu0 0.0
    %1392 = vmatprep.subr.mxu0 0.0
    %1393 = vmatpush1.msra.mxu0 0.0
    %1394 = vmatprep.subr.mxu0 0.0
    %1395 = vmatpush1.msra.mxu0 0.0
    %1396 = vmatprep.subr.mxu0 0.0
    %1397 = vmatpush1.msra.mxu0 0.0
    %1398 = vmatprep.subr.mxu0 0.0
    %1399 = vmatpush1.msra.mxu0 0.0
    %1400 = vmatprep.subr.mxu0 0.0
    %1401 = vmatpush1.msra.mxu0 0.0
    %1402 = vmatprep.subr.mxu0 0.0
    %1403 = vmatpush1.msra.mxu0 0.0
    %1404 = vmatprep.mubr.f32.mxu0 0.0
    %1405 = vmatmul.mubr.f32.gmra.mrb[0].mxu0 %v1127
    %v1406 = vpop.f32.mrb[0].mxu0
    %v1407 = vadd.f32 %v1337, %v1406
    %v1408 = vpop.f32.mrb[0].mxu0
    %1409 = vdwg.mxu0
    %v1410 = vmul.f32 %v1266, 0.015625
    %v1411 = vmul.f32 %v1268, 0.015625
    %v1412 = vmul.f32 %v1407, 0.015625
    %v1413 = vmul.f32 %v1410, %v1410
    %v1414 = vmul.f32 %v1411, %v1411
    %v1415 = vmul.f32 %v1412, %v1412
    %v1419 = vrot.slane %v1413, 7
    %v1420 = vrot.slane %v1414, 7
    %v1421 = vrot.slane %v1415, 7
    %v1425 = vsub.f32 %v1410, %v1419
    %v1426 = vsub.f32 %v1411, %v1420
    %v1427 = vsub.f32 %v1412, %v1421
    %v1428 = vadd.f32 %v1425, 1e-05
    %v1429 = vadd.f32 %v1426, 1e-05
    %v1430 = vadd.f32 %v1427, 1e-05
    %v1431 = vrsqrt.pop %v1428
    %v1432 = vrsqrt.pop %v1429
    %v1433 = vrsqrt.pop %v1430
    %v1435 = vlaneseq
    %v1436 = vshrl.u32 %v1435, 7
    %v1437 = vsub.s32 0, %v1436
    %v1438 = vrot.slane %v330, %v1437
    %v1439 = vlaneseq
    %v1440 = vshrl.u32 %v1439, 7
    %v1441 = vsub.s32 1, %v1440
    %v1442 = vrot.slane %v330, %v1441
    %v1443 = vlaneseq
    %v1444 = vshrl.u32 %v1443, 7
    %v1445 = vsub.s32 2, %v1444
    %v1446 = vrot.slane %v330, %v1445
    %v1450 = vmul.f32 %v1431, %v1438
    %v1451 = vmul.f32 %v1432, %v1442
    %v1452 = vmul.f32 %v1433, %v1446
    %v1456 = vrot.slane %v1450, 1
    %v1457 = vrot.slane %v1451, 1
    %v1458 = vrot.slane %v1452, 1
    %v1462 = vmul.f32 %v1410, %v1456
    %v1463 = vmul.f32 %v1411, %v1457
    %v1464 = vmul.f32 %v1412, %v1458
    %v1468 = vcombine.low %v1462, %v1463
    %v1470 = vunpack.c.l.s4 1966171168
    %v1471 = vunpack.c.0.s8 %v1470
    %v1472 = vlaneseq
    %v1473 = vshrl.u32 %v1472, 7
    %v1474 = vsub.s32 %v1471, %v1473
    %v1475 = vrot.slane %v1468, %v1474
    %v1477 = vunpack.c.l.s4 1966171168
    %v1478 = vunpack.c.0.s8 %v1477
    %v1479 = vlaneseq
    %v1480 = vshrl.u32 %v1479, 7
    %v1481 = vsub.s32 %v1478, %v1480
    %v1482 = vrot.slane %v1464, %v1481
    %v1483 = vcombine.low %v1475, %v1482
    %v1485 = vunpack.c.l.s4 1966171168
    %v1486 = vunpack.c.0.s8 %v1485
    %v1487 = vlaneseq
    %v1488 = vshrl.u32 %v1487, 7
    %v1489 = vsub.s32 %v1486, %v1488
    %v1490 = vrot.slane %v1483, %v1489
    %v1492 = vsub.f32 %v331, %v1490
    %v1493 = vlaneseq
    %v1494 = vshrl.u32 %v1493, 7
    %v1495 = vsub.s32 1, %v1494
    %v1496 = vrot.slane %v1450, %v1495
    %v1497 = vlaneseq
    %v1498 = vshrl.u32 %v1497, 7
    %v1499 = vsub.s32 1, %v1498
    %v1500 = vrot.slane %v1451, %v1499
    %v1501 = vlaneseq
    %v1502 = vshrl.u32 %v1501, 7
    %v1503 = vsub.s32 1, %v1502
    %v1504 = vrot.slane %v1452, %v1503
    %v1505 = vmul.f32 %v1074, %v1496
    %v1506 = vmul.f32 %v1075, %v1500
    %v1507 = vmul.f32 %v1076, %v1504
    %v1509 = vlaneseq
    %v1510 = vshrl.u32 %v1509, 7
    %v1511 = vsub.s32 0, %v1510
    %v1512 = vrot.slane %v1492, %v1511
    %v1513 = vlaneseq
    %v1514 = vshrl.u32 %v1513, 7
    %v1515 = vsub.s32 1, %v1514
    %v1516 = vrot.slane %v1492, %v1515
    %v1517 = vlaneseq
    %v1518 = vshrl.u32 %v1517, 7
    %v1519 = vsub.s32 2, %v1518
    %v1520 = vrot.slane %v1492, %v1519
    %v1524 = vadd.f32 %v1505, %v1512
    %v1525 = vadd.f32 %v1506, %v1516
    %v1526 = vadd.f32 %v1507, %v1520
    %v1527 = vxor.u32 %v1526, 2147483648
    %v1528 = vmul.f32 %v1527, 1.442695
    %v1529 = vpow.pop %v1528
    %v1530 = vadd.f32 %v1529, 1.0
    %v1531 = vrcp.pop %v1530
    %v1532 = vmul.f32 1.0, %v1531
    %v1533 = vlaneseq
    %v1534 = vshrl.u32 %v1533, 7
    %v1535 = vsub.s32 0, %v1534
    %v1536 = vrot.slane %v850, %v1535
    %v1537 = vmul.f32 %v492, %v1536
    %v1538 = vlaneseq
    %v1539 = vshrl.u32 %v1538, 7
    %v1540 = vsub.s32 0, %v1539
    %v1541 = vrot.slane %v859, %v1540
    %v1542 = vadd.f32 %v1537, %v1541
    %v1543 = vtanh.pop %v1524
    %v1544 = vmul.f32 %v1542, %v1543
    %v1545 = vsub.f32 0.0, %v1532
    %v1546 = vmul.f32 %v1545, 1.442695
    %v1547 = vpow.pop %v1546
    %v1548 = vmul.f32 %v863, %v1547
    %v1549 = vmax.f32 %v1548, %v1525
    %v1550 = vsub.f32 %v863, %v1549
    %v1551 = vsub.f32 %v1550, %v1532
    %v1552 = vmul.f32 %v1551, 1.442695
    %v1553 = vpow.pop %v1552
    %v1554 = vsub.f32 %v1525, %v1549
    %v1555 = vmul.f32 %v1554, 1.442695
    %v1556 = vpow.pop %v1555
    %v1557 = vmul.f32 %v861, %v1553
    %v1558 = vmul.f32 %v1544, %v1556
    %v1559 = vadd.f32 %v1557, %v1558
    %v1560 = vmul.f32 %v862, %v1553
    %v1561 = vadd.f32 %v1560, %v1556
    %v1562 = vrcp.pop %v1561
    %v1563 = vmul.f32 %v1559, %v1562
    %v1564 = vtanh.pop %v1563
    %1565 = vst [vmem:[#allocation13] sm:$0xff] %v1559
    %1566 = vst [vmem:[#allocation15] sm:$0xff] %v1561
    %1567 = vst [vmem:[#allocation16] sm:$0xff] %v1564
    %1568 = vst [vmem:[#allocation18] sm:$0xff] %v1549
    %1569 = vst [vmem:[#allocation2] sm:$0xff] %v1564
    %v1570 = vld [vmem:[#allocation16] sm:$0xff]
    %v1571 = vld [vmem:[#allocation13] sm:$0xff]
    %v1572 = vld [vmem:[#allocation15] sm:$0xff]
    %v1573 = vld [vmem:[#allocation18] sm:$0xff]
    %v1574 = vpack.c.bf16 %v1570, %v1570
    %1575 = vmatprep.subr.bf16.mxu0 %v946
    %1576 = vmatpush1.bf16.msra.mxu0 %v945
    %1577 = vmatprep.subr.bf16.mxu0 %v949
    %1578 = vmatpush1.bf16.msra.mxu0 %v948
    %1579 = vmatprep.subr.bf16.mxu0 %v952
    %1580 = vmatpush1.bf16.msra.mxu0 %v951
    %1581 = vmatprep.subr.bf16.mxu0 %v955
    %1582 = vmatpush1.bf16.msra.mxu0 %v954
    %1583 = vmatprep.subr.bf16.mxu0 %v958
    %1584 = vmatpush1.bf16.msra.mxu0 %v957
    %1585 = vmatprep.subr.bf16.mxu0 %v961
    %1586 = vmatpush1.bf16.msra.mxu0 %v960
    %1587 = vmatprep.subr.bf16.mxu0 %v964
    %1588 = vmatpush1.bf16.msra.mxu0 %v963
    %1589 = vmatprep.subr.bf16.mxu0 %v967
    %1590 = vmatpush1.bf16.msra.mxu0 %v966
    %1591 = vmatprep.subr.bf16.mxu0 0
    %1592 = vmatpush1.bf16.msra.mxu0 0
    %1593 = vmatprep.subr.bf16.mxu0 0
    %1594 = vmatpush1.bf16.msra.mxu0 0
    %1595 = vmatprep.subr.bf16.mxu0 0
    %1596 = vmatpush1.bf16.msra.mxu0 0
    %1597 = vmatprep.subr.bf16.mxu0 0
    %1598 = vmatpush1.bf16.msra.mxu0 0
    %1599 = vmatprep.subr.bf16.mxu0 0
    %1600 = vmatpush1.bf16.msra.mxu0 0
    %1601 = vmatprep.subr.bf16.mxu0 0
    %1602 = vmatpush1.bf16.msra.mxu0 0
    %1603 = vmatprep.subr.bf16.mxu0 0
    %1604 = vmatpush1.bf16.msra.mxu0 0
    %1605 = vmatprep.subr.bf16.mxu0 0
    %1606 = vmatpush1.bf16.msra.mxu0 0
    %1607 = vmatprep.mubr.bf16.mxu0 0
    %1608 = vmatmul.mubr.bf16.gmra.mrb[0].mxu0 %v1574
    %v1609 = vpop.f32.mrb[0].mxu0
    %v1610 = vadd.f32 0.0, %v1609
    %v1611 = vpop.f32.mrb[0].mxu0
    %v1612 = vadd.f32 0.0, %v1611
    %v1613 = vpop.f32.mrb[0].mxu0
    %v1614 = vpop.f32.mrb[0].mxu0
    %1615 = vdwg.mxu0
    %1616 = vmatprep.subr.bf16.mxu0 0
    %1617 = vmatpush1.bf16.msra.mxu0 %v947
    %1618 = vmatprep.subr.bf16.mxu0 0
    %1619 = vmatpush1.bf16.msra.mxu0 %v950
    %1620 = vmatprep.subr.bf16.mxu0 0
    %1621 = vmatpush1.bf16.msra.mxu0 %v953
    %1622 = vmatprep.subr.bf16.mxu0 0
    %1623 = vmatpush1.bf16.msra.mxu0 %v956
    %1624 = vmatprep.subr.bf16.mxu0 0
    %1625 = vmatpush1.bf16.msra.mxu0 %v959
    %1626 = vmatprep.subr.bf16.mxu0 0
    %1627 = vmatpush1.bf16.msra.mxu0 %v962
    %1628 = vmatprep.subr.bf16.mxu0 0
    %1629 = vmatpush1.bf16.msra.mxu0 %v965
    %1630 = vmatprep.subr.bf16.mxu0 0
    %1631 = vmatpush1.bf16.msra.mxu0 %v968
    %1632 = vmatprep.subr.bf16.mxu0 0
    %1633 = vmatpush1.bf16.msra.mxu0 0
    %1634 = vmatprep.subr.bf16.mxu0 0
    %1635 = vmatpush1.bf16.msra.mxu0 0
    %1636 = vmatprep.subr.bf16.mxu0 0
    %1637 = vmatpush1.bf16.msra.mxu0 0
    %1638 = vmatprep.subr.bf16.mxu0 0
    %1639 = vmatpush1.bf16.msra.mxu0 0
    %1640 = vmatprep.subr.bf16.mxu0 0
    %1641 = vmatpush1.bf16.msra.mxu0 0
    %1642 = vmatprep.subr.bf16.mxu0 0
    %1643 = vmatpush1.bf16.msra.mxu0 0
    %1644 = vmatprep.subr.bf16.mxu0 0
    %1645 = vmatpush1.bf16.msra.mxu0 0
    %1646 = vmatprep.subr.bf16.mxu0 0
    %1647 = vmatpush1.bf16.msra.mxu0 0
    %1648 = vmatprep.mubr.bf16.mxu0 0
    %1649 = vmatmul.mubr.bf16.gmra.mrb[0].mxu0 %v1574
    %v1650 = vpop.f32.mrb[0].mxu0
    %v1651 = vadd.f32 0.0, %v1650
    %v1652 = vpop.f32.mrb[0].mxu0
    %v1653 = vpop.f32.mrb[0].mxu0
    %v1654 = vpop.f32.mrb[0].mxu0
    %1655 = vdwg.mxu0
    %v1656 = vadd.f32 %v421, %v1610
    %v1657 = vadd.f32 %v423, %v1612
    %v1658 = vadd.f32 %v494, %v1651
    %v1659 = vmul.f32 %v1656, %v1080
    %v1660 = vmul.f32 %v1657, %v1080
    %v1661 = vmul.f32 %v1658, %v1080
    %v1662 = vrot.slane %v1659, 4
    %v1663 = vadd.f32 %v1659, %v1662
    %v1664 = vrot.slane %v1663, 2
    %v1665 = vadd.f32 %v1663, %v1664
    %v1666 = vrot.slane %v1665, 1
    %v1667 = vadd.f32 %v1665, %v1666
    %v1668 = vrot.slane %v1660, 4
    %v1669 = vadd.f32 %v1660, %v1668
    %v1670 = vrot.slane %v1669, 2
    %v1671 = vadd.f32 %v1669, %v1670
    %v1672 = vrot.slane %v1671, 1
    %v1673 = vadd.f32 %v1671, %v1672
    %v1674 = vrot.slane %v1661, 4
    %v1675 = vadd.f32 %v1661, %v1674
    %v1676 = vrot.slane %v1675, 2
    %v1677 = vadd.f32 %v1675, %v1676
    %v1678 = vrot.slane %v1677, 1
    %v1679 = vadd.f32 %v1677, %v1678
    %v1680 = vmul.f32 %v1659, %v1656
    %v1681 = vmul.f32 %v1660, %v1657
    %v1682 = vmul.f32 %v1661, %v1658
    %v1683 = vrot.slane %v1680, 4
    %v1684 = vadd.f32 %v1680, %v1683
    %v1685 = vrot.slane %v1684, 2
    %v1686 = vadd.f32 %v1684, %v1685
    %v1687 = vrot.slane %v1686, 1
    %v1688 = vadd.f32 %v1686, %v1687
    %v1689 = vrot.slane %v1681, 4
    %v1690 = vadd.f32 %v1681, %v1689
    %v1691 = vrot.slane %v1690, 2
    %v1692 = vadd.f32 %v1690, %v1691
    %v1693 = vrot.slane %v1692, 1
    %v1694 = vadd.f32 %v1692, %v1693
    %v1695 = vrot.slane %v1682, 4
    %v1696 = vadd.f32 %v1682, %v1695
    %v1697 = vrot.slane %v1696, 2
    %v1698 = vadd.f32 %v1696, %v1697
    %v1699 = vrot.slane %v1698, 1
    %v1700 = vadd.f32 %v1698, %v1699
    %v1701 = vsel %vm1124, %v1667, %v1688
    %v1702 = vsel %vm1124, %v1673, %v1694
    %v1703 = vsel %vm1124, %v1679, %v1700
    %1704 = vmatprep.subr.mxu0 %v186
    %1705 = vmatpush1.msra.mxu0 %v185
    %1706 = vmatprep.subr.mxu0 %v189
    %1707 = vmatpush1.msra.mxu0 %v188
    %1708 = vmatprep.subr.mxu0 %v192
    %1709 = vmatpush1.msra.mxu0 %v191
    %1710 = vmatprep.subr.mxu0 %v195
    %1711 = vmatpush1.msra.mxu0 %v194
    %1712 = vmatprep.subr.mxu0 %v198
    %1713 = vmatpush1.msra.mxu0 %v197
    %1714 = vmatprep.subr.mxu0 %v201
    %1715 = vmatpush1.msra.mxu0 %v200
    %1716 = vmatprep.subr.mxu0 %v204
    %1717 = vmatpush1.msra.mxu0 %v203
    %1718 = vmatprep.subr.mxu0 %v207
    %1719 = vmatpush1.msra.mxu0 %v206
    %1720 = vmatprep.subr.mxu0 %v210
    %1721 = vmatpush1.msra.mxu0 %v209
    %1722 = vmatprep.subr.mxu0 %v213
    %1723 = vmatpush1.msra.mxu0 %v212
    %1724 = vmatprep.subr.mxu0 %v216
    %1725 = vmatpush1.msra.mxu0 %v215
    %1726 = vmatprep.subr.mxu0 %v219
    %1727 = vmatpush1.msra.mxu0 %v218
    %1728 = vmatprep.subr.mxu0 %v222
    %1729 = vmatpush1.msra.mxu0 %v221
    %1730 = vmatprep.subr.mxu0 %v225
    %1731 = vmatpush1.msra.mxu0 %v224
    %1732 = vmatprep.subr.mxu0 %v228
    %1733 = vmatpush1.msra.mxu0 %v227
    %1734 = vmatprep.subr.mxu0 %v231
    %1735 = vmatpush1.msra.mxu0 %v230
    %1736 = vmatprep.subr.mxu0 %v234
    %1737 = vmatpush1.msra.mxu0 %v233
    %1738 = vmatprep.subr.mxu0 %v237
    %1739 = vmatpush1.msra.mxu0 %v236
    %1740 = vmatprep.subr.mxu0 %v240
    %1741 = vmatpush1.msra.mxu0 %v239
    %1742 = vmatprep.subr.mxu0 %v243
    %1743 = vmatpush1.msra.mxu0 %v242
    %1744 = vmatprep.subr.mxu0 %v246
    %1745 = vmatpush1.msra.mxu0 %v245
    %1746 = vmatprep.subr.mxu0 %v249
    %1747 = vmatpush1.msra.mxu0 %v248
    %1748 = vmatprep.subr.mxu0 %v252
    %1749 = vmatpush1.msra.mxu0 %v251
    %1750 = vmatprep.subr.mxu0 %v255
    %1751 = vmatpush1.msra.mxu0 %v254
    %1752 = vmatprep.subr.mxu0 %v258
    %1753 = vmatpush1.msra.mxu0 %v257
    %1754 = vmatprep.subr.mxu0 %v261
    %1755 = vmatpush1.msra.mxu0 %v260
    %1756 = vmatprep.subr.mxu0 %v264
    %1757 = vmatpush1.msra.mxu0 %v263
    %1758 = vmatprep.subr.mxu0 %v267
    %1759 = vmatpush1.msra.mxu0 %v266
    %1760 = vmatprep.subr.mxu0 %v270
    %1761 = vmatpush1.msra.mxu0 %v269
    %1762 = vmatprep.subr.mxu0 %v273
    %1763 = vmatpush1.msra.mxu0 %v272
    %1764 = vmatprep.subr.mxu0 %v276
    %1765 = vmatpush1.msra.mxu0 %v275
    %1766 = vmatprep.subr.mxu0 %v279
    %1767 = vmatpush1.msra.mxu0 %v278
    %1768 = vmatprep.mubr.f32.mxu0 %v1702
    %1769 = vmatmul.mubr.f32.gmra.mrb[0].mxu0 %v1701
    %v1770 = vpop.f32.mrb[0].mxu0
    %v1771 = vadd.f32 0.0, %v1770
    %v1772 = vpop.f32.mrb[0].mxu0
    %v1773 = vadd.f32 0.0, %v1772
    %1774 = vdwg.mxu0
    %1775 = vmatprep.subr.mxu0 %v282
    %1776 = vmatpush1.msra.mxu0 %v281
    %1777 = vmatprep.subr.mxu0 %v285
    %1778 = vmatpush1.msra.mxu0 %v284
    %1779 = vmatprep.subr.mxu0 %v288
    %1780 = vmatpush1.msra.mxu0 %v287
    %1781 = vmatprep.subr.mxu0 %v291
    %1782 = vmatpush1.msra.mxu0 %v290
    %1783 = vmatprep.subr.mxu0 %v294
    %1784 = vmatpush1.msra.mxu0 %v293
    %1785 = vmatprep.subr.mxu0 %v297
    %1786 = vmatpush1.msra.mxu0 %v296
    %1787 = vmatprep.subr.mxu0 %v300
    %1788 = vmatpush1.msra.mxu0 %v299
    %1789 = vmatprep.subr.mxu0 %v303
    %1790 = vmatpush1.msra.mxu0 %v302
    %1791 = vmatprep.subr.mxu0 %v306
    %1792 = vmatpush1.msra.mxu0 %v305
    %1793 = vmatprep.subr.mxu0 %v309
    %1794 = vmatpush1.msra.mxu0 %v308
    %1795 = vmatprep.subr.mxu0 %v312
    %1796 = vmatpush1.msra.mxu0 %v311
    %1797 = vmatprep.subr.mxu0 %v315
    %1798 = vmatpush1.msra.mxu0 %v314
    %1799 = vmatprep.subr.mxu0 %v318
    %1800 = vmatpush1.msra.mxu0 %v317
    %1801 = vmatprep.subr.mxu0 %v321
    %1802 = vmatpush1.msra.mxu0 %v320
    %1803 = vmatprep.subr.mxu0 %v324
    %1804 = vmatpush1.msra.mxu0 %v323
    %1805 = vmatprep.subr.mxu0 %v327
    %1806 = vmatpush1.msra.mxu0 %v326
    %1807 = vmatprep.subr.mxu0 0.0
    %1808 = vmatpush1.msra.mxu0 0.0
    %1809 = vmatprep.subr.mxu0 0.0
    %1810 = vmatpush1.msra.mxu0 0.0
    %1811 = vmatprep.subr.mxu0 0.0
    %1812 = vmatpush1.msra.mxu0 0.0
    %1813 = vmatprep.subr.mxu0 0.0
    %1814 = vmatpush1.msra.mxu0 0.0
    %1815 = vmatprep.subr.mxu0 0.0
    %1816 = vmatpush1.msra.mxu0 0.0
    %1817 = vmatprep.subr.mxu0 0.0
    %1818 = vmatpush1.msra.mxu0 0.0
    %1819 = vmatprep.subr.mxu0 0.0
    %1820 = vmatpush1.msra.mxu0 0.0
    %1821 = vmatprep.subr.mxu0 0.0
    %1822 = vmatpush1.msra.mxu0 0.0
    %1823 = vmatprep.subr.mxu0 0.0
    %1824 = vmatpush1.msra.mxu0 0.0
    %1825 = vmatprep.subr.mxu0 0.0
    %1826 = vmatpush1.msra.mxu0 0.0
    %1827 = vmatprep.subr.mxu0 0.0
    %1828 = vmatpush1.msra.mxu0 0.0
    %1829 = vmatprep.subr.mxu0 0.0
    %1830 = vmatpush1.msra.mxu0 0.0
    %1831 = vmatprep.subr.mxu0 0.0
    %1832 = vmatpush1.msra.mxu0 0.0
    %1833 = vmatprep.subr.mxu0 0.0
    %1834 = vmatpush1.msra.mxu0 0.0
    %1835 = vmatprep.subr.mxu0 0.0
    %1836 = vmatpush1.msra.mxu0 0.0
    %1837 = vmatprep.subr.mxu0 0.0
    %1838 = vmatpush1.msra.mxu0 0.0
    %1839 = vmatprep.mubr.f32.mxu0 0.0
    %1840 = vmatmul.mubr.f32.gmra.mrb[0].mxu0 %v1703
    %v1841 = vpop.f32.mrb[0].mxu0
    %v1842 = vadd.f32 %v1771, %v1841
    %v1843 = vpop.f32.mrb[0].mxu0
    %v1844 = vadd.f32 %v1773, %v1843
    %1845 = vdwg.mxu0
    %1846 = vmatprep.subr.mxu0 0.0
    %1847 = vmatpush1.msra.mxu0 %v187
    %1848 = vmatprep.subr.mxu0 0.0
    %1849 = vmatpush1.msra.mxu0 %v190
    %1850 = vmatprep.subr.mxu0 0.0
    %1851 = vmatpush1.msra.mxu0 %v193
    %1852 = vmatprep.subr.mxu0 0.0
    %1853 = vmatpush1.msra.mxu0 %v196
    %1854 = vmatprep.subr.mxu0 0.0
    %1855 = vmatpush1.msra.mxu0 %v199
    %1856 = vmatprep.subr.mxu0 0.0
    %1857 = vmatpush1.msra.mxu0 %v202
    %1858 = vmatprep.subr.mxu0 0.0
    %1859 = vmatpush1.msra.mxu0 %v205
    %1860 = vmatprep.subr.mxu0 0.0
    %1861 = vmatpush1.msra.mxu0 %v208
    %1862 = vmatprep.subr.mxu0 0.0
    %1863 = vmatpush1.msra.mxu0 %v211
    %1864 = vmatprep.subr.mxu0 0.0
    %1865 = vmatpush1.msra.mxu0 %v214
    %1866 = vmatprep.subr.mxu0 0.0
    %1867 = vmatpush1.msra.mxu0 %v217
    %1868 = vmatprep.subr.mxu0 0.0
    %1869 = vmatpush1.msra.mxu0 %v220
    %1870 = vmatprep.subr.mxu0 0.0
    %1871 = vmatpush1.msra.mxu0 %v223
    %1872 = vmatprep.subr.mxu0 0.0
    %1873 = vmatpush1.msra.mxu0 %v226
    %1874 = vmatprep.subr.mxu0 0.0
    %1875 = vmatpush1.msra.mxu0 %v229
    %1876 = vmatprep.subr.mxu0 0.0
    %1877 = vmatpush1.msra.mxu0 %v232
    %1878 = vmatprep.subr.mxu0 0.0
    %1879 = vmatpush1.msra.mxu0 %v235
    %1880 = vmatprep.subr.mxu0 0.0
    %1881 = vmatpush1.msra.mxu0 %v238
    %1882 = vmatprep.subr.mxu0 0.0
    %1883 = vmatpush1.msra.mxu0 %v241
    %1884 = vmatprep.subr.mxu0 0.0
    %1885 = vmatpush1.msra.mxu0 %v244
    %1886 = vmatprep.subr.mxu0 0.0
    %1887 = vmatpush1.msra.mxu0 %v247
    %1888 = vmatprep.subr.mxu0 0.0
    %1889 = vmatpush1.msra.mxu0 %v250
    %1890 = vmatprep.subr.mxu0 0.0
    %1891 = vmatpush1.msra.mxu0 %v253
    %1892 = vmatprep.subr.mxu0 0.0
    %1893 = vmatpush1.msra.mxu0 %v256
    %1894 = vmatprep.subr.mxu0 0.0
    %1895 = vmatpush1.msra.mxu0 %v259
    %1896 = vmatprep.subr.mxu0 0.0
    %1897 = vmatpush1.msra.mxu0 %v262
    %1898 = vmatprep.subr.mxu0 0.0
    %1899 = vmatpush1.msra.mxu0 %v265
    %1900 = vmatprep.subr.mxu0 0.0
    %1901 = vmatpush1.msra.mxu0 %v268
    %1902 = vmatprep.subr.mxu0 0.0
    %1903 = vmatpush1.msra.mxu0 %v271
    %1904 = vmatprep.subr.mxu0 0.0
    %1905 = vmatpush1.msra.mxu0 %v274
    %1906 = vmatprep.subr.mxu0 0.0
    %1907 = vmatpush1.msra.mxu0 %v277
    %1908 = vmatprep.subr.mxu0 0.0
    %1909 = vmatpush1.msra.mxu0 %v280
    %1910 = vmatprep.mubr.f32.mxu0 %v1702
    %1911 = vmatmul.mubr.f32.gmra.mrb[0].mxu0 %v1701
    %v1912 = vpop.f32.mrb[0].mxu0
    %v1913 = vadd.f32 0.0, %v1912
    %v1914 = vpop.f32.mrb[0].mxu0
    %1915 = vdwg.mxu0
    %1916 = vmatprep.subr.mxu0 0.0
    %1917 = vmatpush1.msra.mxu0 %v283
    %1918 = vmatprep.subr.mxu0 0.0
    %1919 = vmatpush1.msra.mxu0 %v286
    %1920 = vmatprep.subr.mxu0 0.0
    %1921 = vmatpush1.msra.mxu0 %v289
    %1922 = vmatprep.subr.mxu0 0.0
    %1923 = vmatpush1.msra.mxu0 %v292
    %1924 = vmatprep.subr.mxu0 0.0
    %1925 = vmatpush1.msra.mxu0 %v295
    %1926 = vmatprep.subr.mxu0 0.0
    %1927 = vmatpush1.msra.mxu0 %v298
    %1928 = vmatprep.subr.mxu0 0.0
    %1929 = vmatpush1.msra.mxu0 %v301
    %1930 = vmatprep.subr.mxu0 0.0
    %1931 = vmatpush1.msra.mxu0 %v304
    %1932 = vmatprep.subr.mxu0 0.0
    %1933 = vmatpush1.msra.mxu0 %v307
    %1934 = vmatprep.subr.mxu0 0.0
    %1935 = vmatpush1.msra.mxu0 %v310
    %1936 = vmatprep.subr.mxu0 0.0
    %1937 = vmatpush1.msra.mxu0 %v313
    %1938 = vmatprep.subr.mxu0 0.0
    %1939 = vmatpush1.msra.mxu0 %v316
    %1940 = vmatprep.subr.mxu0 0.0
    %1941 = vmatpush1.msra.mxu0 %v319
    %1942 = vmatprep.subr.mxu0 0.0
    %1943 = vmatpush1.msra.mxu0 %v322
    %1944 = vmatprep.subr.mxu0 0.0
    %1945 = vmatpush1.msra.mxu0 %v325
    %1946 = vmatprep.subr.mxu0 0.0
    %1947 = vmatpush1.msra.mxu0 %v328
    %1948 = vmatprep.subr.mxu0 0.0
    %1949 = vmatpush1.msra.mxu0 0.0
    %1950 = vmatprep.subr.mxu0 0.0
    %1951 = vmatpush1.msra.mxu0 0.0
    %1952 = vmatprep.subr.mxu0 0.0
    %1953 = vmatpush1.msra.mxu0 0.0
    %1954 = vmatprep.subr.mxu0 0.0
    %1955 = vmatpush1.msra.mxu0 0.0
    %1956 = vmatprep.subr.mxu0 0.0
    %1957 = vmatpush1.msra.mxu0 0.0
    %1958 = vmatprep.subr.mxu0 0.0
    %1959 = vmatpush1.msra.mxu0 0.0
    %1960 = vmatprep.subr.mxu0 0.0
    %1961 = vmatpush1.msra.mxu0 0.0
    %1962 = vmatprep.subr.mxu0 0.0
    %1963 = vmatpush1.msra.mxu0 0.0
    %1964 = vmatprep.subr.mxu0 0.0
    %1965 = vmatpush1.msra.mxu0 0.0
    %1966 = vmatprep.subr.mxu0 0.0
    %1967 = vmatpush1.msra.mxu0 0.0
    %1968 = vmatprep.subr.mxu0 0.0
    %1969 = vmatpush1.msra.mxu0 0.0
    %1970 = vmatprep.subr.mxu0 0.0
    %1971 = vmatpush1.msra.mxu0 0.0
    %1972 = vmatprep.subr.mxu0 0.0
    %1973 = vmatpush1.msra.mxu0 0.0
    %1974 = vmatprep.subr.mxu0 0.0
    %1975 = vmatpush1.msra.mxu0 0.0
    %1976 = vmatprep.subr.mxu0 0.0
    %1977 = vmatpush1.msra.mxu0 0.0
    %1978 = vmatprep.subr.mxu0 0.0
    %1979 = vmatpush1.msra.mxu0 0.0
    %1980 = vmatprep.mubr.f32.mxu0 0.0
    %1981 = vmatmul.mubr.f32.gmra.mrb[0].mxu0 %v1703
    %v1982 = vpop.f32.mrb[0].mxu0
    %v1983 = vadd.f32 %v1913, %v1982
    %v1984 = vpop.f32.mrb[0].mxu0
    %1985 = vdwg.mxu0
    %v1986 = vmul.f32 %v1842, 0.015625
    %v1987 = vmul.f32 %v1844, 0.015625
    %v1988 = vmul.f32 %v1983, 0.015625
    %v1989 = vmul.f32 %v1986, %v1986
    %v1990 = vmul.f32 %v1987, %v1987
    %v1991 = vmul.f32 %v1988, %v1988
    %v1995 = vrot.slane %v1989, 7
    %v1996 = vrot.slane %v1990, 7
    %v1997 = vrot.slane %v1991, 7
    %v2001 = vsub.f32 %v1986, %v1995
    %v2002 = vsub.f32 %v1987, %v1996
    %v2003 = vsub.f32 %v1988, %v1997
    %v2004 = vadd.f32 %v2001, 1e-05
    %v2005 = vadd.f32 %v2002, 1e-05
    %v2006 = vadd.f32 %v2003, 1e-05
    %v2007 = vrsqrt.pop %v2004
    %v2008 = vrsqrt.pop %v2005
    %v2009 = vrsqrt.pop %v2006
    %v2010 = vmul.f32 %v2007, %v1438
    %v2011 = vmul.f32 %v2008, %v1442
    %v2012 = vmul.f32 %v2009, %v1446
    %v2016 = vrot.slane %v2010, 1
    %v2017 = vrot.slane %v2011, 1
    %v2018 = vrot.slane %v2012, 1
    %v2022 = vmul.f32 %v1986, %v2016
    %v2023 = vmul.f32 %v1987, %v2017
    %v2024 = vmul.f32 %v1988, %v2018
    %v2028 = vcombine.low %v2022, %v2023
    %v2030 = vunpack.c.l.s4 1966171168
    %v2031 = vunpack.c.0.s8 %v2030
    %v2032 = vlaneseq
    %v2033 = vshrl.u32 %v2032, 7
    %v2034 = vsub.s32 %v2031, %v2033
    %v2035 = vrot.slane %v2028, %v2034
    %v2037 = vunpack.c.l.s4 1966171168
    %v2038 = vunpack.c.0.s8 %v2037
    %v2039 = vlaneseq
    %v2040 = vshrl.u32 %v2039, 7
    %v2041 = vsub.s32 %v2038, %v2040
    %v2042 = vrot.slane %v2024, %v2041
    %v2043 = vcombine.low %v2035, %v2042
    %v2045 = vunpack.c.l.s4 1966171168
    %v2046 = vunpack.c.0.s8 %v2045
    %v2047 = vlaneseq
    %v2048 = vshrl.u32 %v2047, 7
    %v2049 = vsub.s32 %v2046, %v2048
    %v2050 = vrot.slane %v2043, %v2049
    %v2052 = vsub.f32 %v331, %v2050
    %v2053 = vlaneseq
    %v2054 = vshrl.u32 %v2053, 7
    %v2055 = vsub.s32 1, %v2054
    %v2056 = vrot.slane %v2010, %v2055
    %v2057 = vlaneseq
    %v2058 = vshrl.u32 %v2057, 7
    %v2059 = vsub.s32 1, %v2058
    %v2060 = vrot.slane %v2011, %v2059
    %v2061 = vlaneseq
    %v2062 = vshrl.u32 %v2061, 7
    %v2063 = vsub.s32 1, %v2062
    %v2064 = vrot.slane %v2012, %v2063
    %v2065 = vmul.f32 %v1656, %v2056
    %v2066 = vmul.f32 %v1657, %v2060
    %v2067 = vmul.f32 %v1658, %v2064
    %v2069 = vlaneseq
    %v2070 = vshrl.u32 %v2069, 7
    %v2071 = vsub.s32 0, %v2070
    %v2072 = vrot.slane %v2052, %v2071
    %v2073 = vlaneseq
    %v2074 = vshrl.u32 %v2073, 7
    %v2075 = vsub.s32 1, %v2074
    %v2076 = vrot.slane %v2052, %v2075
    %v2077 = vlaneseq
    %v2078 = vshrl.u32 %v2077, 7
    %v2079 = vsub.s32 2, %v2078
    %v2080 = vrot.slane %v2052, %v2079
    %v2084 = vadd.f32 %v2065, %v2072
    %v2085 = vadd.f32 %v2066, %v2076
    %v2086 = vadd.f32 %v2067, %v2080
    %v2087 = vxor.u32 %v2086, 2147483648
    %v2088 = vmul.f32 %v2087, 1.442695
    %v2089 = vpow.pop %v2088
    %v2090 = vadd.f32 %v2089, 1.0
    %v2091 = vrcp.pop %v2090
    %v2092 = vmul.f32 1.0, %v2091
    %v2093 = vlaneseq
    %v2094 = vshrl.u32 %v2093, 7
    %v2095 = vsub.s32 1, %v2094
    %v2096 = vrot.slane %v850, %v2095
    %v2097 = vmul.f32 %v496, %v2096
    %v2098 = vlaneseq
    %v2099 = vshrl.u32 %v2098, 7
    %v2100 = vsub.s32 1, %v2099
    %v2101 = vrot.slane %v859, %v2100
    %v2102 = vadd.f32 %v2097, %v2101
    %v2103 = vtanh.pop %v2084
    %v2104 = vmul.f32 %v2102, %v2103
    %v2105 = vsub.f32 0.0, %v2092
    %v2106 = vmul.f32 %v2105, 1.442695
    %v2107 = vpow.pop %v2106
    %v2108 = vmul.f32 %v1573, %v2107
    %v2109 = vmax.f32 %v2108, %v2085
    %v2110 = vsub.f32 %v1573, %v2109
    %v2111 = vsub.f32 %v2110, %v2092
    %v2112 = vmul.f32 %v2111, 1.442695
    %v2113 = vpow.pop %v2112
    %v2114 = vsub.f32 %v2085, %v2109
    %v2115 = vmul.f32 %v2114, 1.442695
    %v2116 = vpow.pop %v2115
    %v2117 = vmul.f32 %v1571, %v2113
    %v2118 = vmul.f32 %v2104, %v2116
    %v2119 = vadd.f32 %v2117, %v2118
    %v2120 = vmul.f32 %v1572, %v2113
    %v2121 = vadd.f32 %v2120, %v2116
    %v2122 = vrcp.pop %v2121
    %v2123 = vmul.f32 %v2119, %v2122
    %v2124 = vtanh.pop %v2123
    %2125 = vst [vmem:[#allocation13] sm:$0xff] %v2119
    %2126 = vst [vmem:[#allocation15] sm:$0xff] %v2121
    %2127 = vst [vmem:[#allocation16] sm:$0xff] %v2124
    %2128 = vst [vmem:[#allocation18] sm:$0xff] %v2109
    %2129 = vst [vmem:[#allocation2 + $0x8] sm:$0xff] %v2124
    %v2130 = vld [vmem:[#allocation16] sm:$0xff]
    %v2131 = vld [vmem:[#allocation13] sm:$0xff]
    %v2132 = vld [vmem:[#allocation15] sm:$0xff]
    %v2133 = vld [vmem:[#allocation18] sm:$0xff]
    %v2134 = vpack.c.bf16 %v2130, %v2130
    %2135 = vmatprep.subr.bf16.mxu0 %v946
    %2136 = vmatpush1.bf16.msra.mxu0 %v945
    %2137 = vmatprep.subr.bf16.mxu0 %v949
    %2138 = vmatpush1.bf16.msra.mxu0 %v948
    %2139 = vmatprep.subr.bf16.mxu0 %v952
    %2140 = vmatpush1.bf16.msra.mxu0 %v951
    %2141 = vmatprep.subr.bf16.mxu0 %v955
    %2142 = vmatpush1.bf16.msra.mxu0 %v954
    %2143 = vmatprep.subr.bf16.mxu0 %v958
    %2144 = vmatpush1.bf16.msra.mxu0 %v957
    %2145 = vmatprep.subr.bf16.mxu0 %v961
    %2146 = vmatpush1.bf16.msra.mxu0 %v960
    %2147 = vmatprep.subr.bf16.mxu0 %v964
    %2148 = vmatpush1.bf16.msra.mxu0 %v963
    %2149 = vmatprep.subr.bf16.mxu0 %v967
    %2150 = vmatpush1.bf16.msra.mxu0 %v966
    %2151 = vmatprep.subr.bf16.mxu0 0
    %2152 = vmatpush1.bf16.msra.mxu0 0
    %2153 = vmatprep.subr.bf16.mxu0 0
    %2154 = vmatpush1.bf16.msra.mxu0 0
    %2155 = vmatprep.subr.bf16.mxu0 0
    %2156 = vmatpush1.bf16.msra.mxu0 0
    %2157 = vmatprep.subr.bf16.mxu0 0
    %2158 = vmatpush1.bf16.msra.mxu0 0
    %2159 = vmatprep.subr.bf16.mxu0 0
    %2160 = vmatpush1.bf16.msra.mxu0 0
    %2161 = vmatprep.subr.bf16.mxu0 0
    %2162 = vmatpush1.bf16.msra.mxu0 0
    %2163 = vmatprep.subr.bf16.mxu0 0
    %2164 = vmatpush1.bf16.msra.mxu0 0
    %2165 = vmatprep.subr.bf16.mxu0 0
    %2166 = vmatpush1.bf16.msra.mxu0 0
    %2167 = vmatprep.mubr.bf16.mxu0 0
    %2168 = vmatmul.mubr.bf16.gmra.mrb[0].mxu0 %v2134
    %v2169 = vpop.f32.mrb[0].mxu0
    %v2170 = vadd.f32 0.0, %v2169
    %v2171 = vpop.f32.mrb[0].mxu0
    %v2172 = vadd.f32 0.0, %v2171
    %v2173 = vpop.f32.mrb[0].mxu0
    %v2174 = vpop.f32.mrb[0].mxu0
    %2175 = vdwg.mxu0
    %2176 = vmatprep.subr.bf16.mxu0 0
    %2177 = vmatpush1.bf16.msra.mxu0 %v947
    %2178 = vmatprep.subr.bf16.mxu0 0
    %2179 = vmatpush1.bf16.msra.mxu0 %v950
    %2180 = vmatprep.subr.bf16.mxu0 0
    %2181 = vmatpush1.bf16.msra.mxu0 %v953
    %2182 = vmatprep.subr.bf16.mxu0 0
    %2183 = vmatpush1.bf16.msra.mxu0 %v956
    %2184 = vmatprep.subr.bf16.mxu0 0
    %2185 = vmatpush1.bf16.msra.mxu0 %v959
    %2186 = vmatprep.subr.bf16.mxu0 0
    %2187 = vmatpush1.bf16.msra.mxu0 %v962
    %2188 = vmatprep.subr.bf16.mxu0 0
    %2189 = vmatpush1.bf16.msra.mxu0 %v965
    %2190 = vmatprep.subr.bf16.mxu0 0
    %2191 = vmatpush1.bf16.msra.mxu0 %v968
    %2192 = vmatprep.subr.bf16.mxu0 0
    %2193 = vmatpush1.bf16.msra.mxu0 0
    %2194 = vmatprep.subr.bf16.mxu0 0
    %2195 = vmatpush1.bf16.msra.mxu0 0
    %2196 = vmatprep.subr.bf16.mxu0 0
    %2197 = vmatpush1.bf16.msra.mxu0 0
    %2198 = vmatprep.subr.bf16.mxu0 0
    %2199 = vmatpush1.bf16.msra.mxu0 0
    %2200 = vmatprep.subr.bf16.mxu0 0
    %2201 = vmatpush1.bf16.msra.mxu0 0
    %2202 = vmatprep.subr.bf16.mxu0 0
    %2203 = vmatpush1.bf16.msra.mxu0 0
    %2204 = vmatprep.subr.bf16.mxu0 0
    %2205 = vmatpush1.bf16.msra.mxu0 0
    %2206 = vmatprep.subr.bf16.mxu0 0
    %2207 = vmatpush1.bf16.msra.mxu0 0
    %2208 = vmatprep.mubr.bf16.mxu0 0
    %2209 = vmatmul.mubr.bf16.gmra.mrb[0].mxu0 %v2134
    %v2210 = vpop.f32.mrb[0].mxu0
    %v2211 = vadd.f32 0.0, %v2210
    %v2212 = vpop.f32.mrb[0].mxu0
    %v2213 = vpop.f32.mrb[0].mxu0
    %v2214 = vpop.f32.mrb[0].mxu0
    %2215 = vdwg.mxu0
    %v2216 = vadd.f32 %v427, %v2170
    %v2217 = vadd.f32 %v429, %v2172
    %v2218 = vadd.f32 %v500, %v2211
    %v2219 = vmul.f32 %v2216, %v1080
    %v2220 = vmul.f32 %v2217, %v1080
    %v2221 = vmul.f32 %v2218, %v1080
    %v2222 = vrot.slane %v2219, 4
    %v2223 = vadd.f32 %v2219, %v2222
    %v2224 = vrot.slane %v2223, 2
    %v2225 = vadd.f32 %v2223, %v2224
    %v2226 = vrot.slane %v2225, 1
    %v2227 = vadd.f32 %v2225, %v2226
    %v2228 = vrot.slane %v2220, 4
    %v2229 = vadd.f32 %v2220, %v2228
    %v2230 = vrot.slane %v2229, 2
    %v2231 = vadd.f32 %v2229, %v2230
    %v2232 = vrot.slane %v2231, 1
    %v2233 = vadd.f32 %v2231, %v2232
    %v2234 = vrot.slane %v2221, 4
    %v2235 = vadd.f32 %v2221, %v2234
    %v2236 = vrot.slane %v2235, 2
    %v2237 = vadd.f32 %v2235, %v2236
    %v2238 = vrot.slane %v2237, 1
    %v2239 = vadd.f32 %v2237, %v2238
    %v2240 = vmul.f32 %v2219, %v2216
    %v2241 = vmul.f32 %v2220, %v2217
    %v2242 = vmul.f32 %v2221, %v2218
    %v2243 = vrot.slane %v2240, 4
    %v2244 = vadd.f32 %v2240, %v2243
    %v2245 = vrot.slane %v2244, 2
    %v2246 = vadd.f32 %v2244, %v2245
    %v2247 = vrot.slane %v2246, 1
    %v2248 = vadd.f32 %v2246, %v2247
    %v2249 = vrot.slane %v2241, 4
    %v2250 = vadd.f32 %v2241, %v2249
    %v2251 = vrot.slane %v2250, 2
    %v2252 = vadd.f32 %v2250, %v2251
    %v2253 = vrot.slane %v2252, 1
    %v2254 = vadd.f32 %v2252, %v2253
    %v2255 = vrot.slane %v2242, 4
    %v2256 = vadd.f32 %v2242, %v2255
    %v2257 = vrot.slane %v2256, 2
    %v2258 = vadd.f32 %v2256, %v2257
    %v2259 = vrot.slane %v2258, 1
    %v2260 = vadd.f32 %v2258, %v2259
    %v2261 = vsel %vm1124, %v2227, %v2248
    %v2262 = vsel %vm1124, %v2233, %v2254
    %v2263 = vsel %vm1124, %v2239, %v2260
    %2264 = vmatprep.subr.mxu0 %v186
    %2265 = vmatpush1.msra.mxu0 %v185
    %2266 = vmatprep.subr.mxu0 %v189
    %2267 = vmatpush1.msra.mxu0 %v188
    %2268 = vmatprep.subr.mxu0 %v192
    %2269 = vmatpush1.msra.mxu0 %v191
    %2270 = vmatprep.subr.mxu0 %v195
    %2271 = vmatpush1.msra.mxu0 %v194
    %2272 = vmatprep.subr.mxu0 %v198
    %2273 = vmatpush1.msra.mxu0 %v197
    %2274 = vmatprep.subr.mxu0 %v201
    %2275 = vmatpush1.msra.mxu0 %v200
    %2276 = vmatprep.subr.mxu0 %v204
    %2277 = vmatpush1.msra.mxu0 %v203
    %2278 = vmatprep.subr.mxu0 %v207
    %2279 = vmatpush1.msra.mxu0 %v206
    %2280 = vmatprep.subr.mxu0 %v210
    %2281 = vmatpush1.msra.mxu0 %v209
    %2282 = vmatprep.subr.mxu0 %v213
    %2283 = vmatpush1.msra.mxu0 %v212
    %2284 = vmatprep.subr.mxu0 %v216
    %2285 = vmatpush1.msra.mxu0 %v215
    %2286 = vmatprep.subr.mxu0 %v219
    %2287 = vmatpush1.msra.mxu0 %v218
    %2288 = vmatprep.subr.mxu0 %v222
    %2289 = vmatpush1.msra.mxu0 %v221
    %2290 = vmatprep.subr.mxu0 %v225
    %2291 = vmatpush1.msra.mxu0 %v224
    %2292 = vmatprep.subr.mxu0 %v228
    %2293 = vmatpush1.msra.mxu0 %v227
    %2294 = vmatprep.subr.mxu0 %v231
    %2295 = vmatpush1.msra.mxu0 %v230
    %2296 = vmatprep.subr.mxu0 %v234
    %2297 = vmatpush1.msra.mxu0 %v233
    %2298 = vmatprep.subr.mxu0 %v237
    %2299 = vmatpush1.msra.mxu0 %v236
    %2300 = vmatprep.subr.mxu0 %v240
    %2301 = vmatpush1.msra.mxu0 %v239
    %2302 = vmatprep.subr.mxu0 %v243
    %2303 = vmatpush1.msra.mxu0 %v242
    %2304 = vmatprep.subr.mxu0 %v246
    %2305 = vmatpush1.msra.mxu0 %v245
    %2306 = vmatprep.subr.mxu0 %v249
    %2307 = vmatpush1.msra.mxu0 %v248
    %2308 = vmatprep.subr.mxu0 %v252
    %2309 = vmatpush1.msra.mxu0 %v251
    %2310 = vmatprep.subr.mxu0 %v255
    %2311 = vmatpush1.msra.mxu0 %v254
    %2312 = vmatprep.subr.mxu0 %v258
    %2313 = vmatpush1.msra.mxu0 %v257
    %2314 = vmatprep.subr.mxu0 %v261
    %2315 = vmatpush1.msra.mxu0 %v260
    %2316 = vmatprep.subr.mxu0 %v264
    %2317 = vmatpush1.msra.mxu0 %v263
    %2318 = vmatprep.subr.mxu0 %v267
    %2319 = vmatpush1.msra.mxu0 %v266
    %2320 = vmatprep.subr.mxu0 %v270
    %2321 = vmatpush1.msra.mxu0 %v269
    %2322 = vmatprep.subr.mxu0 %v273
    %2323 = vmatpush1.msra.mxu0 %v272
    %2324 = vmatprep.subr.mxu0 %v276
    %2325 = vmatpush1.msra.mxu0 %v275
    %2326 = vmatprep.subr.mxu0 %v279
    %2327 = vmatpush1.msra.mxu0 %v278
    %2328 = vmatprep.mubr.f32.mxu0 %v2262
    %2329 = vmatmul.mubr.f32.gmra.mrb[0].mxu0 %v2261
    %v2330 = vpop.f32.mrb[0].mxu0
    %v2331 = vadd.f32 0.0, %v2330
    %v2332 = vpop.f32.mrb[0].mxu0
    %v2333 = vadd.f32 0.0, %v2332
    %2334 = vdwg.mxu0
    %2335 = vmatprep.subr.mxu0 %v282
    %2336 = vmatpush1.msra.mxu0 %v281
    %2337 = vmatprep.subr.mxu0 %v285
    %2338 = vmatpush1.msra.mxu0 %v284
    %2339 = vmatprep.subr.mxu0 %v288
    %2340 = vmatpush1.msra.mxu0 %v287
    %2341 = vmatprep.subr.mxu0 %v291
    %2342 = vmatpush1.msra.mxu0 %v290
    %2343 = vmatprep.subr.mxu0 %v294
    %2344 = vmatpush1.msra.mxu0 %v293
    %2345 = vmatprep.subr.mxu0 %v297
    %2346 = vmatpush1.msra.mxu0 %v296
    %2347 = vmatprep.subr.mxu0 %v300
    %2348 = vmatpush1.msra.mxu0 %v299
    %2349 = vmatprep.subr.mxu0 %v303
    %2350 = vmatpush1.msra.mxu0 %v302
    %2351 = vmatprep.subr.mxu0 %v306
    %2352 = vmatpush1.msra.mxu0 %v305
    %2353 = vmatprep.subr.mxu0 %v309
    %2354 = vmatpush1.msra.mxu0 %v308
    %2355 = vmatprep.subr.mxu0 %v312
    %2356 = vmatpush1.msra.mxu0 %v311
    %2357 = vmatprep.subr.mxu0 %v315
    %2358 = vmatpush1.msra.mxu0 %v314
    %2359 = vmatprep.subr.mxu0 %v318
    %2360 = vmatpush1.msra.mxu0 %v317
    %2361 = vmatprep.subr.mxu0 %v321
    %2362 = vmatpush1.msra.mxu0 %v320
    %2363 = vmatprep.subr.mxu0 %v324
    %2364 = vmatpush1.msra.mxu0 %v323
    %2365 = vmatprep.subr.mxu0 %v327
    %2366 = vmatpush1.msra.mxu0 %v326
    %2367 = vmatprep.subr.mxu0 0.0
    %2368 = vmatpush1.msra.mxu0 0.0
    %2369 = vmatprep.subr.mxu0 0.0
    %2370 = vmatpush1.msra.mxu0 0.0
    %2371 = vmatprep.subr.mxu0 0.0
    %2372 = vmatpush1.msra.mxu0 0.0
    %2373 = vmatprep.subr.mxu0 0.0
    %2374 = vmatpush1.msra.mxu0 0.0
    %2375 = vmatprep.subr.mxu0 0.0
    %2376 = vmatpush1.msra.mxu0 0.0
    %2377 = vmatprep.subr.mxu0 0.0
    %2378 = vmatpush1.msra.mxu0 0.0
    %2379 = vmatprep.subr.mxu0 0.0
    %2380 = vmatpush1.msra.mxu0 0.0
    %2381 = vmatprep.subr.mxu0 0.0
    %2382 = vmatpush1.msra.mxu0 0.0
    %2383 = vmatprep.subr.mxu0 0.0
    %2384 = vmatpush1.msra.mxu0 0.0
    %2385 = vmatprep.subr.mxu0 0.0
    %2386 = vmatpush1.msra.mxu0 0.0
    %2387 = vmatprep.subr.mxu0 0.0
    %2388 = vmatpush1.msra.mxu0 0.0
    %2389 = vmatprep.subr.mxu0 0.0
    %2390 = vmatpush1.msra.mxu0 0.0
    %2391 = vmatprep.subr.mxu0 0.0
    %2392 = vmatpush1.msra.mxu0 0.0
    %2393 = vmatprep.subr.mxu0 0.0
    %2394 = vmatpush1.msra.mxu0 0.0
    %2395 = vmatprep.subr.mxu0 0.0
    %2396 = vmatpush1.msra.mxu0 0.0
    %2397 = vmatprep.subr.mxu0 0.0
    %2398 = vmatpush1.msra.mxu0 0.0
    %2399 = vmatprep.mubr.f32.mxu0 0.0
    %2400 = vmatmul.mubr.f32.gmra.mrb[0].mxu0 %v2263
    %v2401 = vpop.f32.mrb[0].mxu0
    %v2402 = vadd.f32 %v2331, %v2401
    %v2403 = vpop.f32.mrb[0].mxu0
    %v2404 = vadd.f32 %v2333, %v2403
    %2405 = vdwg.mxu0
    %2406 = vmatprep.subr.mxu0 0.0
    %2407 = vmatpush1.msra.mxu0 %v187
    %2408 = vmatprep.subr.mxu0 0.0
    %2409 = vmatpush1.msra.mxu0 %v190
    %2410 = vmatprep.subr.mxu0 0.0
    %2411 = vmatpush1.msra.mxu0 %v193
    %2412 = vmatprep.subr.mxu0 0.0
    %2413 = vmatpush1.msra.mxu0 %v196
    %2414 = vmatprep.subr.mxu0 0.0
    %2415 = vmatpush1.msra.mxu0 %v199
    %2416 = vmatprep.subr.mxu0 0.0
    %2417 = vmatpush1.msra.mxu0 %v202
    %2418 = vmatprep.subr.mxu0 0.0
    %2419 = vmatpush1.msra.mxu0 %v205
    %2420 = vmatprep.subr.mxu0 0.0
    %2421 = vmatpush1.msra.mxu0 %v208
    %2422 = vmatprep.subr.mxu0 0.0
    %2423 = vmatpush1.msra.mxu0 %v211
    %2424 = vmatprep.subr.mxu0 0.0
    %2425 = vmatpush1.msra.mxu0 %v214
    %2426 = vmatprep.subr.mxu0 0.0
    %2427 = vmatpush1.msra.mxu0 %v217
    %2428 = vmatprep.subr.mxu0 0.0
    %2429 = vmatpush1.msra.mxu0 %v220
    %2430 = vmatprep.subr.mxu0 0.0
    %2431 = vmatpush1.msra.mxu0 %v223
    %2432 = vmatprep.subr.mxu0 0.0
    %2433 = vmatpush1.msra.mxu0 %v226
    %2434 = vmatprep.subr.mxu0 0.0
    %2435 = vmatpush1.msra.mxu0 %v229
    %2436 = vmatprep.subr.mxu0 0.0
    %2437 = vmatpush1.msra.mxu0 %v232
    %2438 = vmatprep.subr.mxu0 0.0
    %2439 = vmatpush1.msra.mxu0 %v235
    %2440 = vmatprep.subr.mxu0 0.0
    %2441 = vmatpush1.msra.mxu0 %v238
    %2442 = vmatprep.subr.mxu0 0.0
    %2443 = vmatpush1.msra.mxu0 %v241
    %2444 = vmatprep.subr.mxu0 0.0
    %2445 = vmatpush1.msra.mxu0 %v244
    %2446 = vmatprep.subr.mxu0 0.0
    %2447 = vmatpush1.msra.mxu0 %v247
    %2448 = vmatprep.subr.mxu0 0.0
    %2449 = vmatpush1.msra.mxu0 %v250
    %2450 = vmatprep.subr.mxu0 0.0
    %2451 = vmatpush1.msra.mxu0 %v253
    %2452 = vmatprep.subr.mxu0 0.0
    %2453 = vmatpush1.msra.mxu0 %v256
    %2454 = vmatprep.subr.mxu0 0.0
    %2455 = vmatpush1.msra.mxu0 %v259
    %2456 = vmatprep.subr.mxu0 0.0
    %2457 = vmatpush1.msra.mxu0 %v262
    %2458 = vmatprep.subr.mxu0 0.0
    %2459 = vmatpush1.msra.mxu0 %v265
    %2460 = vmatprep.subr.mxu0 0.0
    %2461 = vmatpush1.msra.mxu0 %v268
    %2462 = vmatprep.subr.mxu0 0.0
    %2463 = vmatpush1.msra.mxu0 %v271
    %2464 = vmatprep.subr.mxu0 0.0
    %2465 = vmatpush1.msra.mxu0 %v274
    %2466 = vmatprep.subr.mxu0 0.0
    %2467 = vmatpush1.msra.mxu0 %v277
    %2468 = vmatprep.subr.mxu0 0.0
    %2469 = vmatpush1.msra.mxu0 %v280
    %2470 = vmatprep.mubr.f32.mxu0 %v2262
    %2471 = vmatmul.mubr.f32.gmra.mrb[0].mxu0 %v2261
    %v2472 = vpop.f32.mrb[0].mxu0
    %v2473 = vadd.f32 0.0, %v2472
    %v2474 = vpop.f32.mrb[0].mxu0
    %2475 = vdwg.mxu0
    %2476 = vmatprep.subr.mxu0 0.0
    %2477 = vmatpush1.msra.mxu0 %v283
    %2478 = vmatprep.subr.mxu0 0.0
    %2479 = vmatpush1.msra.mxu0 %v286
    %2480 = vmatprep.subr.mxu0 0.0
    %2481 = vmatpush1.msra.mxu0 %v289
    %2482 = vmatprep.subr.mxu0 0.0
    %2483 = vmatpush1.msra.mxu0 %v292
    %2484 = vmatprep.subr.mxu0 0.0
    %2485 = vmatpush1.msra.mxu0 %v295
    %2486 = vmatprep.subr.mxu0 0.0
    %2487 = vmatpush1.msra.mxu0 %v298
    %2488 = vmatprep.subr.mxu0 0.0
    %2489 = vmatpush1.msra.mxu0 %v301
    %2490 = vmatprep.subr.mxu0 0.0
    %2491 = vmatpush1.msra.mxu0 %v304
    %2492 = vmatprep.subr.mxu0 0.0
    %2493 = vmatpush1.msra.mxu0 %v307
    %2494 = vmatprep.subr.mxu0 0.0
    %2495 = vmatpush1.msra.mxu0 %v310
    %2496 = vmatprep.subr.mxu0 0.0
    %2497 = vmatpush1.msra.mxu0 %v313
    %2498 = vmatprep.subr.mxu0 0.0
    %2499 = vmatpush1.msra.mxu0 %v316
    %2500 = vmatprep.subr.mxu0 0.0
    %2501 = vmatpush1.msra.mxu0 %v319
    %2502 = vmatprep.subr.mxu0 0.0
    %2503 = vmatpush1.msra.mxu0 %v322
    %2504 = vmatprep.subr.mxu0 0.0
    %2505 = vmatpush1.msra.mxu0 %v325
    %2506 = vmatprep.subr.mxu0 0.0
    %2507 = vmatpush1.msra.mxu0 %v328
    %2508 = vmatprep.subr.mxu0 0.0
    %2509 = vmatpush1.msra.mxu0 0.0
    %2510 = vmatprep.subr.mxu0 0.0
    %2511 = vmatpush1.msra.mxu0 0.0
    %2512 = vmatprep.subr.mxu0 0.0
    %2513 = vmatpush1.msra.mxu0 0.0
    %2514 = vmatprep.subr.mxu0 0.0
    %2515 = vmatpush1.msra.mxu0 0.0
    %2516 = vmatprep.subr.mxu0 0.0
    %2517 = vmatpush1.msra.mxu0 0.0
    %2518 = vmatprep.subr.mxu0 0.0
    %2519 = vmatpush1.msra.mxu0 0.0
    %2520 = vmatprep.subr.mxu0 0.0
    %2521 = vmatpush1.msra.mxu0 0.0
    %2522 = vmatprep.subr.mxu0 0.0
    %2523 = vmatpush1.msra.mxu0 0.0
    %2524 = vmatprep.subr.mxu0 0.0
    %2525 = vmatpush1.msra.mxu0 0.0
    %2526 = vmatprep.subr.mxu0 0.0
    %2527 = vmatpush1.msra.mxu0 0.0
    %2528 = vmatprep.subr.mxu0 0.0
    %2529 = vmatpush1.msra.mxu0 0.0
    %2530 = vmatprep.subr.mxu0 0.0
    %2531 = vmatpush1.msra.mxu0 0.0
    %2532 = vmatprep.subr.mxu0 0.0
    %2533 = vmatpush1.msra.mxu0 0.0
    %2534 = vmatprep.subr.mxu0 0.0
    %2535 = vmatpush1.msra.mxu0 0.0
    %2536 = vmatprep.subr.mxu0 0.0
    %2537 = vmatpush1.msra.mxu0 0.0
    %2538 = vmatprep.subr.mxu0 0.0
    %2539 = vmatpush1.msra.mxu0 0.0
    %2540 = vmatprep.mubr.f32.mxu0 0.0
    %2541 = vmatmul.mubr.f32.gmra.mrb[0].mxu0 %v2263
    %v2542 = vpop.f32.mrb[0].mxu0
    %v2543 = vadd.f32 %v2473, %v2542
    %v2544 = vpop.f32.mrb[0].mxu0
    %2545 = vdwg.mxu0
    %v2546 = vmul.f32 %v2402, 0.015625
    %v2547 = vmul.f32 %v2404, 0.015625
    %v2548 = vmul.f32 %v2543, 0.015625
    %v2549 = vmul.f32 %v2546, %v2546
    %v2550 = vmul.f32 %v2547, %v2547
    %v2551 = vmul.f32 %v2548, %v2548
    %v2555 = vrot.slane %v2549, 7
    %v2556 = vrot.slane %v2550, 7
    %v2557 = vrot.slane %v2551, 7
    %v2561 = vsub.f32 %v2546, %v2555
    %v2562 = vsub.f32 %v2547, %v2556
    %v2563 = vsub.f32 %v2548, %v2557
    %v2564 = vadd.f32 %v2561, 1e-05
    %v2565 = vadd.f32 %v2562, 1e-05
    %v2566 = vadd.f32 %v2563, 1e-05
    %v2567 = vrsqrt.pop %v2564
    %v2568 = vrsqrt.pop %v2565
    %v2569 = vrsqrt.pop %v2566
    %v2570 = vmul.f32 %v2567, %v1438
    %v2571 = vmul.f32 %v2568, %v1442
    %v2572 = vmul.f32 %v2569, %v1446
    %v2576 = vrot.slane %v2570, 1
    %v2577 = vrot.slane %v2571, 1
    %v2578 = vrot.slane %v2572, 1
    %v2582 = vmul.f32 %v2546, %v2576
    %v2583 = vmul.f32 %v2547, %v2577
    %v2584 = vmul.f32 %v2548, %v2578
    %v2588 = vcombine.low %v2582, %v2583
    %v2590 = vunpack.c.l.s4 1966171168
    %v2591 = vunpack.c.0.s8 %v2590
    %v2592 = vlaneseq
    %v2593 = vshrl.u32 %v2592, 7
    %v2594 = vsub.s32 %v2591, %v2593
    %v2595 = vrot.slane %v2588, %v2594
    %v2597 = vunpack.c.l.s4 1966171168
    %v2598 = vunpack.c.0.s8 %v2597
    %v2599 = vlaneseq
    %v2600 = vshrl.u32 %v2599, 7
    %v2601 = vsub.s32 %v2598, %v2600
    %v2602 = vrot.slane %v2584, %v2601
    %v2603 = vcombine.low %v2595, %v2602
    %v2605 = vunpack.c.l.s4 1966171168
    %v2606 = vunpack.c.0.s8 %v2605
    %v2607 = vlaneseq
    %v2608 = vshrl.u32 %v2607, 7
    %v2609 = vsub.s32 %v2606, %v2608
    %v2610 = vrot.slane %v2603, %v2609
    %v2612 = vsub.f32 %v331, %v2610
    %v2613 = vlaneseq
    %v2614 = vshrl.u32 %v2613, 7
    %v2615 = vsub.s32 1, %v2614
    %v2616 = vrot.slane %v2570, %v2615
    %v2617 = vlaneseq
    %v2618 = vshrl.u32 %v2617, 7
    %v2619 = vsub.s32 1, %v2618
    %v2620 = vrot.slane %v2571, %v2619
    %v2621 = vlaneseq
    %v2622 = vshrl.u32 %v2621, 7
    %v2623 = vsub.s32 1, %v2622
    %v2624 = vrot.slane %v2572, %v2623
    %v2625 = vmul.f32 %v2216, %v2616
    %v2626 = vmul.f32 %v2217, %v2620
    %v2627 = vmul.f32 %v2218, %v2624
    %v2629 = vlaneseq
    %v2630 = vshrl.u32 %v2629, 7
    %v2631 = vsub.s32 0, %v2630
    %v2632 = vrot.slane %v2612, %v2631
    %v2633 = vlaneseq
    %v2634 = vshrl.u32 %v2633, 7
    %v2635 = vsub.s32 1, %v2634
    %v2636 = vrot.slane %v2612, %v2635
    %v2637 = vlaneseq
    %v2638 = vshrl.u32 %v2637, 7
    %v2639 = vsub.s32 2, %v2638
    %v2640 = vrot.slane %v2612, %v2639
    %v2644 = vadd.f32 %v2625, %v2632
    %v2645 = vadd.f32 %v2626, %v2636
    %v2646 = vadd.f32 %v2627, %v2640
    %v2647 = vxor.u32 %v2646, 2147483648
    %v2648 = vmul.f32 %v2647, 1.442695
    %v2649 = vpow.pop %v2648
    %v2650 = vadd.f32 %v2649, 1.0
    %v2651 = vrcp.pop %v2650
    %v2652 = vmul.f32 1.0, %v2651
    %v2653 = vlaneseq
    %v2654 = vshrl.u32 %v2653, 7
    %v2655 = vsub.s32 2, %v2654
    %v2656 = vrot.slane %v850, %v2655
    %v2657 = vmul.f32 %v502, %v2656
    %v2658 = vlaneseq
    %v2659 = vshrl.u32 %v2658, 7
    %v2660 = vsub.s32 2, %v2659
    %v2661 = vrot.slane %v859, %v2660
    %v2662 = vadd.f32 %v2657, %v2661
    %v2663 = vtanh.pop %v2644
    %v2664 = vmul.f32 %v2662, %v2663
    %v2665 = vsub.f32 0.0, %v2652
    %v2666 = vmul.f32 %v2665, 1.442695
    %v2667 = vpow.pop %v2666
    %v2668 = vmul.f32 %v2133, %v2667
    %v2669 = vmax.f32 %v2668, %v2645
    %v2670 = vsub.f32 %v2133, %v2669
    %v2671 = vsub.f32 %v2670, %v2652
    %v2672 = vmul.f32 %v2671, 1.442695
    %v2673 = vpow.pop %v2672
    %v2674 = vsub.f32 %v2645, %v2669
    %v2675 = vmul.f32 %v2674, 1.442695
    %v2676 = vpow.pop %v2675
    %v2677 = vmul.f32 %v2131, %v2673
    %v2678 = vmul.f32 %v2664, %v2676
    %v2679 = vadd.f32 %v2677, %v2678
    %v2680 = vmul.f32 %v2132, %v2673
    %v2681 = vadd.f32 %v2680, %v2676
    %v2682 = vrcp.pop %v2681
    %v2683 = vmul.f32 %v2679, %v2682
    %v2684 = vtanh.pop %v2683
    %2685 = vst [vmem:[#allocation13] sm:$0xff] %v2679
    %2686 = vst [vmem:[#allocation15] sm:$0xff] %v2681
    %2687 = vst [vmem:[#allocation16] sm:$0xff] %v2684
    %2688 = vst [vmem:[#allocation18] sm:$0xff] %v2669
    %2689 = vst [vmem:[#allocation2 + $0x10] sm:$0xff] %v2684
    %v2690 = vld [vmem:[#allocation16] sm:$0xff]
    %v2691 = vld [vmem:[#allocation13] sm:$0xff]
    %v2692 = vld [vmem:[#allocation15] sm:$0xff]
    %v2693 = vld [vmem:[#allocation18] sm:$0xff]
    %v2694 = vpack.c.bf16 %v2690, %v2690
    %2695 = vmatprep.subr.bf16.mxu0 %v946
    %2696 = vmatpush1.bf16.msra.mxu0 %v945
    %2697 = vmatprep.subr.bf16.mxu0 %v949
    %2698 = vmatpush1.bf16.msra.mxu0 %v948
    %2699 = vmatprep.subr.bf16.mxu0 %v952
    %2700 = vmatpush1.bf16.msra.mxu0 %v951
    %2701 = vmatprep.subr.bf16.mxu0 %v955
    %2702 = vmatpush1.bf16.msra.mxu0 %v954
    %2703 = vmatprep.subr.bf16.mxu0 %v958
    %2704 = vmatpush1.bf16.msra.mxu0 %v957
    %2705 = vmatprep.subr.bf16.mxu0 %v961
    %2706 = vmatpush1.bf16.msra.mxu0 %v960
    %2707 = vmatprep.subr.bf16.mxu0 %v964
    %2708 = vmatpush1.bf16.msra.mxu0 %v963
    %2709 = vmatprep.subr.bf16.mxu0 %v967
    %2710 = vmatpush1.bf16.msra.mxu0 %v966
    %2711 = vmatprep.subr.bf16.mxu0 0
    %2712 = vmatpush1.bf16.msra.mxu0 0
    %2713 = vmatprep.subr.bf16.mxu0 0
    %2714 = vmatpush1.bf16.msra.mxu0 0
    %2715 = vmatprep.subr.bf16.mxu0 0
    %2716 = vmatpush1.bf16.msra.mxu0 0
    %2717 = vmatprep.subr.bf16.mxu0 0
    %2718 = vmatpush1.bf16.msra.mxu0 0
    %2719 = vmatprep.subr.bf16.mxu0 0
    %2720 = vmatpush1.bf16.msra.mxu0 0
    %2721 = vmatprep.subr.bf16.mxu0 0
    %2722 = vmatpush1.bf16.msra.mxu0 0
    %2723 = vmatprep.subr.bf16.mxu0 0
    %2724 = vmatpush1.bf16.msra.mxu0 0
    %2725 = vmatprep.subr.bf16.mxu0 0
    %2726 = vmatpush1.bf16.msra.mxu0 0
    %2727 = vmatprep.mubr.bf16.mxu0 0
    %2728 = vmatmul.mubr.bf16.gmra.mrb[0].mxu0 %v2694
    %v2729 = vpop.f32.mrb[0].mxu0
    %v2730 = vadd.f32 0.0, %v2729
    %v2731 = vpop.f32.mrb[0].mxu0
    %v2732 = vadd.f32 0.0, %v2731
    %v2733 = vpop.f32.mrb[0].mxu0
    %v2734 = vpop.f32.mrb[0].mxu0
    %2735 = vdwg.mxu0
    %2736 = vmatprep.subr.bf16.mxu0 0
    %2737 = vmatpush1.bf16.msra.mxu0 %v947
    %2738 = vmatprep.subr.bf16.mxu0 0
    %2739 = vmatpush1.bf16.msra.mxu0 %v950
    %2740 = vmatprep.subr.bf16.mxu0 0
    %2741 = vmatpush1.bf16.msra.mxu0 %v953
    %2742 = vmatprep.subr.bf16.mxu0 0
    %2743 = vmatpush1.bf16.msra.mxu0 %v956
    %2744 = vmatprep.subr.bf16.mxu0 0
    %2745 = vmatpush1.bf16.msra.mxu0 %v959
    %2746 = vmatprep.subr.bf16.mxu0 0
    %2747 = vmatpush1.bf16.msra.mxu0 %v962
    %2748 = vmatprep.subr.bf16.mxu0 0
    %2749 = vmatpush1.bf16.msra.mxu0 %v965
    %2750 = vmatprep.subr.bf16.mxu0 0
    %2751 = vmatpush1.bf16.msra.mxu0 %v968
    %2752 = vmatprep.subr.bf16.mxu0 0
    %2753 = vmatpush1.bf16.msra.mxu0 0
    %2754 = vmatprep.subr.bf16.mxu0 0
    %2755 = vmatpush1.bf16.msra.mxu0 0
    %2756 = vmatprep.subr.bf16.mxu0 0
    %2757 = vmatpush1.bf16.msra.mxu0 0
    %2758 = vmatprep.subr.bf16.mxu0 0
    %2759 = vmatpush1.bf16.msra.mxu0 0
    %2760 = vmatprep.subr.bf16.mxu0 0
    %2761 = vmatpush1.bf16.msra.mxu0 0
    %2762 = vmatprep.subr.bf16.mxu0 0
    %2763 = vmatpush1.bf16.msra.mxu0 0
    %2764 = vmatprep.subr.bf16.mxu0 0
    %2765 = vmatpush1.bf16.msra.mxu0 0
    %2766 = vmatprep.subr.bf16.mxu0 0
    %2767 = vmatpush1.bf16.msra.mxu0 0
    %2768 = vmatprep.mubr.bf16.mxu0 0
    %2769 = vmatmul.mubr.bf16.gmra.mrb[0].mxu0 %v2694
    %v2770 = vpop.f32.mrb[0].mxu0
    %v2771 = vadd.f32 0.0, %v2770
    %v2772 = vpop.f32.mrb[0].mxu0
    %v2773 = vpop.f32.mrb[0].mxu0
    %v2774 = vpop.f32.mrb[0].mxu0
    %2775 = vdwg.mxu0
    %v2776 = vadd.f32 %v431, %v2730
    %v2777 = vadd.f32 %v433, %v2732
    %v2778 = vadd.f32 %v504, %v2771
    %v2779 = vmul.f32 %v2776, %v1080
    %v2780 = vmul.f32 %v2777, %v1080
    %v2781 = vmul.f32 %v2778, %v1080
    %v2782 = vrot.slane %v2779, 4
    %v2783 = vadd.f32 %v2779, %v2782
    %v2784 = vrot.slane %v2783, 2
    %v2785 = vadd.f32 %v2783, %v2784
    %v2786 = vrot.slane %v2785, 1
    %v2787 = vadd.f32 %v2785, %v2786
    %v2788 = vrot.slane %v2780, 4
    %v2789 = vadd.f32 %v2780, %v2788
    %v2790 = vrot.slane %v2789, 2
    %v2791 = vadd.f32 %v2789, %v2790
    %v2792 = vrot.slane %v2791, 1
    %v2793 = vadd.f32 %v2791, %v2792
    %v2794 = vrot.slane %v2781, 4
    %v2795 = vadd.f32 %v2781, %v2794
    %v2796 = vrot.slane %v2795, 2
    %v2797 = vadd.f32 %v2795, %v2796
    %v2798 = vrot.slane %v2797, 1
    %v2799 = vadd.f32 %v2797, %v2798
    %v2800 = vmul.f32 %v2779, %v2776
    %v2801 = vmul.f32 %v2780, %v2777
    %v2802 = vmul.f32 %v2781, %v2778
    %v2803 = vrot.slane %v2800, 4
    %v2804 = vadd.f32 %v2800, %v2803
    %v2805 = vrot.slane %v2804, 2
    %v2806 = vadd.f32 %v2804, %v2805
    %v2807 = vrot.slane %v2806, 1
    %v2808 = vadd.f32 %v2806, %v2807
    %v2809 = vrot.slane %v2801, 4
    %v2810 = vadd.f32 %v2801, %v2809
    %v2811 = vrot.slane %v2810, 2
    %v2812 = vadd.f32 %v2810, %v2811
    %v2813 = vrot.slane %v2812, 1
    %v2814 = vadd.f32 %v2812, %v2813
    %v2815 = vrot.slane %v2802, 4
    %v2816 = vadd.f32 %v2802, %v2815
    %v2817 = vrot.slane %v2816, 2
    %v2818 = vadd.f32 %v2816, %v2817
    %v2819 = vrot.slane %v2818, 1
    %v2820 = vadd.f32 %v2818, %v2819
    %v2821 = vsel %vm1124, %v2787, %v2808
    %v2822 = vsel %vm1124, %v2793, %v2814
    %v2823 = vsel %vm1124, %v2799, %v2820
    %2824 = vmatprep.subr.mxu0 %v186
    %2825 = vmatpush1.msra.mxu0 %v185
    %2826 = vmatprep.subr.mxu0 %v189
    %2827 = vmatpush1.msra.mxu0 %v188
    %2828 = vmatprep.subr.mxu0 %v192
    %2829 = vmatpush1.msra.mxu0 %v191
    %2830 = vmatprep.subr.mxu0 %v195
    %2831 = vmatpush1.msra.mxu0 %v194
    %2832 = vmatprep.subr.mxu0 %v198
    %2833 = vmatpush1.msra.mxu0 %v197
    %2834 = vmatprep.subr.mxu0 %v201
    %2835 = vmatpush1.msra.mxu0 %v200
    %2836 = vmatprep.subr.mxu0 %v204
    %2837 = vmatpush1.msra.mxu0 %v203
    %2838 = vmatprep.subr.mxu0 %v207
    %2839 = vmatpush1.msra.mxu0 %v206
    %2840 = vmatprep.subr.mxu0 %v210
    %2841 = vmatpush1.msra.mxu0 %v209
    %2842 = vmatprep.subr.mxu0 %v213
    %2843 = vmatpush1.msra.mxu0 %v212
    %2844 = vmatprep.subr.mxu0 %v216
    %2845 = vmatpush1.msra.mxu0 %v215
    %2846 = vmatprep.subr.mxu0 %v219
    %2847 = vmatpush1.msra.mxu0 %v218
    %2848 = vmatprep.subr.mxu0 %v222
    %2849 = vmatpush1.msra.mxu0 %v221
    %2850 = vmatprep.subr.mxu0 %v225
    %2851 = vmatpush1.msra.mxu0 %v224
    %2852 = vmatprep.subr.mxu0 %v228
    %2853 = vmatpush1.msra.mxu0 %v227
    %2854 = vmatprep.subr.mxu0 %v231
    %2855 = vmatpush1.msra.mxu0 %v230
    %2856 = vmatprep.subr.mxu0 %v234
    %2857 = vmatpush1.msra.mxu0 %v233
    %2858 = vmatprep.subr.mxu0 %v237
    %2859 = vmatpush1.msra.mxu0 %v236
    %2860 = vmatprep.subr.mxu0 %v240
    %2861 = vmatpush1.msra.mxu0 %v239
    %2862 = vmatprep.subr.mxu0 %v243
    %2863 = vmatpush1.msra.mxu0 %v242
    %2864 = vmatprep.subr.mxu0 %v246
    %2865 = vmatpush1.msra.mxu0 %v245
    %2866 = vmatprep.subr.mxu0 %v249
    %2867 = vmatpush1.msra.mxu0 %v248
    %2868 = vmatprep.subr.mxu0 %v252
    %2869 = vmatpush1.msra.mxu0 %v251
    %2870 = vmatprep.subr.mxu0 %v255
    %2871 = vmatpush1.msra.mxu0 %v254
    %2872 = vmatprep.subr.mxu0 %v258
    %2873 = vmatpush1.msra.mxu0 %v257
    %2874 = vmatprep.subr.mxu0 %v261
    %2875 = vmatpush1.msra.mxu0 %v260
    %2876 = vmatprep.subr.mxu0 %v264
    %2877 = vmatpush1.msra.mxu0 %v263
    %2878 = vmatprep.subr.mxu0 %v267
    %2879 = vmatpush1.msra.mxu0 %v266
    %2880 = vmatprep.subr.mxu0 %v270
    %2881 = vmatpush1.msra.mxu0 %v269
    %2882 = vmatprep.subr.mxu0 %v273
    %2883 = vmatpush1.msra.mxu0 %v272
    %2884 = vmatprep.subr.mxu0 %v276
    %2885 = vmatpush1.msra.mxu0 %v275
    %2886 = vmatprep.subr.mxu0 %v279
    %2887 = vmatpush1.msra.mxu0 %v278
    %2888 = vmatprep.mubr.f32.mxu0 %v2822
    %2889 = vmatmul.mubr.f32.gmra.mrb[0].mxu0 %v2821
    %v2890 = vpop.f32.mrb[0].mxu0
    %v2891 = vadd.f32 0.0, %v2890
    %v2892 = vpop.f32.mrb[0].mxu0
    %v2893 = vadd.f32 0.0, %v2892
    %2894 = vdwg.mxu0
    %2895 = vmatprep.subr.mxu0 %v282
    %2896 = vmatpush1.msra.mxu0 %v281
    %2897 = vmatprep.subr.mxu0 %v285
    %2898 = vmatpush1.msra.mxu0 %v284
    %2899 = vmatprep.subr.mxu0 %v288
    %2900 = vmatpush1.msra.mxu0 %v287
    %2901 = vmatprep.subr.mxu0 %v291
    %2902 = vmatpush1.msra.mxu0 %v290
    %2903 = vmatprep.subr.mxu0 %v294
    %2904 = vmatpush1.msra.mxu0 %v293
    %2905 = vmatprep.subr.mxu0 %v297
    %2906 = vmatpush1.msra.mxu0 %v296
    %2907 = vmatprep.subr.mxu0 %v300
    %2908 = vmatpush1.msra.mxu0 %v299
    %2909 = vmatprep.subr.mxu0 %v303
    %2910 = vmatpush1.msra.mxu0 %v302
    %2911 = vmatprep.subr.mxu0 %v306
    %2912 = vmatpush1.msra.mxu0 %v305
    %2913 = vmatprep.subr.mxu0 %v309
    %2914 = vmatpush1.msra.mxu0 %v308
    %2915 = vmatprep.subr.mxu0 %v312
    %2916 = vmatpush1.msra.mxu0 %v311
    %2917 = vmatprep.subr.mxu0 %v315
    %2918 = vmatpush1.msra.mxu0 %v314
    %2919 = vmatprep.subr.mxu0 %v318
    %2920 = vmatpush1.msra.mxu0 %v317
    %2921 = vmatprep.subr.mxu0 %v321
    %2922 = vmatpush1.msra.mxu0 %v320
    %2923 = vmatprep.subr.mxu0 %v324
    %2924 = vmatpush1.msra.mxu0 %v323
    %2925 = vmatprep.subr.mxu0 %v327
    %2926 = vmatpush1.msra.mxu0 %v326
    %2927 = vmatprep.subr.mxu0 0.0
    %2928 = vmatpush1.msra.mxu0 0.0
    %2929 = vmatprep.subr.mxu0 0.0
    %2930 = vmatpush1.msra.mxu0 0.0
    %2931 = vmatprep.subr.mxu0 0.0
    %2932 = vmatpush1.msra.mxu0 0.0
    %2933 = vmatprep.subr.mxu0 0.0
    %2934 = vmatpush1.msra.mxu0 0.0
    %2935 = vmatprep.subr.mxu0 0.0
    %2936 = vmatpush1.msra.mxu0 0.0
    %2937 = vmatprep.subr.mxu0 0.0
    %2938 = vmatpush1.msra.mxu0 0.0
    %2939 = vmatprep.subr.mxu0 0.0
    %2940 = vmatpush1.msra.mxu0 0.0
    %2941 = vmatprep.subr.mxu0 0.0
    %2942 = vmatpush1.msra.mxu0 0.0
    %2943 = vmatprep.subr.mxu0 0.0
    %2944 = vmatpush1.msra.mxu0 0.0
    %2945 = vmatprep.subr.mxu0 0.0
    %2946 = vmatpush1.msra.mxu0 0.0
    %2947 = vmatprep.subr.mxu0 0.0
    %2948 = vmatpush1.msra.mxu0 0.0
    %2949 = vmatprep.subr.mxu0 0.0
    %2950 = vmatpush1.msra.mxu0 0.0
    %2951 = vmatprep.subr.mxu0 0.0
    %2952 = vmatpush1.msra.mxu0 0.0
    %2953 = vmatprep.subr.mxu0 0.0
    %2954 = vmatpush1.msra.mxu0 0.0
    %2955 = vmatprep.subr.mxu0 0.0
    %2956 = vmatpush1.msra.mxu0 0.0
    %2957 = vmatprep.subr.mxu0 0.0
    %2958 = vmatpush1.msra.mxu0 0.0
    %2959 = vmatprep.mubr.f32.mxu0 0.0
    %2960 = vmatmul.mubr.f32.gmra.mrb[0].mxu0 %v2823
    %v2961 = vpop.f32.mrb[0].mxu0
    %v2962 = vadd.f32 %v2891, %v2961
    %v2963 = vpop.f32.mrb[0].mxu0
    %v2964 = vadd.f32 %v2893, %v2963
    %2965 = vdwg.mxu0
    %2966 = vmatprep.subr.mxu0 0.0
    %2967 = vmatpush1.msra.mxu0 %v187
    %2968 = vmatprep.subr.mxu0 0.0
    %2969 = vmatpush1.msra.mxu0 %v190
    %2970 = vmatprep.subr.mxu0 0.0
    %2971 = vmatpush1.msra.mxu0 %v193
    %2972 = vmatprep.subr.mxu0 0.0
    %2973 = vmatpush1.msra.mxu0 %v196
    %2974 = vmatprep.subr.mxu0 0.0
    %2975 = vmatpush1.msra.mxu0 %v199
    %2976 = vmatprep.subr.mxu0 0.0
    %2977 = vmatpush1.msra.mxu0 %v202
    %2978 = vmatprep.subr.mxu0 0.0
    %2979 = vmatpush1.msra.mxu0 %v205
    %2980 = vmatprep.subr.mxu0 0.0
    %2981 = vmatpush1.msra.mxu0 %v208
    %2982 = vmatprep.subr.mxu0 0.0
    %2983 = vmatpush1.msra.mxu0 %v211
    %2984 = vmatprep.subr.mxu0 0.0
    %2985 = vmatpush1.msra.mxu0 %v214
    %2986 = vmatprep.subr.mxu0 0.0
    %2987 = vmatpush1.msra.mxu0 %v217
    %2988 = vmatprep.subr.mxu0 0.0
    %2989 = vmatpush1.msra.mxu0 %v220
    %2990 = vmatprep.subr.mxu0 0.0
    %2991 = vmatpush1.msra.mxu0 %v223
    %2992 = vmatprep.subr.mxu0 0.0
    %2993 = vmatpush1.msra.mxu0 %v226
    %2994 = vmatprep.subr.mxu0 0.0
    %2995 = vmatpush1.msra.mxu0 %v229
    %2996 = vmatprep.subr.mxu0 0.0
    %2997 = vmatpush1.msra.mxu0 %v232
    %2998 = vmatprep.subr.mxu0 0.0
    %2999 = vmatpush1.msra.mxu0 %v235
    %3000 = vmatprep.subr.mxu0 0.0
    %3001 = vmatpush1.msra.mxu0 %v238
    %3002 = vmatprep.subr.mxu0 0.0
    %3003 = vmatpush1.msra.mxu0 %v241
    %3004 = vmatprep.subr.mxu0 0.0
    %3005 = vmatpush1.msra.mxu0 %v244
    %3006 = vmatprep.subr.mxu0 0.0
    %3007 = vmatpush1.msra.mxu0 %v247
    %3008 = vmatprep.subr.mxu0 0.0
    %3009 = vmatpush1.msra.mxu0 %v250
    %3010 = vmatprep.subr.mxu0 0.0
    %3011 = vmatpush1.msra.mxu0 %v253
    %3012 = vmatprep.subr.mxu0 0.0
    %3013 = vmatpush1.msra.mxu0 %v256
    %3014 = vmatprep.subr.mxu0 0.0
    %3015 = vmatpush1.msra.mxu0 %v259
    %3016 = vmatprep.subr.mxu0 0.0
    %3017 = vmatpush1.msra.mxu0 %v262
    %3018 = vmatprep.subr.mxu0 0.0
    %3019 = vmatpush1.msra.mxu0 %v265
    %3020 = vmatprep.subr.mxu0 0.0
    %3021 = vmatpush1.msra.mxu0 %v268
    %3022 = vmatprep.subr.mxu0 0.0
    %3023 = vmatpush1.msra.mxu0 %v271
    %3024 = vmatprep.subr.mxu0 0.0
    %3025 = vmatpush1.msra.mxu0 %v274
    %3026 = vmatprep.subr.mxu0 0.0
    %3027 = vmatpush1.msra.mxu0 %v277
    %3028 = vmatprep.subr.mxu0 0.0
    %3029 = vmatpush1.msra.mxu0 %v280
    %3030 = vmatprep.mubr.f32.mxu0 %v2822
    %3031 = vmatmul.mubr.f32.gmra.mrb[0].mxu0 %v2821
    %v3032 = vpop.f32.mrb[0].mxu0
    %v3033 = vadd.f32 0.0, %v3032
    %v3034 = vpop.f32.mrb[0].mxu0
    %3035 = vdwg.mxu0
    %3036 = vmatprep.subr.mxu0 0.0
    %3037 = vmatpush1.msra.mxu0 %v283
    %3038 = vmatprep.subr.mxu0 0.0
    %3039 = vmatpush1.msra.mxu0 %v286
    %3040 = vmatprep.subr.mxu0 0.0
    %3041 = vmatpush1.msra.mxu0 %v289
    %3042 = vmatprep.subr.mxu0 0.0
    %3043 = vmatpush1.msra.mxu0 %v292
    %3044 = vmatprep.subr.mxu0 0.0
    %3045 = vmatpush1.msra.mxu0 %v295
    %3046 = vmatprep.subr.mxu0 0.0
    %3047 = vmatpush1.msra.mxu0 %v298
    %3048 = vmatprep.subr.mxu0 0.0
    %3049 = vmatpush1.msra.mxu0 %v301
    %3050 = vmatprep.subr.mxu0 0.0
    %3051 = vmatpush1.msra.mxu0 %v304
    %3052 = vmatprep.subr.mxu0 0.0
    %3053 = vmatpush1.msra.mxu0 %v307
    %3054 = vmatprep.subr.mxu0 0.0
    %3055 = vmatpush1.msra.mxu0 %v310
    %3056 = vmatprep.subr.mxu0 0.0
    %3057 = vmatpush1.msra.mxu0 %v313
    %3058 = vmatprep.subr.mxu0 0.0
    %3059 = vmatpush1.msra.mxu0 %v316
    %3060 = vmatprep.subr.mxu0 0.0
    %3061 = vmatpush1.msra.mxu0 %v319
    %3062 = vmatprep.subr.mxu0 0.0
    %3063 = vmatpush1.msra.mxu0 %v322
    %3064 = vmatprep.subr.mxu0 0.0
    %3065 = vmatpush1.msra.mxu0 %v325
    %3066 = vmatprep.subr.mxu0 0.0
    %3067 = vmatpush1.msra.mxu0 %v328
    %3068 = vmatprep.subr.mxu0 0.0
    %3069 = vmatpush1.msra.mxu0 0.0
    %3070 = vmatprep.subr.mxu0 0.0
    %3071 = vmatpush1.msra.mxu0 0.0
    %3072 = vmatprep.subr.mxu0 0.0
    %3073 = vmatpush1.msra.mxu0 0.0
    %3074 = vmatprep.subr.mxu0 0.0
    %3075 = vmatpush1.msra.mxu0 0.0
    %3076 = vmatprep.subr.mxu0 0.0
    %3077 = vmatpush1.msra.mxu0 0.0
    %3078 = vmatprep.subr.mxu0 0.0
    %3079 = vmatpush1.msra.mxu0 0.0
    %3080 = vmatprep.subr.mxu0 0.0
    %3081 = vmatpush1.msra.mxu0 0.0
    %3082 = vmatprep.subr.mxu0 0.0
    %3083 = vmatpush1.msra.mxu0 0.0
    %3084 = vmatprep.subr.mxu0 0.0
    %3085 = vmatpush1.msra.mxu0 0.0
    %3086 = vmatprep.subr.mxu0 0.0
    %3087 = vmatpush1.msra.mxu0 0.0
    %3088 = vmatprep.subr.mxu0 0.0
    %3089 = vmatpush1.msra.mxu0 0.0
    %3090 = vmatprep.subr.mxu0 0.0
    %3091 = vmatpush1.msra.mxu0 0.0
    %3092 = vmatprep.subr.mxu0 0.0
    %3093 = vmatpush1.msra.mxu0 0.0
    %3094 = vmatprep.subr.mxu0 0.0
    %3095 = vmatpush1.msra.mxu0 0.0
    %3096 = vmatprep.subr.mxu0 0.0
    %3097 = vmatpush1.msra.mxu0 0.0
    %3098 = vmatprep.subr.mxu0 0.0
    %3099 = vmatpush1.msra.mxu0 0.0
    %3100 = vmatprep.mubr.f32.mxu0 0.0
    %3101 = vmatmul.mubr.f32.gmra.mrb[0].mxu0 %v2823
    %v3102 = vpop.f32.mrb[0].mxu0
    %v3103 = vadd.f32 %v3033, %v3102
    %v3104 = vpop.f32.mrb[0].mxu0
    %3105 = vdwg.mxu0
    %v3106 = vmul.f32 %v2962, 0.015625
    %v3107 = vmul.f32 %v2964, 0.015625
    %v3108 = vmul.f32 %v3103, 0.015625
    %v3109 = vmul.f32 %v3106, %v3106
    %v3110 = vmul.f32 %v3107, %v3107
    %v3111 = vmul.f32 %v3108, %v3108
    %v3115 = vrot.slane %v3109, 7
    %v3116 = vrot.slane %v3110, 7
    %v3117 = vrot.slane %v3111, 7
    %v3121 = vsub.f32 %v3106, %v3115
    %v3122 = vsub.f32 %v3107, %v3116
    %v3123 = vsub.f32 %v3108, %v3117
    %v3124 = vadd.f32 %v3121, 1e-05
    %v3125 = vadd.f32 %v3122, 1e-05
    %v3126 = vadd.f32 %v3123, 1e-05
    %v3127 = vrsqrt.pop %v3124
    %v3128 = vrsqrt.pop %v3125
    %v3129 = vrsqrt.pop %v3126
    %v3130 = vmul.f32 %v3127, %v1438
    %v3131 = vmul.f32 %v3128, %v1442
    %v3132 = vmul.f32 %v3129, %v1446
    %v3136 = vrot.slane %v3130, 1
    %v3137 = vrot.slane %v3131, 1
    %v3138 = vrot.slane %v3132, 1
    %v3142 = vmul.f32 %v3106, %v3136
    %v3143 = vmul.f32 %v3107, %v3137
    %v3144 = vmul.f32 %v3108, %v3138
    %v3148 = vcombine.low %v3142, %v3143
    %v3150 = vunpack.c.l.s4 1966171168
    %v3151 = vunpack.c.0.s8 %v3150
    %v3152 = vlaneseq
    %v3153 = vshrl.u32 %v3152, 7
    %v3154 = vsub.s32 %v3151, %v3153
    %v3155 = vrot.slane %v3148, %v3154
    %v3157 = vunpack.c.l.s4 1966171168
    %v3158 = vunpack.c.0.s8 %v3157
    %v3159 = vlaneseq
    %v3160 = vshrl.u32 %v3159, 7
    %v3161 = vsub.s32 %v3158, %v3160
    %v3162 = vrot.slane %v3144, %v3161
    %v3163 = vcombine.low %v3155, %v3162
    %v3165 = vunpack.c.l.s4 1966171168
    %v3166 = vunpack.c.0.s8 %v3165
    %v3167 = vlaneseq
    %v3168 = vshrl.u32 %v3167, 7
    %v3169 = vsub.s32 %v3166, %v3168
    %v3170 = vrot.slane %v3163, %v3169
    %v3172 = vsub.f32 %v331, %v3170
    %v3173 = vlaneseq
    %v3174 = vshrl.u32 %v3173, 7
    %v3175 = vsub.s32 1, %v3174
    %v3176 = vrot.slane %v3130, %v3175
    %v3177 = vlaneseq
    %v3178 = vshrl.u32 %v3177, 7
    %v3179 = vsub.s32 1, %v3178
    %v3180 = vrot.slane %v3131, %v3179
    %v3181 = vlaneseq
    %v3182 = vshrl.u32 %v3181, 7
    %v3183 = vsub.s32 1, %v3182
    %v3184 = vrot.slane %v3132, %v3183
    %v3185 = vmul.f32 %v2776, %v3176
    %v3186 = vmul.f32 %v2777, %v3180
    %v3187 = vmul.f32 %v2778, %v3184
    %v3189 = vlaneseq
    %v3190 = vshrl.u32 %v3189, 7
    %v3191 = vsub.s32 0, %v3190
    %v3192 = vrot.slane %v3172, %v3191
    %v3193 = vlaneseq
    %v3194 = vshrl.u32 %v3193, 7
    %v3195 = vsub.s32 1, %v3194
    %v3196 = vrot.slane %v3172, %v3195
    %v3197 = vlaneseq
    %v3198 = vshrl.u32 %v3197, 7
    %v3199 = vsub.s32 2, %v3198
    %v3200 = vrot.slane %v3172, %v3199
    %v3204 = vadd.f32 %v3185, %v3192
    %v3205 = vadd.f32 %v3186, %v3196
    %v3206 = vadd.f32 %v3187, %v3200
    %v3207 = vxor.u32 %v3206, 2147483648
    %v3208 = vmul.f32 %v3207, 1.442695
    %v3209 = vpow.pop %v3208
    %v3210 = vadd.f32 %v3209, 1.0
    %v3211 = vrcp.pop %v3210
    %v3212 = vmul.f32 1.0, %v3211
    %v3213 = vlaneseq
    %v3214 = vshrl.u32 %v3213, 7
    %v3215 = vsub.s32 3, %v3214
    %v3216 = vrot.slane %v850, %v3215
    %v3217 = vmul.f32 %v506, %v3216
    %v3218 = vlaneseq
    %v3219 = vshrl.u32 %v3218, 7
    %v3220 = vsub.s32 3, %v3219
    %v3221 = vrot.slane %v859, %v3220
    %v3222 = vadd.f32 %v3217, %v3221
    %v3223 = vtanh.pop %v3204
    %v3224 = vmul.f32 %v3222, %v3223
    %v3225 = vsub.f32 0.0, %v3212
    %v3226 = vmul.f32 %v3225, 1.442695
    %v3227 = vpow.pop %v3226
    %v3228 = vmul.f32 %v2693, %v3227
    %v3229 = vmax.f32 %v3228, %v3205
    %v3230 = vsub.f32 %v2693, %v3229
    %v3231 = vsub.f32 %v3230, %v3212
    %v3232 = vmul.f32 %v3231, 1.442695
    %v3233 = vpow.pop %v3232
    %v3234 = vsub.f32 %v3205, %v3229
    %v3235 = vmul.f32 %v3234, 1.442695
    %v3236 = vpow.pop %v3235
    %v3237 = vmul.f32 %v2691, %v3233
    %v3238 = vmul.f32 %v3224, %v3236
    %v3239 = vadd.f32 %v3237, %v3238
    %v3240 = vmul.f32 %v2692, %v3233
    %v3241 = vadd.f32 %v3240, %v3236
    %v3242 = vrcp.pop %v3241
    %v3243 = vmul.f32 %v3239, %v3242
    %v3244 = vtanh.pop %v3243
    %3245 = vst [vmem:[#allocation13] sm:$0xff] %v3239
    %3246 = vst [vmem:[#allocation15] sm:$0xff] %v3241
    %3247 = vst [vmem:[#allocation16] sm:$0xff] %v3244
    %3248 = vst [vmem:[#allocation18] sm:$0xff] %v3229
    %3249 = vst [vmem:[#allocation2 + $0x18] sm:$0xff] %v3244
    %v3250 = vld [vmem:[#allocation16] sm:$0xff]
    %v3251 = vld [vmem:[#allocation13] sm:$0xff]
    %v3252 = vld [vmem:[#allocation15] sm:$0xff]
    %v3253 = vld [vmem:[#allocation18] sm:$0xff]
    %v3254 = vpack.c.bf16 %v3250, %v3250
    %3255 = vmatprep.subr.bf16.mxu0 %v946
    %3256 = vmatpush1.bf16.msra.mxu0 %v945
    %3257 = vmatprep.subr.bf16.mxu0 %v949
    %3258 = vmatpush1.bf16.msra.mxu0 %v948
    %3259 = vmatprep.subr.bf16.mxu0 %v952
    %3260 = vmatpush1.bf16.msra.mxu0 %v951
    %3261 = vmatprep.subr.bf16.mxu0 %v955
    %3262 = vmatpush1.bf16.msra.mxu0 %v954
    %3263 = vmatprep.subr.bf16.mxu0 %v958
    %3264 = vmatpush1.bf16.msra.mxu0 %v957
    %3265 = vmatprep.subr.bf16.mxu0 %v961
    %3266 = vmatpush1.bf16.msra.mxu0 %v960
    %3267 = vmatprep.subr.bf16.mxu0 %v964
    %3268 = vmatpush1.bf16.msra.mxu0 %v963
    %3269 = vmatprep.subr.bf16.mxu0 %v967
    %3270 = vmatpush1.bf16.msra.mxu0 %v966
    %3271 = vmatprep.subr.bf16.mxu0 0
    %3272 = vmatpush1.bf16.msra.mxu0 0
    %3273 = vmatprep.subr.bf16.mxu0 0
    %3274 = vmatpush1.bf16.msra.mxu0 0
    %3275 = vmatprep.subr.bf16.mxu0 0
    %3276 = vmatpush1.bf16.msra.mxu0 0
    %3277 = vmatprep.subr.bf16.mxu0 0
    %3278 = vmatpush1.bf16.msra.mxu0 0
    %3279 = vmatprep.subr.bf16.mxu0 0
    %3280 = vmatpush1.bf16.msra.mxu0 0
    %3281 = vmatprep.subr.bf16.mxu0 0
    %3282 = vmatpush1.bf16.msra.mxu0 0
    %3283 = vmatprep.subr.bf16.mxu0 0
    %3284 = vmatpush1.bf16.msra.mxu0 0
    %3285 = vmatprep.subr.bf16.mxu0 0
    %3286 = vmatpush1.bf16.msra.mxu0 0
    %3287 = vmatprep.mubr.bf16.mxu0 0
    %3288 = vmatmul.mubr.bf16.gmra.mrb[0].mxu0 %v3254
    %v3289 = vpop.f32.mrb[0].mxu0
    %v3290 = vadd.f32 0.0, %v3289
    %v3291 = vpop.f32.mrb[0].mxu0
    %v3292 = vadd.f32 0.0, %v3291
    %v3293 = vpop.f32.mrb[0].mxu0
    %v3294 = vpop.f32.mrb[0].mxu0
    %3295 = vdwg.mxu0
    %3296 = vmatprep.subr.bf16.mxu0 0
    %3297 = vmatpush1.bf16.msra.mxu0 %v947
    %3298 = vmatprep.subr.bf16.mxu0 0
    %3299 = vmatpush1.bf16.msra.mxu0 %v950
    %3300 = vmatprep.subr.bf16.mxu0 0
    %3301 = vmatpush1.bf16.msra.mxu0 %v953
    %3302 = vmatprep.subr.bf16.mxu0 0
    %3303 = vmatpush1.bf16.msra.mxu0 %v956
    %3304 = vmatprep.subr.bf16.mxu0 0
    %3305 = vmatpush1.bf16.msra.mxu0 %v959
    %3306 = vmatprep.subr.bf16.mxu0 0
    %3307 = vmatpush1.bf16.msra.mxu0 %v962
    %3308 = vmatprep.subr.bf16.mxu0 0
    %3309 = vmatpush1.bf16.msra.mxu0 %v965
    %3310 = vmatprep.subr.bf16.mxu0 0
    %3311 = vmatpush1.bf16.msra.mxu0 %v968
    %3312 = vmatprep.subr.bf16.mxu0 0
    %3313 = vmatpush1.bf16.msra.mxu0 0
    %3314 = vmatprep.subr.bf16.mxu0 0
    %3315 = vmatpush1.bf16.msra.mxu0 0
    %3316 = vmatprep.subr.bf16.mxu0 0
    %3317 = vmatpush1.bf16.msra.mxu0 0
    %3318 = vmatprep.subr.bf16.mxu0 0
    %3319 = vmatpush1.bf16.msra.mxu0 0
    %3320 = vmatprep.subr.bf16.mxu0 0
    %3321 = vmatpush1.bf16.msra.mxu0 0
    %3322 = vmatprep.subr.bf16.mxu0 0
    %3323 = vmatpush1.bf16.msra.mxu0 0
    %3324 = vmatprep.subr.bf16.mxu0 0
    %3325 = vmatpush1.bf16.msra.mxu0 0
    %3326 = vmatprep.subr.bf16.mxu0 0
    %3327 = vmatpush1.bf16.msra.mxu0 0
    %3328 = vmatprep.mubr.bf16.mxu0 0
    %3329 = vmatmul.mubr.bf16.gmra.mrb[0].mxu0 %v3254
    %v3330 = vpop.f32.mrb[0].mxu0
    %v3331 = vadd.f32 0.0, %v3330
    %v3332 = vpop.f32.mrb[0].mxu0
    %v3333 = vpop.f32.mrb[0].mxu0
    %v3334 = vpop.f32.mrb[0].mxu0
    %3335 = vdwg.mxu0
    %v3336 = vadd.f32 %v437, %v3290
    %v3337 = vadd.f32 %v439, %v3292
    %v3338 = vadd.f32 %v510, %v3331
    %v3339 = vmul.f32 %v3336, %v1080
    %v3340 = vmul.f32 %v3337, %v1080
    %v3341 = vmul.f32 %v3338, %v1080
    %v3342 = vrot.slane %v3339, 4
    %v3343 = vadd.f32 %v3339, %v3342
    %v3344 = vrot.slane %v3343, 2
    %v3345 = vadd.f32 %v3343, %v3344
    %v3346 = vrot.slane %v3345, 1
    %v3347 = vadd.f32 %v3345, %v3346
    %v3348 = vrot.slane %v3340, 4
    %v3349 = vadd.f32 %v3340, %v3348
    %v3350 = vrot.slane %v3349, 2
    %v3351 = vadd.f32 %v3349, %v3350
    %v3352 = vrot.slane %v3351, 1
    %v3353 = vadd.f32 %v3351, %v3352
    %v3354 = vrot.slane %v3341, 4
    %v3355 = vadd.f32 %v3341, %v3354
    %v3356 = vrot.slane %v3355, 2
    %v3357 = vadd.f32 %v3355, %v3356
    %v3358 = vrot.slane %v3357, 1
    %v3359 = vadd.f32 %v3357, %v3358
    %v3360 = vmul.f32 %v3339, %v3336
    %v3361 = vmul.f32 %v3340, %v3337
    %v3362 = vmul.f32 %v3341, %v3338
    %v3363 = vrot.slane %v3360, 4
    %v3364 = vadd.f32 %v3360, %v3363
    %v3365 = vrot.slane %v3364, 2
    %v3366 = vadd.f32 %v3364, %v3365
    %v3367 = vrot.slane %v3366, 1
    %v3368 = vadd.f32 %v3366, %v3367
    %v3369 = vrot.slane %v3361, 4
    %v3370 = vadd.f32 %v3361, %v3369
    %v3371 = vrot.slane %v3370, 2
    %v3372 = vadd.f32 %v3370, %v3371
    %v3373 = vrot.slane %v3372, 1
    %v3374 = vadd.f32 %v3372, %v3373
    %v3375 = vrot.slane %v3362, 4
    %v3376 = vadd.f32 %v3362, %v3375
    %v3377 = vrot.slane %v3376, 2
    %v3378 = vadd.f32 %v3376, %v3377
    %v3379 = vrot.slane %v3378, 1
    %v3380 = vadd.f32 %v3378, %v3379
    %v3381 = vsel %vm1124, %v3347, %v3368
    %v3382 = vsel %vm1124, %v3353, %v3374
    %v3383 = vsel %vm1124, %v3359, %v3380
    %3384 = vmatprep.subr.mxu0 %v186
    %3385 = vmatpush1.msra.mxu0 %v185
    %3386 = vmatprep.subr.mxu0 %v189
    %3387 = vmatpush1.msra.mxu0 %v188
    %3388 = vmatprep.subr.mxu0 %v192
    %3389 = vmatpush1.msra.mxu0 %v191
    %3390 = vmatprep.subr.mxu0 %v195
    %3391 = vmatpush1.msra.mxu0 %v194
    %3392 = vmatprep.subr.mxu0 %v198
    %3393 = vmatpush1.msra.mxu0 %v197
    %3394 = vmatprep.subr.mxu0 %v201
    %3395 = vmatpush1.msra.mxu0 %v200
    %3396 = vmatprep.subr.mxu0 %v204
    %3397 = vmatpush1.msra.mxu0 %v203
    %3398 = vmatprep.subr.mxu0 %v207
    %3399 = vmatpush1.msra.mxu0 %v206
    %3400 = vmatprep.subr.mxu0 %v210
    %3401 = vmatpush1.msra.mxu0 %v209
    %3402 = vmatprep.subr.mxu0 %v213
    %3403 = vmatpush1.msra.mxu0 %v212
    %3404 = vmatprep.subr.mxu0 %v216
    %3405 = vmatpush1.msra.mxu0 %v215
    %3406 = vmatprep.subr.mxu0 %v219
    %3407 = vmatpush1.msra.mxu0 %v218
    %3408 = vmatprep.subr.mxu0 %v222
    %3409 = vmatpush1.msra.mxu0 %v221
    %3410 = vmatprep.subr.mxu0 %v225
    %3411 = vmatpush1.msra.mxu0 %v224
    %3412 = vmatprep.subr.mxu0 %v228
    %3413 = vmatpush1.msra.mxu0 %v227
    %3414 = vmatprep.subr.mxu0 %v231
    %3415 = vmatpush1.msra.mxu0 %v230
    %3416 = vmatprep.subr.mxu0 %v234
    %3417 = vmatpush1.msra.mxu0 %v233
    %3418 = vmatprep.subr.mxu0 %v237
    %3419 = vmatpush1.msra.mxu0 %v236
    %3420 = vmatprep.subr.mxu0 %v240
    %3421 = vmatpush1.msra.mxu0 %v239
    %3422 = vmatprep.subr.mxu0 %v243
    %3423 = vmatpush1.msra.mxu0 %v242
    %3424 = vmatprep.subr.mxu0 %v246
    %3425 = vmatpush1.msra.mxu0 %v245
    %3426 = vmatprep.subr.mxu0 %v249
    %3427 = vmatpush1.msra.mxu0 %v248
    %3428 = vmatprep.subr.mxu0 %v252
    %3429 = vmatpush1.msra.mxu0 %v251
    %3430 = vmatprep.subr.mxu0 %v255
    %3431 = vmatpush1.msra.mxu0 %v254
    %3432 = vmatprep.subr.mxu0 %v258
    %3433 = vmatpush1.msra.mxu0 %v257
    %3434 = vmatprep.subr.mxu0 %v261
    %3435 = vmatpush1.msra.mxu0 %v260
    %3436 = vmatprep.subr.mxu0 %v264
    %3437 = vmatpush1.msra.mxu0 %v263
    %3438 = vmatprep.subr.mxu0 %v267
    %3439 = vmatpush1.msra.mxu0 %v266
    %3440 = vmatprep.subr.mxu0 %v270
    %3441 = vmatpush1.msra.mxu0 %v269
    %3442 = vmatprep.subr.mxu0 %v273
    %3443 = vmatpush1.msra.mxu0 %v272
    %3444 = vmatprep.subr.mxu0 %v276
    %3445 = vmatpush1.msra.mxu0 %v275
    %3446 = vmatprep.subr.mxu0 %v279
    %3447 = vmatpush1.msra.mxu0 %v278
    %3448 = vmatprep.mubr.f32.mxu0 %v3382
    %3449 = vmatmul.mubr.f32.gmra.mrb[0].mxu0 %v3381
    %v3450 = vpop.f32.mrb[0].mxu0
    %v3451 = vadd.f32 0.0, %v3450
    %v3452 = vpop.f32.mrb[0].mxu0
    %v3453 = vadd.f32 0.0, %v3452
    %3454 = vdwg.mxu0
    %3455 = vmatprep.subr.mxu0 %v282
    %3456 = vmatpush1.msra.mxu0 %v281
    %3457 = vmatprep.subr.mxu0 %v285
    %3458 = vmatpush1.msra.mxu0 %v284
    %3459 = vmatprep.subr.mxu0 %v288
    %3460 = vmatpush1.msra.mxu0 %v287
    %3461 = vmatprep.subr.mxu0 %v291
    %3462 = vmatpush1.msra.mxu0 %v290
    %3463 = vmatprep.subr.mxu0 %v294
    %3464 = vmatpush1.msra.mxu0 %v293
    %3465 = vmatprep.subr.mxu0 %v297
    %3466 = vmatpush1.msra.mxu0 %v296
    %3467 = vmatprep.subr.mxu0 %v300
    %3468 = vmatpush1.msra.mxu0 %v299
    %3469 = vmatprep.subr.mxu0 %v303
    %3470 = vmatpush1.msra.mxu0 %v302
    %3471 = vmatprep.subr.mxu0 %v306
    %3472 = vmatpush1.msra.mxu0 %v305
    %3473 = vmatprep.subr.mxu0 %v309
    %3474 = vmatpush1.msra.mxu0 %v308
    %3475 = vmatprep.subr.mxu0 %v312
    %3476 = vmatpush1.msra.mxu0 %v311
    %3477 = vmatprep.subr.mxu0 %v315
    %3478 = vmatpush1.msra.mxu0 %v314
    %3479 = vmatprep.subr.mxu0 %v318
    %3480 = vmatpush1.msra.mxu0 %v317
    %3481 = vmatprep.subr.mxu0 %v321
    %3482 = vmatpush1.msra.mxu0 %v320
    %3483 = vmatprep.subr.mxu0 %v324
    %3484 = vmatpush1.msra.mxu0 %v323
    %3485 = vmatprep.subr.mxu0 %v327
    %3486 = vmatpush1.msra.mxu0 %v326
    %3487 = vmatprep.subr.mxu0 0.0
    %3488 = vmatpush1.msra.mxu0 0.0
    %3489 = vmatprep.subr.mxu0 0.0
    %3490 = vmatpush1.msra.mxu0 0.0
    %3491 = vmatprep.subr.mxu0 0.0
    %3492 = vmatpush1.msra.mxu0 0.0
    %3493 = vmatprep.subr.mxu0 0.0
    %3494 = vmatpush1.msra.mxu0 0.0
    %3495 = vmatprep.subr.mxu0 0.0
    %3496 = vmatpush1.msra.mxu0 0.0
    %3497 = vmatprep.subr.mxu0 0.0
    %3498 = vmatpush1.msra.mxu0 0.0
    %3499 = vmatprep.subr.mxu0 0.0
    %3500 = vmatpush1.msra.mxu0 0.0
    %3501 = vmatprep.subr.mxu0 0.0
    %3502 = vmatpush1.msra.mxu0 0.0
    %3503 = vmatprep.subr.mxu0 0.0
    %3504 = vmatpush1.msra.mxu0 0.0
    %3505 = vmatprep.subr.mxu0 0.0
    %3506 = vmatpush1.msra.mxu0 0.0
    %3507 = vmatprep.subr.mxu0 0.0
    %3508 = vmatpush1.msra.mxu0 0.0
    %3509 = vmatprep.subr.mxu0 0.0
    %3510 = vmatpush1.msra.mxu0 0.0
    %3511 = vmatprep.subr.mxu0 0.0
    %3512 = vmatpush1.msra.mxu0 0.0
    %3513 = vmatprep.subr.mxu0 0.0
    %3514 = vmatpush1.msra.mxu0 0.0
    %3515 = vmatprep.subr.mxu0 0.0
    %3516 = vmatpush1.msra.mxu0 0.0
    %3517 = vmatprep.subr.mxu0 0.0
    %3518 = vmatpush1.msra.mxu0 0.0
    %3519 = vmatprep.mubr.f32.mxu0 0.0
    %3520 = vmatmul.mubr.f32.gmra.mrb[0].mxu0 %v3383
    %v3521 = vpop.f32.mrb[0].mxu0
    %v3522 = vadd.f32 %v3451, %v3521
    %v3523 = vpop.f32.mrb[0].mxu0
    %v3524 = vadd.f32 %v3453, %v3523
    %3525 = vdwg.mxu0
    %3526 = vmatprep.subr.mxu0 0.0
    %3527 = vmatpush1.msra.mxu0 %v187
    %3528 = vmatprep.subr.mxu0 0.0
    %3529 = vmatpush1.msra.mxu0 %v190
    %3530 = vmatprep.subr.mxu0 0.0
    %3531 = vmatpush1.msra.mxu0 %v193
    %3532 = vmatprep.subr.mxu0 0.0
    %3533 = vmatpush1.msra.mxu0 %v196
    %3534 = vmatprep.subr.mxu0 0.0
    %3535 = vmatpush1.msra.mxu0 %v199
    %3536 = vmatprep.subr.mxu0 0.0
    %3537 = vmatpush1.msra.mxu0 %v202
    %3538 = vmatprep.subr.mxu0 0.0
    %3539 = vmatpush1.msra.mxu0 %v205
    %3540 = vmatprep.subr.mxu0 0.0
    %3541 = vmatpush1.msra.mxu0 %v208
    %3542 = vmatprep.subr.mxu0 0.0
    %3543 = vmatpush1.msra.mxu0 %v211
    %3544 = vmatprep.subr.mxu0 0.0
    %3545 = vmatpush1.msra.mxu0 %v214
    %3546 = vmatprep.subr.mxu0 0.0
    %3547 = vmatpush1.msra.mxu0 %v217
    %3548 = vmatprep.subr.mxu0 0.0
    %3549 = vmatpush1.msra.mxu0 %v220
    %3550 = vmatprep.subr.mxu0 0.0
    %3551 = vmatpush1.msra.mxu0 %v223
    %3552 = vmatprep.subr.mxu0 0.0
    %3553 = vmatpush1.msra.mxu0 %v226
    %3554 = vmatprep.subr.mxu0 0.0
    %3555 = vmatpush1.msra.mxu0 %v229
    %3556 = vmatprep.subr.mxu0 0.0
    %3557 = vmatpush1.msra.mxu0 %v232
    %3558 = vmatprep.subr.mxu0 0.0
    %3559 = vmatpush1.msra.mxu0 %v235
    %3560 = vmatprep.subr.mxu0 0.0
    %3561 = vmatpush1.msra.mxu0 %v238
    %3562 = vmatprep.subr.mxu0 0.0
    %3563 = vmatpush1.msra.mxu0 %v241
    %3564 = vmatprep.subr.mxu0 0.0
    %3565 = vmatpush1.msra.mxu0 %v244
    %3566 = vmatprep.subr.mxu0 0.0
    %3567 = vmatpush1.msra.mxu0 %v247
    %3568 = vmatprep.subr.mxu0 0.0
    %3569 = vmatpush1.msra.mxu0 %v250
    %3570 = vmatprep.subr.mxu0 0.0
    %3571 = vmatpush1.msra.mxu0 %v253
    %3572 = vmatprep.subr.mxu0 0.0
    %3573 = vmatpush1.msra.mxu0 %v256
    %3574 = vmatprep.subr.mxu0 0.0
    %3575 = vmatpush1.msra.mxu0 %v259
    %3576 = vmatprep.subr.mxu0 0.0
    %3577 = vmatpush1.msra.mxu0 %v262
    %3578 = vmatprep.subr.mxu0 0.0
    %3579 = vmatpush1.msra.mxu0 %v265
    %3580 = vmatprep.subr.mxu0 0.0
    %3581 = vmatpush1.msra.mxu0 %v268
    %3582 = vmatprep.subr.mxu0 0.0
    %3583 = vmatpush1.msra.mxu0 %v271
    %3584 = vmatprep.subr.mxu0 0.0
    %3585 = vmatpush1.msra.mxu0 %v274
    %3586 = vmatprep.subr.mxu0 0.0
    %3587 = vmatpush1.msra.mxu0 %v277
    %3588 = vmatprep.subr.mxu0 0.0
    %3589 = vmatpush1.msra.mxu0 %v280
    %3590 = vmatprep.mubr.f32.mxu0 %v3382
    %3591 = vmatmul.mubr.f32.gmra.mrb[0].mxu0 %v3381
    %v3592 = vpop.f32.mrb[0].mxu0
    %v3593 = vadd.f32 0.0, %v3592
    %v3594 = vpop.f32.mrb[0].mxu0
    %3595 = vdwg.mxu0
    %3596 = vmatprep.subr.mxu0 0.0
    %3597 = vmatpush1.msra.mxu0 %v283
    %3598 = vmatprep.subr.mxu0 0.0
    %3599 = vmatpush1.msra.mxu0 %v286
    %3600 = vmatprep.subr.mxu0 0.0
    %3601 = vmatpush1.msra.mxu0 %v289
    %3602 = vmatprep.subr.mxu0 0.0
    %3603 = vmatpush1.msra.mxu0 %v292
    %3604 = vmatprep.subr.mxu0 0.0
    %3605 = vmatpush1.msra.mxu0 %v295
    %3606 = vmatprep.subr.mxu0 0.0
    %3607 = vmatpush1.msra.mxu0 %v298
    %3608 = vmatprep.subr.mxu0 0.0
    %3609 = vmatpush1.msra.mxu0 %v301
    %3610 = vmatprep.subr.mxu0 0.0
    %3611 = vmatpush1.msra.mxu0 %v304
    %3612 = vmatprep.subr.mxu0 0.0
    %3613 = vmatpush1.msra.mxu0 %v307
    %3614 = vmatprep.subr.mxu0 0.0
    %3615 = vmatpush1.msra.mxu0 %v310
    %3616 = vmatprep.subr.mxu0 0.0
    %3617 = vmatpush1.msra.mxu0 %v313
    %3618 = vmatprep.subr.mxu0 0.0
    %3619 = vmatpush1.msra.mxu0 %v316
    %3620 = vmatprep.subr.mxu0 0.0
    %3621 = vmatpush1.msra.mxu0 %v319
    %3622 = vmatprep.subr.mxu0 0.0
    %3623 = vmatpush1.msra.mxu0 %v322
    %3624 = vmatprep.subr.mxu0 0.0
    %3625 = vmatpush1.msra.mxu0 %v325
    %3626 = vmatprep.subr.mxu0 0.0
    %3627 = vmatpush1.msra.mxu0 %v328
    %3628 = vmatprep.subr.mxu0 0.0
    %3629 = vmatpush1.msra.mxu0 0.0
    %3630 = vmatprep.subr.mxu0 0.0
    %3631 = vmatpush1.msra.mxu0 0.0
    %3632 = vmatprep.subr.mxu0 0.0
    %3633 = vmatpush1.msra.mxu0 0.0
    %3634 = vmatprep.subr.mxu0 0.0
    %3635 = vmatpush1.msra.mxu0 0.0
    %3636 = vmatprep.subr.mxu0 0.0
    %3637 = vmatpush1.msra.mxu0 0.0
    %3638 = vmatprep.subr.mxu0 0.0
    %3639 = vmatpush1.msra.mxu0 0.0
    %3640 = vmatprep.subr.mxu0 0.0
    %3641 = vmatpush1.msra.mxu0 0.0
    %3642 = vmatprep.subr.mxu0 0.0
    %3643 = vmatpush1.msra.mxu0 0.0
    %3644 = vmatprep.subr.mxu0 0.0
    %3645 = vmatpush1.msra.mxu0 0.0
    %3646 = vmatprep.subr.mxu0 0.0
    %3647 = vmatpush1.msra.mxu0 0.0
    %3648 = vmatprep.subr.mxu0 0.0
    %3649 = vmatpush1.msra.mxu0 0.0
    %3650 = vmatprep.subr.mxu0 0.0
    %3651 = vmatpush1.msra.mxu0 0.0
    %3652 = vmatprep.subr.mxu0 0.0
    %3653 = vmatpush1.msra.mxu0 0.0
    %3654 = vmatprep.subr.mxu0 0.0
    %3655 = vmatpush1.msra.mxu0 0.0
    %3656 = vmatprep.subr.mxu0 0.0
    %3657 = vmatpush1.msra.mxu0 0.0
    %3658 = vmatprep.subr.mxu0 0.0
    %3659 = vmatpush1.msra.mxu0 0.0
    %3660 = vmatprep.mubr.f32.mxu0 0.0
    %3661 = vmatmul.mubr.f32.gmra.mrb[0].mxu0 %v3383
    %v3662 = vpop.f32.mrb[0].mxu0
    %v3663 = vadd.f32 %v3593, %v3662
    %v3664 = vpop.f32.mrb[0].mxu0
    %3665 = vdwg.mxu0
    %v3666 = vmul.f32 %v3522, 0.015625
    %v3667 = vmul.f32 %v3524, 0.015625
    %v3668 = vmul.f32 %v3663, 0.015625
    %v3669 = vmul.f32 %v3666, %v3666
    %v3670 = vmul.f32 %v3667, %v3667
    %v3671 = vmul.f32 %v3668, %v3668
    %v3675 = vrot.slane %v3669, 7
    %v3676 = vrot.slane %v3670, 7
    %v3677 = vrot.slane %v3671, 7
    %v3681 = vsub.f32 %v3666, %v3675
    %v3682 = vsub.f32 %v3667, %v3676
    %v3683 = vsub.f32 %v3668, %v3677
    %v3684 = vadd.f32 %v3681, 1e-05
    %v3685 = vadd.f32 %v3682, 1e-05
    %v3686 = vadd.f32 %v3683, 1e-05
    %v3687 = vrsqrt.pop %v3684
    %v3688 = vrsqrt.pop %v3685
    %v3689 = vrsqrt.pop %v3686
    %v3690 = vmul.f32 %v3687, %v1438
    %v3691 = vmul.f32 %v3688, %v1442
    %v3692 = vmul.f32 %v3689, %v1446
    %v3696 = vrot.slane %v3690, 1
    %v3697 = vrot.slane %v3691, 1
    %v3698 = vrot.slane %v3692, 1
    %v3702 = vmul.f32 %v3666, %v3696
    %v3703 = vmul.f32 %v3667, %v3697
    %v3704 = vmul.f32 %v3668, %v3698
    %v3708 = vcombine.low %v3702, %v3703
    %v3710 = vunpack.c.l.s4 1966171168
    %v3711 = vunpack.c.0.s8 %v3710
    %v3712 = vlaneseq
    %v3713 = vshrl.u32 %v3712, 7
    %v3714 = vsub.s32 %v3711, %v3713
    %v3715 = vrot.slane %v3708, %v3714
    %v3717 = vunpack.c.l.s4 1966171168
    %v3718 = vunpack.c.0.s8 %v3717
    %v3719 = vlaneseq
    %v3720 = vshrl.u32 %v3719, 7
    %v3721 = vsub.s32 %v3718, %v3720
    %v3722 = vrot.slane %v3704, %v3721
    %v3723 = vcombine.low %v3715, %v3722
    %v3725 = vunpack.c.l.s4 1966171168
    %v3726 = vunpack.c.0.s8 %v3725
    %v3727 = vlaneseq
    %v3728 = vshrl.u32 %v3727, 7
    %v3729 = vsub.s32 %v3726, %v3728
    %v3730 = vrot.slane %v3723, %v3729
    %v3732 = vsub.f32 %v331, %v3730
    %v3733 = vlaneseq
    %v3734 = vshrl.u32 %v3733, 7
    %v3735 = vsub.s32 1, %v3734
    %v3736 = vrot.slane %v3690, %v3735
    %v3737 = vlaneseq
    %v3738 = vshrl.u32 %v3737, 7
    %v3739 = vsub.s32 1, %v3738
    %v3740 = vrot.slane %v3691, %v3739
    %v3741 = vlaneseq
    %v3742 = vshrl.u32 %v3741, 7
    %v3743 = vsub.s32 1, %v3742
    %v3744 = vrot.slane %v3692, %v3743
    %v3745 = vmul.f32 %v3336, %v3736
    %v3746 = vmul.f32 %v3337, %v3740
    %v3747 = vmul.f32 %v3338, %v3744
    %v3749 = vlaneseq
    %v3750 = vshrl.u32 %v3749, 7
    %v3751 = vsub.s32 0, %v3750
    %v3752 = vrot.slane %v3732, %v3751
    %v3753 = vlaneseq
    %v3754 = vshrl.u32 %v3753, 7
    %v3755 = vsub.s32 1, %v3754
    %v3756 = vrot.slane %v3732, %v3755
    %v3757 = vlaneseq
    %v3758 = vshrl.u32 %v3757, 7
    %v3759 = vsub.s32 2, %v3758
    %v3760 = vrot.slane %v3732, %v3759
    %v3764 = vadd.f32 %v3745, %v3752
    %v3765 = vadd.f32 %v3746, %v3756
    %v3766 = vadd.f32 %v3747, %v3760
    %v3767 = vxor.u32 %v3766, 2147483648
    %v3768 = vmul.f32 %v3767, 1.442695
    %v3769 = vpow.pop %v3768
    %v3770 = vadd.f32 %v3769, 1.0
    %v3771 = vrcp.pop %v3770
    %v3772 = vmul.f32 1.0, %v3771
    %v3773 = vlaneseq
    %v3774 = vshrl.u32 %v3773, 7
    %v3775 = vsub.s32 4, %v3774
    %v3776 = vrot.slane %v850, %v3775
    %v3777 = vmul.f32 %v512, %v3776
    %v3778 = vlaneseq
    %v3779 = vshrl.u32 %v3778, 7
    %v3780 = vsub.s32 4, %v3779
    %v3781 = vrot.slane %v859, %v3780
    %v3782 = vadd.f32 %v3777, %v3781
    %v3783 = vtanh.pop %v3764
    %v3784 = vmul.f32 %v3782, %v3783
    %v3785 = vsub.f32 0.0, %v3772
    %v3786 = vmul.f32 %v3785, 1.442695
    %v3787 = vpow.pop %v3786
    %v3788 = vmul.f32 %v3253, %v3787
    %v3789 = vmax.f32 %v3788, %v3765
    %v3790 = vsub.f32 %v3253, %v3789
    %v3791 = vsub.f32 %v3790, %v3772
    %v3792 = vmul.f32 %v3791, 1.442695
    %v3793 = vpow.pop %v3792
    %v3794 = vsub.f32 %v3765, %v3789
    %v3795 = vmul.f32 %v3794, 1.442695
    %v3796 = vpow.pop %v3795
    %v3797 = vmul.f32 %v3251, %v3793
    %v3798 = vmul.f32 %v3784, %v3796
    %v3799 = vadd.f32 %v3797, %v3798
    %v3800 = vmul.f32 %v3252, %v3793
    %v3801 = vadd.f32 %v3800, %v3796
    %v3802 = vrcp.pop %v3801
    %v3803 = vmul.f32 %v3799, %v3802
    %v3804 = vtanh.pop %v3803
    %3805 = vst [vmem:[#allocation13] sm:$0xff] %v3799
    %3806 = vst [vmem:[#allocation15] sm:$0xff] %v3801
    %3807 = vst [vmem:[#allocation16] sm:$0xff] %v3804
    %3808 = vst [vmem:[#allocation18] sm:$0xff] %v3789
    %3809 = vst [vmem:[#allocation2 + $0x20] sm:$0xff] %v3804
    %v3810 = vld [vmem:[#allocation16] sm:$0xff]
    %v3811 = vld [vmem:[#allocation13] sm:$0xff]
    %v3812 = vld [vmem:[#allocation15] sm:$0xff]
    %v3813 = vld [vmem:[#allocation18] sm:$0xff]
    %v3814 = vpack.c.bf16 %v3810, %v3810
    %3815 = vmatprep.subr.bf16.mxu0 %v946
    %3816 = vmatpush1.bf16.msra.mxu0 %v945
    %3817 = vmatprep.subr.bf16.mxu0 %v949
    %3818 = vmatpush1.bf16.msra.mxu0 %v948
    %3819 = vmatprep.subr.bf16.mxu0 %v952
    %3820 = vmatpush1.bf16.msra.mxu0 %v951
    %3821 = vmatprep.subr.bf16.mxu0 %v955
    %3822 = vmatpush1.bf16.msra.mxu0 %v954
    %3823 = vmatprep.subr.bf16.mxu0 %v958
    %3824 = vmatpush1.bf16.msra.mxu0 %v957
    %3825 = vmatprep.subr.bf16.mxu0 %v961
    %3826 = vmatpush1.bf16.msra.mxu0 %v960
    %3827 = vmatprep.subr.bf16.mxu0 %v964
    %3828 = vmatpush1.bf16.msra.mxu0 %v963
    %3829 = vmatprep.subr.bf16.mxu0 %v967
    %3830 = vmatpush1.bf16.msra.mxu0 %v966
    %3831 = vmatprep.subr.bf16.mxu0 0
    %3832 = vmatpush1.bf16.msra.mxu0 0
    %3833 = vmatprep.subr.bf16.mxu0 0
    %3834 = vmatpush1.bf16.msra.mxu0 0
    %3835 = vmatprep.subr.bf16.mxu0 0
    %3836 = vmatpush1.bf16.msra.mxu0 0
    %3837 = vmatprep.subr.bf16.mxu0 0
    %3838 = vmatpush1.bf16.msra.mxu0 0
    %3839 = vmatprep.subr.bf16.mxu0 0
    %3840 = vmatpush1.bf16.msra.mxu0 0
    %3841 = vmatprep.subr.bf16.mxu0 0
    %3842 = vmatpush1.bf16.msra.mxu0 0
    %3843 = vmatprep.subr.bf16.mxu0 0
    %3844 = vmatpush1.bf16.msra.mxu0 0
    %3845 = vmatprep.subr.bf16.mxu0 0
    %3846 = vmatpush1.bf16.msra.mxu0 0
    %3847 = vmatprep.mubr.bf16.mxu0 0
    %3848 = vmatmul.mubr.bf16.gmra.mrb[0].mxu0 %v3814
    %v3849 = vpop.f32.mrb[0].mxu0
    %v3850 = vadd.f32 0.0, %v3849
    %v3851 = vpop.f32.mrb[0].mxu0
    %v3852 = vadd.f32 0.0, %v3851
    %v3853 = vpop.f32.mrb[0].mxu0
    %v3854 = vpop.f32.mrb[0].mxu0
    %3855 = vdwg.mxu0
    %3856 = vmatprep.subr.bf16.mxu0 0
    %3857 = vmatpush1.bf16.msra.mxu0 %v947
    %3858 = vmatprep.subr.bf16.mxu0 0
    %3859 = vmatpush1.bf16.msra.mxu0 %v950
    %3860 = vmatprep.subr.bf16.mxu0 0
    %3861 = vmatpush1.bf16.msra.mxu0 %v953
    %3862 = vmatprep.subr.bf16.mxu0 0
    %3863 = vmatpush1.bf16.msra.mxu0 %v956
    %3864 = vmatprep.subr.bf16.mxu0 0
    %3865 = vmatpush1.bf16.msra.mxu0 %v959
    %3866 = vmatprep.subr.bf16.mxu0 0
    %3867 = vmatpush1.bf16.msra.mxu0 %v962
    %3868 = vmatprep.subr.bf16.mxu0 0
    %3869 = vmatpush1.bf16.msra.mxu0 %v965
    %3870 = vmatprep.subr.bf16.mxu0 0
    %3871 = vmatpush1.bf16.msra.mxu0 %v968
    %3872 = vmatprep.subr.bf16.mxu0 0
    %3873 = vmatpush1.bf16.msra.mxu0 0
    %3874 = vmatprep.subr.bf16.mxu0 0
    %3875 = vmatpush1.bf16.msra.mxu0 0
    %3876 = vmatprep.subr.bf16.mxu0 0
    %3877 = vmatpush1.bf16.msra.mxu0 0
    %3878 = vmatprep.subr.bf16.mxu0 0
    %3879 = vmatpush1.bf16.msra.mxu0 0
    %3880 = vmatprep.subr.bf16.mxu0 0
    %3881 = vmatpush1.bf16.msra.mxu0 0
    %3882 = vmatprep.subr.bf16.mxu0 0
    %3883 = vmatpush1.bf16.msra.mxu0 0
    %3884 = vmatprep.subr.bf16.mxu0 0
    %3885 = vmatpush1.bf16.msra.mxu0 0
    %3886 = vmatprep.subr.bf16.mxu0 0
    %3887 = vmatpush1.bf16.msra.mxu0 0
    %3888 = vmatprep.mubr.bf16.mxu0 0
    %3889 = vmatmul.mubr.bf16.gmra.mrb[0].mxu0 %v3814
    %v3890 = vpop.f32.mrb[0].mxu0
    %v3891 = vadd.f32 0.0, %v3890
    %v3892 = vpop.f32.mrb[0].mxu0
    %v3893 = vpop.f32.mrb[0].mxu0
    %v3894 = vpop.f32.mrb[0].mxu0
    %3895 = vdwg.mxu0
    %v3896 = vadd.f32 %v441, %v3850
    %v3897 = vadd.f32 %v443, %v3852
    %v3898 = vadd.f32 %v514, %v3891
    %v3899 = vmul.f32 %v3896, %v1080
    %v3900 = vmul.f32 %v3897, %v1080
    %v3901 = vmul.f32 %v3898, %v1080
    %v3902 = vrot.slane %v3899, 4
    %v3903 = vadd.f32 %v3899, %v3902
    %v3904 = vrot.slane %v3903, 2
    %v3905 = vadd.f32 %v3903, %v3904
    %v3906 = vrot.slane %v3905, 1
    %v3907 = vadd.f32 %v3905, %v3906
    %v3908 = vrot.slane %v3900, 4
    %v3909 = vadd.f32 %v3900, %v3908
    %v3910 = vrot.slane %v3909, 2
    %v3911 = vadd.f32 %v3909, %v3910
    %v3912 = vrot.slane %v3911, 1
    %v3913 = vadd.f32 %v3911, %v3912
    %v3914 = vrot.slane %v3901, 4
    %v3915 = vadd.f32 %v3901, %v3914
    %v3916 = vrot.slane %v3915, 2
    %v3917 = vadd.f32 %v3915, %v3916
    %v3918 = vrot.slane %v3917, 1
    %v3919 = vadd.f32 %v3917, %v3918
    %v3920 = vmul.f32 %v3899, %v3896
    %v3921 = vmul.f32 %v3900, %v3897
    %v3922 = vmul.f32 %v3901, %v3898
    %v3923 = vrot.slane %v3920, 4
    %v3924 = vadd.f32 %v3920, %v3923
    %v3925 = vrot.slane %v3924, 2
    %v3926 = vadd.f32 %v3924, %v3925
    %v3927 = vrot.slane %v3926, 1
    %v3928 = vadd.f32 %v3926, %v3927
    %v3929 = vrot.slane %v3921, 4
    %v3930 = vadd.f32 %v3921, %v3929
    %v3931 = vrot.slane %v3930, 2
    %v3932 = vadd.f32 %v3930, %v3931
    %v3933 = vrot.slane %v3932, 1
    %v3934 = vadd.f32 %v3932, %v3933
    %v3935 = vrot.slane %v3922, 4
    %v3936 = vadd.f32 %v3922, %v3935
    %v3937 = vrot.slane %v3936, 2
    %v3938 = vadd.f32 %v3936, %v3937
    %v3939 = vrot.slane %v3938, 1
    %v3940 = vadd.f32 %v3938, %v3939
    %v3941 = vsel %vm1124, %v3907, %v3928
    %v3942 = vsel %vm1124, %v3913, %v3934
    %v3943 = vsel %vm1124, %v3919, %v3940
    %3944 = vmatprep.subr.mxu0 %v186
    %3945 = vmatpush1.msra.mxu0 %v185
    %3946 = vmatprep.subr.mxu0 %v189
    %3947 = vmatpush1.msra.mxu0 %v188
    %3948 = vmatprep.subr.mxu0 %v192
    %3949 = vmatpush1.msra.mxu0 %v191
    %3950 = vmatprep.subr.mxu0 %v195
    %3951 = vmatpush1.msra.mxu0 %v194
    %3952 = vmatprep.subr.mxu0 %v198
    %3953 = vmatpush1.msra.mxu0 %v197
    %3954 = vmatprep.subr.mxu0 %v201
    %3955 = vmatpush1.msra.mxu0 %v200
    %3956 = vmatprep.subr.mxu0 %v204
    %3957 = vmatpush1.msra.mxu0 %v203
    %3958 = vmatprep.subr.mxu0 %v207
    %3959 = vmatpush1.msra.mxu0 %v206
    %3960 = vmatprep.subr.mxu0 %v210
    %3961 = vmatpush1.msra.mxu0 %v209
    %3962 = vmatprep.subr.mxu0 %v213
    %3963 = vmatpush1.msra.mxu0 %v212
    %3964 = vmatprep.subr.mxu0 %v216
    %3965 = vmatpush1.msra.mxu0 %v215
    %3966 = vmatprep.subr.mxu0 %v219
    %3967 = vmatpush1.msra.mxu0 %v218
    %3968 = vmatprep.subr.mxu0 %v222
    %3969 = vmatpush1.msra.mxu0 %v221
    %3970 = vmatprep.subr.mxu0 %v225
    %3971 = vmatpush1.msra.mxu0 %v224
    %3972 = vmatprep.subr.mxu0 %v228
    %3973 = vmatpush1.msra.mxu0 %v227
    %3974 = vmatprep.subr.mxu0 %v231
    %3975 = vmatpush1.msra.mxu0 %v230
    %3976 = vmatprep.subr.mxu0 %v234
    %3977 = vmatpush1.msra.mxu0 %v233
    %3978 = vmatprep.subr.mxu0 %v237
    %3979 = vmatpush1.msra.mxu0 %v236
    %3980 = vmatprep.subr.mxu0 %v240
    %3981 = vmatpush1.msra.mxu0 %v239
    %3982 = vmatprep.subr.mxu0 %v243
    %3983 = vmatpush1.msra.mxu0 %v242
    %3984 = vmatprep.subr.mxu0 %v246
    %3985 = vmatpush1.msra.mxu0 %v245
    %3986 = vmatprep.subr.mxu0 %v249
    %3987 = vmatpush1.msra.mxu0 %v248
    %3988 = vmatprep.subr.mxu0 %v252
    %3989 = vmatpush1.msra.mxu0 %v251
    %3990 = vmatprep.subr.mxu0 %v255
    %3991 = vmatpush1.msra.mxu0 %v254
    %3992 = vmatprep.subr.mxu0 %v258
    %3993 = vmatpush1.msra.mxu0 %v257
    %3994 = vmatprep.subr.mxu0 %v261
    %3995 = vmatpush1.msra.mxu0 %v260
    %3996 = vmatprep.subr.mxu0 %v264
    %3997 = vmatpush1.msra.mxu0 %v263
    %3998 = vmatprep.subr.mxu0 %v267
    %3999 = vmatpush1.msra.mxu0 %v266
    %4000 = vmatprep.subr.mxu0 %v270
    %4001 = vmatpush1.msra.mxu0 %v269
    %4002 = vmatprep.subr.mxu0 %v273
    %4003 = vmatpush1.msra.mxu0 %v272
    %4004 = vmatprep.subr.mxu0 %v276
    %4005 = vmatpush1.msra.mxu0 %v275
    %4006 = vmatprep.subr.mxu0 %v279
    %4007 = vmatpush1.msra.mxu0 %v278
    %4008 = vmatprep.mubr.f32.mxu0 %v3942
    %4009 = vmatmul.mubr.f32.gmra.mrb[0].mxu0 %v3941
    %v4010 = vpop.f32.mrb[0].mxu0
    %v4011 = vadd.f32 0.0, %v4010
    %v4012 = vpop.f32.mrb[0].mxu0
    %v4013 = vadd.f32 0.0, %v4012
    %4014 = vdwg.mxu0
    %4015 = vmatprep.subr.mxu0 %v282
    %4016 = vmatpush1.msra.mxu0 %v281
    %4017 = vmatprep.subr.mxu0 %v285
    %4018 = vmatpush1.msra.mxu0 %v284
    %4019 = vmatprep.subr.mxu0 %v288
    %4020 = vmatpush1.msra.mxu0 %v287
    %4021 = vmatprep.subr.mxu0 %v291
    %4022 = vmatpush1.msra.mxu0 %v290
    %4023 = vmatprep.subr.mxu0 %v294
    %4024 = vmatpush1.msra.mxu0 %v293
    %4025 = vmatprep.subr.mxu0 %v297
    %4026 = vmatpush1.msra.mxu0 %v296
    %4027 = vmatprep.subr.mxu0 %v300
    %4028 = vmatpush1.msra.mxu0 %v299
    %4029 = vmatprep.subr.mxu0 %v303
    %4030 = vmatpush1.msra.mxu0 %v302
    %4031 = vmatprep.subr.mxu0 %v306
    %4032 = vmatpush1.msra.mxu0 %v305
    %4033 = vmatprep.subr.mxu0 %v309
    %4034 = vmatpush1.msra.mxu0 %v308
    %4035 = vmatprep.subr.mxu0 %v312
    %4036 = vmatpush1.msra.mxu0 %v311
    %4037 = vmatprep.subr.mxu0 %v315
    %4038 = vmatpush1.msra.mxu0 %v314
    %4039 = vmatprep.subr.mxu0 %v318
    %4040 = vmatpush1.msra.mxu0 %v317
    %4041 = vmatprep.subr.mxu0 %v321
    %4042 = vmatpush1.msra.mxu0 %v320
    %4043 = vmatprep.subr.mxu0 %v324
    %4044 = vmatpush1.msra.mxu0 %v323
    %4045 = vmatprep.subr.mxu0 %v327
    %4046 = vmatpush1.msra.mxu0 %v326
    %4047 = vmatprep.subr.mxu0 0.0
    %4048 = vmatpush1.msra.mxu0 0.0
    %4049 = vmatprep.subr.mxu0 0.0
    %4050 = vmatpush1.msra.mxu0 0.0
    %4051 = vmatprep.subr.mxu0 0.0
    %4052 = vmatpush1.msra.mxu0 0.0
    %4053 = vmatprep.subr.mxu0 0.0
    %4054 = vmatpush1.msra.mxu0 0.0
    %4055 = vmatprep.subr.mxu0 0.0
    %4056 = vmatpush1.msra.mxu0 0.0
    %4057 = vmatprep.subr.mxu0 0.0
    %4058 = vmatpush1.msra.mxu0 0.0
    %4059 = vmatprep.subr.mxu0 0.0
    %4060 = vmatpush1.msra.mxu0 0.0
    %4061 = vmatprep.subr.mxu0 0.0
    %4062 = vmatpush1.msra.mxu0 0.0
    %4063 = vmatprep.subr.mxu0 0.0
    %4064 = vmatpush1.msra.mxu0 0.0
    %4065 = vmatprep.subr.mxu0 0.0
    %4066 = vmatpush1.msra.mxu0 0.0
    %4067 = vmatprep.subr.mxu0 0.0
    %4068 = vmatpush1.msra.mxu0 0.0
    %4069 = vmatprep.subr.mxu0 0.0
    %4070 = vmatpush1.msra.mxu0 0.0
    %4071 = vmatprep.subr.mxu0 0.0
    %4072 = vmatpush1.msra.mxu0 0.0
    %4073 = vmatprep.subr.mxu0 0.0
    %4074 = vmatpush1.msra.mxu0 0.0
    %4075 = vmatprep.subr.mxu0 0.0
    %4076 = vmatpush1.msra.mxu0 0.0
    %4077 = vmatprep.subr.mxu0 0.0
    %4078 = vmatpush1.msra.mxu0 0.0
    %4079 = vmatprep.mubr.f32.mxu0 0.0
    %4080 = vmatmul.mubr.f32.gmra.mrb[0].mxu0 %v3943
    %v4081 = vpop.f32.mrb[0].mxu0
    %v4082 = vadd.f32 %v4011, %v4081
    %v4083 = vpop.f32.mrb[0].mxu0
    %v4084 = vadd.f32 %v4013, %v4083
    %4085 = vdwg.mxu0
    %4086 = vmatprep.subr.mxu0 0.0
    %4087 = vmatpush1.msra.mxu0 %v187
    %4088 = vmatprep.subr.mxu0 0.0
    %4089 = vmatpush1.msra.mxu0 %v190
    %4090 = vmatprep.subr.mxu0 0.0
    %4091 = vmatpush1.msra.mxu0 %v193
    %4092 = vmatprep.subr.mxu0 0.0
    %4093 = vmatpush1.msra.mxu0 %v196
    %4094 = vmatprep.subr.mxu0 0.0
    %4095 = vmatpush1.msra.mxu0 %v199
    %4096 = vmatprep.subr.mxu0 0.0
    %4097 = vmatpush1.msra.mxu0 %v202
    %4098 = vmatprep.subr.mxu0 0.0
    %4099 = vmatpush1.msra.mxu0 %v205
    %4100 = vmatprep.subr.mxu0 0.0
    %4101 = vmatpush1.msra.mxu0 %v208
    %4102 = vmatprep.subr.mxu0 0.0
    %4103 = vmatpush1.msra.mxu0 %v211
    %4104 = vmatprep.subr.mxu0 0.0
    %4105 = vmatpush1.msra.mxu0 %v214
    %4106 = vmatprep.subr.mxu0 0.0
    %4107 = vmatpush1.msra.mxu0 %v217
    %4108 = vmatprep.subr.mxu0 0.0
    %4109 = vmatpush1.msra.mxu0 %v220
    %4110 = vmatprep.subr.mxu0 0.0
    %4111 = vmatpush1.msra.mxu0 %v223
    %4112 = vmatprep.subr.mxu0 0.0
    %4113 = vmatpush1.msra.mxu0 %v226
    %4114 = vmatprep.subr.mxu0 0.0
    %4115 = vmatpush1.msra.mxu0 %v229
    %4116 = vmatprep.subr.mxu0 0.0
    %4117 = vmatpush1.msra.mxu0 %v232
    %4118 = vmatprep.subr.mxu0 0.0
    %4119 = vmatpush1.msra.mxu0 %v235
    %4120 = vmatprep.subr.mxu0 0.0
    %4121 = vmatpush1.msra.mxu0 %v238
    %4122 = vmatprep.subr.mxu0 0.0
    %4123 = vmatpush1.msra.mxu0 %v241
    %4124 = vmatprep.subr.mxu0 0.0
    %4125 = vmatpush1.msra.mxu0 %v244
    %4126 = vmatprep.subr.mxu0 0.0
    %4127 = vmatpush1.msra.mxu0 %v247
    %4128 = vmatprep.subr.mxu0 0.0
    %4129 = vmatpush1.msra.mxu0 %v250
    %4130 = vmatprep.subr.mxu0 0.0
    %4131 = vmatpush1.msra.mxu0 %v253
    %4132 = vmatprep.subr.mxu0 0.0
    %4133 = vmatpush1.msra.mxu0 %v256
    %4134 = vmatprep.subr.mxu0 0.0
    %4135 = vmatpush1.msra.mxu0 %v259
    %4136 = vmatprep.subr.mxu0 0.0
    %4137 = vmatpush1.msra.mxu0 %v262
    %4138 = vmatprep.subr.mxu0 0.0
    %4139 = vmatpush1.msra.mxu0 %v265
    %4140 = vmatprep.subr.mxu0 0.0
    %4141 = vmatpush1.msra.mxu0 %v268
    %4142 = vmatprep.subr.mxu0 0.0
    %4143 = vmatpush1.msra.mxu0 %v271
    %4144 = vmatprep.subr.mxu0 0.0
    %4145 = vmatpush1.msra.mxu0 %v274
    %4146 = vmatprep.subr.mxu0 0.0
    %4147 = vmatpush1.msra.mxu0 %v277
    %4148 = vmatprep.subr.mxu0 0.0
    %4149 = vmatpush1.msra.mxu0 %v280
    %4150 = vmatprep.mubr.f32.mxu0 %v3942
    %4151 = vmatmul.mubr.f32.gmra.mrb[0].mxu0 %v3941
    %v4152 = vpop.f32.mrb[0].mxu0
    %v4153 = vadd.f32 0.0, %v4152
    %v4154 = vpop.f32.mrb[0].mxu0
    %4155 = vdwg.mxu0
    %4156 = vmatprep.subr.mxu0 0.0
    %4157 = vmatpush1.msra.mxu0 %v283
    %4158 = vmatprep.subr.mxu0 0.0
    %4159 = vmatpush1.msra.mxu0 %v286
    %4160 = vmatprep.subr.mxu0 0.0
    %4161 = vmatpush1.msra.mxu0 %v289
    %4162 = vmatprep.subr.mxu0 0.0
    %4163 = vmatpush1.msra.mxu0 %v292
    %4164 = vmatprep.subr.mxu0 0.0
    %4165 = vmatpush1.msra.mxu0 %v295
    %4166 = vmatprep.subr.mxu0 0.0
    %4167 = vmatpush1.msra.mxu0 %v298
    %4168 = vmatprep.subr.mxu0 0.0
    %4169 = vmatpush1.msra.mxu0 %v301
    %4170 = vmatprep.subr.mxu0 0.0
    %4171 = vmatpush1.msra.mxu0 %v304
    %4172 = vmatprep.subr.mxu0 0.0
    %4173 = vmatpush1.msra.mxu0 %v307
    %4174 = vmatprep.subr.mxu0 0.0
    %4175 = vmatpush1.msra.mxu0 %v310
    %4176 = vmatprep.subr.mxu0 0.0
    %4177 = vmatpush1.msra.mxu0 %v313
    %4178 = vmatprep.subr.mxu0 0.0
    %4179 = vmatpush1.msra.mxu0 %v316
    %4180 = vmatprep.subr.mxu0 0.0
    %4181 = vmatpush1.msra.mxu0 %v319
    %4182 = vmatprep.subr.mxu0 0.0
    %4183 = vmatpush1.msra.mxu0 %v322
    %4184 = vmatprep.subr.mxu0 0.0
    %4185 = vmatpush1.msra.mxu0 %v325
    %4186 = vmatprep.subr.mxu0 0.0
    %4187 = vmatpush1.msra.mxu0 %v328
    %4188 = vmatprep.subr.mxu0 0.0
    %4189 = vmatpush1.msra.mxu0 0.0
    %4190 = vmatprep.subr.mxu0 0.0
    %4191 = vmatpush1.msra.mxu0 0.0
    %4192 = vmatprep.subr.mxu0 0.0
    %4193 = vmatpush1.msra.mxu0 0.0
    %4194 = vmatprep.subr.mxu0 0.0
    %4195 = vmatpush1.msra.mxu0 0.0
    %4196 = vmatprep.subr.mxu0 0.0
    %4197 = vmatpush1.msra.mxu0 0.0
    %4198 = vmatprep.subr.mxu0 0.0
    %4199 = vmatpush1.msra.mxu0 0.0
    %4200 = vmatprep.subr.mxu0 0.0
    %4201 = vmatpush1.msra.mxu0 0.0
    %4202 = vmatprep.subr.mxu0 0.0
    %4203 = vmatpush1.msra.mxu0 0.0
    %4204 = vmatprep.subr.mxu0 0.0
    %4205 = vmatpush1.msra.mxu0 0.0
    %4206 = vmatprep.subr.mxu0 0.0
    %4207 = vmatpush1.msra.mxu0 0.0
    %4208 = vmatprep.subr.mxu0 0.0
    %4209 = vmatpush1.msra.mxu0 0.0
    %4210 = vmatprep.subr.mxu0 0.0
    %4211 = vmatpush1.msra.mxu0 0.0
    %4212 = vmatprep.subr.mxu0 0.0
    %4213 = vmatpush1.msra.mxu0 0.0
    %4214 = vmatprep.subr.mxu0 0.0
    %4215 = vmatpush1.msra.mxu0 0.0
    %4216 = vmatprep.subr.mxu0 0.0
    %4217 = vmatpush1.msra.mxu0 0.0
    %4218 = vmatprep.subr.mxu0 0.0
    %4219 = vmatpush1.msra.mxu0 0.0
    %4220 = vmatprep.mubr.f32.mxu0 0.0
    %4221 = vmatmul.mubr.f32.gmra.mrb[0].mxu0 %v3943
    %v4222 = vpop.f32.mrb[0].mxu0
    %v4223 = vadd.f32 %v4153, %v4222
    %v4224 = vpop.f32.mrb[0].mxu0
    %4225 = vdwg.mxu0
    %v4226 = vmul.f32 %v4082, 0.015625
    %v4227 = vmul.f32 %v4084, 0.015625
    %v4228 = vmul.f32 %v4223, 0.015625
    %v4229 = vmul.f32 %v4226, %v4226
    %v4230 = vmul.f32 %v4227, %v4227
    %v4231 = vmul.f32 %v4228, %v4228
    %v4235 = vrot.slane %v4229, 7
    %v4236 = vrot.slane %v4230, 7
    %v4237 = vrot.slane %v4231, 7
    %v4241 = vsub.f32 %v4226, %v4235
    %v4242 = vsub.f32 %v4227, %v4236
    %v4243 = vsub.f32 %v4228, %v4237
    %v4244 = vadd.f32 %v4241, 1e-05
    %v4245 = vadd.f32 %v4242, 1e-05
    %v4246 = vadd.f32 %v4243, 1e-05
    %v4247 = vrsqrt.pop %v4244
    %v4248 = vrsqrt.pop %v4245
    %v4249 = vrsqrt.pop %v4246
    %v4250 = vmul.f32 %v4247, %v1438
    %v4251 = vmul.f32 %v4248, %v1442
    %v4252 = vmul.f32 %v4249, %v1446
    %v4256 = vrot.slane %v4250, 1
    %v4257 = vrot.slane %v4251, 1
    %v4258 = vrot.slane %v4252, 1
    %v4262 = vmul.f32 %v4226, %v4256
    %v4263 = vmul.f32 %v4227, %v4257
    %v4264 = vmul.f32 %v4228, %v4258
    %v4268 = vcombine.low %v4262, %v4263
    %v4270 = vunpack.c.l.s4 1966171168
    %v4271 = vunpack.c.0.s8 %v4270
    %v4272 = vlaneseq
    %v4273 = vshrl.u32 %v4272, 7
    %v4274 = vsub.s32 %v4271, %v4273
    %v4275 = vrot.slane %v4268, %v4274
    %v4277 = vunpack.c.l.s4 1966171168
    %v4278 = vunpack.c.0.s8 %v4277
    %v4279 = vlaneseq
    %v4280 = vshrl.u32 %v4279, 7
    %v4281 = vsub.s32 %v4278, %v4280
    %v4282 = vrot.slane %v4264, %v4281
    %v4283 = vcombine.low %v4275, %v4282
    %v4285 = vunpack.c.l.s4 1966171168
    %v4286 = vunpack.c.0.s8 %v4285
    %v4287 = vlaneseq
    %v4288 = vshrl.u32 %v4287, 7
    %v4289 = vsub.s32 %v4286, %v4288
    %v4290 = vrot.slane %v4283, %v4289
    %v4292 = vsub.f32 %v331, %v4290
    %v4293 = vlaneseq
    %v4294 = vshrl.u32 %v4293, 7
    %v4295 = vsub.s32 1, %v4294
    %v4296 = vrot.slane %v4250, %v4295
    %v4297 = vlaneseq
    %v4298 = vshrl.u32 %v4297, 7
    %v4299 = vsub.s32 1, %v4298
    %v4300 = vrot.slane %v4251, %v4299
    %v4301 = vlaneseq
    %v4302 = vshrl.u32 %v4301, 7
    %v4303 = vsub.s32 1, %v4302
    %v4304 = vrot.slane %v4252, %v4303
    %v4305 = vmul.f32 %v3896, %v4296
    %v4306 = vmul.f32 %v3897, %v4300
    %v4307 = vmul.f32 %v3898, %v4304
    %v4309 = vlaneseq
    %v4310 = vshrl.u32 %v4309, 7
    %v4311 = vsub.s32 0, %v4310
    %v4312 = vrot.slane %v4292, %v4311
    %v4313 = vlaneseq
    %v4314 = vshrl.u32 %v4313, 7
    %v4315 = vsub.s32 1, %v4314
    %v4316 = vrot.slane %v4292, %v4315
    %v4317 = vlaneseq
    %v4318 = vshrl.u32 %v4317, 7
    %v4319 = vsub.s32 2, %v4318
    %v4320 = vrot.slane %v4292, %v4319
    %v4324 = vadd.f32 %v4305, %v4312
    %v4325 = vadd.f32 %v4306, %v4316
    %v4326 = vadd.f32 %v4307, %v4320
    %v4327 = vxor.u32 %v4326, 2147483648
    %v4328 = vmul.f32 %v4327, 1.442695
    %v4329 = vpow.pop %v4328
    %v4330 = vadd.f32 %v4329, 1.0
    %v4331 = vrcp.pop %v4330
    %v4332 = vmul.f32 1.0, %v4331
    %v4333 = vlaneseq
    %v4334 = vshrl.u32 %v4333, 7
    %v4335 = vsub.s32 5, %v4334
    %v4336 = vrot.slane %v850, %v4335
    %v4337 = vmul.f32 %v516, %v4336
    %v4338 = vlaneseq
    %v4339 = vshrl.u32 %v4338, 7
    %v4340 = vsub.s32 5, %v4339
    %v4341 = vrot.slane %v859, %v4340
    %v4342 = vadd.f32 %v4337, %v4341
    %v4343 = vtanh.pop %v4324
    %v4344 = vmul.f32 %v4342, %v4343
    %v4345 = vsub.f32 0.0, %v4332
    %v4346 = vmul.f32 %v4345, 1.442695
    %v4347 = vpow.pop %v4346
    %v4348 = vmul.f32 %v3813, %v4347
    %v4349 = vmax.f32 %v4348, %v4325
    %v4350 = vsub.f32 %v3813, %v4349
    %v4351 = vsub.f32 %v4350, %v4332
    %v4352 = vmul.f32 %v4351, 1.442695
    %v4353 = vpow.pop %v4352
    %v4354 = vsub.f32 %v4325, %v4349
    %v4355 = vmul.f32 %v4354, 1.442695
    %v4356 = vpow.pop %v4355
    %v4357 = vmul.f32 %v3811, %v4353
    %v4358 = vmul.f32 %v4344, %v4356
    %v4359 = vadd.f32 %v4357, %v4358
    %v4360 = vmul.f32 %v3812, %v4353
    %v4361 = vadd.f32 %v4360, %v4356
    %v4362 = vrcp.pop %v4361
    %v4363 = vmul.f32 %v4359, %v4362
    %v4364 = vtanh.pop %v4363
    %4365 = vst [vmem:[#allocation13] sm:$0xff] %v4359
    %4366 = vst [vmem:[#allocation15] sm:$0xff] %v4361
    %4367 = vst [vmem:[#allocation16] sm:$0xff] %v4364
    %4368 = vst [vmem:[#allocation18] sm:$0xff] %v4349
    %4369 = vst [vmem:[#allocation2 + $0x28] sm:$0xff] %v4364
    %v4370 = vld [vmem:[#allocation16] sm:$0xff]
    %v4371 = vld [vmem:[#allocation13] sm:$0xff]
    %v4372 = vld [vmem:[#allocation15] sm:$0xff]
    %v4373 = vld [vmem:[#allocation18] sm:$0xff]
    %v4374 = vpack.c.bf16 %v4370, %v4370
    %4375 = vmatprep.subr.bf16.mxu0 %v946
    %4376 = vmatpush1.bf16.msra.mxu0 %v945
    %4377 = vmatprep.subr.bf16.mxu0 %v949
    %4378 = vmatpush1.bf16.msra.mxu0 %v948
    %4379 = vmatprep.subr.bf16.mxu0 %v952
    %4380 = vmatpush1.bf16.msra.mxu0 %v951
    %4381 = vmatprep.subr.bf16.mxu0 %v955
    %4382 = vmatpush1.bf16.msra.mxu0 %v954
    %4383 = vmatprep.subr.bf16.mxu0 %v958
    %4384 = vmatpush1.bf16.msra.mxu0 %v957
    %4385 = vmatprep.subr.bf16.mxu0 %v961
    %4386 = vmatpush1.bf16.msra.mxu0 %v960
    %4387 = vmatprep.subr.bf16.mxu0 %v964
    %4388 = vmatpush1.bf16.msra.mxu0 %v963
    %4389 = vmatprep.subr.bf16.mxu0 %v967
    %4390 = vmatpush1.bf16.msra.mxu0 %v966
    %4391 = vmatprep.subr.bf16.mxu0 0
    %4392 = vmatpush1.bf16.msra.mxu0 0
    %4393 = vmatprep.subr.bf16.mxu0 0
    %4394 = vmatpush1.bf16.msra.mxu0 0
    %4395 = vmatprep.subr.bf16.mxu0 0
    %4396 = vmatpush1.bf16.msra.mxu0 0
    %4397 = vmatprep.subr.bf16.mxu0 0
    %4398 = vmatpush1.bf16.msra.mxu0 0
    %4399 = vmatprep.subr.bf16.mxu0 0
    %4400 = vmatpush1.bf16.msra.mxu0 0
    %4401 = vmatprep.subr.bf16.mxu0 0
    %4402 = vmatpush1.bf16.msra.mxu0 0
    %4403 = vmatprep.subr.bf16.mxu0 0
    %4404 = vmatpush1.bf16.msra.mxu0 0
    %4405 = vmatprep.subr.bf16.mxu0 0
    %4406 = vmatpush1.bf16.msra.mxu0 0
    %4407 = vmatprep.mubr.bf16.mxu0 0
    %4408 = vmatmul.mubr.bf16.gmra.mrb[0].mxu0 %v4374
    %v4409 = vpop.f32.mrb[0].mxu0
    %v4410 = vadd.f32 0.0, %v4409
    %v4411 = vpop.f32.mrb[0].mxu0
    %v4412 = vadd.f32 0.0, %v4411
    %v4413 = vpop.f32.mrb[0].mxu0
    %v4414 = vpop.f32.mrb[0].mxu0
    %4415 = vdwg.mxu0
    %4416 = vmatprep.subr.bf16.mxu0 0
    %4417 = vmatpush1.bf16.msra.mxu0 %v947
    %4418 = vmatprep.subr.bf16.mxu0 0
    %4419 = vmatpush1.bf16.msra.mxu0 %v950
    %4420 = vmatprep.subr.bf16.mxu0 0
    %4421 = vmatpush1.bf16.msra.mxu0 %v953
    %4422 = vmatprep.subr.bf16.mxu0 0
    %4423 = vmatpush1.bf16.msra.mxu0 %v956
    %4424 = vmatprep.subr.bf16.mxu0 0
    %4425 = vmatpush1.bf16.msra.mxu0 %v959
    %4426 = vmatprep.subr.bf16.mxu0 0
    %4427 = vmatpush1.bf16.msra.mxu0 %v962
    %4428 = vmatprep.subr.bf16.mxu0 0
    %4429 = vmatpush1.bf16.msra.mxu0 %v965
    %4430 = vmatprep.subr.bf16.mxu0 0
    %4431 = vmatpush1.bf16.msra.mxu0 %v968
    %4432 = vmatprep.subr.bf16.mxu0 0
    %4433 = vmatpush1.bf16.msra.mxu0 0
    %4434 = vmatprep.subr.bf16.mxu0 0
    %4435 = vmatpush1.bf16.msra.mxu0 0
    %4436 = vmatprep.subr.bf16.mxu0 0
    %4437 = vmatpush1.bf16.msra.mxu0 0
    %4438 = vmatprep.subr.bf16.mxu0 0
    %4439 = vmatpush1.bf16.msra.mxu0 0
    %4440 = vmatprep.subr.bf16.mxu0 0
    %4441 = vmatpush1.bf16.msra.mxu0 0
    %4442 = vmatprep.subr.bf16.mxu0 0
    %4443 = vmatpush1.bf16.msra.mxu0 0
    %4444 = vmatprep.subr.bf16.mxu0 0
    %4445 = vmatpush1.bf16.msra.mxu0 0
    %4446 = vmatprep.subr.bf16.mxu0 0
    %4447 = vmatpush1.bf16.msra.mxu0 0
    %4448 = vmatprep.mubr.bf16.mxu0 0
    %4449 = vmatmul.mubr.bf16.gmra.mrb[0].mxu0 %v4374
    %v4450 = vpop.f32.mrb[0].mxu0
    %v4451 = vadd.f32 0.0, %v4450
    %v4452 = vpop.f32.mrb[0].mxu0
    %v4453 = vpop.f32.mrb[0].mxu0
    %v4454 = vpop.f32.mrb[0].mxu0
    %4455 = vdwg.mxu0
    %v4456 = vadd.f32 %v447, %v4410
    %v4457 = vadd.f32 %v449, %v4412
    %v4458 = vadd.f32 %v520, %v4451
    %v4459 = vmul.f32 %v4456, %v1080
    %v4460 = vmul.f32 %v4457, %v1080
    %v4461 = vmul.f32 %v4458, %v1080
    %v4462 = vrot.slane %v4459, 4
    %v4463 = vadd.f32 %v4459, %v4462
    %v4464 = vrot.slane %v4463, 2
    %v4465 = vadd.f32 %v4463, %v4464
    %v4466 = vrot.slane %v4465, 1
    %v4467 = vadd.f32 %v4465, %v4466
    %v4468 = vrot.slane %v4460, 4
    %v4469 = vadd.f32 %v4460, %v4468
    %v4470 = vrot.slane %v4469, 2
    %v4471 = vadd.f32 %v4469, %v4470
    %v4472 = vrot.slane %v4471, 1
    %v4473 = vadd.f32 %v4471, %v4472
    %v4474 = vrot.slane %v4461, 4
    %v4475 = vadd.f32 %v4461, %v4474
    %v4476 = vrot.slane %v4475, 2
    %v4477 = vadd.f32 %v4475, %v4476
    %v4478 = vrot.slane %v4477, 1
    %v4479 = vadd.f32 %v4477, %v4478
    %v4480 = vmul.f32 %v4459, %v4456
    %v4481 = vmul.f32 %v4460, %v4457
    %v4482 = vmul.f32 %v4461, %v4458
    %v4483 = vrot.slane %v4480, 4
    %v4484 = vadd.f32 %v4480, %v4483
    %v4485 = vrot.slane %v4484, 2
    %v4486 = vadd.f32 %v4484, %v4485
    %v4487 = vrot.slane %v4486, 1
    %v4488 = vadd.f32 %v4486, %v4487
    %v4489 = vrot.slane %v4481, 4
    %v4490 = vadd.f32 %v4481, %v4489
    %v4491 = vrot.slane %v4490, 2
    %v4492 = vadd.f32 %v4490, %v4491
    %v4493 = vrot.slane %v4492, 1
    %v4494 = vadd.f32 %v4492, %v4493
    %v4495 = vrot.slane %v4482, 4
    %v4496 = vadd.f32 %v4482, %v4495
    %v4497 = vrot.slane %v4496, 2
    %v4498 = vadd.f32 %v4496, %v4497
    %v4499 = vrot.slane %v4498, 1
    %v4500 = vadd.f32 %v4498, %v4499
    %v4501 = vsel %vm1124, %v4467, %v4488
    %v4502 = vsel %vm1124, %v4473, %v4494
    %v4503 = vsel %vm1124, %v4479, %v4500
    %4504 = vmatprep.subr.mxu0 %v186
    %4505 = vmatpush1.msra.mxu0 %v185
    %4506 = vmatprep.subr.mxu0 %v189
    %4507 = vmatpush1.msra.mxu0 %v188
    %4508 = vmatprep.subr.mxu0 %v192
    %4509 = vmatpush1.msra.mxu0 %v191
    %4510 = vmatprep.subr.mxu0 %v195
    %4511 = vmatpush1.msra.mxu0 %v194
    %4512 = vmatprep.subr.mxu0 %v198
    %4513 = vmatpush1.msra.mxu0 %v197
    %4514 = vmatprep.subr.mxu0 %v201
    %4515 = vmatpush1.msra.mxu0 %v200
    %4516 = vmatprep.subr.mxu0 %v204
    %4517 = vmatpush1.msra.mxu0 %v203
    %4518 = vmatprep.subr.mxu0 %v207
    %4519 = vmatpush1.msra.mxu0 %v206
    %4520 = vmatprep.subr.mxu0 %v210
    %4521 = vmatpush1.msra.mxu0 %v209
    %4522 = vmatprep.subr.mxu0 %v213
    %4523 = vmatpush1.msra.mxu0 %v212
    %4524 = vmatprep.subr.mxu0 %v216
    %4525 = vmatpush1.msra.mxu0 %v215
    %4526 = vmatprep.subr.mxu0 %v219
    %4527 = vmatpush1.msra.mxu0 %v218
    %4528 = vmatprep.subr.mxu0 %v222
    %4529 = vmatpush1.msra.mxu0 %v221
    %4530 = vmatprep.subr.mxu0 %v225
    %4531 = vmatpush1.msra.mxu0 %v224
    %4532 = vmatprep.subr.mxu0 %v228
    %4533 = vmatpush1.msra.mxu0 %v227
    %4534 = vmatprep.subr.mxu0 %v231
    %4535 = vmatpush1.msra.mxu0 %v230
    %4536 = vmatprep.subr.mxu0 %v234
    %4537 = vmatpush1.msra.mxu0 %v233
    %4538 = vmatprep.subr.mxu0 %v237
    %4539 = vmatpush1.msra.mxu0 %v236
    %4540 = vmatprep.subr.mxu0 %v240
    %4541 = vmatpush1.msra.mxu0 %v239
    %4542 = vmatprep.subr.mxu0 %v243
    %4543 = vmatpush1.msra.mxu0 %v242
    %4544 = vmatprep.subr.mxu0 %v246
    %4545 = vmatpush1.msra.mxu0 %v245
    %4546 = vmatprep.subr.mxu0 %v249
    %4547 = vmatpush1.msra.mxu0 %v248
    %4548 = vmatprep.subr.mxu0 %v252
    %4549 = vmatpush1.msra.mxu0 %v251
    %4550 = vmatprep.subr.mxu0 %v255
    %4551 = vmatpush1.msra.mxu0 %v254
    %4552 = vmatprep.subr.mxu0 %v258
    %4553 = vmatpush1.msra.mxu0 %v257
    %4554 = vmatprep.subr.mxu0 %v261
    %4555 = vmatpush1.msra.mxu0 %v260
    %4556 = vmatprep.subr.mxu0 %v264
    %4557 = vmatpush1.msra.mxu0 %v263
    %4558 = vmatprep.subr.mxu0 %v267
    %4559 = vmatpush1.msra.mxu0 %v266
    %4560 = vmatprep.subr.mxu0 %v270
    %4561 = vmatpush1.msra.mxu0 %v269
    %4562 = vmatprep.subr.mxu0 %v273
    %4563 = vmatpush1.msra.mxu0 %v272
    %4564 = vmatprep.subr.mxu0 %v276
    %4565 = vmatpush1.msra.mxu0 %v275
    %4566 = vmatprep.subr.mxu0 %v279
    %4567 = vmatpush1.msra.mxu0 %v278
    %4568 = vmatprep.mubr.f32.mxu0 %v4502
    %4569 = vmatmul.mubr.f32.gmra.mrb[0].mxu0 %v4501
    %v4570 = vpop.f32.mrb[0].mxu0
    %v4571 = vadd.f32 0.0, %v4570
    %v4572 = vpop.f32.mrb[0].mxu0
    %v4573 = vadd.f32 0.0, %v4572
    %4574 = vdwg.mxu0
    %4575 = vmatprep.subr.mxu0 %v282
    %4576 = vmatpush1.msra.mxu0 %v281
    %4577 = vmatprep.subr.mxu0 %v285
    %4578 = vmatpush1.msra.mxu0 %v284
    %4579 = vmatprep.subr.mxu0 %v288
    %4580 = vmatpush1.msra.mxu0 %v287
    %4581 = vmatprep.subr.mxu0 %v291
    %4582 = vmatpush1.msra.mxu0 %v290
    %4583 = vmatprep.subr.mxu0 %v294
    %4584 = vmatpush1.msra.mxu0 %v293
    %4585 = vmatprep.subr.mxu0 %v297
    %4586 = vmatpush1.msra.mxu0 %v296
    %4587 = vmatprep.subr.mxu0 %v300
    %4588 = vmatpush1.msra.mxu0 %v299
    %4589 = vmatprep.subr.mxu0 %v303
    %4590 = vmatpush1.msra.mxu0 %v302
    %4591 = vmatprep.subr.mxu0 %v306
    %4592 = vmatpush1.msra.mxu0 %v305
    %4593 = vmatprep.subr.mxu0 %v309
    %4594 = vmatpush1.msra.mxu0 %v308
    %4595 = vmatprep.subr.mxu0 %v312
    %4596 = vmatpush1.msra.mxu0 %v311
    %4597 = vmatprep.subr.mxu0 %v315
    %4598 = vmatpush1.msra.mxu0 %v314
    %4599 = vmatprep.subr.mxu0 %v318
    %4600 = vmatpush1.msra.mxu0 %v317
    %4601 = vmatprep.subr.mxu0 %v321
    %4602 = vmatpush1.msra.mxu0 %v320
    %4603 = vmatprep.subr.mxu0 %v324
    %4604 = vmatpush1.msra.mxu0 %v323
    %4605 = vmatprep.subr.mxu0 %v327
    %4606 = vmatpush1.msra.mxu0 %v326
    %4607 = vmatprep.subr.mxu0 0.0
    %4608 = vmatpush1.msra.mxu0 0.0
    %4609 = vmatprep.subr.mxu0 0.0
    %4610 = vmatpush1.msra.mxu0 0.0
    %4611 = vmatprep.subr.mxu0 0.0
    %4612 = vmatpush1.msra.mxu0 0.0
    %4613 = vmatprep.subr.mxu0 0.0
    %4614 = vmatpush1.msra.mxu0 0.0
    %4615 = vmatprep.subr.mxu0 0.0
    %4616 = vmatpush1.msra.mxu0 0.0
    %4617 = vmatprep.subr.mxu0 0.0
    %4618 = vmatpush1.msra.mxu0 0.0
    %4619 = vmatprep.subr.mxu0 0.0
    %4620 = vmatpush1.msra.mxu0 0.0
    %4621 = vmatprep.subr.mxu0 0.0
    %4622 = vmatpush1.msra.mxu0 0.0
    %4623 = vmatprep.subr.mxu0 0.0
    %4624 = vmatpush1.msra.mxu0 0.0
    %4625 = vmatprep.subr.mxu0 0.0
    %4626 = vmatpush1.msra.mxu0 0.0
    %4627 = vmatprep.subr.mxu0 0.0
    %4628 = vmatpush1.msra.mxu0 0.0
    %4629 = vmatprep.subr.mxu0 0.0
    %4630 = vmatpush1.msra.mxu0 0.0
    %4631 = vmatprep.subr.mxu0 0.0
    %4632 = vmatpush1.msra.mxu0 0.0
    %4633 = vmatprep.subr.mxu0 0.0
    %4634 = vmatpush1.msra.mxu0 0.0
    %4635 = vmatprep.subr.mxu0 0.0
    %4636 = vmatpush1.msra.mxu0 0.0
    %4637 = vmatprep.subr.mxu0 0.0
    %4638 = vmatpush1.msra.mxu0 0.0
    %4639 = vmatprep.mubr.f32.mxu0 0.0
    %4640 = vmatmul.mubr.f32.gmra.mrb[0].mxu0 %v4503
    %v4641 = vpop.f32.mrb[0].mxu0
    %v4642 = vadd.f32 %v4571, %v4641
    %v4643 = vpop.f32.mrb[0].mxu0
    %v4644 = vadd.f32 %v4573, %v4643
    %4645 = vdwg.mxu0
    %4646 = vmatprep.subr.mxu0 0.0
    %4647 = vmatpush1.msra.mxu0 %v187
    %4648 = vmatprep.subr.mxu0 0.0
    %4649 = vmatpush1.msra.mxu0 %v190
    %4650 = vmatprep.subr.mxu0 0.0
    %4651 = vmatpush1.msra.mxu0 %v193
    %4652 = vmatprep.subr.mxu0 0.0
    %4653 = vmatpush1.msra.mxu0 %v196
    %4654 = vmatprep.subr.mxu0 0.0
    %4655 = vmatpush1.msra.mxu0 %v199
    %4656 = vmatprep.subr.mxu0 0.0
    %4657 = vmatpush1.msra.mxu0 %v202
    %4658 = vmatprep.subr.mxu0 0.0
    %4659 = vmatpush1.msra.mxu0 %v205
    %4660 = vmatprep.subr.mxu0 0.0
    %4661 = vmatpush1.msra.mxu0 %v208
    %4662 = vmatprep.subr.mxu0 0.0
    %4663 = vmatpush1.msra.mxu0 %v211
    %4664 = vmatprep.subr.mxu0 0.0
    %4665 = vmatpush1.msra.mxu0 %v214
    %4666 = vmatprep.subr.mxu0 0.0
    %4667 = vmatpush1.msra.mxu0 %v217
    %4668 = vmatprep.subr.mxu0 0.0
    %4669 = vmatpush1.msra.mxu0 %v220
    %4670 = vmatprep.subr.mxu0 0.0
    %4671 = vmatpush1.msra.mxu0 %v223
    %4672 = vmatprep.subr.mxu0 0.0
    %4673 = vmatpush1.msra.mxu0 %v226
    %4674 = vmatprep.subr.mxu0 0.0
    %4675 = vmatpush1.msra.mxu0 %v229
    %4676 = vmatprep.subr.mxu0 0.0
    %4677 = vmatpush1.msra.mxu0 %v232
    %4678 = vmatprep.subr.mxu0 0.0
    %4679 = vmatpush1.msra.mxu0 %v235
    %4680 = vmatprep.subr.mxu0 0.0
    %4681 = vmatpush1.msra.mxu0 %v238
    %4682 = vmatprep.subr.mxu0 0.0
    %4683 = vmatpush1.msra.mxu0 %v241
    %4684 = vmatprep.subr.mxu0 0.0
    %4685 = vmatpush1.msra.mxu0 %v244
    %4686 = vmatprep.subr.mxu0 0.0
    %4687 = vmatpush1.msra.mxu0 %v247
    %4688 = vmatprep.subr.mxu0 0.0
    %4689 = vmatpush1.msra.mxu0 %v250
    %4690 = vmatprep.subr.mxu0 0.0
    %4691 = vmatpush1.msra.mxu0 %v253
    %4692 = vmatprep.subr.mxu0 0.0
    %4693 = vmatpush1.msra.mxu0 %v256
    %4694 = vmatprep.subr.mxu0 0.0
    %4695 = vmatpush1.msra.mxu0 %v259
    %4696 = vmatprep.subr.mxu0 0.0
    %4697 = vmatpush1.msra.mxu0 %v262
    %4698 = vmatprep.subr.mxu0 0.0
    %4699 = vmatpush1.msra.mxu0 %v265
    %4700 = vmatprep.subr.mxu0 0.0
    %4701 = vmatpush1.msra.mxu0 %v268
    %4702 = vmatprep.subr.mxu0 0.0
    %4703 = vmatpush1.msra.mxu0 %v271
    %4704 = vmatprep.subr.mxu0 0.0
    %4705 = vmatpush1.msra.mxu0 %v274
    %4706 = vmatprep.subr.mxu0 0.0
    %4707 = vmatpush1.msra.mxu0 %v277
    %4708 = vmatprep.subr.mxu0 0.0
    %4709 = vmatpush1.msra.mxu0 %v280
    %4710 = vmatprep.mubr.f32.mxu0 %v4502
    %4711 = vmatmul.mubr.f32.gmra.mrb[0].mxu0 %v4501
    %v4712 = vpop.f32.mrb[0].mxu0
    %v4713 = vadd.f32 0.0, %v4712
    %v4714 = vpop.f32.mrb[0].mxu0
    %4715 = vdwg.mxu0
    %4716 = vmatprep.subr.mxu0 0.0
    %4717 = vmatpush1.msra.mxu0 %v283
    %4718 = vmatprep.subr.mxu0 0.0
    %4719 = vmatpush1.msra.mxu0 %v286
    %4720 = vmatprep.subr.mxu0 0.0
    %4721 = vmatpush1.msra.mxu0 %v289
    %4722 = vmatprep.subr.mxu0 0.0
    %4723 = vmatpush1.msra.mxu0 %v292
    %4724 = vmatprep.subr.mxu0 0.0
    %4725 = vmatpush1.msra.mxu0 %v295
    %4726 = vmatprep.subr.mxu0 0.0
    %4727 = vmatpush1.msra.mxu0 %v298
    %4728 = vmatprep.subr.mxu0 0.0
    %4729 = vmatpush1.msra.mxu0 %v301
    %4730 = vmatprep.subr.mxu0 0.0
    %4731 = vmatpush1.msra.mxu0 %v304
    %4732 = vmatprep.subr.mxu0 0.0
    %4733 = vmatpush1.msra.mxu0 %v307
    %4734 = vmatprep.subr.mxu0 0.0
    %4735 = vmatpush1.msra.mxu0 %v310
    %4736 = vmatprep.subr.mxu0 0.0
    %4737 = vmatpush1.msra.mxu0 %v313
    %4738 = vmatprep.subr.mxu0 0.0
    %4739 = vmatpush1.msra.mxu0 %v316
    %4740 = vmatprep.subr.mxu0 0.0
    %4741 = vmatpush1.msra.mxu0 %v319
    %4742 = vmatprep.subr.mxu0 0.0
    %4743 = vmatpush1.msra.mxu0 %v322
    %4744 = vmatprep.subr.mxu0 0.0
    %4745 = vmatpush1.msra.mxu0 %v325
    %4746 = vmatprep.subr.mxu0 0.0
    %4747 = vmatpush1.msra.mxu0 %v328
    %4748 = vmatprep.subr.mxu0 0.0
    %4749 = vmatpush1.msra.mxu0 0.0
    %4750 = vmatprep.subr.mxu0 0.0
    %4751 = vmatpush1.msra.mxu0 0.0
    %4752 = vmatprep.subr.mxu0 0.0
    %4753 = vmatpush1.msra.mxu0 0.0
    %4754 = vmatprep.subr.mxu0 0.0
    %4755 = vmatpush1.msra.mxu0 0.0
    %4756 = vmatprep.subr.mxu0 0.0
    %4757 = vmatpush1.msra.mxu0 0.0
    %4758 = vmatprep.subr.mxu0 0.0
    %4759 = vmatpush1.msra.mxu0 0.0
    %4760 = vmatprep.subr.mxu0 0.0
    %4761 = vmatpush1.msra.mxu0 0.0
    %4762 = vmatprep.subr.mxu0 0.0
    %4763 = vmatpush1.msra.mxu0 0.0
    %4764 = vmatprep.subr.mxu0 0.0
    %4765 = vmatpush1.msra.mxu0 0.0
    %4766 = vmatprep.subr.mxu0 0.0
    %4767 = vmatpush1.msra.mxu0 0.0
    %4768 = vmatprep.subr.mxu0 0.0
    %4769 = vmatpush1.msra.mxu0 0.0
    %4770 = vmatprep.subr.mxu0 0.0
    %4771 = vmatpush1.msra.mxu0 0.0
    %4772 = vmatprep.subr.mxu0 0.0
    %4773 = vmatpush1.msra.mxu0 0.0
    %4774 = vmatprep.subr.mxu0 0.0
    %4775 = vmatpush1.msra.mxu0 0.0
    %4776 = vmatprep.subr.mxu0 0.0
    %4777 = vmatpush1.msra.mxu0 0.0
    %4778 = vmatprep.subr.mxu0 0.0
    %4779 = vmatpush1.msra.mxu0 0.0
    %4780 = vmatprep.mubr.f32.mxu0 0.0
    %4781 = vmatmul.mubr.f32.gmra.mrb[0].mxu0 %v4503
    %v4782 = vpop.f32.mrb[0].mxu0
    %v4783 = vadd.f32 %v4713, %v4782
    %v4784 = vpop.f32.mrb[0].mxu0
    %4785 = vdwg.mxu0
    %v4786 = vmul.f32 %v4642, 0.015625
    %v4787 = vmul.f32 %v4644, 0.015625
    %v4788 = vmul.f32 %v4783, 0.015625
    %v4789 = vmul.f32 %v4786, %v4786
    %v4790 = vmul.f32 %v4787, %v4787
    %v4791 = vmul.f32 %v4788, %v4788
    %v4795 = vrot.slane %v4789, 7
    %v4796 = vrot.slane %v4790, 7
    %v4797 = vrot.slane %v4791, 7
    %v4801 = vsub.f32 %v4786, %v4795
    %v4802 = vsub.f32 %v4787, %v4796
    %v4803 = vsub.f32 %v4788, %v4797
    %v4804 = vadd.f32 %v4801, 1e-05
    %v4805 = vadd.f32 %v4802, 1e-05
    %v4806 = vadd.f32 %v4803, 1e-05
    %v4807 = vrsqrt.pop %v4804
    %v4808 = vrsqrt.pop %v4805
    %v4809 = vrsqrt.pop %v4806
    %v4810 = vmul.f32 %v4807, %v1438
    %v4811 = vmul.f32 %v4808, %v1442
    %v4812 = vmul.f32 %v4809, %v1446
    %v4816 = vrot.slane %v4810, 1
    %v4817 = vrot.slane %v4811, 1
    %v4818 = vrot.slane %v4812, 1
    %v4822 = vmul.f32 %v4786, %v4816
    %v4823 = vmul.f32 %v4787, %v4817
    %v4824 = vmul.f32 %v4788, %v4818
    %v4828 = vcombine.low %v4822, %v4823
    %v4830 = vunpack.c.l.s4 1966171168
    %v4831 = vunpack.c.0.s8 %v4830
    %v4832 = vlaneseq
    %v4833 = vshrl.u32 %v4832, 7
    %v4834 = vsub.s32 %v4831, %v4833
    %v4835 = vrot.slane %v4828, %v4834
    %v4837 = vunpack.c.l.s4 1966171168
    %v4838 = vunpack.c.0.s8 %v4837
    %v4839 = vlaneseq
    %v4840 = vshrl.u32 %v4839, 7
    %v4841 = vsub.s32 %v4838, %v4840
    %v4842 = vrot.slane %v4824, %v4841
    %v4843 = vcombine.low %v4835, %v4842
    %v4845 = vunpack.c.l.s4 1966171168
    %v4846 = vunpack.c.0.s8 %v4845
    %v4847 = vlaneseq
    %v4848 = vshrl.u32 %v4847, 7
    %v4849 = vsub.s32 %v4846, %v4848
    %v4850 = vrot.slane %v4843, %v4849
    %v4852 = vsub.f32 %v331, %v4850
    %v4853 = vlaneseq
    %v4854 = vshrl.u32 %v4853, 7
    %v4855 = vsub.s32 1, %v4854
    %v4856 = vrot.slane %v4810, %v4855
    %v4857 = vlaneseq
    %v4858 = vshrl.u32 %v4857, 7
    %v4859 = vsub.s32 1, %v4858
    %v4860 = vrot.slane %v4811, %v4859
    %v4861 = vlaneseq
    %v4862 = vshrl.u32 %v4861, 7
    %v4863 = vsub.s32 1, %v4862
    %v4864 = vrot.slane %v4812, %v4863
    %v4865 = vmul.f32 %v4456, %v4856
    %v4866 = vmul.f32 %v4457, %v4860
    %v4867 = vmul.f32 %v4458, %v4864
    %v4869 = vlaneseq
    %v4870 = vshrl.u32 %v4869, 7
    %v4871 = vsub.s32 0, %v4870
    %v4872 = vrot.slane %v4852, %v4871
    %v4873 = vlaneseq
    %v4874 = vshrl.u32 %v4873, 7
    %v4875 = vsub.s32 1, %v4874
    %v4876 = vrot.slane %v4852, %v4875
    %v4877 = vlaneseq
    %v4878 = vshrl.u32 %v4877, 7
    %v4879 = vsub.s32 2, %v4878
    %v4880 = vrot.slane %v4852, %v4879
    %v4884 = vadd.f32 %v4865, %v4872
    %v4885 = vadd.f32 %v4866, %v4876
    %v4886 = vadd.f32 %v4867, %v4880
    %v4887 = vxor.u32 %v4886, 2147483648
    %v4888 = vmul.f32 %v4887, 1.442695
    %v4889 = vpow.pop %v4888
    %v4890 = vadd.f32 %v4889, 1.0
    %v4891 = vrcp.pop %v4890
    %v4892 = vmul.f32 1.0, %v4891
    %v4893 = vlaneseq
    %v4894 = vshrl.u32 %v4893, 7
    %v4895 = vsub.s32 6, %v4894
    %v4896 = vrot.slane %v850, %v4895
    %v4897 = vmul.f32 %v522, %v4896
    %v4898 = vlaneseq
    %v4899 = vshrl.u32 %v4898, 7
    %v4900 = vsub.s32 6, %v4899
    %v4901 = vrot.slane %v859, %v4900
    %v4902 = vadd.f32 %v4897, %v4901
    %v4903 = vtanh.pop %v4884
    %v4904 = vmul.f32 %v4902, %v4903
    %v4905 = vsub.f32 0.0, %v4892
    %v4906 = vmul.f32 %v4905, 1.442695
    %v4907 = vpow.pop %v4906
    %v4908 = vmul.f32 %v4373, %v4907
    %v4909 = vmax.f32 %v4908, %v4885
    %v4910 = vsub.f32 %v4373, %v4909
    %v4911 = vsub.f32 %v4910, %v4892
    %v4912 = vmul.f32 %v4911, 1.442695
    %v4913 = vpow.pop %v4912
    %v4914 = vsub.f32 %v4885, %v4909
    %v4915 = vmul.f32 %v4914, 1.442695
    %v4916 = vpow.pop %v4915
    %v4917 = vmul.f32 %v4371, %v4913
    %v4918 = vmul.f32 %v4904, %v4916
    %v4919 = vadd.f32 %v4917, %v4918
    %v4920 = vmul.f32 %v4372, %v4913
    %v4921 = vadd.f32 %v4920, %v4916
    %v4922 = vrcp.pop %v4921
    %v4923 = vmul.f32 %v4919, %v4922
    %v4924 = vtanh.pop %v4923
    %4925 = vst [vmem:[#allocation13] sm:$0xff] %v4919
    %4926 = vst [vmem:[#allocation15] sm:$0xff] %v4921
    %4927 = vst [vmem:[#allocation16] sm:$0xff] %v4924
    %4928 = vst [vmem:[#allocation18] sm:$0xff] %v4909
    %4929 = vst [vmem:[#allocation2 + $0x30] sm:$0xff] %v4924
    %v4930 = vld [vmem:[#allocation16] sm:$0xff]
    %v4931 = vld [vmem:[#allocation13] sm:$0xff]
    %v4932 = vld [vmem:[#allocation15] sm:$0xff]
    %v4933 = vld [vmem:[#allocation18] sm:$0xff]
    %v4934 = vpack.c.bf16 %v4930, %v4930
    %4935 = vmatprep.subr.bf16.mxu0 %v946
    %4936 = vmatpush1.bf16.msra.mxu0 %v945
    %4937 = vmatprep.subr.bf16.mxu0 %v949
    %4938 = vmatpush1.bf16.msra.mxu0 %v948
    %4939 = vmatprep.subr.bf16.mxu0 %v952
    %4940 = vmatpush1.bf16.msra.mxu0 %v951
    %4941 = vmatprep.subr.bf16.mxu0 %v955
    %4942 = vmatpush1.bf16.msra.mxu0 %v954
    %4943 = vmatprep.subr.bf16.mxu0 %v958
    %4944 = vmatpush1.bf16.msra.mxu0 %v957
    %4945 = vmatprep.subr.bf16.mxu0 %v961
    %4946 = vmatpush1.bf16.msra.mxu0 %v960
    %4947 = vmatprep.subr.bf16.mxu0 %v964
    %4948 = vmatpush1.bf16.msra.mxu0 %v963
    %4949 = vmatprep.subr.bf16.mxu0 %v967
    %4950 = vmatpush1.bf16.msra.mxu0 %v966
    %4951 = vmatprep.subr.bf16.mxu0 0
    %4952 = vmatpush1.bf16.msra.mxu0 0
    %4953 = vmatprep.subr.bf16.mxu0 0
    %4954 = vmatpush1.bf16.msra.mxu0 0
    %4955 = vmatprep.subr.bf16.mxu0 0
    %4956 = vmatpush1.bf16.msra.mxu0 0
    %4957 = vmatprep.subr.bf16.mxu0 0
    %4958 = vmatpush1.bf16.msra.mxu0 0
    %4959 = vmatprep.subr.bf16.mxu0 0
    %4960 = vmatpush1.bf16.msra.mxu0 0
    %4961 = vmatprep.subr.bf16.mxu0 0
    %4962 = vmatpush1.bf16.msra.mxu0 0
    %4963 = vmatprep.subr.bf16.mxu0 0
    %4964 = vmatpush1.bf16.msra.mxu0 0
    %4965 = vmatprep.subr.bf16.mxu0 0
    %4966 = vmatpush1.bf16.msra.mxu0 0
    %4967 = vmatprep.mubr.bf16.mxu0 0
    %4968 = vmatmul.mubr.bf16.gmra.mrb[0].mxu0 %v4934
    %v4969 = vpop.f32.mrb[0].mxu0
    %v4970 = vadd.f32 0.0, %v4969
    %v4971 = vpop.f32.mrb[0].mxu0
    %v4972 = vadd.f32 0.0, %v4971
    %v4973 = vpop.f32.mrb[0].mxu0
    %v4974 = vpop.f32.mrb[0].mxu0
    %4975 = vdwg.mxu0
    %4976 = vmatprep.subr.bf16.mxu0 0
    %4977 = vmatpush1.bf16.msra.mxu0 %v947
    %4978 = vmatprep.subr.bf16.mxu0 0
    %4979 = vmatpush1.bf16.msra.mxu0 %v950
    %4980 = vmatprep.subr.bf16.mxu0 0
    %4981 = vmatpush1.bf16.msra.mxu0 %v953
    %4982 = vmatprep.subr.bf16.mxu0 0
    %4983 = vmatpush1.bf16.msra.mxu0 %v956
    %4984 = vmatprep.subr.bf16.mxu0 0
    %4985 = vmatpush1.bf16.msra.mxu0 %v959
    %4986 = vmatprep.subr.bf16.mxu0 0
    %4987 = vmatpush1.bf16.msra.mxu0 %v962
    %4988 = vmatprep.subr.bf16.mxu0 0
    %4989 = vmatpush1.bf16.msra.mxu0 %v965
    %4990 = vmatprep.subr.bf16.mxu0 0
    %4991 = vmatpush1.bf16.msra.mxu0 %v968
    %4992 = vmatprep.subr.bf16.mxu0 0
    %4993 = vmatpush1.bf16.msra.mxu0 0
    %4994 = vmatprep.subr.bf16.mxu0 0
    %4995 = vmatpush1.bf16.msra.mxu0 0
    %4996 = vmatprep.subr.bf16.mxu0 0
    %4997 = vmatpush1.bf16.msra.mxu0 0
    %4998 = vmatprep.subr.bf16.mxu0 0
    %4999 = vmatpush1.bf16.msra.mxu0 0
    %5000 = vmatprep.subr.bf16.mxu0 0
    %5001 = vmatpush1.bf16.msra.mxu0 0
    %5002 = vmatprep.subr.bf16.mxu0 0
    %5003 = vmatpush1.bf16.msra.mxu0 0
    %5004 = vmatprep.subr.bf16.mxu0 0
    %5005 = vmatpush1.bf16.msra.mxu0 0
    %5006 = vmatprep.subr.bf16.mxu0 0
    %5007 = vmatpush1.bf16.msra.mxu0 0
    %5008 = vmatprep.mubr.bf16.mxu0 0
    %5009 = vmatmul.mubr.bf16.gmra.mrb[0].mxu0 %v4934
    %v5010 = vpop.f32.mrb[0].mxu0
    %v5011 = vadd.f32 0.0, %v5010
    %v5012 = vpop.f32.mrb[0].mxu0
    %v5013 = vpop.f32.mrb[0].mxu0
    %v5014 = vpop.f32.mrb[0].mxu0
    %5015 = vdwg.mxu0
    %v5016 = vadd.f32 %v451, %v4970
    %v5017 = vadd.f32 %v453, %v4972
    %v5018 = vadd.f32 %v524, %v5011
    %v5019 = vmul.f32 %v5016, %v1080
    %v5020 = vmul.f32 %v5017, %v1080
    %v5021 = vmul.f32 %v5018, %v1080
    %v5022 = vrot.slane %v5019, 4
    %v5023 = vadd.f32 %v5019, %v5022
    %v5024 = vrot.slane %v5023, 2
    %v5025 = vadd.f32 %v5023, %v5024
    %v5026 = vrot.slane %v5025, 1
    %v5027 = vadd.f32 %v5025, %v5026
    %v5028 = vrot.slane %v5020, 4
    %v5029 = vadd.f32 %v5020, %v5028
    %v5030 = vrot.slane %v5029, 2
    %v5031 = vadd.f32 %v5029, %v5030
    %v5032 = vrot.slane %v5031, 1
    %v5033 = vadd.f32 %v5031, %v5032
    %v5034 = vrot.slane %v5021, 4
    %v5035 = vadd.f32 %v5021, %v5034
    %v5036 = vrot.slane %v5035, 2
    %v5037 = vadd.f32 %v5035, %v5036
    %v5038 = vrot.slane %v5037, 1
    %v5039 = vadd.f32 %v5037, %v5038
    %v5040 = vmul.f32 %v5019, %v5016
    %v5041 = vmul.f32 %v5020, %v5017
    %v5042 = vmul.f32 %v5021, %v5018
    %v5043 = vrot.slane %v5040, 4
    %v5044 = vadd.f32 %v5040, %v5043
    %v5045 = vrot.slane %v5044, 2
    %v5046 = vadd.f32 %v5044, %v5045
    %v5047 = vrot.slane %v5046, 1
    %v5048 = vadd.f32 %v5046, %v5047
    %v5049 = vrot.slane %v5041, 4
    %v5050 = vadd.f32 %v5041, %v5049
    %v5051 = vrot.slane %v5050, 2
    %v5052 = vadd.f32 %v5050, %v5051
    %v5053 = vrot.slane %v5052, 1
    %v5054 = vadd.f32 %v5052, %v5053
    %v5055 = vrot.slane %v5042, 4
    %v5056 = vadd.f32 %v5042, %v5055
    %v5057 = vrot.slane %v5056, 2
    %v5058 = vadd.f32 %v5056, %v5057
    %v5059 = vrot.slane %v5058, 1
    %v5060 = vadd.f32 %v5058, %v5059
    %v5061 = vsel %vm1124, %v5027, %v5048
    %v5062 = vsel %vm1124, %v5033, %v5054
    %v5063 = vsel %vm1124, %v5039, %v5060
    %5064 = vmatprep.subr.mxu0 %v186
    %5065 = vmatpush1.msra.mxu0 %v185
    %5066 = vmatprep.subr.mxu0 %v189
    %5067 = vmatpush1.msra.mxu0 %v188
    %5068 = vmatprep.subr.mxu0 %v192
    %5069 = vmatpush1.msra.mxu0 %v191
    %5070 = vmatprep.subr.mxu0 %v195
    %5071 = vmatpush1.msra.mxu0 %v194
    %5072 = vmatprep.subr.mxu0 %v198
    %5073 = vmatpush1.msra.mxu0 %v197
    %5074 = vmatprep.subr.mxu0 %v201
    %5075 = vmatpush1.msra.mxu0 %v200
    %5076 = vmatprep.subr.mxu0 %v204
    %5077 = vmatpush1.msra.mxu0 %v203
    %5078 = vmatprep.subr.mxu0 %v207
    %5079 = vmatpush1.msra.mxu0 %v206
    %5080 = vmatprep.subr.mxu0 %v210
    %5081 = vmatpush1.msra.mxu0 %v209
    %5082 = vmatprep.subr.mxu0 %v213
    %5083 = vmatpush1.msra.mxu0 %v212
    %5084 = vmatprep.subr.mxu0 %v216
    %5085 = vmatpush1.msra.mxu0 %v215
    %5086 = vmatprep.subr.mxu0 %v219
    %5087 = vmatpush1.msra.mxu0 %v218
    %5088 = vmatprep.subr.mxu0 %v222
    %5089 = vmatpush1.msra.mxu0 %v221
    %5090 = vmatprep.subr.mxu0 %v225
    %5091 = vmatpush1.msra.mxu0 %v224
    %5092 = vmatprep.subr.mxu0 %v228
    %5093 = vmatpush1.msra.mxu0 %v227
    %5094 = vmatprep.subr.mxu0 %v231
    %5095 = vmatpush1.msra.mxu0 %v230
    %5096 = vmatprep.subr.mxu0 %v234
    %5097 = vmatpush1.msra.mxu0 %v233
    %5098 = vmatprep.subr.mxu0 %v237
    %5099 = vmatpush1.msra.mxu0 %v236
    %5100 = vmatprep.subr.mxu0 %v240
    %5101 = vmatpush1.msra.mxu0 %v239
    %5102 = vmatprep.subr.mxu0 %v243
    %5103 = vmatpush1.msra.mxu0 %v242
    %5104 = vmatprep.subr.mxu0 %v246
    %5105 = vmatpush1.msra.mxu0 %v245
    %5106 = vmatprep.subr.mxu0 %v249
    %5107 = vmatpush1.msra.mxu0 %v248
    %5108 = vmatprep.subr.mxu0 %v252
    %5109 = vmatpush1.msra.mxu0 %v251
    %5110 = vmatprep.subr.mxu0 %v255
    %5111 = vmatpush1.msra.mxu0 %v254
    %5112 = vmatprep.subr.mxu0 %v258
    %5113 = vmatpush1.msra.mxu0 %v257
    %5114 = vmatprep.subr.mxu0 %v261
    %5115 = vmatpush1.msra.mxu0 %v260
    %5116 = vmatprep.subr.mxu0 %v264
    %5117 = vmatpush1.msra.mxu0 %v263
    %5118 = vmatprep.subr.mxu0 %v267
    %5119 = vmatpush1.msra.mxu0 %v266
    %5120 = vmatprep.subr.mxu0 %v270
    %5121 = vmatpush1.msra.mxu0 %v269
    %5122 = vmatprep.subr.mxu0 %v273
    %5123 = vmatpush1.msra.mxu0 %v272
    %5124 = vmatprep.subr.mxu0 %v276
    %5125 = vmatpush1.msra.mxu0 %v275
    %5126 = vmatprep.subr.mxu0 %v279
    %5127 = vmatpush1.msra.mxu0 %v278
    %5128 = vmatprep.mubr.f32.mxu0 %v5062
    %5129 = vmatmul.mubr.f32.gmra.mrb[0].mxu0 %v5061
    %v5130 = vpop.f32.mrb[0].mxu0
    %v5131 = vadd.f32 0.0, %v5130
    %v5132 = vpop.f32.mrb[0].mxu0
    %v5133 = vadd.f32 0.0, %v5132
    %5134 = vdwg.mxu0
    %5135 = vmatprep.subr.mxu0 %v282
    %5136 = vmatpush1.msra.mxu0 %v281
    %5137 = vmatprep.subr.mxu0 %v285
    %5138 = vmatpush1.msra.mxu0 %v284
    %5139 = vmatprep.subr.mxu0 %v288
    %5140 = vmatpush1.msra.mxu0 %v287
    %5141 = vmatprep.subr.mxu0 %v291
    %5142 = vmatpush1.msra.mxu0 %v290
    %5143 = vmatprep.subr.mxu0 %v294
    %5144 = vmatpush1.msra.mxu0 %v293
    %5145 = vmatprep.subr.mxu0 %v297
    %5146 = vmatpush1.msra.mxu0 %v296
    %5147 = vmatprep.subr.mxu0 %v300
    %5148 = vmatpush1.msra.mxu0 %v299
    %5149 = vmatprep.subr.mxu0 %v303
    %5150 = vmatpush1.msra.mxu0 %v302
    %5151 = vmatprep.subr.mxu0 %v306
    %5152 = vmatpush1.msra.mxu0 %v305
    %5153 = vmatprep.subr.mxu0 %v309
    %5154 = vmatpush1.msra.mxu0 %v308
    %5155 = vmatprep.subr.mxu0 %v312
    %5156 = vmatpush1.msra.mxu0 %v311
    %5157 = vmatprep.subr.mxu0 %v315
    %5158 = vmatpush1.msra.mxu0 %v314
    %5159 = vmatprep.subr.mxu0 %v318
    %5160 = vmatpush1.msra.mxu0 %v317
    %5161 = vmatprep.subr.mxu0 %v321
    %5162 = vmatpush1.msra.mxu0 %v320
    %5163 = vmatprep.subr.mxu0 %v324
    %5164 = vmatpush1.msra.mxu0 %v323
    %5165 = vmatprep.subr.mxu0 %v327
    %5166 = vmatpush1.msra.mxu0 %v326
    %5167 = vmatprep.subr.mxu0 0.0
    %5168 = vmatpush1.msra.mxu0 0.0
    %5169 = vmatprep.subr.mxu0 0.0
    %5170 = vmatpush1.msra.mxu0 0.0
    %5171 = vmatprep.subr.mxu0 0.0
    %5172 = vmatpush1.msra.mxu0 0.0
    %5173 = vmatprep.subr.mxu0 0.0
    %5174 = vmatpush1.msra.mxu0 0.0
    %5175 = vmatprep.subr.mxu0 0.0
    %5176 = vmatpush1.msra.mxu0 0.0
    %5177 = vmatprep.subr.mxu0 0.0
    %5178 = vmatpush1.msra.mxu0 0.0
    %5179 = vmatprep.subr.mxu0 0.0
    %5180 = vmatpush1.msra.mxu0 0.0
    %5181 = vmatprep.subr.mxu0 0.0
    %5182 = vmatpush1.msra.mxu0 0.0
    %5183 = vmatprep.subr.mxu0 0.0
    %5184 = vmatpush1.msra.mxu0 0.0
    %5185 = vmatprep.subr.mxu0 0.0
    %5186 = vmatpush1.msra.mxu0 0.0
    %5187 = vmatprep.subr.mxu0 0.0
    %5188 = vmatpush1.msra.mxu0 0.0
    %5189 = vmatprep.subr.mxu0 0.0
    %5190 = vmatpush1.msra.mxu0 0.0
    %5191 = vmatprep.subr.mxu0 0.0
    %5192 = vmatpush1.msra.mxu0 0.0
    %5193 = vmatprep.subr.mxu0 0.0
    %5194 = vmatpush1.msra.mxu0 0.0
    %5195 = vmatprep.subr.mxu0 0.0
    %5196 = vmatpush1.msra.mxu0 0.0
    %5197 = vmatprep.subr.mxu0 0.0
    %5198 = vmatpush1.msra.mxu0 0.0
    %5199 = vmatprep.mubr.f32.mxu0 0.0
    %5200 = vmatmul.mubr.f32.gmra.mrb[0].mxu0 %v5063
    %v5201 = vpop.f32.mrb[0].mxu0
    %v5202 = vadd.f32 %v5131, %v5201
    %v5203 = vpop.f32.mrb[0].mxu0
    %v5204 = vadd.f32 %v5133, %v5203
    %5205 = vdwg.mxu0
    %5206 = vmatprep.subr.mxu0 0.0
    %5207 = vmatpush1.msra.mxu0 %v187
    %5208 = vmatprep.subr.mxu0 0.0
    %5209 = vmatpush1.msra.mxu0 %v190
    %5210 = vmatprep.subr.mxu0 0.0
    %5211 = vmatpush1.msra.mxu0 %v193
    %5212 = vmatprep.subr.mxu0 0.0
    %5213 = vmatpush1.msra.mxu0 %v196
    %5214 = vmatprep.subr.mxu0 0.0
    %5215 = vmatpush1.msra.mxu0 %v199
    %5216 = vmatprep.subr.mxu0 0.0
    %5217 = vmatpush1.msra.mxu0 %v202
    %5218 = vmatprep.subr.mxu0 0.0
    %5219 = vmatpush1.msra.mxu0 %v205
    %5220 = vmatprep.subr.mxu0 0.0
    %5221 = vmatpush1.msra.mxu0 %v208
    %5222 = vmatprep.subr.mxu0 0.0
    %5223 = vmatpush1.msra.mxu0 %v211
    %5224 = vmatprep.subr.mxu0 0.0
    %5225 = vmatpush1.msra.mxu0 %v214
    %5226 = vmatprep.subr.mxu0 0.0
    %5227 = vmatpush1.msra.mxu0 %v217
    %5228 = vmatprep.subr.mxu0 0.0
    %5229 = vmatpush1.msra.mxu0 %v220
    %5230 = vmatprep.subr.mxu0 0.0
    %5231 = vmatpush1.msra.mxu0 %v223
    %5232 = vmatprep.subr.mxu0 0.0
    %5233 = vmatpush1.msra.mxu0 %v226
    %5234 = vmatprep.subr.mxu0 0.0
    %5235 = vmatpush1.msra.mxu0 %v229
    %5236 = vmatprep.subr.mxu0 0.0
    %5237 = vmatpush1.msra.mxu0 %v232
    %5238 = vmatprep.subr.mxu0 0.0
    %5239 = vmatpush1.msra.mxu0 %v235
    %5240 = vmatprep.subr.mxu0 0.0
    %5241 = vmatpush1.msra.mxu0 %v238
    %5242 = vmatprep.subr.mxu0 0.0
    %5243 = vmatpush1.msra.mxu0 %v241
    %5244 = vmatprep.subr.mxu0 0.0
    %5245 = vmatpush1.msra.mxu0 %v244
    %5246 = vmatprep.subr.mxu0 0.0
    %5247 = vmatpush1.msra.mxu0 %v247
    %5248 = vmatprep.subr.mxu0 0.0
    %5249 = vmatpush1.msra.mxu0 %v250
    %5250 = vmatprep.subr.mxu0 0.0
    %5251 = vmatpush1.msra.mxu0 %v253
    %5252 = vmatprep.subr.mxu0 0.0
    %5253 = vmatpush1.msra.mxu0 %v256
    %5254 = vmatprep.subr.mxu0 0.0
    %5255 = vmatpush1.msra.mxu0 %v259
    %5256 = vmatprep.subr.mxu0 0.0
    %5257 = vmatpush1.msra.mxu0 %v262
    %5258 = vmatprep.subr.mxu0 0.0
    %5259 = vmatpush1.msra.mxu0 %v265
    %5260 = vmatprep.subr.mxu0 0.0
    %5261 = vmatpush1.msra.mxu0 %v268
    %5262 = vmatprep.subr.mxu0 0.0
    %5263 = vmatpush1.msra.mxu0 %v271
    %5264 = vmatprep.subr.mxu0 0.0
    %5265 = vmatpush1.msra.mxu0 %v274
    %5266 = vmatprep.subr.mxu0 0.0
    %5267 = vmatpush1.msra.mxu0 %v277
    %5268 = vmatprep.subr.mxu0 0.0
    %5269 = vmatpush1.msra.mxu0 %v280
    %5270 = vmatprep.mubr.f32.mxu0 %v5062
    %5271 = vmatmul.mubr.f32.gmra.mrb[0].mxu0 %v5061
    %v5272 = vpop.f32.mrb[0].mxu0
    %v5273 = vadd.f32 0.0, %v5272
    %v5274 = vpop.f32.mrb[0].mxu0
    %5275 = vdwg.mxu0
    %5276 = vmatprep.subr.mxu0 0.0
    %5277 = vmatpush1.msra.mxu0 %v283
    %5278 = vmatprep.subr.mxu0 0.0
    %5279 = vmatpush1.msra.mxu0 %v286
    %5280 = vmatprep.subr.mxu0 0.0
    %5281 = vmatpush1.msra.mxu0 %v289
    %5282 = vmatprep.subr.mxu0 0.0
    %5283 = vmatpush1.msra.mxu0 %v292
    %5284 = vmatprep.subr.mxu0 0.0
    %5285 = vmatpush1.msra.mxu0 %v295
    %5286 = vmatprep.subr.mxu0 0.0
    %5287 = vmatpush1.msra.mxu0 %v298
    %5288 = vmatprep.subr.mxu0 0.0
    %5289 = vmatpush1.msra.mxu0 %v301
    %5290 = vmatprep.subr.mxu0 0.0
    %5291 = vmatpush1.msra.mxu0 %v304
    %5292 = vmatprep.subr.mxu0 0.0
    %5293 = vmatpush1.msra.mxu0 %v307
    %5294 = vmatprep.subr.mxu0 0.0
    %5295 = vmatpush1.msra.mxu0 %v310
    %5296 = vmatprep.subr.mxu0 0.0
    %5297 = vmatpush1.msra.mxu0 %v313
    %5298 = vmatprep.subr.mxu0 0.0
    %5299 = vmatpush1.msra.mxu0 %v316
    %5300 = vmatprep.subr.mxu0 0.0
    %5301 = vmatpush1.msra.mxu0 %v319
    %5302 = vmatprep.subr.mxu0 0.0
    %5303 = vmatpush1.msra.mxu0 %v322
    %5304 = vmatprep.subr.mxu0 0.0
    %5305 = vmatpush1.msra.mxu0 %v325
    %5306 = vmatprep.subr.mxu0 0.0
    %5307 = vmatpush1.msra.mxu0 %v328
    %5308 = vmatprep.subr.mxu0 0.0
    %5309 = vmatpush1.msra.mxu0 0.0
    %5310 = vmatprep.subr.mxu0 0.0
    %5311 = vmatpush1.msra.mxu0 0.0
    %5312 = vmatprep.subr.mxu0 0.0
    %5313 = vmatpush1.msra.mxu0 0.0
    %5314 = vmatprep.subr.mxu0 0.0
    %5315 = vmatpush1.msra.mxu0 0.0
    %5316 = vmatprep.subr.mxu0 0.0
    %5317 = vmatpush1.msra.mxu0 0.0
    %5318 = vmatprep.subr.mxu0 0.0
    %5319 = vmatpush1.msra.mxu0 0.0
    %5320 = vmatprep.subr.mxu0 0.0
    %5321 = vmatpush1.msra.mxu0 0.0
    %5322 = vmatprep.subr.mxu0 0.0
    %5323 = vmatpush1.msra.mxu0 0.0
    %5324 = vmatprep.subr.mxu0 0.0
    %5325 = vmatpush1.msra.mxu0 0.0
    %5326 = vmatprep.subr.mxu0 0.0
    %5327 = vmatpush1.msra.mxu0 0.0
    %5328 = vmatprep.subr.mxu0 0.0
    %5329 = vmatpush1.msra.mxu0 0.0
    %5330 = vmatprep.subr.mxu0 0.0
    %5331 = vmatpush1.msra.mxu0 0.0
    %5332 = vmatprep.subr.mxu0 0.0
    %5333 = vmatpush1.msra.mxu0 0.0
    %5334 = vmatprep.subr.mxu0 0.0
    %5335 = vmatpush1.msra.mxu0 0.0
    %5336 = vmatprep.subr.mxu0 0.0
    %5337 = vmatpush1.msra.mxu0 0.0
    %5338 = vmatprep.subr.mxu0 0.0
    %5339 = vmatpush1.msra.mxu0 0.0
    %5340 = vmatprep.mubr.f32.mxu0 0.0
    %5341 = vmatmul.mubr.f32.gmra.mrb[0].mxu0 %v5063
    %v5342 = vpop.f32.mrb[0].mxu0
    %v5343 = vadd.f32 %v5273, %v5342
    %v5344 = vpop.f32.mrb[0].mxu0
    %5345 = vdwg.mxu0
    %v5346 = vmul.f32 %v5202, 0.015625
    %v5347 = vmul.f32 %v5204, 0.015625
    %v5348 = vmul.f32 %v5343, 0.015625
    %v5349 = vmul.f32 %v5346, %v5346
    %v5350 = vmul.f32 %v5347, %v5347
    %v5351 = vmul.f32 %v5348, %v5348
    %v5355 = vrot.slane %v5349, 7
    %v5356 = vrot.slane %v5350, 7
    %v5357 = vrot.slane %v5351, 7
    %v5361 = vsub.f32 %v5346, %v5355
    %v5362 = vsub.f32 %v5347, %v5356
    %v5363 = vsub.f32 %v5348, %v5357
    %v5364 = vadd.f32 %v5361, 1e-05
    %v5365 = vadd.f32 %v5362, 1e-05
    %v5366 = vadd.f32 %v5363, 1e-05
    %v5367 = vrsqrt.pop %v5364
    %v5368 = vrsqrt.pop %v5365
    %v5369 = vrsqrt.pop %v5366
    %v5370 = vmul.f32 %v5367, %v1438
    %v5371 = vmul.f32 %v5368, %v1442
    %v5372 = vmul.f32 %v5369, %v1446
    %v5376 = vrot.slane %v5370, 1
    %v5377 = vrot.slane %v5371, 1
    %v5378 = vrot.slane %v5372, 1
    %v5382 = vmul.f32 %v5346, %v5376
    %v5383 = vmul.f32 %v5347, %v5377
    %v5384 = vmul.f32 %v5348, %v5378
    %v5388 = vcombine.low %v5382, %v5383
    %v5390 = vunpack.c.l.s4 1966171168
    %v5391 = vunpack.c.0.s8 %v5390
    %v5392 = vlaneseq
    %v5393 = vshrl.u32 %v5392, 7
    %v5394 = vsub.s32 %v5391, %v5393
    %v5395 = vrot.slane %v5388, %v5394
    %v5397 = vunpack.c.l.s4 1966171168
    %v5398 = vunpack.c.0.s8 %v5397
    %v5399 = vlaneseq
    %v5400 = vshrl.u32 %v5399, 7
    %v5401 = vsub.s32 %v5398, %v5400
    %v5402 = vrot.slane %v5384, %v5401
    %v5403 = vcombine.low %v5395, %v5402
    %v5405 = vunpack.c.l.s4 1966171168
    %v5406 = vunpack.c.0.s8 %v5405
    %v5407 = vlaneseq
    %v5408 = vshrl.u32 %v5407, 7
    %v5409 = vsub.s32 %v5406, %v5408
    %v5410 = vrot.slane %v5403, %v5409
    %v5412 = vsub.f32 %v331, %v5410
    %v5413 = vlaneseq
    %v5414 = vshrl.u32 %v5413, 7
    %v5415 = vsub.s32 1, %v5414
    %v5416 = vrot.slane %v5370, %v5415
    %v5417 = vlaneseq
    %v5418 = vshrl.u32 %v5417, 7
    %v5419 = vsub.s32 1, %v5418
    %v5420 = vrot.slane %v5371, %v5419
    %v5421 = vlaneseq
    %v5422 = vshrl.u32 %v5421, 7
    %v5423 = vsub.s32 1, %v5422
    %v5424 = vrot.slane %v5372, %v5423
    %v5425 = vmul.f32 %v5016, %v5416
    %v5426 = vmul.f32 %v5017, %v5420
    %v5427 = vmul.f32 %v5018, %v5424
    %v5429 = vlaneseq
    %v5430 = vshrl.u32 %v5429, 7
    %v5431 = vsub.s32 0, %v5430
    %v5432 = vrot.slane %v5412, %v5431
    %v5433 = vlaneseq
    %v5434 = vshrl.u32 %v5433, 7
    %v5435 = vsub.s32 1, %v5434
    %v5436 = vrot.slane %v5412, %v5435
    %v5437 = vlaneseq
    %v5438 = vshrl.u32 %v5437, 7
    %v5439 = vsub.s32 2, %v5438
    %v5440 = vrot.slane %v5412, %v5439
    %v5444 = vadd.f32 %v5425, %v5432
    %v5445 = vadd.f32 %v5426, %v5436
    %v5446 = vadd.f32 %v5427, %v5440
    %v5447 = vxor.u32 %v5446, 2147483648
    %v5448 = vmul.f32 %v5447, 1.442695
    %v5449 = vpow.pop %v5448
    %v5450 = vadd.f32 %v5449, 1.0
    %v5451 = vrcp.pop %v5450
    %v5452 = vmul.f32 1.0, %v5451
    %v5453 = vlaneseq
    %v5454 = vshrl.u32 %v5453, 7
    %v5455 = vsub.s32 7, %v5454
    %v5456 = vrot.slane %v850, %v5455
    %v5457 = vmul.f32 %v526, %v5456
    %v5458 = vlaneseq
    %v5459 = vshrl.u32 %v5458, 7
    %v5460 = vsub.s32 7, %v5459
    %v5461 = vrot.slane %v859, %v5460
    %v5462 = vadd.f32 %v5457, %v5461
    %v5463 = vtanh.pop %v5444
    %v5464 = vmul.f32 %v5462, %v5463
    %v5465 = vsub.f32 0.0, %v5452
    %v5466 = vmul.f32 %v5465, 1.442695
    %v5467 = vpow.pop %v5466
    %v5468 = vmul.f32 %v4933, %v5467
    %v5469 = vmax.f32 %v5468, %v5445
    %v5470 = vsub.f32 %v4933, %v5469
    %v5471 = vsub.f32 %v5470, %v5452
    %v5472 = vmul.f32 %v5471, 1.442695
    %v5473 = vpow.pop %v5472
    %v5474 = vsub.f32 %v5445, %v5469
    %v5475 = vmul.f32 %v5474, 1.442695
    %v5476 = vpow.pop %v5475
    %v5477 = vmul.f32 %v4931, %v5473
    %v5478 = vmul.f32 %v5464, %v5476
    %v5479 = vadd.f32 %v5477, %v5478
    %v5480 = vmul.f32 %v4932, %v5473
    %v5481 = vadd.f32 %v5480, %v5476
    %v5482 = vrcp.pop %v5481
    %v5483 = vmul.f32 %v5479, %v5482
    %v5484 = vtanh.pop %v5483
    %5485 = vst [vmem:[#allocation13] sm:$0xff] %v5479
    %5486 = vst [vmem:[#allocation15] sm:$0xff] %v5481
    %5487 = vst [vmem:[#allocation16] sm:$0xff] %v5484
    %5488 = vst [vmem:[#allocation18] sm:$0xff] %v5469
    %5489 = vst [vmem:[#allocation2 + $0x38] sm:$0xff] %v5484
    %v5490 = vld [vmem:[#allocation2] sm:$0xff]
    %v5491 = vld [vmem:[#allocation2 + $0x8] sm:$0xff]
    %v5492 = vld [vmem:[#allocation2 + $0x10] sm:$0xff]
    %v5493 = vld [vmem:[#allocation2 + $0x18] sm:$0xff]
    %v5494 = vld [vmem:[#allocation2 + $0x20] sm:$0xff]
    %v5495 = vld [vmem:[#allocation2 + $0x28] sm:$0xff]
    %v5496 = vld [vmem:[#allocation2 + $0x30] sm:$0xff]
    %v5497 = vld [vmem:[#allocation2 + $0x38] sm:$0xff]
    %v5498 = vpack.c.bf16 %v5491, %v5490
    %v5499 = vpack.c.bf16 %v5493, %v5492
    %v5500 = vpack.c.bf16 %v5495, %v5494
    %v5501 = vpack.c.bf16 %v5497, %v5496
    %v5502 = vld [vmem:[%s11] sm:$0xf]
    %v5503 = vld [vmem:[%s11 + $0x4] sm:$0xf]
    %v5504 = vld [vmem:[%s11 + $0x8] sm:$0xf]
    %v5505 = vld [vmem:[%s11 + $0xc] sm:$0xf]
    %v5506 = vld [vmem:[%s11 + $0x10] sm:$0xf]
    %v5507 = vld [vmem:[%s11 + $0x14] sm:$0xf]
    %v5508 = vld [vmem:[%s11 + $0x18] sm:$0xf]
    %v5509 = vld [vmem:[%s11 + $0x1c] sm:$0xf]
    %v5510 = vld [vmem:[%s11 + $0x20] sm:$0xf]
    %v5511 = vld [vmem:[%s11 + $0x24] sm:$0xf]
    %v5512 = vld [vmem:[%s11 + $0x28] sm:$0xf]
    %v5513 = vld [vmem:[%s11 + $0x2c] sm:$0xf]
    %v5514 = vld [vmem:[%s11 + $0x30] sm:$0xf]
    %v5515 = vld [vmem:[%s11 + $0x34] sm:$0xf]
    %v5516 = vld [vmem:[%s11 + $0x38] sm:$0xf]
    %v5517 = vld [vmem:[%s11 + $0x3c] sm:$0xf]
    %v5518 = vld [vmem:[%s12] sm:$0x1]
    %v5520 = vlaneseq
    %v5521 = vshrl.u32 %v5520, 7
    %v5522 = vsub.s32 0, %v5521
    %v5523 = vrot.slane %v5518, %v5522
    %v5541 = vunpack.c.l.b16 %v5502
    %v5542 = vunpack.c.l.b16 %v5503
    %v5543 = vunpack.c.l.b16 %v5504
    %v5544 = vunpack.c.l.b16 %v5505
    %v5545 = vunpack.c.l.b16 %v5506
    %v5546 = vunpack.c.l.b16 %v5507
    %v5547 = vunpack.c.l.b16 %v5508
    %v5548 = vunpack.c.l.b16 %v5509
    %v5549 = vunpack.c.l.b16 %v5510
    %v5550 = vunpack.c.l.b16 %v5511
    %v5551 = vunpack.c.l.b16 %v5512
    %v5552 = vunpack.c.l.b16 %v5513
    %v5553 = vunpack.c.l.b16 %v5514
    %v5554 = vunpack.c.l.b16 %v5515
    %v5555 = vunpack.c.l.b16 %v5516
    %v5556 = vunpack.c.l.b16 %v5517
    %v5557 = vpack.c.b16 %v5542, %v5541
    %v5558 = vpack.c.b16 %v5544, %v5543
    %v5559 = vpack.c.b16 %v5546, %v5545
    %v5560 = vpack.c.b16 %v5548, %v5547
    %v5561 = vpack.c.b16 %v5550, %v5549
    %v5562 = vpack.c.b16 %v5552, %v5551
    %v5563 = vpack.c.b16 %v5554, %v5553
    %v5564 = vpack.c.b16 %v5556, %v5555
    %5573 = vmatprep.subr.bf16.mxu0 0
    %5574 = vmatpush1.bf16.msra.mxu0 %v5557
    %5575 = vmatprep.subr.bf16.mxu0 0
    %5576 = vmatpush1.bf16.msra.mxu0 %v5558
    %5577 = vmatprep.subr.bf16.mxu0 0
    %5578 = vmatpush1.bf16.msra.mxu0 %v5559
    %5579 = vmatprep.subr.bf16.mxu0 0
    %5580 = vmatpush1.bf16.msra.mxu0 %v5560
    %5581 = vmatprep.subr.bf16.mxu0 0
    %5582 = vmatpush1.bf16.msra.mxu0 %v5561
    %5583 = vmatprep.subr.bf16.mxu0 0
    %5584 = vmatpush1.bf16.msra.mxu0 %v5562
    %5585 = vmatprep.subr.bf16.mxu0 0
    %5586 = vmatpush1.bf16.msra.mxu0 %v5563
    %5587 = vmatprep.subr.bf16.mxu0 0
    %5588 = vmatpush1.bf16.msra.mxu0 %v5564
    %5589 = vmatprep.subr.bf16.mxu0 0
    %5590 = vmatpush1.bf16.msra.mxu0 0
    %5591 = vmatprep.subr.bf16.mxu0 0
    %5592 = vmatpush1.bf16.msra.mxu0 0
    %5593 = vmatprep.subr.bf16.mxu0 0
    %5594 = vmatpush1.bf16.msra.mxu0 0
    %5595 = vmatprep.subr.bf16.mxu0 0
    %5596 = vmatpush1.bf16.msra.mxu0 0
    %5597 = vmatprep.subr.bf16.mxu0 0
    %5598 = vmatpush1.bf16.msra.mxu0 0
    %5599 = vmatprep.subr.bf16.mxu0 0
    %5600 = vmatpush1.bf16.msra.mxu0 0
    %5601 = vmatprep.subr.bf16.mxu0 0
    %5602 = vmatpush1.bf16.msra.mxu0 0
    %5603 = vmatprep.subr.bf16.mxu0 0
    %5604 = vmatpush1.bf16.msra.mxu0 0
    %5605 = vmatprep.mubr.bf16.mxu0 0
    %5606 = vmatmul.mubr.bf16.gmra.mrb[0].mxu0 %v5498
    %v5607 = vpop.f32.mrb[0].mxu0
    %v5608 = vadd.f32 %v5523, %v5607
    %v5609 = vpop.f32.mrb[0].mxu0
    %v5610 = vpop.f32.mrb[0].mxu0
    %v5611 = vadd.f32 %v5523, %v5610
    %v5612 = vpop.f32.mrb[0].mxu0
    %5613 = vmatprep.mubr.bf16.mxu0 0
    %5614 = vmatmul.mubr.bf16.gmra.mrb[0].mxu0 %v5499
    %v5615 = vpop.f32.mrb[0].mxu0
    %v5616 = vadd.f32 %v5523, %v5615
    %v5617 = vpop.f32.mrb[0].mxu0
    %v5618 = vpop.f32.mrb[0].mxu0
    %v5619 = vadd.f32 %v5523, %v5618
    %v5620 = vpop.f32.mrb[0].mxu0
    %5621 = vmatprep.mubr.bf16.mxu0 0
    %5622 = vmatmul.mubr.bf16.gmra.mrb[0].mxu0 %v5500
    %v5623 = vpop.f32.mrb[0].mxu0
    %v5624 = vadd.f32 %v5523, %v5623
    %v5625 = vpop.f32.mrb[0].mxu0
    %v5626 = vpop.f32.mrb[0].mxu0
    %v5627 = vadd.f32 %v5523, %v5626
    %v5628 = vpop.f32.mrb[0].mxu0
    %5629 = vmatprep.mubr.bf16.mxu0 0
    %5630 = vmatmul.mubr.bf16.gmra.mrb[0].mxu0 %v5501
    %v5631 = vpop.f32.mrb[0].mxu0
    %v5632 = vadd.f32 %v5523, %v5631
    %v5633 = vpop.f32.mrb[0].mxu0
    %v5634 = vpop.f32.mrb[0].mxu0
    %v5635 = vadd.f32 %v5523, %v5634
    %v5636 = vpop.f32.mrb[0].mxu0
    %5637 = vdwg.mxu0
    %5638 = vst [vmem:[#allocation12] sm:$0xff] %v5608
    %5639 = vst [vmem:[#allocation12 + $0x8] sm:$0xff] %v5611
    %5640 = vst [vmem:[#allocation12 + $0x10] sm:$0xff] %v5616
    %5641 = vst [vmem:[#allocation12 + $0x18] sm:$0xff] %v5619
    %5642 = vst [vmem:[#allocation12 + $0x20] sm:$0xff] %v5624
    %5643 = vst [vmem:[#allocation12 + $0x28] sm:$0xff] %v5627
    %5644 = vst [vmem:[#allocation12 + $0x30] sm:$0xff] %v5632
    %5645 = vst [vmem:[#allocation12 + $0x38] sm:$0xff] %v5635
    // Predicated region
    $region98: #{tpu_custom_call.1} parent=1 // pred_check
      _
    $region99: #{tpu_custom_call.1} parent=1 // pred_check_branch
      %5647 = sbr.rel (0) target = $region101
    $region100: #{tpu_custom_call.1} parent=1 // pred_region
      %s5649 = ssub.s32 1024, 1024
      %5650 = vsyncadd [#allocation5], %s5649
      %s5651 = sshll.u32 [#allocation12], 4
      %s5652 = int_to_ptr.vmem [resolvable:$true] %s5651
      %5657 = dma.vmem_to_hbm [thread:$0]  %s5652, 1024, %s18, [#allocation5], 128, 128, 8
    $region101: #{tpu_custom_call.1} parent=1 // pred_fallthru
      _
    // Predicated region
    $region102: #{tpu_custom_call.1} parent=1 // pred_check
      _
    $region103: #{tpu_custom_call.1} parent=1 // pred_check_branch
      %5659 = sbr.rel (0) target = $region105
    $region104: #{tpu_custom_call.1} parent=1 // pred_region
      %s5661 = ssub.s32 128, 128
      %5662 = vsyncadd [#allocation14], %s5661
      %s5664 = sshll.u32 [#allocation13], 4
      %s5665 = int_to_ptr.vmem [resolvable:$true] %s5664
      %5667 = dma.vmem_to_hbm [thread:$0]  %s5665, 128, %s19, [#allocation14]
    $region105: #{tpu_custom_call.1} parent=1 // pred_fallthru
      _
    // Predicated region
    $region106: #{tpu_custom_call.1} parent=1 // pred_check
      _
    $region107: #{tpu_custom_call.1} parent=1 // pred_check_branch
      %5669 = sbr.rel (0) target = $region109
    $region108: #{tpu_custom_call.1} parent=1 // pred_region
      %s5671 = ssub.s32 128, 128
      %5672 = vsyncadd [#allocation14], %s5671
      %s5674 = sshll.u32 [#allocation15], 4
      %s5675 = int_to_ptr.vmem [resolvable:$true] %s5674
      %5677 = dma.vmem_to_hbm [thread:$0]  %s5675, 128, %s20, [#allocation14]
    $region109: #{tpu_custom_call.1} parent=1 // pred_fallthru
      _
    // Predicated region
    $region110: #{tpu_custom_call.1} parent=1 // pred_check
      _
    $region111: #{tpu_custom_call.1} parent=1 // pred_check_branch
      %5679 = sbr.rel (0) target = $region113
    $region112: #{tpu_custom_call.1} parent=1 // pred_region
      %s5681 = ssub.s32 128, 128
      %5682 = vsyncadd [#allocation17], %s5681
      %s5684 = sshll.u32 [#allocation16], 4
      %s5685 = int_to_ptr.vmem [resolvable:$true] %s5684
      %5687 = dma.vmem_to_hbm [thread:$0]  %s5685, 128, %s21, [#allocation17]
    $region113: #{tpu_custom_call.1} parent=1 // pred_fallthru
      _
    // Predicated region
    $region114: #{tpu_custom_call.1} parent=1 // pred_check
      _
    $region115: #{tpu_custom_call.1} parent=1 // pred_check_branch
      %5689 = sbr.rel (0) target = $region117
    $region116: #{tpu_custom_call.1} parent=1 // pred_region
      %s5691 = ssub.s32 128, 128
      %5692 = vsyncadd [#allocation17], %s5691
      %s5694 = sshll.u32 [#allocation18], 4
      %s5695 = int_to_ptr.vmem [resolvable:$true] %s5694
      %5697 = dma.vmem_to_hbm [thread:$0]  %s5695, 128, %s22, [#allocation17]
    $region117: #{tpu_custom_call.1} parent=1 // pred_fallthru
      _
    // Predicated region
    $region118: #{tpu_custom_call.1} parent=1 // pred_check
      _
    $region119: #{tpu_custom_call.1} parent=1 // pred_check_branch
      %5699 = sbr.rel (0) target = $region121
    $region120: #{tpu_custom_call.1} parent=1 // pred_region
      %5700 = dma.done [#allocation5], 1024
    $region121: #{tpu_custom_call.1} parent=1 // pred_fallthru
      _
    // Predicated region
    $region122: #{tpu_custom_call.1} parent=1 // pred_check
      _
    $region123: #{tpu_custom_call.1} parent=1 // pred_check_branch
      %5702 = sbr.rel (0) target = $region125
    $region124: #{tpu_custom_call.1} parent=1 // pred_region
      %5703 = dma.done [#allocation14], 128
    $region125: #{tpu_custom_call.1} parent=1 // pred_fallthru
      _
    // Predicated region
    $region126: #{tpu_custom_call.1} parent=1 // pred_check
      _
    $region127: #{tpu_custom_call.1} parent=1 // pred_check_branch
      %5705 = sbr.rel (0) target = $region129
    $region128: #{tpu_custom_call.1} parent=1 // pred_region
      %5706 = dma.done [#allocation14], 128
    $region129: #{tpu_custom_call.1} parent=1 // pred_fallthru
      _
    // Predicated region
    $region130: #{tpu_custom_call.1} parent=1 // pred_check
      _
    $region131: #{tpu_custom_call.1} parent=1 // pred_check_branch
      %5708 = sbr.rel (0) target = $region133
    $region132: #{tpu_custom_call.1} parent=1 // pred_region
      %5709 = dma.done [#allocation17], 128
    $region133: #{tpu_custom_call.1} parent=1 // pred_fallthru
      _
    // Predicated region
    $region134: #{tpu_custom_call.1} parent=1 // pred_check
      _
    $region135: #{tpu_custom_call.1} parent=1 // pred_check_branch
      %5711 = sbr.rel (0) target = $region137
    $region136: #{tpu_custom_call.1} parent=1 // pred_region
      %5712 = dma.done [#allocation17], 128
    $region137: #{tpu_custom_call.1} parent=1 // pred_fallthru
      _
    %5713 = vsyncpa [#allocation4], 1
    %5714 = vsyncpa [#allocation7], 1
    %5715 = vsyncpa [#allocation10], 1
    %5716 = vsyncpa [#allocation5], 1
    %5717 = vsyncpa [#allocation14], 1
    %5718 = vsyncpa [#allocation17], 1

</llo_original>
